<compile_context>
chip_gen: v7x
topology: tpu7x:2x2x1
jax: 0.10.0
libtpu: 0.0.40
codegen_flags: <defaults>
</compile_context>

<pallas_src>
import functools

import jax
import jax.numpy as jnp
from jax.experimental import pallas as pl
from jax.experimental.pallas import tpu as pltpu

_LANE = 128


def _round_up(x, m):
    return ((x + m - 1) // m) * m


# --------------------------------------------------------------------------
# Host-side parameter packing: four slabs, every entry 128-column aligned.
# --------------------------------------------------------------------------
class _Packer:
    """Packs (rows, w) tensors side by side at 128-aligned column offsets."""

    def __init__(self, rows, dtype):
        self.rows = rows
        self.dtype = dtype
        self.cols = []
        self.layout = {}
        self._off = 0

    def add(self, name, arr):
        assert int(arr.shape[0]) == self.rows, (name, arr.shape, self.rows)
        w = int(arr.shape[-1])
        pw = _round_up(w, _LANE)
        if pw != w:
            arr = jnp.pad(arr, ((0, 0), (0, pw - w)))
        self.layout[name] = (self._off, w)
        self.cols.append(arr.astype(self.dtype))
        self._off += pw

    def slab(self):
        return jnp.concatenate(self.cols, axis=1)


def pack_params(params, dim, dtype=jnp.float32):
    """Pack the nested param dict into four slabs.

    Returns (slabs, layouts) with layouts mapping name -> (col offset, width):
      wd : (dim, *)     fused [Wq*scale | Wk | Wv] and FF first-layer weights
      wh : (hidden, *)  FF second-layer weights
      wg : (2*dim, *)   GRU block-diagonal blockdiag(Wi, Wh) fused weights
      bs : (1, *)       every bias / layernorm gamma & beta
    Attention scale is folded into Wq / bq.  Every entry starts at a
    128-aligned column offset so in-kernel ref slices are clean lane tiles.
    """
    scale = dim ** -0.5
    hidden = int(params['ff_slots']['W2'].shape[0])

    wd = _Packer(dim, dtype)
    wh = _Packer(hidden, dtype)
    wg = _Packer(2 * dim, dtype)
    bs = _Packer(1, dtype)

    bs.add('norm_inputs/g', params['norm_inputs']['g'])
    bs.add('norm_inputs/b', params['norm_inputs']['b'])

    def pack_attn(name):
        p = params[name]
        bs.add(name + '/gi', p['gi'])
        bs.add(name + '/bi', p['bi'])
        bs.add(name + '/gc', p['gc'])
        bs.add(name + '/bc', p['bc'])
        wd.add(name + '/Wqkv',
               jnp.concatenate([p['Wq'] * scale, p['Wk'], p['Wv']], axis=1))
        bs.add(name + '/bqkv',
               jnp.concatenate([p['bq'] * scale, p['bk'], p['bv']], axis=1))

    def pack_gru(name):
        p = params[name]
        wi = jnp.concatenate([p['Wir'], p['Wiz'], p['Win']], axis=1)   # (D,3D)
        wh_ = jnp.concatenate([p['Whr'], p['Whz'], p['Whn']], axis=1)  # (D,3D)
        z = jnp.zeros_like(wi)
        blk = jnp.concatenate(
            [jnp.concatenate([wi, z], axis=1),
             jnp.concatenate([z, wh_], axis=1)], axis=0)               # (2D,6D)
        wg.add(name + '/W', blk)
        bs.add(name + '/bi',
               jnp.concatenate([p['bir'], p['biz'], p['bin']], axis=1))
        bs.add(name + '/bh',
               jnp.concatenate([p['bhr'], p['bhz'], p['bhn']], axis=1))

    def pack_ff(name):
        p = params[name]
        bs.add(name + '/g', p['g'])
        bs.add(name + '/b', p['b'])
        wd.add(name + '/W1', p['W1'])
        bs.add(name + '/b1', p['b1'])
        wh.add(name + '/W2', p['W2'])
        bs.add(name + '/b2', p['b2'])

    pack_attn('attn_s2i'); pack_gru('gru_s2i')
    pack_ff('ff_slots');   pack_gru('gru_ffs')
    pack_attn('attn_i2s'); pack_gru('gru_i2s')
    pack_ff('ff_inputs');  pack_gru('gru_ffi')

    slabs = (wd.slab(), wh.slab(), wg.slab(), bs.slab())
    layouts = (wd.layout, wh.layout, wg.layout, bs.layout)
    return slabs, layouts


# --------------------------------------------------------------------------
# Pallas kernel: one batch block per grid step, full iterative refinement.
# --------------------------------------------------------------------------
def _slot_attention_kernel(inputs_ref, slots_ref, wd_ref, wh_ref, wg_ref,
                           b_ref, slots_out_ref, inputs_out_ref, *,
                           iters, eps, dim, bt, n, n_s, layouts, matmul_dtype):
    wd_layout, wh_layout, wg_layout, b_layout = layouts

    # Static ref slices at 128-aligned offsets: cheap full-lane VMEM loads,
    # never a value-slice of a large live slab.
    def _slice(ref, layout, name):
        off, w = layout[name]
        return ref[:, off:off + w]

    w_d = lambda name: _slice(wd_ref, wd_layout, name)
    w_h = lambda name: _slice(wh_ref, wh_layout, name)
    w_g = lambda name: _slice(wg_ref, wg_layout, name)

    def bias(name):
        off, w = b_layout[name]
        return b_ref[:, off:off + w].astype(jnp.float32)          # (1, w)

    def matmul(x, w):
        # Weights are already stored in matmul_dtype; only activations cast.
        return jnp.dot(x.astype(matmul_dtype), w,
                       preferred_element_type=jnp.float32)

    def layernorm(x, g, b):
        mu = jnp.mean(x, axis=-1, keepdims=True)
        xc = x - mu
        var = jnp.mean(xc * xc, axis=-1, keepdims=True)
        return xc * jax.lax.rsqrt(var + 1e-5) * g + b

    def softmax(x, axis):
        m = jnp.max(x, axis=axis, keepdims=True)
        e = jnp.exp(x - m)
        return e * pl.reciprocal(jnp.sum(e, axis=axis, keepdims=True),
                                 approx=True)

    def weighted_attn(inp2d, ctx2d, rows, cols, name, softmax_axis, mean_axis):
        # inp2d: (bt*rows, dim) queries; ctx2d: (bt*cols, dim) keys / values.
        inp_n = layernorm(inp2d, bias(name + '/gi'), bias(name + '/bi'))
        ctx_n = layernorm(ctx2d, bias(name + '/gc'), bias(name + '/bc'))
        mi = bt * rows
        # One MXU push for q, k and v: stack query/context rows against the
        # fused [Wq*scale | Wk | Wv]; unused output quadrants are free here.
        stacked = jnp.concatenate([inp_n, ctx_n], axis=0)
        qkv = matmul(stacked, w_d(name + '/Wqkv')) + bias(name + '/bqkv')
        q3 = qkv[:mi, :dim].reshape(bt, rows, dim)
        k3 = qkv[mi:, dim:2 * dim].reshape(bt, cols, dim)
        v3 = qkv[mi:, 2 * dim:].reshape(bt, cols, dim)
        dots = jnp.einsum('bid,bjd->bij',
                          q3.astype(matmul_dtype), k3.astype(matmul_dtype),
                          preferred_element_type=jnp.float32)
        attn = softmax(dots, softmax_axis) + eps
        # Exact division for the weighted-mean normalisation (parity).
        attn = attn / jnp.sum(attn, axis=mean_axis, keepdims=True)
        upd = jnp.einsum('bij,bjd->bid',
                         attn.astype(matmul_dtype), v3.astype(matmul_dtype),
                         preferred_element_type=jnp.float32)
        return upd.reshape(bt * rows, dim)

    def gru(x, h, name):
        # Fused GRUCell: ONE matmul against blockdiag(Wi, Wh) -> [gx | gh].
        xh = jnp.concatenate([x, h], axis=1)                        # (M, 2D)
        g = matmul(xh, w_g(name + '/W'))                            # (M, 6D)
        gx = g[:, :3 * dim] + bias(name + '/bi')
        gh = g[:, 3 * dim:] + bias(name + '/bh')
        rz = jax.nn.sigmoid(gx[:, :2 * dim] + gh[:, :2 * dim])
        r, z = rz[:, :dim], rz[:, dim:]
        c = jnp.tanh(gx[:, 2 * dim:] + r * gh[:, 2 * dim:])
        return (1.0 - z) * c + z * h

    def feed_forward(x, name):
        xn = layernorm(x, bias(name + '/g'), bias(name + '/b'))
        h1 = jnp.maximum(matmul(xn, w_d(name + '/W1')) + bias(name + '/b1'),
                         0.0)
        return matmul(h1, w_h(name + '/W2')) + bias(name + '/b2')

    # Fold the batch block into the matmul M dimension.
    inputs = inputs_ref[...].reshape(bt * n, dim).astype(jnp.float32)
    slots = slots_ref[...].reshape(bt * n_s, dim).astype(jnp.float32)

    inputs = layernorm(inputs, bias('norm_inputs/g'), bias('norm_inputs/b'))

    for _ in range(iters):
        # slots <- GatedResidual(WeightedAttention(softmax_dim=1, mean_dim=2))
        slots = gru(weighted_attn(slots, inputs, n_s, n, 'attn_s2i', 1, 2),
                    slots, 'gru_s2i')
        # slots <- GatedResidual(FeedForward)
        slots = gru(feed_forward(slots, 'ff_slots'), slots, 'gru_ffs')
        # inputs <- GatedResidual(WeightedAttention(softmax_dim=2, mean_dim=1))
        inputs = gru(weighted_attn(inputs, slots, n, n_s, 'attn_i2s', 2, 1),
                     inputs, 'gru_i2s')
        # inputs <- GatedResidual(FeedForward)
        inputs = gru(feed_forward(inputs, 'ff_inputs'), inputs, 'gru_ffi')

    slots_out_ref[...] = slots.reshape(bt, n_s, dim).astype(slots_out_ref.dtype)
    inputs_out_ref[...] = inputs.reshape(bt, n, dim).astype(inputs_out_ref.dtype)


def _default_num_blocks(batch):
    # v5e / v6e: a single TensorCore -> the grid is a sequential loop, so one
    # grid step (batch already folded into the matmul M dim) avoids doubling
    # the fixed per-step overhead.  v7x: two TensorCores -> two "parallel"
    # batch blocks so both cores get work.
    try:
        kind = jax.devices()[0].device_kind.lower()
    except Exception:
        kind = ""
    if "v7" in kind and batch % 2 == 0:
        return 2
    return 1


def slot_attention_forward(inputs, slots_init, params, *, iters, eps,
                           num_blocks=None, matmul_dtype=jnp.float32):
    b, n, d = inputs.shape
    n_s = slots_init.shape[1]

    slabs, layouts = pack_params(params, d, dtype=matmul_dtype)
    wd_slab, wh_slab, wg_slab, b_slab = slabs

    if num_blocks is None:
        num_blocks = _default_num_blocks(b)
    assert b % num_blocks == 0, "batch must divide evenly into grid blocks"
    bt = b // num_blocks

    kernel = functools.partial(
        _slot_attention_kernel,
        iters=iters, eps=eps, dim=d, bt=bt, n=n, n_s=n_s,
        layouts=layouts, matmul_dtype=matmul_dtype)

    # Grid-invariant parameter slabs (constant index_map).  At these shapes the
    # default double buffering costs <1 MiB; at production D mark these
    # single-buffered / tile wd & wg over a K axis to fit v7x's 64 MiB VMEM.
    def invariant(shape):
        return pl.BlockSpec(shape, lambda i: (0, 0))

    in_specs = [
        pl.BlockSpec((bt, n, d), lambda i: (i, 0, 0)),
        pl.BlockSpec((bt, n_s, d), lambda i: (i, 0, 0)),
        invariant(wd_slab.shape),
        invariant(wh_slab.shape),
        invariant(wg_slab.shape),
        invariant(b_slab.shape),
    ]
    out_specs = (
        pl.BlockSpec((bt, n_s, d), lambda i: (i, 0, 0)),
        pl.BlockSpec((bt, n, d), lambda i: (i, 0, 0)),
    )
    out_shape = (jax.ShapeDtypeStruct((b, n_s, d), inputs.dtype),
                 jax.ShapeDtypeStruct((b, n, d), inputs.dtype))

    return pl.pallas_call(
        kernel,
        grid=(num_blocks,),
        in_specs=in_specs,
        out_specs=out_specs,
        out_shape=out_shape,
        compiler_params=pltpu.CompilerParams(
            dimension_semantics=("parallel",),
            vmem_limit_bytes=32 * 1024 * 1024),
    )(inputs, slots_init, wd_slab, wh_slab, wg_slab, b_slab)


# --------------------------------------------------------------------------
# Pure-JAX reference (mirrors the PyTorch module math, batched).
# --------------------------------------------------------------------------
def reference_forward(inputs, slots, params, *, iters, eps):
    d = inputs.shape[-1]
    scale = d ** -0.5

    def softmax(x, axis):
        m = jnp.max(x, axis=axis, keepdims=True)
        e = jnp.exp(x - m)
        return e / jnp.sum(e, axis=axis, keepdims=True)

    def layernorm(x, g, b):
        mu = jnp.mean(x, axis=-1, keepdims=True)
        var = jnp.mean((x - mu) ** 2, axis=-1, keepdims=True)
        return (x - mu) * jax.lax.rsqrt(var + 1e-5) * g + b

    def linear(x, W, b):
        return x @ W + b

    def weighted_attn(inp, ctx, pp, sm_axis, wm_axis):
        inp_n = layernorm(inp, pp['gi'], pp['bi'])
        ctx_n = layernorm(ctx, pp['gc'], pp['bc'])
        q = linear(inp_n, pp['Wq'], pp['bq'])
        k = linear(ctx_n, pp['Wk'], pp['bk'])
        v = linear(ctx_n, pp['Wv'], pp['bv'])
        dots = jnp.einsum('bid,bjd->bij', q, k) * scale
        attn = softmax(dots, axis=sm_axis) + eps
        attn = attn / jnp.sum(attn, axis=wm_axis, keepdims=True)
        return jnp.einsum('bij,bjd->bid', attn, v)

    def gru(x, h, pp):
        r = jax.nn.sigmoid(linear(x, pp['Wir'], pp['bir']) +
                           linear(h, pp['Whr'], pp['bhr']))
        z = jax.nn.sigmoid(linear(x, pp['Wiz'], pp['biz']) +
                           linear(h, pp['Whz'], pp['bhz']))
        c = jnp.tanh(linear(x, pp['Win'], pp['bin']) +
                     r * linear(h, pp['Whn'], pp['bhn']))
        return (1.0 - z) * c + z * h

    def feed_forward(x, pp):
        xn = layernorm(x, pp['g'], pp['b'])
        h1 = jnp.maximum(linear(xn, pp['W1'], pp['b1']), 0.0)
        return linear(h1, pp['W2'], pp['b2'])

    p = params
    inputs = layernorm(inputs, p['norm_inputs']['g'], p['norm_inputs']['b'])
    for _ in range(iters):
        slots = gru(weighted_attn(slots, inputs, p['attn_s2i'], 1, 2),
                    slots, p['gru_s2i'])
        slots = gru(feed_forward(slots, p['ff_slots']), slots, p['gru_ffs'])
        inputs = gru(weighted_attn(inputs, slots, p['attn_i2s'], 2, 1),
                     inputs, p['gru_i2s'])
        inputs = gru(feed_forward(inputs, p['ff_inputs']), inputs, p['gru_ffi'])
    return slots, inputs


# --------------------------------------------------------------------------
# Deterministic parameter initialization (shapes from the PyTorch __init__).
# Weights are stored pre-transposed as (in, out).
# --------------------------------------------------------------------------
def init_params(key, dim, hidden):
    keys = iter(jax.random.split(key, 128))

    def w(shape, fan_in):
        lim = 1.0 / (fan_in ** 0.5)
        return jax.random.uniform(next(keys), shape, jnp.float32, -lim, lim)

    def lin(din, dout):
        return w((din, dout), din), w((1, dout), din)

    def ln(d_):
        return jnp.ones((1, d_), jnp.float32), jnp.zeros((1, d_), jnp.float32)

    def attn():
        gi, bi = ln(dim)
        gc, bc = ln(dim)
        Wq, bq = lin(dim, dim)
        Wk, bk = lin(dim, dim)
        Wv, bv = lin(dim, dim)
        return dict(gi=gi, bi=bi, gc=gc, bc=bc,
                    Wq=Wq, bq=bq, Wk=Wk, bk=bk, Wv=Wv, bv=bv)

    def gru():
        out = {}
        for gate in ('r', 'z', 'n'):
            Wi, bi_ = lin(dim, dim)
            Wh, bh_ = lin(dim, dim)
            out['Wi' + gate] = Wi
            out['Wh' + gate] = Wh
            out['bi' + gate] = bi_
            out['bh' + gate] = bh_
        return out

    def ff():
        g, b = ln(dim)
        W1, b1 = lin(dim, hidden)
        W2, b2 = lin(hidden, dim)
        return dict(g=g, b=b, W1=W1, b1=b1, W2=W2, b2=b2)

    ng, nb = ln(dim)
    return {
        'norm_inputs': dict(g=ng, b=nb),
        'attn_s2i': attn(), 'gru_s2i': gru(),
        'ff_slots': ff(),   'gru_ffs': gru(),
        'attn_i2s': attn(), 'gru_i2s': gru(),
        'ff_inputs': ff(),  'gru_ffi': gru(),
    }


if __name__ == "__main__":
    B, N, S, D, HID, ITERS, EPS = 2, 16, 4, 32, 64, 3, 1e-8
    HIDDEN = max(D, HID)  # FeedForward: hidden_dim = max(dim, hidden_dim)

    key = jax.random.PRNGKey(0)
    k_in, k_mu, k_ls, k_noise, k_par = jax.random.split(key, 5)

    inputs = jax.random.normal(k_in, (B, N, D), jnp.float32)
    params = init_params(k_par, D, HIDDEN)

    # slots_mu ~ randn, slots_logsigma ~ xavier_uniform, slot sampling is host
    # glue (stateful torch.randn in the PyTorch forward).
    slots_mu = jax.random.normal(k_mu, (1, 1, D), jnp.float32)
    limit = (6.0 / (1 + D)) ** 0.5
    slots_logsigma = jax.random.uniform(k_ls, (1, 1, D), jnp.float32, -limit, limit)
    noise = jax.random.normal(k_noise, (B, S, D), jnp.float32)
    slots_init = slots_mu + jnp.exp(slots_logsigma) * noise

    # matmul_dtype=jnp.bfloat16 packs the weight slabs in bf16 on the host
    # (bf16-native MXUs on all three generations); default f32 keeps the
    # strict reference tolerance below.
    slots_out, inputs_out = slot_attention_forward(
        inputs, slots_init, params, iters=ITERS, eps=EPS)
    jax.block_until_ready((slots_out, inputs_out))

    ref_slots, ref_inputs = reference_forward(
        inputs, slots_init, params, iters=ITERS, eps=EPS)
    err = max(float(jnp.max(jnp.abs(slots_out - ref_slots))),
              float(jnp.max(jnp.abs(inputs_out - ref_inputs))))
    assert slots_out.shape == (B, S, D) and inputs_out.shape == (B, N, D)
    assert err < 5e-2, f"max abs error vs reference: {err}"
    print("KERNEL_OK")
</pallas_src>

<mosaic_0001>
module attributes {stable_mosaic.version = 11 : i64} {
  func.func @_slot_attention_kernel(%arg0: i32, %arg1: memref<2x16x32xf32, #tpu.memory_space<vmem>>, %arg2: memref<2x4x32xf32, #tpu.memory_space<vmem>>, %arg3: memref<32x512xf32, #tpu.memory_space<vmem>>, %arg4: memref<64x256xf32, #tpu.memory_space<vmem>>, %arg5: memref<64x1024xf32, #tpu.memory_space<vmem>>, %arg6: memref<1x3584xf32, #tpu.memory_space<vmem>>, %arg7: memref<2x4x32xf32, #tpu.memory_space<vmem>>, %arg8: memref<2x16x32xf32, #tpu.memory_space<vmem>>) attributes {dimension_semantics = [#tpu.dimension_semantics<parallel>], iteration_bounds = array<i64: 1>, scalar_prefetch = 0 : i64, scratch_operands = 0 : i64, tpu.core_type = #tpu.core_type<tc>, window_params = [{transform_indices = @transform_0, window_bounds = array<i64: 2, 16, 32>}, {transform_indices = @transform_1, window_bounds = array<i64: 2, 4, 32>}, {pipeline_mode = #tpu.pipeline_mode<synchronous>, transform_indices = @transform_2, window_bounds = array<i64: 32, 512>}, {pipeline_mode = #tpu.pipeline_mode<synchronous>, transform_indices = @transform_3, window_bounds = array<i64: 64, 256>}, {pipeline_mode = #tpu.pipeline_mode<synchronous>, transform_indices = @transform_4, window_bounds = array<i64: 64, 1024>}, {pipeline_mode = #tpu.pipeline_mode<synchronous>, transform_indices = @transform_5, window_bounds = array<i64: 1, 3584>}, {transform_indices = @transform_6, window_bounds = array<i64: 2, 4, 32>}, {transform_indices = @transform_7, window_bounds = array<i64: 2, 16, 32>}]} {
    %c0 = arith.constant 0 : index
    %c0_0 = arith.constant 0 : index
    %c0_1 = arith.constant 0 : index
    %0 = vector.load %arg1[%c0, %c0_0, %c0_1] : memref<2x16x32xf32, #tpu.memory_space<vmem>>, vector<2x16x32xf32>
    %1 = vector.shape_cast %0 : vector<2x16x32xf32> to vector<32x32xf32>
    %c0_2 = arith.constant 0 : index
    %c0_3 = arith.constant 0 : index
    %c0_4 = arith.constant 0 : index
    %2 = vector.load %arg2[%c0_2, %c0_3, %c0_4] : memref<2x4x32xf32, #tpu.memory_space<vmem>>, vector<2x4x32xf32>
    %3 = vector.shape_cast %2 : vector<2x4x32xf32> to vector<8x32xf32>
    %c0_5 = arith.constant 0 : index
    %c0_6 = arith.constant 0 : index
    %4 = vector.load %arg6[%c0_5, %c0_6] : memref<1x3584xf32, #tpu.memory_space<vmem>>, vector<1x32xf32>
    %c0_7 = arith.constant 0 : index
    %c128 = arith.constant 128 : index
    %5 = vector.load %arg6[%c0_7, %c128] : memref<1x3584xf32, #tpu.memory_space<vmem>>, vector<1x32xf32>
    %cst = arith.constant dense<0.000000e+00> : vector<32xf32>
    %6 = vector.multi_reduction <add>, %1, %cst [1] : vector<32x32xf32> to vector<32xf32>
    %7 = vector.shape_cast %6 : vector<32xf32> to vector<32x1xf32>
    %cst_8 = arith.constant 3.200000e+01 : f32
    %8 = vector.broadcast %cst_8 : f32 to vector<32x1xf32>
    %9 = arith.divf %7, %8 : vector<32x1xf32>
    %10 = vector.broadcast %9 : vector<32x1xf32> to vector<32x32xf32>
    %11 = arith.subf %1, %10 : vector<32x32xf32>
    %12 = arith.mulf %11, %11 : vector<32x32xf32>
    %cst_9 = arith.constant dense<0.000000e+00> : vector<32xf32>
    %13 = vector.multi_reduction <add>, %12, %cst_9 [1] : vector<32x32xf32> to vector<32xf32>
    %14 = vector.shape_cast %13 : vector<32xf32> to vector<32x1xf32>
    %cst_10 = arith.constant 3.200000e+01 : f32
    %15 = vector.broadcast %cst_10 : f32 to vector<32x1xf32>
    %16 = arith.divf %14, %15 : vector<32x1xf32>
    %cst_11 = arith.constant 9.99999974E-6 : f32
    %17 = vector.broadcast %cst_11 : f32 to vector<32x1xf32>
    %18 = arith.addf %16, %17 : vector<32x1xf32>
    %19 = math.rsqrt %18 : vector<32x1xf32>
    %20 = vector.broadcast %19 : vector<32x1xf32> to vector<32x32xf32>
    %21 = arith.mulf %11, %20 : vector<32x32xf32>
    %22 = vector.broadcast %4 : vector<1x32xf32> to vector<32x32xf32>
    %23 = arith.mulf %21, %22 : vector<32x32xf32>
    %24 = vector.broadcast %5 : vector<1x32xf32> to vector<32x32xf32>
    %25 = arith.addf %23, %24 : vector<32x32xf32>
    %c0_12 = arith.constant 0 : index
    %c256 = arith.constant 256 : index
    %26 = vector.load %arg6[%c0_12, %c256] : memref<1x3584xf32, #tpu.memory_space<vmem>>, vector<1x32xf32>
    %c0_13 = arith.constant 0 : index
    %c384 = arith.constant 384 : index
    %27 = vector.load %arg6[%c0_13, %c384] : memref<1x3584xf32, #tpu.memory_space<vmem>>, vector<1x32xf32>
    %cst_14 = arith.constant dense<0.000000e+00> : vector<8xf32>
    %28 = vector.multi_reduction <add>, %3, %cst_14 [1] : vector<8x32xf32> to vector<8xf32>
    %29 = vector.shape_cast %28 : vector<8xf32> to vector<8x1xf32>
    %cst_15 = arith.constant 3.200000e+01 : f32
    %30 = vector.broadcast %cst_15 : f32 to vector<8x1xf32>
    %31 = arith.divf %29, %30 : vector<8x1xf32>
    %32 = vector.broadcast %31 : vector<8x1xf32> to vector<8x32xf32>
    %33 = arith.subf %3, %32 : vector<8x32xf32>
    %34 = arith.mulf %33, %33 : vector<8x32xf32>
    %cst_16 = arith.constant dense<0.000000e+00> : vector<8xf32>
    %35 = vector.multi_reduction <add>, %34, %cst_16 [1] : vector<8x32xf32> to vector<8xf32>
    %36 = vector.shape_cast %35 : vector<8xf32> to vector<8x1xf32>
    %cst_17 = arith.constant 3.200000e+01 : f32
    %37 = vector.broadcast %cst_17 : f32 to vector<8x1xf32>
    %38 = arith.divf %36, %37 : vector<8x1xf32>
    %cst_18 = arith.constant 9.99999974E-6 : f32
    %39 = vector.broadcast %cst_18 : f32 to vector<8x1xf32>
    %40 = arith.addf %38, %39 : vector<8x1xf32>
    %41 = math.rsqrt %40 : vector<8x1xf32>
    %42 = vector.broadcast %41 : vector<8x1xf32> to vector<8x32xf32>
    %43 = arith.mulf %33, %42 : vector<8x32xf32>
    %44 = vector.broadcast %26 : vector<1x32xf32> to vector<8x32xf32>
    %45 = arith.mulf %43, %44 : vector<8x32xf32>
    %46 = vector.broadcast %27 : vector<1x32xf32> to vector<8x32xf32>
    %47 = arith.addf %45, %46 : vector<8x32xf32>
    %c0_19 = arith.constant 0 : index
    %c512 = arith.constant 512 : index
    %48 = vector.load %arg6[%c0_19, %c512] : memref<1x3584xf32, #tpu.memory_space<vmem>>, vector<1x32xf32>
    %c0_20 = arith.constant 0 : index
    %c640 = arith.constant 640 : index
    %49 = vector.load %arg6[%c0_20, %c640] : memref<1x3584xf32, #tpu.memory_space<vmem>>, vector<1x32xf32>
    %cst_21 = arith.constant dense<0.000000e+00> : vector<32xf32>
    %50 = vector.multi_reduction <add>, %25, %cst_21 [1] : vector<32x32xf32> to vector<32xf32>
    %51 = vector.shape_cast %50 : vector<32xf32> to vector<32x1xf32>
    %cst_22 = arith.constant 3.200000e+01 : f32
    %52 = vector.broadcast %cst_22 : f32 to vector<32x1xf32>
    %53 = arith.divf %51, %52 : vector<32x1xf32>
    %54 = vector.broadcast %53 : vector<32x1xf32> to vector<32x32xf32>
    %55 = arith.subf %25, %54 : vector<32x32xf32>
    %56 = arith.mulf %55, %55 : vector<32x32xf32>
    %cst_23 = arith.constant dense<0.000000e+00> : vector<32xf32>
    %57 = vector.multi_reduction <add>, %56, %cst_23 [1] : vector<32x32xf32> to vector<32xf32>
    %58 = vector.shape_cast %57 : vector<32xf32> to vector<32x1xf32>
    %cst_24 = arith.constant 3.200000e+01 : f32
    %59 = vector.broadcast %cst_24 : f32 to vector<32x1xf32>
    %60 = arith.divf %58, %59 : vector<32x1xf32>
    %cst_25 = arith.constant 9.99999974E-6 : f32
    %61 = vector.broadcast %cst_25 : f32 to vector<32x1xf32>
    %62 = arith.addf %60, %61 : vector<32x1xf32>
    %63 = math.rsqrt %62 : vector<32x1xf32>
    %64 = vector.broadcast %63 : vector<32x1xf32> to vector<32x32xf32>
    %65 = arith.mulf %55, %64 : vector<32x32xf32>
    %66 = vector.broadcast %48 : vector<1x32xf32> to vector<32x32xf32>
    %67 = arith.mulf %65, %66 : vector<32x32xf32>
    %68 = vector.broadcast %49 : vector<1x32xf32> to vector<32x32xf32>
    %69 = arith.addf %67, %68 : vector<32x32xf32>
    %70 = tpu.concatenate %47, %69 in 0 : vector<8x32xf32>, vector<32x32xf32> -> vector<40x32xf32>
    %c0_26 = arith.constant 0 : index
    %c0_27 = arith.constant 0 : index
    %71 = vector.load %arg3[%c0_26, %c0_27] : memref<32x512xf32, #tpu.memory_space<vmem>>, vector<32x96xf32>
    %cst_28 = arith.constant dense<0.000000e+00> : vector<40x96xf32>
    %72 = tpu.matmul %70, %71, %cst_28 {dimension_numbers = #tpu.dot_dimension_numbers<[1], [0], [0], [1], [0, 0, 1, 1], [], []>} : vector<40x32xf32>, vector<32x96xf32>, vector<40x96xf32> -> vector<40x96xf32>
    %c0_29 = arith.constant 0 : index
    %c768 = arith.constant 768 : index
    %73 = vector.load %arg6[%c0_29, %c768] : memref<1x3584xf32, #tpu.memory_space<vmem>>, vector<1x96xf32>
    %74 = vector.broadcast %73 : vector<1x96xf32> to vector<40x96xf32>
    %75 = arith.addf %72, %74 : vector<40x96xf32>
    %76 = vector.extract_strided_slice %75 {offsets = [0, 0], sizes = [8, 32], strides = [1, 1]} : vector<40x96xf32> to vector<8x32xf32>
    %77 = vector.shape_cast %76 : vector<8x32xf32> to vector<2x4x32xf32>
    %78 = vector.extract_strided_slice %75 {offsets = [8, 32], sizes = [32, 32], strides = [1, 1]} : vector<40x96xf32> to vector<32x32xf32>
    %79 = vector.shape_cast %78 : vector<32x32xf32> to vector<2x16x32xf32>
    %80 = vector.extract_strided_slice %75 {offsets = [8, 64], sizes = [32, 32], strides = [1, 1]} : vector<40x96xf32> to vector<32x32xf32>
    %81 = vector.shape_cast %80 : vector<32x32xf32> to vector<2x16x32xf32>
    "tpu.trace_start"() <{level = 10 : i32, message = "bid,bjd->bij"}> : () -> ()
    %cst_30 = arith.constant dense<0.000000e+00> : vector<2x4x16xf32>
    %82 = tpu.matmul %77, %79, %cst_30 {dimension_numbers = #tpu.dot_dimension_numbers<[2], [2], [1], [1], [0, 0, 0, 1, 1, 1], [0], [0]>} : vector<2x4x32xf32>, vector<2x16x32xf32>, vector<2x4x16xf32> -> vector<2x4x16xf32>
    "tpu.trace_stop"() : () -> ()
    %cst_31 = arith.constant dense<0xFF800000> : vector<2x16xf32>
    %83 = vector.multi_reduction <maximumf>, %82, %cst_31 [1] : vector<2x4x16xf32> to vector<2x16xf32>
    %84 = vector.shape_cast %83 : vector<2x16xf32> to vector<2x1x16xf32>
    %85 = vector.broadcast %84 : vector<2x1x16xf32> to vector<2x4x16xf32>
    %86 = arith.subf %82, %85 : vector<2x4x16xf32>
    %87 = math.exp %86 : vector<2x4x16xf32>
    %cst_32 = arith.constant dense<0.000000e+00> : vector<2x16xf32>
    %88 = vector.multi_reduction <add>, %87, %cst_32 [1] : vector<2x4x16xf32> to vector<2x16xf32>
    %89 = vector.shape_cast %88 : vector<2x16xf32> to vector<2x1x16xf32>
    %90 = tpu.reciprocal %89 {approx = true} : vector<2x1x16xf32> -> vector<2x1x16xf32>
    %91 = vector.broadcast %90 : vector<2x1x16xf32> to vector<2x4x16xf32>
    %92 = arith.mulf %87, %91 : vector<2x4x16xf32>
    %cst_33 = arith.constant 9.99999993E-9 : f32
    %93 = vector.broadcast %cst_33 : f32 to vector<2x4x16xf32>
    %94 = arith.addf %92, %93 : vector<2x4x16xf32>
    %cst_34 = arith.constant dense<0.000000e+00> : vector<2x4xf32>
    %95 = vector.multi_reduction <add>, %94, %cst_34 [2] : vector<2x4x16xf32> to vector<2x4xf32>
    %96 = vector.shape_cast %95 : vector<2x4xf32> to vector<2x4x1xf32>
    %97 = vector.broadcast %96 : vector<2x4x1xf32> to vector<2x4x16xf32>
    %98 = arith.divf %94, %97 : vector<2x4x16xf32>
    "tpu.trace_start"() <{level = 10 : i32, message = "bij,bjd->bid"}> : () -> ()
    %cst_35 = arith.constant dense<0.000000e+00> : vector<2x4x32xf32>
    %99 = tpu.matmul %98, %81, %cst_35 {dimension_numbers = #tpu.dot_dimension_numbers<[2], [1], [1], [2], [0, 0, 0, 1, 1, 2], [0], [0]>} : vector<2x4x16xf32>, vector<2x16x32xf32>, vector<2x4x32xf32> -> vector<2x4x32xf32>
    "tpu.trace_stop"() : () -> ()
    %100 = vector.shape_cast %99 : vector<2x4x32xf32> to vector<8x32xf32>
    %101 = tpu.concatenate %100, %3 in 1 : vector<8x32xf32>, vector<8x32xf32> -> vector<8x64xf32>
    %c0_36 = arith.constant 0 : index
    %c0_37 = arith.constant 0 : index
    %102 = vector.load %arg5[%c0_36, %c0_37] : memref<64x1024xf32, #tpu.memory_space<vmem>>, vector<64x192xf32>
    %cst_38 = arith.constant dense<0.000000e+00> : vector<8x192xf32>
    %103 = tpu.matmul %101, %102, %cst_38 {dimension_numbers = #tpu.dot_dimension_numbers<[1], [0], [0], [1], [0, 0, 1, 1], [], []>} : vector<8x64xf32>, vector<64x192xf32>, vector<8x192xf32> -> vector<8x192xf32>
    %104 = vector.extract_strided_slice %103 {offsets = [0, 0], sizes = [8, 96], strides = [1, 1]} : vector<8x192xf32> to vector<8x96xf32>
    %c0_39 = arith.constant 0 : index
    %c896 = arith.constant 896 : index
    %105 = vector.load %arg6[%c0_39, %c896] : memref<1x3584xf32, #tpu.memory_space<vmem>>, vector<1x96xf32>
    %106 = vector.broadcast %105 : vector<1x96xf32> to vector<8x96xf32>
    %107 = arith.addf %104, %106 : vector<8x96xf32>
    %108 = vector.extract_strided_slice %103 {offsets = [0, 96], sizes = [8, 96], strides = [1, 1]} : vector<8x192xf32> to vector<8x96xf32>
    %c0_40 = arith.constant 0 : index
    %c1024 = arith.constant 1024 : index
    %109 = vector.load %arg6[%c0_40, %c1024] : memref<1x3584xf32, #tpu.memory_space<vmem>>, vector<1x96xf32>
    %110 = vector.broadcast %109 : vector<1x96xf32> to vector<8x96xf32>
    %111 = arith.addf %108, %110 : vector<8x96xf32>
    %112 = vector.extract_strided_slice %107 {offsets = [0, 0], sizes = [8, 64], strides = [1, 1]} : vector<8x96xf32> to vector<8x64xf32>
    %113 = vector.extract_strided_slice %111 {offsets = [0, 0], sizes = [8, 64], strides = [1, 1]} : vector<8x96xf32> to vector<8x64xf32>
    %114 = arith.addf %112, %113 : vector<8x64xf32>
    %115 = arith.negf %114 : vector<8x64xf32>
    %116 = math.exp %115 : vector<8x64xf32>
    %cst_41 = arith.constant 1.000000e+00 : f32
    %117 = vector.broadcast %cst_41 : f32 to vector<8x64xf32>
    %118 = arith.addf %117, %116 : vector<8x64xf32>
    %119 = arith.divf %117, %118 : vector<8x64xf32>
    %120 = vector.extract_strided_slice %119 {offsets = [0, 0], sizes = [8, 32], strides = [1, 1]} : vector<8x64xf32> to vector<8x32xf32>
    %121 = vector.extract_strided_slice %119 {offsets = [0, 32], sizes = [8, 32], strides = [1, 1]} : vector<8x64xf32> to vector<8x32xf32>
    %122 = vector.extract_strided_slice %107 {offsets = [0, 64], sizes = [8, 32], strides = [1, 1]} : vector<8x96xf32> to vector<8x32xf32>
    %123 = vector.extract_strided_slice %111 {offsets = [0, 64], sizes = [8, 32], strides = [1, 1]} : vector<8x96xf32> to vector<8x32xf32>
    %124 = arith.mulf %120, %123 : vector<8x32xf32>
    %125 = arith.addf %122, %124 : vector<8x32xf32>
    %126 = math.tanh %125 : vector<8x32xf32>
    %cst_42 = arith.constant 1.000000e+00 : f32
    %127 = vector.broadcast %cst_42 : f32 to vector<8x32xf32>
    %128 = arith.subf %127, %121 : vector<8x32xf32>
    %129 = arith.mulf %128, %126 : vector<8x32xf32>
    %130 = arith.mulf %121, %3 : vector<8x32xf32>
    %131 = arith.addf %129, %130 : vector<8x32xf32>
    %c0_43 = arith.constant 0 : index
    %c1152 = arith.constant 1152 : index
    %132 = vector.load %arg6[%c0_43, %c1152] : memref<1x3584xf32, #tpu.memory_space<vmem>>, vector<1x32xf32>
    %c0_44 = arith.constant 0 : index
    %c1280 = arith.constant 1280 : index
    %133 = vector.load %arg6[%c0_44, %c1280] : memref<1x3584xf32, #tpu.memory_space<vmem>>, vector<1x32xf32>
    %cst_45 = arith.constant dense<0.000000e+00> : vector<8xf32>
    %134 = vector.multi_reduction <add>, %131, %cst_45 [1] : vector<8x32xf32> to vector<8xf32>
    %135 = vector.shape_cast %134 : vector<8xf32> to vector<8x1xf32>
    %cst_46 = arith.constant 3.200000e+01 : f32
    %136 = vector.broadcast %cst_46 : f32 to vector<8x1xf32>
    %137 = arith.divf %135, %136 : vector<8x1xf32>
    %138 = vector.broadcast %137 : vector<8x1xf32> to vector<8x32xf32>
    %139 = arith.subf %131, %138 : vector<8x32xf32>
    %140 = arith.mulf %139, %139 : vector<8x32xf32>
    %cst_47 = arith.constant dense<0.000000e+00> : vector<8xf32>
    %141 = vector.multi_reduction <add>, %140, %cst_47 [1] : vector<8x32xf32> to vector<8xf32>
    %142 = vector.shape_cast %141 : vector<8xf32> to vector<8x1xf32>
    %cst_48 = arith.constant 3.200000e+01 : f32
    %143 = vector.broadcast %cst_48 : f32 to vector<8x1xf32>
    %144 = arith.divf %142, %143 : vector<8x1xf32>
    %cst_49 = arith.constant 9.99999974E-6 : f32
    %145 = vector.broadcast %cst_49 : f32 to vector<8x1xf32>
    %146 = arith.addf %144, %145 : vector<8x1xf32>
    %147 = math.rsqrt %146 : vector<8x1xf32>
    %148 = vector.broadcast %147 : vector<8x1xf32> to vector<8x32xf32>
    %149 = arith.mulf %139, %148 : vector<8x32xf32>
    %150 = vector.broadcast %132 : vector<1x32xf32> to vector<8x32xf32>
    %151 = arith.mulf %149, %150 : vector<8x32xf32>
    %152 = vector.broadcast %133 : vector<1x32xf32> to vector<8x32xf32>
    %153 = arith.addf %151, %152 : vector<8x32xf32>
    %c0_50 = arith.constant 0 : index
    %c128_51 = arith.constant 128 : index
    %154 = vector.load %arg3[%c0_50, %c128_51] : memref<32x512xf32, #tpu.memory_space<vmem>>, vector<32x64xf32>
    %cst_52 = arith.constant dense<0.000000e+00> : vector<8x64xf32>
    %155 = tpu.matmul %153, %154, %cst_52 {dimension_numbers = #tpu.dot_dimension_numbers<[1], [0], [0], [1], [0, 0, 1, 1], [], []>} : vector<8x32xf32>, vector<32x64xf32>, vector<8x64xf32> -> vector<8x64xf32>
    %c0_53 = arith.constant 0 : index
    %c1408 = arith.constant 1408 : index
    %156 = vector.load %arg6[%c0_53, %c1408] : memref<1x3584xf32, #tpu.memory_space<vmem>>, vector<1x64xf32>
    %157 = vector.broadcast %156 : vector<1x64xf32> to vector<8x64xf32>
    %158 = arith.addf %155, %157 : vector<8x64xf32>
    %cst_54 = arith.constant 0.000000e+00 : f32
    %159 = vector.broadcast %cst_54 : f32 to vector<8x64xf32>
    %160 = arith.maximumf %158, %159 : vector<8x64xf32>
    %c0_55 = arith.constant 0 : index
    %c0_56 = arith.constant 0 : index
    %161 = vector.load %arg4[%c0_55, %c0_56] : memref<64x256xf32, #tpu.memory_space<vmem>>, vector<64x32xf32>
    %cst_57 = arith.constant dense<0.000000e+00> : vector<8x32xf32>
    %162 = tpu.matmul %160, %161, %cst_57 {dimension_numbers = #tpu.dot_dimension_numbers<[1], [0], [0], [1], [0, 0, 1, 1], [], []>} : vector<8x64xf32>, vector<64x32xf32>, vector<8x32xf32> -> vector<8x32xf32>
    %c0_58 = arith.constant 0 : index
    %c1536 = arith.constant 1536 : index
    %163 = vector.load %arg6[%c0_58, %c1536] : memref<1x3584xf32, #tpu.memory_space<vmem>>, vector<1x32xf32>
    %164 = vector.broadcast %163 : vector<1x32xf32> to vector<8x32xf32>
    %165 = arith.addf %162, %164 : vector<8x32xf32>
    %166 = tpu.concatenate %165, %131 in 1 : vector<8x32xf32>, vector<8x32xf32> -> vector<8x64xf32>
    %c0_59 = arith.constant 0 : index
    %c256_60 = arith.constant 256 : index
    %167 = vector.load %arg5[%c0_59, %c256_60] : memref<64x1024xf32, #tpu.memory_space<vmem>>, vector<64x192xf32>
    %cst_61 = arith.constant dense<0.000000e+00> : vector<8x192xf32>
    %168 = tpu.matmul %166, %167, %cst_61 {dimension_numbers = #tpu.dot_dimension_numbers<[1], [0], [0], [1], [0, 0, 1, 1], [], []>} : vector<8x64xf32>, vector<64x192xf32>, vector<8x192xf32> -> vector<8x192xf32>
    %169 = vector.extract_strided_slice %168 {offsets = [0, 0], sizes = [8, 96], strides = [1, 1]} : vector<8x192xf32> to vector<8x96xf32>
    %c0_62 = arith.constant 0 : index
    %c1664 = arith.constant 1664 : index
    %170 = vector.load %arg6[%c0_62, %c1664] : memref<1x3584xf32, #tpu.memory_space<vmem>>, vector<1x96xf32>
    %171 = vector.broadcast %170 : vector<1x96xf32> to vector<8x96xf32>
    %172 = arith.addf %169, %171 : vector<8x96xf32>
    %173 = vector.extract_strided_slice %168 {offsets = [0, 96], sizes = [8, 96], strides = [1, 1]} : vector<8x192xf32> to vector<8x96xf32>
    %c0_63 = arith.constant 0 : index
    %c1792 = arith.constant 1792 : index
    %174 = vector.load %arg6[%c0_63, %c1792] : memref<1x3584xf32, #tpu.memory_space<vmem>>, vector<1x96xf32>
    %175 = vector.broadcast %174 : vector<1x96xf32> to vector<8x96xf32>
    %176 = arith.addf %173, %175 : vector<8x96xf32>
    %177 = vector.extract_strided_slice %172 {offsets = [0, 0], sizes = [8, 64], strides = [1, 1]} : vector<8x96xf32> to vector<8x64xf32>
    %178 = vector.extract_strided_slice %176 {offsets = [0, 0], sizes = [8, 64], strides = [1, 1]} : vector<8x96xf32> to vector<8x64xf32>
    %179 = arith.addf %177, %178 : vector<8x64xf32>
    %180 = arith.negf %179 : vector<8x64xf32>
    %181 = math.exp %180 : vector<8x64xf32>
    %cst_64 = arith.constant 1.000000e+00 : f32
    %182 = vector.broadcast %cst_64 : f32 to vector<8x64xf32>
    %183 = arith.addf %182, %181 : vector<8x64xf32>
    %184 = arith.divf %182, %183 : vector<8x64xf32>
    %185 = vector.extract_strided_slice %184 {offsets = [0, 0], sizes = [8, 32], strides = [1, 1]} : vector<8x64xf32> to vector<8x32xf32>
    %186 = vector.extract_strided_slice %184 {offsets = [0, 32], sizes = [8, 32], strides = [1, 1]} : vector<8x64xf32> to vector<8x32xf32>
    %187 = vector.extract_strided_slice %172 {offsets = [0, 64], sizes = [8, 32], strides = [1, 1]} : vector<8x96xf32> to vector<8x32xf32>
    %188 = vector.extract_strided_slice %176 {offsets = [0, 64], sizes = [8, 32], strides = [1, 1]} : vector<8x96xf32> to vector<8x32xf32>
    %189 = arith.mulf %185, %188 : vector<8x32xf32>
    %190 = arith.addf %187, %189 : vector<8x32xf32>
    %191 = math.tanh %190 : vector<8x32xf32>
    %cst_65 = arith.constant 1.000000e+00 : f32
    %192 = vector.broadcast %cst_65 : f32 to vector<8x32xf32>
    %193 = arith.subf %192, %186 : vector<8x32xf32>
    %194 = arith.mulf %193, %191 : vector<8x32xf32>
    %195 = arith.mulf %186, %131 : vector<8x32xf32>
    %196 = arith.addf %194, %195 : vector<8x32xf32>
    %c0_66 = arith.constant 0 : index
    %c1920 = arith.constant 1920 : index
    %197 = vector.load %arg6[%c0_66, %c1920] : memref<1x3584xf32, #tpu.memory_space<vmem>>, vector<1x32xf32>
    %c0_67 = arith.constant 0 : index
    %c2048 = arith.constant 2048 : index
    %198 = vector.load %arg6[%c0_67, %c2048] : memref<1x3584xf32, #tpu.memory_space<vmem>>, vector<1x32xf32>
    %cst_68 = arith.constant dense<0.000000e+00> : vector<32xf32>
    %199 = vector.multi_reduction <add>, %25, %cst_68 [1] : vector<32x32xf32> to vector<32xf32>
    %200 = vector.shape_cast %199 : vector<32xf32> to vector<32x1xf32>
    %cst_69 = arith.constant 3.200000e+01 : f32
    %201 = vector.broadcast %cst_69 : f32 to vector<32x1xf32>
    %202 = arith.divf %200, %201 : vector<32x1xf32>
    %203 = vector.broadcast %202 : vector<32x1xf32> to vector<32x32xf32>
    %204 = arith.subf %25, %203 : vector<32x32xf32>
    %205 = arith.mulf %204, %204 : vector<32x32xf32>
    %cst_70 = arith.constant dense<0.000000e+00> : vector<32xf32>
    %206 = vector.multi_reduction <add>, %205, %cst_70 [1] : vector<32x32xf32> to vector<32xf32>
    %207 = vector.shape_cast %206 : vector<32xf32> to vector<32x1xf32>
    %cst_71 = arith.constant 3.200000e+01 : f32
    %208 = vector.broadcast %cst_71 : f32 to vector<32x1xf32>
    %209 = arith.divf %207, %208 : vector<32x1xf32>
    %cst_72 = arith.constant 9.99999974E-6 : f32
    %210 = vector.broadcast %cst_72 : f32 to vector<32x1xf32>
    %211 = arith.addf %209, %210 : vector<32x1xf32>
    %212 = math.rsqrt %211 : vector<32x1xf32>
    %213 = vector.broadcast %212 : vector<32x1xf32> to vector<32x32xf32>
    %214 = arith.mulf %204, %213 : vector<32x32xf32>
    %215 = vector.broadcast %197 : vector<1x32xf32> to vector<32x32xf32>
    %216 = arith.mulf %214, %215 : vector<32x32xf32>
    %217 = vector.broadcast %198 : vector<1x32xf32> to vector<32x32xf32>
    %218 = arith.addf %216, %217 : vector<32x32xf32>
    %c0_73 = arith.constant 0 : index
    %c2176 = arith.constant 2176 : index
    %219 = vector.load %arg6[%c0_73, %c2176] : memref<1x3584xf32, #tpu.memory_space<vmem>>, vector<1x32xf32>
    %c0_74 = arith.constant 0 : index
    %c2304 = arith.constant 2304 : index
    %220 = vector.load %arg6[%c0_74, %c2304] : memref<1x3584xf32, #tpu.memory_space<vmem>>, vector<1x32xf32>
    %cst_75 = arith.constant dense<0.000000e+00> : vector<8xf32>
    %221 = vector.multi_reduction <add>, %196, %cst_75 [1] : vector<8x32xf32> to vector<8xf32>
    %222 = vector.shape_cast %221 : vector<8xf32> to vector<8x1xf32>
    %cst_76 = arith.constant 3.200000e+01 : f32
    %223 = vector.broadcast %cst_76 : f32 to vector<8x1xf32>
    %224 = arith.divf %222, %223 : vector<8x1xf32>
    %225 = vector.broadcast %224 : vector<8x1xf32> to vector<8x32xf32>
    %226 = arith.subf %196, %225 : vector<8x32xf32>
    %227 = arith.mulf %226, %226 : vector<8x32xf32>
    %cst_77 = arith.constant dense<0.000000e+00> : vector<8xf32>
    %228 = vector.multi_reduction <add>, %227, %cst_77 [1] : vector<8x32xf32> to vector<8xf32>
    %229 = vector.shape_cast %228 : vector<8xf32> to vector<8x1xf32>
    %cst_78 = arith.constant 3.200000e+01 : f32
    %230 = vector.broadcast %cst_78 : f32 to vector<8x1xf32>
    %231 = arith.divf %229, %230 : vector<8x1xf32>
    %cst_79 = arith.constant 9.99999974E-6 : f32
    %232 = vector.broadcast %cst_79 : f32 to vector<8x1xf32>
    %233 = arith.addf %231, %232 : vector<8x1xf32>
    %234 = math.rsqrt %233 : vector<8x1xf32>
    %235 = vector.broadcast %234 : vector<8x1xf32> to vector<8x32xf32>
    %236 = arith.mulf %226, %235 : vector<8x32xf32>
    %237 = vector.broadcast %219 : vector<1x32xf32> to vector<8x32xf32>
    %238 = arith.mulf %236, %237 : vector<8x32xf32>
    %239 = vector.broadcast %220 : vector<1x32xf32> to vector<8x32xf32>
    %240 = arith.addf %238, %239 : vector<8x32xf32>
    %241 = tpu.concatenate %218, %240 in 0 : vector<32x32xf32>, vector<8x32xf32> -> vector<40x32xf32>
    %c0_80 = arith.constant 0 : index
    %c256_81 = arith.constant 256 : index
    %242 = vector.load %arg3[%c0_80, %c256_81] : memref<32x512xf32, #tpu.memory_space<vmem>>, vector<32x96xf32>
    %cst_82 = arith.constant dense<0.000000e+00> : vector<40x96xf32>
    %243 = tpu.matmul %241, %242, %cst_82 {dimension_numbers = #tpu.dot_dimension_numbers<[1], [0], [0], [1], [0, 0, 1, 1], [], []>} : vector<40x32xf32>, vector<32x96xf32>, vector<40x96xf32> -> vector<40x96xf32>
    %c0_83 = arith.constant 0 : index
    %c2432 = arith.constant 2432 : index
    %244 = vector.load %arg6[%c0_83, %c2432] : memref<1x3584xf32, #tpu.memory_space<vmem>>, vector<1x96xf32>
    %245 = vector.broadcast %244 : vector<1x96xf32> to vector<40x96xf32>
    %246 = arith.addf %243, %245 : vector<40x96xf32>
    %247 = vector.extract_strided_slice %246 {offsets = [0, 0], sizes = [32, 32], strides = [1, 1]} : vector<40x96xf32> to vector<32x32xf32>
    %248 = vector.shape_cast %247 : vector<32x32xf32> to vector<2x16x32xf32>
    %249 = vector.extract_strided_slice %246 {offsets = [32, 32], sizes = [8, 32], strides = [1, 1]} : vector<40x96xf32> to vector<8x32xf32>
    %250 = vector.shape_cast %249 : vector<8x32xf32> to vector<2x4x32xf32>
    %251 = vector.extract_strided_slice %246 {offsets = [32, 64], sizes = [8, 32], strides = [1, 1]} : vector<40x96xf32> to vector<8x32xf32>
    %252 = vector.shape_cast %251 : vector<8x32xf32> to vector<2x4x32xf32>
    "tpu.trace_start"() <{level = 10 : i32, message = "bid,bjd->bij"}> : () -> ()
    %cst_84 = arith.constant dense<0.000000e+00> : vector<2x16x4xf32>
    %253 = tpu.matmul %248, %250, %cst_84 {dimension_numbers = #tpu.dot_dimension_numbers<[2], [2], [1], [1], [0, 0, 0, 1, 1, 1], [0], [0]>} : vector<2x16x32xf32>, vector<2x4x32xf32>, vector<2x16x4xf32> -> vector<2x16x4xf32>
    "tpu.trace_stop"() : () -> ()
    %cst_85 = arith.constant dense<0xFF800000> : vector<2x16xf32>
    %254 = vector.multi_reduction <maximumf>, %253, %cst_85 [2] : vector<2x16x4xf32> to vector<2x16xf32>
    %255 = vector.shape_cast %254 : vector<2x16xf32> to vector<2x16x1xf32>
    %256 = vector.broadcast %255 : vector<2x16x1xf32> to vector<2x16x4xf32>
    %257 = arith.subf %253, %256 : vector<2x16x4xf32>
    %258 = math.exp %257 : vector<2x16x4xf32>
    %cst_86 = arith.constant dense<0.000000e+00> : vector<2x16xf32>
    %259 = vector.multi_reduction <add>, %258, %cst_86 [2] : vector<2x16x4xf32> to vector<2x16xf32>
    %260 = vector.shape_cast %259 : vector<2x16xf32> to vector<2x16x1xf32>
    %261 = tpu.reciprocal %260 {approx = true} : vector<2x16x1xf32> -> vector<2x16x1xf32>
    %262 = vector.broadcast %261 : vector<2x16x1xf32> to vector<2x16x4xf32>
    %263 = arith.mulf %258, %262 : vector<2x16x4xf32>
    %cst_87 = arith.constant 9.99999993E-9 : f32
    %264 = vector.broadcast %cst_87 : f32 to vector<2x16x4xf32>
    %265 = arith.addf %263, %264 : vector<2x16x4xf32>
    %cst_88 = arith.constant dense<0.000000e+00> : vector<2x4xf32>
    %266 = vector.multi_reduction <add>, %265, %cst_88 [1] : vector<2x16x4xf32> to vector<2x4xf32>
    %267 = vector.shape_cast %266 : vector<2x4xf32> to vector<2x1x4xf32>
    %268 = vector.broadcast %267 : vector<2x1x4xf32> to vector<2x16x4xf32>
    %269 = arith.divf %265, %268 : vector<2x16x4xf32>
    "tpu.trace_start"() <{level = 10 : i32, message = "bij,bjd->bid"}> : () -> ()
    %cst_89 = arith.constant dense<0.000000e+00> : vector<2x16x32xf32>
    %270 = tpu.matmul %269, %252, %cst_89 {dimension_numbers = #tpu.dot_dimension_numbers<[2], [1], [1], [2], [0, 0, 0, 1, 1, 2], [0], [0]>} : vector<2x16x4xf32>, vector<2x4x32xf32>, vector<2x16x32xf32> -> vector<2x16x32xf32>
    "tpu.trace_stop"() : () -> ()
    %271 = vector.shape_cast %270 : vector<2x16x32xf32> to vector<32x32xf32>
    %272 = tpu.concatenate %271, %25 in 1 : vector<32x32xf32>, vector<32x32xf32> -> vector<32x64xf32>
    %c0_90 = arith.constant 0 : index
    %c512_91 = arith.constant 512 : index
    %273 = vector.load %arg5[%c0_90, %c512_91] : memref<64x1024xf32, #tpu.memory_space<vmem>>, vector<64x192xf32>
    %cst_92 = arith.constant dense<0.000000e+00> : vector<32x192xf32>
    %274 = tpu.matmul %272, %273, %cst_92 {dimension_numbers = #tpu.dot_dimension_numbers<[1], [0], [0], [1], [0, 0, 1, 1], [], []>} : vector<32x64xf32>, vector<64x192xf32>, vector<32x192xf32> -> vector<32x192xf32>
    %275 = vector.extract_strided_slice %274 {offsets = [0, 0], sizes = [32, 96], strides = [1, 1]} : vector<32x192xf32> to vector<32x96xf32>
    %c0_93 = arith.constant 0 : index
    %c2560 = arith.constant 2560 : index
    %276 = vector.load %arg6[%c0_93, %c2560] : memref<1x3584xf32, #tpu.memory_space<vmem>>, vector<1x96xf32>
    %277 = vector.broadcast %276 : vector<1x96xf32> to vector<32x96xf32>
    %278 = arith.addf %275, %277 : vector<32x96xf32>
    %279 = vector.extract_strided_slice %274 {offsets = [0, 96], sizes = [32, 96], strides = [1, 1]} : vector<32x192xf32> to vector<32x96xf32>
    %c0_94 = arith.constant 0 : index
    %c2688 = arith.constant 2688 : index
    %280 = vector.load %arg6[%c0_94, %c2688] : memref<1x3584xf32, #tpu.memory_space<vmem>>, vector<1x96xf32>
    %281 = vector.broadcast %280 : vector<1x96xf32> to vector<32x96xf32>
    %282 = arith.addf %279, %281 : vector<32x96xf32>
    %283 = vector.extract_strided_slice %278 {offsets = [0, 0], sizes = [32, 64], strides = [1, 1]} : vector<32x96xf32> to vector<32x64xf32>
    %284 = vector.extract_strided_slice %282 {offsets = [0, 0], sizes = [32, 64], strides = [1, 1]} : vector<32x96xf32> to vector<32x64xf32>
    %285 = arith.addf %283, %284 : vector<32x64xf32>
    %286 = arith.negf %285 : vector<32x64xf32>
    %287 = math.exp %286 : vector<32x64xf32>
    %cst_95 = arith.constant 1.000000e+00 : f32
    %288 = vector.broadcast %cst_95 : f32 to vector<32x64xf32>
    %289 = arith.addf %288, %287 : vector<32x64xf32>
    %290 = arith.divf %288, %289 : vector<32x64xf32>
    %291 = vector.extract_strided_slice %290 {offsets = [0, 0], sizes = [32, 32], strides = [1, 1]} : vector<32x64xf32> to vector<32x32xf32>
    %292 = vector.extract_strided_slice %290 {offsets = [0, 32], sizes = [32, 32], strides = [1, 1]} : vector<32x64xf32> to vector<32x32xf32>
    %293 = vector.extract_strided_slice %278 {offsets = [0, 64], sizes = [32, 32], strides = [1, 1]} : vector<32x96xf32> to vector<32x32xf32>
    %294 = vector.extract_strided_slice %282 {offsets = [0, 64], sizes = [32, 32], strides = [1, 1]} : vector<32x96xf32> to vector<32x32xf32>
    %295 = arith.mulf %291, %294 : vector<32x32xf32>
    %296 = arith.addf %293, %295 : vector<32x32xf32>
    %297 = math.tanh %296 : vector<32x32xf32>
    %cst_96 = arith.constant 1.000000e+00 : f32
    %298 = vector.broadcast %cst_96 : f32 to vector<32x32xf32>
    %299 = arith.subf %298, %292 : vector<32x32xf32>
    %300 = arith.mulf %299, %297 : vector<32x32xf32>
    %301 = arith.mulf %292, %25 : vector<32x32xf32>
    %302 = arith.addf %300, %301 : vector<32x32xf32>
    %c0_97 = arith.constant 0 : index
    %c2816 = arith.constant 2816 : index
    %303 = vector.load %arg6[%c0_97, %c2816] : memref<1x3584xf32, #tpu.memory_space<vmem>>, vector<1x32xf32>
    %c0_98 = arith.constant 0 : index
    %c2944 = arith.constant 2944 : index
    %304 = vector.load %arg6[%c0_98, %c2944] : memref<1x3584xf32, #tpu.memory_space<vmem>>, vector<1x32xf32>
    %cst_99 = arith.constant dense<0.000000e+00> : vector<32xf32>
    %305 = vector.multi_reduction <add>, %302, %cst_99 [1] : vector<32x32xf32> to vector<32xf32>
    %306 = vector.shape_cast %305 : vector<32xf32> to vector<32x1xf32>
    %cst_100 = arith.constant 3.200000e+01 : f32
    %307 = vector.broadcast %cst_100 : f32 to vector<32x1xf32>
    %308 = arith.divf %306, %307 : vector<32x1xf32>
    %309 = vector.broadcast %308 : vector<32x1xf32> to vector<32x32xf32>
    %310 = arith.subf %302, %309 : vector<32x32xf32>
    %311 = arith.mulf %310, %310 : vector<32x32xf32>
    %cst_101 = arith.constant dense<0.000000e+00> : vector<32xf32>
    %312 = vector.multi_reduction <add>, %311, %cst_101 [1] : vector<32x32xf32> to vector<32xf32>
    %313 = vector.shape_cast %312 : vector<32xf32> to vector<32x1xf32>
    %cst_102 = arith.constant 3.200000e+01 : f32
    %314 = vector.broadcast %cst_102 : f32 to vector<32x1xf32>
    %315 = arith.divf %313, %314 : vector<32x1xf32>
    %cst_103 = arith.constant 9.99999974E-6 : f32
    %316 = vector.broadcast %cst_103 : f32 to vector<32x1xf32>
    %317 = arith.addf %315, %316 : vector<32x1xf32>
    %318 = math.rsqrt %317 : vector<32x1xf32>
    %319 = vector.broadcast %318 : vector<32x1xf32> to vector<32x32xf32>
    %320 = arith.mulf %310, %319 : vector<32x32xf32>
    %321 = vector.broadcast %303 : vector<1x32xf32> to vector<32x32xf32>
    %322 = arith.mulf %320, %321 : vector<32x32xf32>
    %323 = vector.broadcast %304 : vector<1x32xf32> to vector<32x32xf32>
    %324 = arith.addf %322, %323 : vector<32x32xf32>
    %c0_104 = arith.constant 0 : index
    %c384_105 = arith.constant 384 : index
    %325 = vector.load %arg3[%c0_104, %c384_105] : memref<32x512xf32, #tpu.memory_space<vmem>>, vector<32x64xf32>
    %cst_106 = arith.constant dense<0.000000e+00> : vector<32x64xf32>
    %326 = tpu.matmul %324, %325, %cst_106 {dimension_numbers = #tpu.dot_dimension_numbers<[1], [0], [0], [1], [0, 0, 1, 1], [], []>} : vector<32x32xf32>, vector<32x64xf32>, vector<32x64xf32> -> vector<32x64xf32>
    %c0_107 = arith.constant 0 : index
    %c3072 = arith.constant 3072 : index
    %327 = vector.load %arg6[%c0_107, %c3072] : memref<1x3584xf32, #tpu.memory_space<vmem>>, vector<1x64xf32>
    %328 = vector.broadcast %327 : vector<1x64xf32> to vector<32x64xf32>
    %329 = arith.addf %326, %328 : vector<32x64xf32>
    %cst_108 = arith.constant 0.000000e+00 : f32
    %330 = vector.broadcast %cst_108 : f32 to vector<32x64xf32>
    %331 = arith.maximumf %329, %330 : vector<32x64xf32>
    %c0_109 = arith.constant 0 : index
    %c128_110 = arith.constant 128 : index
    %332 = vector.load %arg4[%c0_109, %c128_110] : memref<64x256xf32, #tpu.memory_space<vmem>>, vector<64x32xf32>
    %cst_111 = arith.constant dense<0.000000e+00> : vector<32x32xf32>
    %333 = tpu.matmul %331, %332, %cst_111 {dimension_numbers = #tpu.dot_dimension_numbers<[1], [0], [0], [1], [0, 0, 1, 1], [], []>} : vector<32x64xf32>, vector<64x32xf32>, vector<32x32xf32> -> vector<32x32xf32>
    %c0_112 = arith.constant 0 : index
    %c3200 = arith.constant 3200 : index
    %334 = vector.load %arg6[%c0_112, %c3200] : memref<1x3584xf32, #tpu.memory_space<vmem>>, vector<1x32xf32>
    %335 = vector.broadcast %334 : vector<1x32xf32> to vector<32x32xf32>
    %336 = arith.addf %333, %335 : vector<32x32xf32>
    %337 = tpu.concatenate %336, %302 in 1 : vector<32x32xf32>, vector<32x32xf32> -> vector<32x64xf32>
    %c0_113 = arith.constant 0 : index
    %c768_114 = arith.constant 768 : index
    %338 = vector.load %arg5[%c0_113, %c768_114] : memref<64x1024xf32, #tpu.memory_space<vmem>>, vector<64x192xf32>
    %cst_115 = arith.constant dense<0.000000e+00> : vector<32x192xf32>
    %339 = tpu.matmul %337, %338, %cst_115 {dimension_numbers = #tpu.dot_dimension_numbers<[1], [0], [0], [1], [0, 0, 1, 1], [], []>} : vector<32x64xf32>, vector<64x192xf32>, vector<32x192xf32> -> vector<32x192xf32>
    %340 = vector.extract_strided_slice %339 {offsets = [0, 0], sizes = [32, 96], strides = [1, 1]} : vector<32x192xf32> to vector<32x96xf32>
    %c0_116 = arith.constant 0 : index
    %c3328 = arith.constant 3328 : index
    %341 = vector.load %arg6[%c0_116, %c3328] : memref<1x3584xf32, #tpu.memory_space<vmem>>, vector<1x96xf32>
    %342 = vector.broadcast %341 : vector<1x96xf32> to vector<32x96xf32>
    %343 = arith.addf %340, %342 : vector<32x96xf32>
    %344 = vector.extract_strided_slice %339 {offsets = [0, 96], sizes = [32, 96], strides = [1, 1]} : vector<32x192xf32> to vector<32x96xf32>
    %c0_117 = arith.constant 0 : index
    %c3456 = arith.constant 3456 : index
    %345 = vector.load %arg6[%c0_117, %c3456] : memref<1x3584xf32, #tpu.memory_space<vmem>>, vector<1x96xf32>
    %346 = vector.broadcast %345 : vector<1x96xf32> to vector<32x96xf32>
    %347 = arith.addf %344, %346 : vector<32x96xf32>
    %348 = vector.extract_strided_slice %343 {offsets = [0, 0], sizes = [32, 64], strides = [1, 1]} : vector<32x96xf32> to vector<32x64xf32>
    %349 = vector.extract_strided_slice %347 {offsets = [0, 0], sizes = [32, 64], strides = [1, 1]} : vector<32x96xf32> to vector<32x64xf32>
    %350 = arith.addf %348, %349 : vector<32x64xf32>
    %351 = arith.negf %350 : vector<32x64xf32>
    %352 = math.exp %351 : vector<32x64xf32>
    %cst_118 = arith.constant 1.000000e+00 : f32
    %353 = vector.broadcast %cst_118 : f32 to vector<32x64xf32>
    %354 = arith.addf %353, %352 : vector<32x64xf32>
    %355 = arith.divf %353, %354 : vector<32x64xf32>
    %356 = vector.extract_strided_slice %355 {offsets = [0, 0], sizes = [32, 32], strides = [1, 1]} : vector<32x64xf32> to vector<32x32xf32>
    %357 = vector.extract_strided_slice %355 {offsets = [0, 32], sizes = [32, 32], strides = [1, 1]} : vector<32x64xf32> to vector<32x32xf32>
    %358 = vector.extract_strided_slice %343 {offsets = [0, 64], sizes = [32, 32], strides = [1, 1]} : vector<32x96xf32> to vector<32x32xf32>
    %359 = vector.extract_strided_slice %347 {offsets = [0, 64], sizes = [32, 32], strides = [1, 1]} : vector<32x96xf32> to vector<32x32xf32>
    %360 = arith.mulf %356, %359 : vector<32x32xf32>
    %361 = arith.addf %358, %360 : vector<32x32xf32>
    %362 = math.tanh %361 : vector<32x32xf32>
    %cst_119 = arith.constant 1.000000e+00 : f32
    %363 = vector.broadcast %cst_119 : f32 to vector<32x32xf32>
    %364 = arith.subf %363, %357 : vector<32x32xf32>
    %365 = arith.mulf %364, %362 : vector<32x32xf32>
    %366 = arith.mulf %357, %302 : vector<32x32xf32>
    %367 = arith.addf %365, %366 : vector<32x32xf32>
    %c0_120 = arith.constant 0 : index
    %c256_121 = arith.constant 256 : index
    %368 = vector.load %arg6[%c0_120, %c256_121] : memref<1x3584xf32, #tpu.memory_space<vmem>>, vector<1x32xf32>
    %c0_122 = arith.constant 0 : index
    %c384_123 = arith.constant 384 : index
    %369 = vector.load %arg6[%c0_122, %c384_123] : memref<1x3584xf32, #tpu.memory_space<vmem>>, vector<1x32xf32>
    %cst_124 = arith.constant dense<0.000000e+00> : vector<8xf32>
    %370 = vector.multi_reduction <add>, %196, %cst_124 [1] : vector<8x32xf32> to vector<8xf32>
    %371 = vector.shape_cast %370 : vector<8xf32> to vector<8x1xf32>
    %cst_125 = arith.constant 3.200000e+01 : f32
    %372 = vector.broadcast %cst_125 : f32 to vector<8x1xf32>
    %373 = arith.divf %371, %372 : vector<8x1xf32>
    %374 = vector.broadcast %373 : vector<8x1xf32> to vector<8x32xf32>
    %375 = arith.subf %196, %374 : vector<8x32xf32>
    %376 = arith.mulf %375, %375 : vector<8x32xf32>
    %cst_126 = arith.constant dense<0.000000e+00> : vector<8xf32>
    %377 = vector.multi_reduction <add>, %376, %cst_126 [1] : vector<8x32xf32> to vector<8xf32>
    %378 = vector.shape_cast %377 : vector<8xf32> to vector<8x1xf32>
    %cst_127 = arith.constant 3.200000e+01 : f32
    %379 = vector.broadcast %cst_127 : f32 to vector<8x1xf32>
    %380 = arith.divf %378, %379 : vector<8x1xf32>
    %cst_128 = arith.constant 9.99999974E-6 : f32
    %381 = vector.broadcast %cst_128 : f32 to vector<8x1xf32>
    %382 = arith.addf %380, %381 : vector<8x1xf32>
    %383 = math.rsqrt %382 : vector<8x1xf32>
    %384 = vector.broadcast %383 : vector<8x1xf32> to vector<8x32xf32>
    %385 = arith.mulf %375, %384 : vector<8x32xf32>
    %386 = vector.broadcast %368 : vector<1x32xf32> to vector<8x32xf32>
    %387 = arith.mulf %385, %386 : vector<8x32xf32>
    %388 = vector.broadcast %369 : vector<1x32xf32> to vector<8x32xf32>
    %389 = arith.addf %387, %388 : vector<8x32xf32>
    %c0_129 = arith.constant 0 : index
    %c512_130 = arith.constant 512 : index
    %390 = vector.load %arg6[%c0_129, %c512_130] : memref<1x3584xf32, #tpu.memory_space<vmem>>, vector<1x32xf32>
    %c0_131 = arith.constant 0 : index
    %c640_132 = arith.constant 640 : index
    %391 = vector.load %arg6[%c0_131, %c640_132] : memref<1x3584xf32, #tpu.memory_space<vmem>>, vector<1x32xf32>
    %cst_133 = arith.constant dense<0.000000e+00> : vector<32xf32>
    %392 = vector.multi_reduction <add>, %367, %cst_133 [1] : vector<32x32xf32> to vector<32xf32>
    %393 = vector.shape_cast %392 : vector<32xf32> to vector<32x1xf32>
    %cst_134 = arith.constant 3.200000e+01 : f32
    %394 = vector.broadcast %cst_134 : f32 to vector<32x1xf32>
    %395 = arith.divf %393, %394 : vector<32x1xf32>
    %396 = vector.broadcast %395 : vector<32x1xf32> to vector<32x32xf32>
    %397 = arith.subf %367, %396 : vector<32x32xf32>
    %398 = arith.mulf %397, %397 : vector<32x32xf32>
    %cst_135 = arith.constant dense<0.000000e+00> : vector<32xf32>
    %399 = vector.multi_reduction <add>, %398, %cst_135 [1] : vector<32x32xf32> to vector<32xf32>
    %400 = vector.shape_cast %399 : vector<32xf32> to vector<32x1xf32>
    %cst_136 = arith.constant 3.200000e+01 : f32
    %401 = vector.broadcast %cst_136 : f32 to vector<32x1xf32>
    %402 = arith.divf %400, %401 : vector<32x1xf32>
    %cst_137 = arith.constant 9.99999974E-6 : f32
    %403 = vector.broadcast %cst_137 : f32 to vector<32x1xf32>
    %404 = arith.addf %402, %403 : vector<32x1xf32>
    %405 = math.rsqrt %404 : vector<32x1xf32>
    %406 = vector.broadcast %405 : vector<32x1xf32> to vector<32x32xf32>
    %407 = arith.mulf %397, %406 : vector<32x32xf32>
    %408 = vector.broadcast %390 : vector<1x32xf32> to vector<32x32xf32>
    %409 = arith.mulf %407, %408 : vector<32x32xf32>
    %410 = vector.broadcast %391 : vector<1x32xf32> to vector<32x32xf32>
    %411 = arith.addf %409, %410 : vector<32x32xf32>
    %412 = tpu.concatenate %389, %411 in 0 : vector<8x32xf32>, vector<32x32xf32> -> vector<40x32xf32>
    %c0_138 = arith.constant 0 : index
    %c0_139 = arith.constant 0 : index
    %413 = vector.load %arg3[%c0_138, %c0_139] : memref<32x512xf32, #tpu.memory_space<vmem>>, vector<32x96xf32>
    %cst_140 = arith.constant dense<0.000000e+00> : vector<40x96xf32>
    %414 = tpu.matmul %412, %413, %cst_140 {dimension_numbers = #tpu.dot_dimension_numbers<[1], [0], [0], [1], [0, 0, 1, 1], [], []>} : vector<40x32xf32>, vector<32x96xf32>, vector<40x96xf32> -> vector<40x96xf32>
    %c0_141 = arith.constant 0 : index
    %c768_142 = arith.constant 768 : index
    %415 = vector.load %arg6[%c0_141, %c768_142] : memref<1x3584xf32, #tpu.memory_space<vmem>>, vector<1x96xf32>
    %416 = vector.broadcast %415 : vector<1x96xf32> to vector<40x96xf32>
    %417 = arith.addf %414, %416 : vector<40x96xf32>
    %418 = vector.extract_strided_slice %417 {offsets = [0, 0], sizes = [8, 32], strides = [1, 1]} : vector<40x96xf32> to vector<8x32xf32>
    %419 = vector.shape_cast %418 : vector<8x32xf32> to vector<2x4x32xf32>
    %420 = vector.extract_strided_slice %417 {offsets = [8, 32], sizes = [32, 32], strides = [1, 1]} : vector<40x96xf32> to vector<32x32xf32>
    %421 = vector.shape_cast %420 : vector<32x32xf32> to vector<2x16x32xf32>
    %422 = vector.extract_strided_slice %417 {offsets = [8, 64], sizes = [32, 32], strides = [1, 1]} : vector<40x96xf32> to vector<32x32xf32>
    %423 = vector.shape_cast %422 : vector<32x32xf32> to vector<2x16x32xf32>
    "tpu.trace_start"() <{level = 10 : i32, message = "bid,bjd->bij"}> : () -> ()
    %cst_143 = arith.constant dense<0.000000e+00> : vector<2x4x16xf32>
    %424 = tpu.matmul %419, %421, %cst_143 {dimension_numbers = #tpu.dot_dimension_numbers<[2], [2], [1], [1], [0, 0, 0, 1, 1, 1], [0], [0]>} : vector<2x4x32xf32>, vector<2x16x32xf32>, vector<2x4x16xf32> -> vector<2x4x16xf32>
    "tpu.trace_stop"() : () -> ()
    %cst_144 = arith.constant dense<0xFF800000> : vector<2x16xf32>
    %425 = vector.multi_reduction <maximumf>, %424, %cst_144 [1] : vector<2x4x16xf32> to vector<2x16xf32>
    %426 = vector.shape_cast %425 : vector<2x16xf32> to vector<2x1x16xf32>
    %427 = vector.broadcast %426 : vector<2x1x16xf32> to vector<2x4x16xf32>
    %428 = arith.subf %424, %427 : vector<2x4x16xf32>
    %429 = math.exp %428 : vector<2x4x16xf32>
    %cst_145 = arith.constant dense<0.000000e+00> : vector<2x16xf32>
    %430 = vector.multi_reduction <add>, %429, %cst_145 [1] : vector<2x4x16xf32> to vector<2x16xf32>
    %431 = vector.shape_cast %430 : vector<2x16xf32> to vector<2x1x16xf32>
    %432 = tpu.reciprocal %431 {approx = true} : vector<2x1x16xf32> -> vector<2x1x16xf32>
    %433 = vector.broadcast %432 : vector<2x1x16xf32> to vector<2x4x16xf32>
    %434 = arith.mulf %429, %433 : vector<2x4x16xf32>
    %cst_146 = arith.constant 9.99999993E-9 : f32
    %435 = vector.broadcast %cst_146 : f32 to vector<2x4x16xf32>
    %436 = arith.addf %434, %435 : vector<2x4x16xf32>
    %cst_147 = arith.constant dense<0.000000e+00> : vector<2x4xf32>
    %437 = vector.multi_reduction <add>, %436, %cst_147 [2] : vector<2x4x16xf32> to vector<2x4xf32>
    %438 = vector.shape_cast %437 : vector<2x4xf32> to vector<2x4x1xf32>
    %439 = vector.broadcast %438 : vector<2x4x1xf32> to vector<2x4x16xf32>
    %440 = arith.divf %436, %439 : vector<2x4x16xf32>
    "tpu.trace_start"() <{level = 10 : i32, message = "bij,bjd->bid"}> : () -> ()
    %cst_148 = arith.constant dense<0.000000e+00> : vector<2x4x32xf32>
    %441 = tpu.matmul %440, %423, %cst_148 {dimension_numbers = #tpu.dot_dimension_numbers<[2], [1], [1], [2], [0, 0, 0, 1, 1, 2], [0], [0]>} : vector<2x4x16xf32>, vector<2x16x32xf32>, vector<2x4x32xf32> -> vector<2x4x32xf32>
    "tpu.trace_stop"() : () -> ()
    %442 = vector.shape_cast %441 : vector<2x4x32xf32> to vector<8x32xf32>
    %443 = tpu.concatenate %442, %196 in 1 : vector<8x32xf32>, vector<8x32xf32> -> vector<8x64xf32>
    %c0_149 = arith.constant 0 : index
    %c0_150 = arith.constant 0 : index
    %444 = vector.load %arg5[%c0_149, %c0_150] : memref<64x1024xf32, #tpu.memory_space<vmem>>, vector<64x192xf32>
    %cst_151 = arith.constant dense<0.000000e+00> : vector<8x192xf32>
    %445 = tpu.matmul %443, %444, %cst_151 {dimension_numbers = #tpu.dot_dimension_numbers<[1], [0], [0], [1], [0, 0, 1, 1], [], []>} : vector<8x64xf32>, vector<64x192xf32>, vector<8x192xf32> -> vector<8x192xf32>
    %446 = vector.extract_strided_slice %445 {offsets = [0, 0], sizes = [8, 96], strides = [1, 1]} : vector<8x192xf32> to vector<8x96xf32>
    %c0_152 = arith.constant 0 : index
    %c896_153 = arith.constant 896 : index
    %447 = vector.load %arg6[%c0_152, %c896_153] : memref<1x3584xf32, #tpu.memory_space<vmem>>, vector<1x96xf32>
    %448 = vector.broadcast %447 : vector<1x96xf32> to vector<8x96xf32>
    %449 = arith.addf %446, %448 : vector<8x96xf32>
    %450 = vector.extract_strided_slice %445 {offsets = [0, 96], sizes = [8, 96], strides = [1, 1]} : vector<8x192xf32> to vector<8x96xf32>
    %c0_154 = arith.constant 0 : index
    %c1024_155 = arith.constant 1024 : index
    %451 = vector.load %arg6[%c0_154, %c1024_155] : memref<1x3584xf32, #tpu.memory_space<vmem>>, vector<1x96xf32>
    %452 = vector.broadcast %451 : vector<1x96xf32> to vector<8x96xf32>
    %453 = arith.addf %450, %452 : vector<8x96xf32>
    %454 = vector.extract_strided_slice %449 {offsets = [0, 0], sizes = [8, 64], strides = [1, 1]} : vector<8x96xf32> to vector<8x64xf32>
    %455 = vector.extract_strided_slice %453 {offsets = [0, 0], sizes = [8, 64], strides = [1, 1]} : vector<8x96xf32> to vector<8x64xf32>
    %456 = arith.addf %454, %455 : vector<8x64xf32>
    %457 = arith.negf %456 : vector<8x64xf32>
    %458 = math.exp %457 : vector<8x64xf32>
    %cst_156 = arith.constant 1.000000e+00 : f32
    %459 = vector.broadcast %cst_156 : f32 to vector<8x64xf32>
    %460 = arith.addf %459, %458 : vector<8x64xf32>
    %461 = arith.divf %459, %460 : vector<8x64xf32>
    %462 = vector.extract_strided_slice %461 {offsets = [0, 0], sizes = [8, 32], strides = [1, 1]} : vector<8x64xf32> to vector<8x32xf32>
    %463 = vector.extract_strided_slice %461 {offsets = [0, 32], sizes = [8, 32], strides = [1, 1]} : vector<8x64xf32> to vector<8x32xf32>
    %464 = vector.extract_strided_slice %449 {offsets = [0, 64], sizes = [8, 32], strides = [1, 1]} : vector<8x96xf32> to vector<8x32xf32>
    %465 = vector.extract_strided_slice %453 {offsets = [0, 64], sizes = [8, 32], strides = [1, 1]} : vector<8x96xf32> to vector<8x32xf32>
    %466 = arith.mulf %462, %465 : vector<8x32xf32>
    %467 = arith.addf %464, %466 : vector<8x32xf32>
    %468 = math.tanh %467 : vector<8x32xf32>
    %cst_157 = arith.constant 1.000000e+00 : f32
    %469 = vector.broadcast %cst_157 : f32 to vector<8x32xf32>
    %470 = arith.subf %469, %463 : vector<8x32xf32>
    %471 = arith.mulf %470, %468 : vector<8x32xf32>
    %472 = arith.mulf %463, %196 : vector<8x32xf32>
    %473 = arith.addf %471, %472 : vector<8x32xf32>
    %c0_158 = arith.constant 0 : index
    %c1152_159 = arith.constant 1152 : index
    %474 = vector.load %arg6[%c0_158, %c1152_159] : memref<1x3584xf32, #tpu.memory_space<vmem>>, vector<1x32xf32>
    %c0_160 = arith.constant 0 : index
    %c1280_161 = arith.constant 1280 : index
    %475 = vector.load %arg6[%c0_160, %c1280_161] : memref<1x3584xf32, #tpu.memory_space<vmem>>, vector<1x32xf32>
    %cst_162 = arith.constant dense<0.000000e+00> : vector<8xf32>
    %476 = vector.multi_reduction <add>, %473, %cst_162 [1] : vector<8x32xf32> to vector<8xf32>
    %477 = vector.shape_cast %476 : vector<8xf32> to vector<8x1xf32>
    %cst_163 = arith.constant 3.200000e+01 : f32
    %478 = vector.broadcast %cst_163 : f32 to vector<8x1xf32>
    %479 = arith.divf %477, %478 : vector<8x1xf32>
    %480 = vector.broadcast %479 : vector<8x1xf32> to vector<8x32xf32>
    %481 = arith.subf %473, %480 : vector<8x32xf32>
    %482 = arith.mulf %481, %481 : vector<8x32xf32>
    %cst_164 = arith.constant dense<0.000000e+00> : vector<8xf32>
    %483 = vector.multi_reduction <add>, %482, %cst_164 [1] : vector<8x32xf32> to vector<8xf32>
    %484 = vector.shape_cast %483 : vector<8xf32> to vector<8x1xf32>
    %cst_165 = arith.constant 3.200000e+01 : f32
    %485 = vector.broadcast %cst_165 : f32 to vector<8x1xf32>
    %486 = arith.divf %484, %485 : vector<8x1xf32>
    %cst_166 = arith.constant 9.99999974E-6 : f32
    %487 = vector.broadcast %cst_166 : f32 to vector<8x1xf32>
    %488 = arith.addf %486, %487 : vector<8x1xf32>
    %489 = math.rsqrt %488 : vector<8x1xf32>
    %490 = vector.broadcast %489 : vector<8x1xf32> to vector<8x32xf32>
    %491 = arith.mulf %481, %490 : vector<8x32xf32>
    %492 = vector.broadcast %474 : vector<1x32xf32> to vector<8x32xf32>
    %493 = arith.mulf %491, %492 : vector<8x32xf32>
    %494 = vector.broadcast %475 : vector<1x32xf32> to vector<8x32xf32>
    %495 = arith.addf %493, %494 : vector<8x32xf32>
    %c0_167 = arith.constant 0 : index
    %c128_168 = arith.constant 128 : index
    %496 = vector.load %arg3[%c0_167, %c128_168] : memref<32x512xf32, #tpu.memory_space<vmem>>, vector<32x64xf32>
    %cst_169 = arith.constant dense<0.000000e+00> : vector<8x64xf32>
    %497 = tpu.matmul %495, %496, %cst_169 {dimension_numbers = #tpu.dot_dimension_numbers<[1], [0], [0], [1], [0, 0, 1, 1], [], []>} : vector<8x32xf32>, vector<32x64xf32>, vector<8x64xf32> -> vector<8x64xf32>
    %c0_170 = arith.constant 0 : index
    %c1408_171 = arith.constant 1408 : index
    %498 = vector.load %arg6[%c0_170, %c1408_171] : memref<1x3584xf32, #tpu.memory_space<vmem>>, vector<1x64xf32>
    %499 = vector.broadcast %498 : vector<1x64xf32> to vector<8x64xf32>
    %500 = arith.addf %497, %499 : vector<8x64xf32>
    %cst_172 = arith.constant 0.000000e+00 : f32
    %501 = vector.broadcast %cst_172 : f32 to vector<8x64xf32>
    %502 = arith.maximumf %500, %501 : vector<8x64xf32>
    %c0_173 = arith.constant 0 : index
    %c0_174 = arith.constant 0 : index
    %503 = vector.load %arg4[%c0_173, %c0_174] : memref<64x256xf32, #tpu.memory_space<vmem>>, vector<64x32xf32>
    %cst_175 = arith.constant dense<0.000000e+00> : vector<8x32xf32>
    %504 = tpu.matmul %502, %503, %cst_175 {dimension_numbers = #tpu.dot_dimension_numbers<[1], [0], [0], [1], [0, 0, 1, 1], [], []>} : vector<8x64xf32>, vector<64x32xf32>, vector<8x32xf32> -> vector<8x32xf32>
    %c0_176 = arith.constant 0 : index
    %c1536_177 = arith.constant 1536 : index
    %505 = vector.load %arg6[%c0_176, %c1536_177] : memref<1x3584xf32, #tpu.memory_space<vmem>>, vector<1x32xf32>
    %506 = vector.broadcast %505 : vector<1x32xf32> to vector<8x32xf32>
    %507 = arith.addf %504, %506 : vector<8x32xf32>
    %508 = tpu.concatenate %507, %473 in 1 : vector<8x32xf32>, vector<8x32xf32> -> vector<8x64xf32>
    %c0_178 = arith.constant 0 : index
    %c256_179 = arith.constant 256 : index
    %509 = vector.load %arg5[%c0_178, %c256_179] : memref<64x1024xf32, #tpu.memory_space<vmem>>, vector<64x192xf32>
    %cst_180 = arith.constant dense<0.000000e+00> : vector<8x192xf32>
    %510 = tpu.matmul %508, %509, %cst_180 {dimension_numbers = #tpu.dot_dimension_numbers<[1], [0], [0], [1], [0, 0, 1, 1], [], []>} : vector<8x64xf32>, vector<64x192xf32>, vector<8x192xf32> -> vector<8x192xf32>
    %511 = vector.extract_strided_slice %510 {offsets = [0, 0], sizes = [8, 96], strides = [1, 1]} : vector<8x192xf32> to vector<8x96xf32>
    %c0_181 = arith.constant 0 : index
    %c1664_182 = arith.constant 1664 : index
    %512 = vector.load %arg6[%c0_181, %c1664_182] : memref<1x3584xf32, #tpu.memory_space<vmem>>, vector<1x96xf32>
    %513 = vector.broadcast %512 : vector<1x96xf32> to vector<8x96xf32>
    %514 = arith.addf %511, %513 : vector<8x96xf32>
    %515 = vector.extract_strided_slice %510 {offsets = [0, 96], sizes = [8, 96], strides = [1, 1]} : vector<8x192xf32> to vector<8x96xf32>
    %c0_183 = arith.constant 0 : index
    %c1792_184 = arith.constant 1792 : index
    %516 = vector.load %arg6[%c0_183, %c1792_184] : memref<1x3584xf32, #tpu.memory_space<vmem>>, vector<1x96xf32>
    %517 = vector.broadcast %516 : vector<1x96xf32> to vector<8x96xf32>
    %518 = arith.addf %515, %517 : vector<8x96xf32>
    %519 = vector.extract_strided_slice %514 {offsets = [0, 0], sizes = [8, 64], strides = [1, 1]} : vector<8x96xf32> to vector<8x64xf32>
    %520 = vector.extract_strided_slice %518 {offsets = [0, 0], sizes = [8, 64], strides = [1, 1]} : vector<8x96xf32> to vector<8x64xf32>
    %521 = arith.addf %519, %520 : vector<8x64xf32>
    %522 = arith.negf %521 : vector<8x64xf32>
    %523 = math.exp %522 : vector<8x64xf32>
    %cst_185 = arith.constant 1.000000e+00 : f32
    %524 = vector.broadcast %cst_185 : f32 to vector<8x64xf32>
    %525 = arith.addf %524, %523 : vector<8x64xf32>
    %526 = arith.divf %524, %525 : vector<8x64xf32>
    %527 = vector.extract_strided_slice %526 {offsets = [0, 0], sizes = [8, 32], strides = [1, 1]} : vector<8x64xf32> to vector<8x32xf32>
    %528 = vector.extract_strided_slice %526 {offsets = [0, 32], sizes = [8, 32], strides = [1, 1]} : vector<8x64xf32> to vector<8x32xf32>
    %529 = vector.extract_strided_slice %514 {offsets = [0, 64], sizes = [8, 32], strides = [1, 1]} : vector<8x96xf32> to vector<8x32xf32>
    %530 = vector.extract_strided_slice %518 {offsets = [0, 64], sizes = [8, 32], strides = [1, 1]} : vector<8x96xf32> to vector<8x32xf32>
    %531 = arith.mulf %527, %530 : vector<8x32xf32>
    %532 = arith.addf %529, %531 : vector<8x32xf32>
    %533 = math.tanh %532 : vector<8x32xf32>
    %cst_186 = arith.constant 1.000000e+00 : f32
    %534 = vector.broadcast %cst_186 : f32 to vector<8x32xf32>
    %535 = arith.subf %534, %528 : vector<8x32xf32>
    %536 = arith.mulf %535, %533 : vector<8x32xf32>
    %537 = arith.mulf %528, %473 : vector<8x32xf32>
    %538 = arith.addf %536, %537 : vector<8x32xf32>
    %c0_187 = arith.constant 0 : index
    %c1920_188 = arith.constant 1920 : index
    %539 = vector.load %arg6[%c0_187, %c1920_188] : memref<1x3584xf32, #tpu.memory_space<vmem>>, vector<1x32xf32>
    %c0_189 = arith.constant 0 : index
    %c2048_190 = arith.constant 2048 : index
    %540 = vector.load %arg6[%c0_189, %c2048_190] : memref<1x3584xf32, #tpu.memory_space<vmem>>, vector<1x32xf32>
    %cst_191 = arith.constant dense<0.000000e+00> : vector<32xf32>
    %541 = vector.multi_reduction <add>, %367, %cst_191 [1] : vector<32x32xf32> to vector<32xf32>
    %542 = vector.shape_cast %541 : vector<32xf32> to vector<32x1xf32>
    %cst_192 = arith.constant 3.200000e+01 : f32
    %543 = vector.broadcast %cst_192 : f32 to vector<32x1xf32>
    %544 = arith.divf %542, %543 : vector<32x1xf32>
    %545 = vector.broadcast %544 : vector<32x1xf32> to vector<32x32xf32>
    %546 = arith.subf %367, %545 : vector<32x32xf32>
    %547 = arith.mulf %546, %546 : vector<32x32xf32>
    %cst_193 = arith.constant dense<0.000000e+00> : vector<32xf32>
    %548 = vector.multi_reduction <add>, %547, %cst_193 [1] : vector<32x32xf32> to vector<32xf32>
    %549 = vector.shape_cast %548 : vector<32xf32> to vector<32x1xf32>
    %cst_194 = arith.constant 3.200000e+01 : f32
    %550 = vector.broadcast %cst_194 : f32 to vector<32x1xf32>
    %551 = arith.divf %549, %550 : vector<32x1xf32>
    %cst_195 = arith.constant 9.99999974E-6 : f32
    %552 = vector.broadcast %cst_195 : f32 to vector<32x1xf32>
    %553 = arith.addf %551, %552 : vector<32x1xf32>
    %554 = math.rsqrt %553 : vector<32x1xf32>
    %555 = vector.broadcast %554 : vector<32x1xf32> to vector<32x32xf32>
    %556 = arith.mulf %546, %555 : vector<32x32xf32>
    %557 = vector.broadcast %539 : vector<1x32xf32> to vector<32x32xf32>
    %558 = arith.mulf %556, %557 : vector<32x32xf32>
    %559 = vector.broadcast %540 : vector<1x32xf32> to vector<32x32xf32>
    %560 = arith.addf %558, %559 : vector<32x32xf32>
    %c0_196 = arith.constant 0 : index
    %c2176_197 = arith.constant 2176 : index
    %561 = vector.load %arg6[%c0_196, %c2176_197] : memref<1x3584xf32, #tpu.memory_space<vmem>>, vector<1x32xf32>
    %c0_198 = arith.constant 0 : index
    %c2304_199 = arith.constant 2304 : index
    %562 = vector.load %arg6[%c0_198, %c2304_199] : memref<1x3584xf32, #tpu.memory_space<vmem>>, vector<1x32xf32>
    %cst_200 = arith.constant dense<0.000000e+00> : vector<8xf32>
    %563 = vector.multi_reduction <add>, %538, %cst_200 [1] : vector<8x32xf32> to vector<8xf32>
    %564 = vector.shape_cast %563 : vector<8xf32> to vector<8x1xf32>
    %cst_201 = arith.constant 3.200000e+01 : f32
    %565 = vector.broadcast %cst_201 : f32 to vector<8x1xf32>
    %566 = arith.divf %564, %565 : vector<8x1xf32>
    %567 = vector.broadcast %566 : vector<8x1xf32> to vector<8x32xf32>
    %568 = arith.subf %538, %567 : vector<8x32xf32>
    %569 = arith.mulf %568, %568 : vector<8x32xf32>
    %cst_202 = arith.constant dense<0.000000e+00> : vector<8xf32>
    %570 = vector.multi_reduction <add>, %569, %cst_202 [1] : vector<8x32xf32> to vector<8xf32>
    %571 = vector.shape_cast %570 : vector<8xf32> to vector<8x1xf32>
    %cst_203 = arith.constant 3.200000e+01 : f32
    %572 = vector.broadcast %cst_203 : f32 to vector<8x1xf32>
    %573 = arith.divf %571, %572 : vector<8x1xf32>
    %cst_204 = arith.constant 9.99999974E-6 : f32
    %574 = vector.broadcast %cst_204 : f32 to vector<8x1xf32>
    %575 = arith.addf %573, %574 : vector<8x1xf32>
    %576 = math.rsqrt %575 : vector<8x1xf32>
    %577 = vector.broadcast %576 : vector<8x1xf32> to vector<8x32xf32>
    %578 = arith.mulf %568, %577 : vector<8x32xf32>
    %579 = vector.broadcast %561 : vector<1x32xf32> to vector<8x32xf32>
    %580 = arith.mulf %578, %579 : vector<8x32xf32>
    %581 = vector.broadcast %562 : vector<1x32xf32> to vector<8x32xf32>
    %582 = arith.addf %580, %581 : vector<8x32xf32>
    %583 = tpu.concatenate %560, %582 in 0 : vector<32x32xf32>, vector<8x32xf32> -> vector<40x32xf32>
    %c0_205 = arith.constant 0 : index
    %c256_206 = arith.constant 256 : index
    %584 = vector.load %arg3[%c0_205, %c256_206] : memref<32x512xf32, #tpu.memory_space<vmem>>, vector<32x96xf32>
    %cst_207 = arith.constant dense<0.000000e+00> : vector<40x96xf32>
    %585 = tpu.matmul %583, %584, %cst_207 {dimension_numbers = #tpu.dot_dimension_numbers<[1], [0], [0], [1], [0, 0, 1, 1], [], []>} : vector<40x32xf32>, vector<32x96xf32>, vector<40x96xf32> -> vector<40x96xf32>
    %c0_208 = arith.constant 0 : index
    %c2432_209 = arith.constant 2432 : index
    %586 = vector.load %arg6[%c0_208, %c2432_209] : memref<1x3584xf32, #tpu.memory_space<vmem>>, vector<1x96xf32>
    %587 = vector.broadcast %586 : vector<1x96xf32> to vector<40x96xf32>
    %588 = arith.addf %585, %587 : vector<40x96xf32>
    %589 = vector.extract_strided_slice %588 {offsets = [0, 0], sizes = [32, 32], strides = [1, 1]} : vector<40x96xf32> to vector<32x32xf32>
    %590 = vector.shape_cast %589 : vector<32x32xf32> to vector<2x16x32xf32>
    %591 = vector.extract_strided_slice %588 {offsets = [32, 32], sizes = [8, 32], strides = [1, 1]} : vector<40x96xf32> to vector<8x32xf32>
    %592 = vector.shape_cast %591 : vector<8x32xf32> to vector<2x4x32xf32>
    %593 = vector.extract_strided_slice %588 {offsets = [32, 64], sizes = [8, 32], strides = [1, 1]} : vector<40x96xf32> to vector<8x32xf32>
    %594 = vector.shape_cast %593 : vector<8x32xf32> to vector<2x4x32xf32>
    "tpu.trace_start"() <{level = 10 : i32, message = "bid,bjd->bij"}> : () -> ()
    %cst_210 = arith.constant dense<0.000000e+00> : vector<2x16x4xf32>
    %595 = tpu.matmul %590, %592, %cst_210 {dimension_numbers = #tpu.dot_dimension_numbers<[2], [2], [1], [1], [0, 0, 0, 1, 1, 1], [0], [0]>} : vector<2x16x32xf32>, vector<2x4x32xf32>, vector<2x16x4xf32> -> vector<2x16x4xf32>
    "tpu.trace_stop"() : () -> ()
    %cst_211 = arith.constant dense<0xFF800000> : vector<2x16xf32>
    %596 = vector.multi_reduction <maximumf>, %595, %cst_211 [2] : vector<2x16x4xf32> to vector<2x16xf32>
    %597 = vector.shape_cast %596 : vector<2x16xf32> to vector<2x16x1xf32>
    %598 = vector.broadcast %597 : vector<2x16x1xf32> to vector<2x16x4xf32>
    %599 = arith.subf %595, %598 : vector<2x16x4xf32>
    %600 = math.exp %599 : vector<2x16x4xf32>
    %cst_212 = arith.constant dense<0.000000e+00> : vector<2x16xf32>
    %601 = vector.multi_reduction <add>, %600, %cst_212 [2] : vector<2x16x4xf32> to vector<2x16xf32>
    %602 = vector.shape_cast %601 : vector<2x16xf32> to vector<2x16x1xf32>
    %603 = tpu.reciprocal %602 {approx = true} : vector<2x16x1xf32> -> vector<2x16x1xf32>
    %604 = vector.broadcast %603 : vector<2x16x1xf32> to vector<2x16x4xf32>
    %605 = arith.mulf %600, %604 : vector<2x16x4xf32>
    %cst_213 = arith.constant 9.99999993E-9 : f32
    %606 = vector.broadcast %cst_213 : f32 to vector<2x16x4xf32>
    %607 = arith.addf %605, %606 : vector<2x16x4xf32>
    %cst_214 = arith.constant dense<0.000000e+00> : vector<2x4xf32>
    %608 = vector.multi_reduction <add>, %607, %cst_214 [1] : vector<2x16x4xf32> to vector<2x4xf32>
    %609 = vector.shape_cast %608 : vector<2x4xf32> to vector<2x1x4xf32>
    %610 = vector.broadcast %609 : vector<2x1x4xf32> to vector<2x16x4xf32>
    %611 = arith.divf %607, %610 : vector<2x16x4xf32>
    "tpu.trace_start"() <{level = 10 : i32, message = "bij,bjd->bid"}> : () -> ()
    %cst_215 = arith.constant dense<0.000000e+00> : vector<2x16x32xf32>
    %612 = tpu.matmul %611, %594, %cst_215 {dimension_numbers = #tpu.dot_dimension_numbers<[2], [1], [1], [2], [0, 0, 0, 1, 1, 2], [0], [0]>} : vector<2x16x4xf32>, vector<2x4x32xf32>, vector<2x16x32xf32> -> vector<2x16x32xf32>
    "tpu.trace_stop"() : () -> ()
    %613 = vector.shape_cast %612 : vector<2x16x32xf32> to vector<32x32xf32>
    %614 = tpu.concatenate %613, %367 in 1 : vector<32x32xf32>, vector<32x32xf32> -> vector<32x64xf32>
    %c0_216 = arith.constant 0 : index
    %c512_217 = arith.constant 512 : index
    %615 = vector.load %arg5[%c0_216, %c512_217] : memref<64x1024xf32, #tpu.memory_space<vmem>>, vector<64x192xf32>
    %cst_218 = arith.constant dense<0.000000e+00> : vector<32x192xf32>
    %616 = tpu.matmul %614, %615, %cst_218 {dimension_numbers = #tpu.dot_dimension_numbers<[1], [0], [0], [1], [0, 0, 1, 1], [], []>} : vector<32x64xf32>, vector<64x192xf32>, vector<32x192xf32> -> vector<32x192xf32>
    %617 = vector.extract_strided_slice %616 {offsets = [0, 0], sizes = [32, 96], strides = [1, 1]} : vector<32x192xf32> to vector<32x96xf32>
    %c0_219 = arith.constant 0 : index
    %c2560_220 = arith.constant 2560 : index
    %618 = vector.load %arg6[%c0_219, %c2560_220] : memref<1x3584xf32, #tpu.memory_space<vmem>>, vector<1x96xf32>
    %619 = vector.broadcast %618 : vector<1x96xf32> to vector<32x96xf32>
    %620 = arith.addf %617, %619 : vector<32x96xf32>
    %621 = vector.extract_strided_slice %616 {offsets = [0, 96], sizes = [32, 96], strides = [1, 1]} : vector<32x192xf32> to vector<32x96xf32>
    %c0_221 = arith.constant 0 : index
    %c2688_222 = arith.constant 2688 : index
    %622 = vector.load %arg6[%c0_221, %c2688_222] : memref<1x3584xf32, #tpu.memory_space<vmem>>, vector<1x96xf32>
    %623 = vector.broadcast %622 : vector<1x96xf32> to vector<32x96xf32>
    %624 = arith.addf %621, %623 : vector<32x96xf32>
    %625 = vector.extract_strided_slice %620 {offsets = [0, 0], sizes = [32, 64], strides = [1, 1]} : vector<32x96xf32> to vector<32x64xf32>
    %626 = vector.extract_strided_slice %624 {offsets = [0, 0], sizes = [32, 64], strides = [1, 1]} : vector<32x96xf32> to vector<32x64xf32>
    %627 = arith.addf %625, %626 : vector<32x64xf32>
    %628 = arith.negf %627 : vector<32x64xf32>
    %629 = math.exp %628 : vector<32x64xf32>
    %cst_223 = arith.constant 1.000000e+00 : f32
    %630 = vector.broadcast %cst_223 : f32 to vector<32x64xf32>
    %631 = arith.addf %630, %629 : vector<32x64xf32>
    %632 = arith.divf %630, %631 : vector<32x64xf32>
    %633 = vector.extract_strided_slice %632 {offsets = [0, 0], sizes = [32, 32], strides = [1, 1]} : vector<32x64xf32> to vector<32x32xf32>
    %634 = vector.extract_strided_slice %632 {offsets = [0, 32], sizes = [32, 32], strides = [1, 1]} : vector<32x64xf32> to vector<32x32xf32>
    %635 = vector.extract_strided_slice %620 {offsets = [0, 64], sizes = [32, 32], strides = [1, 1]} : vector<32x96xf32> to vector<32x32xf32>
    %636 = vector.extract_strided_slice %624 {offsets = [0, 64], sizes = [32, 32], strides = [1, 1]} : vector<32x96xf32> to vector<32x32xf32>
    %637 = arith.mulf %633, %636 : vector<32x32xf32>
    %638 = arith.addf %635, %637 : vector<32x32xf32>
    %639 = math.tanh %638 : vector<32x32xf32>
    %cst_224 = arith.constant 1.000000e+00 : f32
    %640 = vector.broadcast %cst_224 : f32 to vector<32x32xf32>
    %641 = arith.subf %640, %634 : vector<32x32xf32>
    %642 = arith.mulf %641, %639 : vector<32x32xf32>
    %643 = arith.mulf %634, %367 : vector<32x32xf32>
    %644 = arith.addf %642, %643 : vector<32x32xf32>
    %c0_225 = arith.constant 0 : index
    %c2816_226 = arith.constant 2816 : index
    %645 = vector.load %arg6[%c0_225, %c2816_226] : memref<1x3584xf32, #tpu.memory_space<vmem>>, vector<1x32xf32>
    %c0_227 = arith.constant 0 : index
    %c2944_228 = arith.constant 2944 : index
    %646 = vector.load %arg6[%c0_227, %c2944_228] : memref<1x3584xf32, #tpu.memory_space<vmem>>, vector<1x32xf32>
    %cst_229 = arith.constant dense<0.000000e+00> : vector<32xf32>
    %647 = vector.multi_reduction <add>, %644, %cst_229 [1] : vector<32x32xf32> to vector<32xf32>
    %648 = vector.shape_cast %647 : vector<32xf32> to vector<32x1xf32>
    %cst_230 = arith.constant 3.200000e+01 : f32
    %649 = vector.broadcast %cst_230 : f32 to vector<32x1xf32>
    %650 = arith.divf %648, %649 : vector<32x1xf32>
    %651 = vector.broadcast %650 : vector<32x1xf32> to vector<32x32xf32>
    %652 = arith.subf %644, %651 : vector<32x32xf32>
    %653 = arith.mulf %652, %652 : vector<32x32xf32>
    %cst_231 = arith.constant dense<0.000000e+00> : vector<32xf32>
    %654 = vector.multi_reduction <add>, %653, %cst_231 [1] : vector<32x32xf32> to vector<32xf32>
    %655 = vector.shape_cast %654 : vector<32xf32> to vector<32x1xf32>
    %cst_232 = arith.constant 3.200000e+01 : f32
    %656 = vector.broadcast %cst_232 : f32 to vector<32x1xf32>
    %657 = arith.divf %655, %656 : vector<32x1xf32>
    %cst_233 = arith.constant 9.99999974E-6 : f32
    %658 = vector.broadcast %cst_233 : f32 to vector<32x1xf32>
    %659 = arith.addf %657, %658 : vector<32x1xf32>
    %660 = math.rsqrt %659 : vector<32x1xf32>
    %661 = vector.broadcast %660 : vector<32x1xf32> to vector<32x32xf32>
    %662 = arith.mulf %652, %661 : vector<32x32xf32>
    %663 = vector.broadcast %645 : vector<1x32xf32> to vector<32x32xf32>
    %664 = arith.mulf %662, %663 : vector<32x32xf32>
    %665 = vector.broadcast %646 : vector<1x32xf32> to vector<32x32xf32>
    %666 = arith.addf %664, %665 : vector<32x32xf32>
    %c0_234 = arith.constant 0 : index
    %c384_235 = arith.constant 384 : index
    %667 = vector.load %arg3[%c0_234, %c384_235] : memref<32x512xf32, #tpu.memory_space<vmem>>, vector<32x64xf32>
    %cst_236 = arith.constant dense<0.000000e+00> : vector<32x64xf32>
    %668 = tpu.matmul %666, %667, %cst_236 {dimension_numbers = #tpu.dot_dimension_numbers<[1], [0], [0], [1], [0, 0, 1, 1], [], []>} : vector<32x32xf32>, vector<32x64xf32>, vector<32x64xf32> -> vector<32x64xf32>
    %c0_237 = arith.constant 0 : index
    %c3072_238 = arith.constant 3072 : index
    %669 = vector.load %arg6[%c0_237, %c3072_238] : memref<1x3584xf32, #tpu.memory_space<vmem>>, vector<1x64xf32>
    %670 = vector.broadcast %669 : vector<1x64xf32> to vector<32x64xf32>
    %671 = arith.addf %668, %670 : vector<32x64xf32>
    %cst_239 = arith.constant 0.000000e+00 : f32
    %672 = vector.broadcast %cst_239 : f32 to vector<32x64xf32>
    %673 = arith.maximumf %671, %672 : vector<32x64xf32>
    %c0_240 = arith.constant 0 : index
    %c128_241 = arith.constant 128 : index
    %674 = vector.load %arg4[%c0_240, %c128_241] : memref<64x256xf32, #tpu.memory_space<vmem>>, vector<64x32xf32>
    %cst_242 = arith.constant dense<0.000000e+00> : vector<32x32xf32>
    %675 = tpu.matmul %673, %674, %cst_242 {dimension_numbers = #tpu.dot_dimension_numbers<[1], [0], [0], [1], [0, 0, 1, 1], [], []>} : vector<32x64xf32>, vector<64x32xf32>, vector<32x32xf32> -> vector<32x32xf32>
    %c0_243 = arith.constant 0 : index
    %c3200_244 = arith.constant 3200 : index
    %676 = vector.load %arg6[%c0_243, %c3200_244] : memref<1x3584xf32, #tpu.memory_space<vmem>>, vector<1x32xf32>
    %677 = vector.broadcast %676 : vector<1x32xf32> to vector<32x32xf32>
    %678 = arith.addf %675, %677 : vector<32x32xf32>
    %679 = tpu.concatenate %678, %644 in 1 : vector<32x32xf32>, vector<32x32xf32> -> vector<32x64xf32>
    %c0_245 = arith.constant 0 : index
    %c768_246 = arith.constant 768 : index
    %680 = vector.load %arg5[%c0_245, %c768_246] : memref<64x1024xf32, #tpu.memory_space<vmem>>, vector<64x192xf32>
    %cst_247 = arith.constant dense<0.000000e+00> : vector<32x192xf32>
    %681 = tpu.matmul %679, %680, %cst_247 {dimension_numbers = #tpu.dot_dimension_numbers<[1], [0], [0], [1], [0, 0, 1, 1], [], []>} : vector<32x64xf32>, vector<64x192xf32>, vector<32x192xf32> -> vector<32x192xf32>
    %682 = vector.extract_strided_slice %681 {offsets = [0, 0], sizes = [32, 96], strides = [1, 1]} : vector<32x192xf32> to vector<32x96xf32>
    %c0_248 = arith.constant 0 : index
    %c3328_249 = arith.constant 3328 : index
    %683 = vector.load %arg6[%c0_248, %c3328_249] : memref<1x3584xf32, #tpu.memory_space<vmem>>, vector<1x96xf32>
    %684 = vector.broadcast %683 : vector<1x96xf32> to vector<32x96xf32>
    %685 = arith.addf %682, %684 : vector<32x96xf32>
    %686 = vector.extract_strided_slice %681 {offsets = [0, 96], sizes = [32, 96], strides = [1, 1]} : vector<32x192xf32> to vector<32x96xf32>
    %c0_250 = arith.constant 0 : index
    %c3456_251 = arith.constant 3456 : index
    %687 = vector.load %arg6[%c0_250, %c3456_251] : memref<1x3584xf32, #tpu.memory_space<vmem>>, vector<1x96xf32>
    %688 = vector.broadcast %687 : vector<1x96xf32> to vector<32x96xf32>
    %689 = arith.addf %686, %688 : vector<32x96xf32>
    %690 = vector.extract_strided_slice %685 {offsets = [0, 0], sizes = [32, 64], strides = [1, 1]} : vector<32x96xf32> to vector<32x64xf32>
    %691 = vector.extract_strided_slice %689 {offsets = [0, 0], sizes = [32, 64], strides = [1, 1]} : vector<32x96xf32> to vector<32x64xf32>
    %692 = arith.addf %690, %691 : vector<32x64xf32>
    %693 = arith.negf %692 : vector<32x64xf32>
    %694 = math.exp %693 : vector<32x64xf32>
    %cst_252 = arith.constant 1.000000e+00 : f32
    %695 = vector.broadcast %cst_252 : f32 to vector<32x64xf32>
    %696 = arith.addf %695, %694 : vector<32x64xf32>
    %697 = arith.divf %695, %696 : vector<32x64xf32>
    %698 = vector.extract_strided_slice %697 {offsets = [0, 0], sizes = [32, 32], strides = [1, 1]} : vector<32x64xf32> to vector<32x32xf32>
    %699 = vector.extract_strided_slice %697 {offsets = [0, 32], sizes = [32, 32], strides = [1, 1]} : vector<32x64xf32> to vector<32x32xf32>
    %700 = vector.extract_strided_slice %685 {offsets = [0, 64], sizes = [32, 32], strides = [1, 1]} : vector<32x96xf32> to vector<32x32xf32>
    %701 = vector.extract_strided_slice %689 {offsets = [0, 64], sizes = [32, 32], strides = [1, 1]} : vector<32x96xf32> to vector<32x32xf32>
    %702 = arith.mulf %698, %701 : vector<32x32xf32>
    %703 = arith.addf %700, %702 : vector<32x32xf32>
    %704 = math.tanh %703 : vector<32x32xf32>
    %cst_253 = arith.constant 1.000000e+00 : f32
    %705 = vector.broadcast %cst_253 : f32 to vector<32x32xf32>
    %706 = arith.subf %705, %699 : vector<32x32xf32>
    %707 = arith.mulf %706, %704 : vector<32x32xf32>
    %708 = arith.mulf %699, %644 : vector<32x32xf32>
    %709 = arith.addf %707, %708 : vector<32x32xf32>
    %c0_254 = arith.constant 0 : index
    %c256_255 = arith.constant 256 : index
    %710 = vector.load %arg6[%c0_254, %c256_255] : memref<1x3584xf32, #tpu.memory_space<vmem>>, vector<1x32xf32>
    %c0_256 = arith.constant 0 : index
    %c384_257 = arith.constant 384 : index
    %711 = vector.load %arg6[%c0_256, %c384_257] : memref<1x3584xf32, #tpu.memory_space<vmem>>, vector<1x32xf32>
    %cst_258 = arith.constant dense<0.000000e+00> : vector<8xf32>
    %712 = vector.multi_reduction <add>, %538, %cst_258 [1] : vector<8x32xf32> to vector<8xf32>
    %713 = vector.shape_cast %712 : vector<8xf32> to vector<8x1xf32>
    %cst_259 = arith.constant 3.200000e+01 : f32
    %714 = vector.broadcast %cst_259 : f32 to vector<8x1xf32>
    %715 = arith.divf %713, %714 : vector<8x1xf32>
    %716 = vector.broadcast %715 : vector<8x1xf32> to vector<8x32xf32>
    %717 = arith.subf %538, %716 : vector<8x32xf32>
    %718 = arith.mulf %717, %717 : vector<8x32xf32>
    %cst_260 = arith.constant dense<0.000000e+00> : vector<8xf32>
    %719 = vector.multi_reduction <add>, %718, %cst_260 [1] : vector<8x32xf32> to vector<8xf32>
    %720 = vector.shape_cast %719 : vector<8xf32> to vector<8x1xf32>
    %cst_261 = arith.constant 3.200000e+01 : f32
    %721 = vector.broadcast %cst_261 : f32 to vector<8x1xf32>
    %722 = arith.divf %720, %721 : vector<8x1xf32>
    %cst_262 = arith.constant 9.99999974E-6 : f32
    %723 = vector.broadcast %cst_262 : f32 to vector<8x1xf32>
    %724 = arith.addf %722, %723 : vector<8x1xf32>
    %725 = math.rsqrt %724 : vector<8x1xf32>
    %726 = vector.broadcast %725 : vector<8x1xf32> to vector<8x32xf32>
    %727 = arith.mulf %717, %726 : vector<8x32xf32>
    %728 = vector.broadcast %710 : vector<1x32xf32> to vector<8x32xf32>
    %729 = arith.mulf %727, %728 : vector<8x32xf32>
    %730 = vector.broadcast %711 : vector<1x32xf32> to vector<8x32xf32>
    %731 = arith.addf %729, %730 : vector<8x32xf32>
    %c0_263 = arith.constant 0 : index
    %c512_264 = arith.constant 512 : index
    %732 = vector.load %arg6[%c0_263, %c512_264] : memref<1x3584xf32, #tpu.memory_space<vmem>>, vector<1x32xf32>
    %c0_265 = arith.constant 0 : index
    %c640_266 = arith.constant 640 : index
    %733 = vector.load %arg6[%c0_265, %c640_266] : memref<1x3584xf32, #tpu.memory_space<vmem>>, vector<1x32xf32>
    %cst_267 = arith.constant dense<0.000000e+00> : vector<32xf32>
    %734 = vector.multi_reduction <add>, %709, %cst_267 [1] : vector<32x32xf32> to vector<32xf32>
    %735 = vector.shape_cast %734 : vector<32xf32> to vector<32x1xf32>
    %cst_268 = arith.constant 3.200000e+01 : f32
    %736 = vector.broadcast %cst_268 : f32 to vector<32x1xf32>
    %737 = arith.divf %735, %736 : vector<32x1xf32>
    %738 = vector.broadcast %737 : vector<32x1xf32> to vector<32x32xf32>
    %739 = arith.subf %709, %738 : vector<32x32xf32>
    %740 = arith.mulf %739, %739 : vector<32x32xf32>
    %cst_269 = arith.constant dense<0.000000e+00> : vector<32xf32>
    %741 = vector.multi_reduction <add>, %740, %cst_269 [1] : vector<32x32xf32> to vector<32xf32>
    %742 = vector.shape_cast %741 : vector<32xf32> to vector<32x1xf32>
    %cst_270 = arith.constant 3.200000e+01 : f32
    %743 = vector.broadcast %cst_270 : f32 to vector<32x1xf32>
    %744 = arith.divf %742, %743 : vector<32x1xf32>
    %cst_271 = arith.constant 9.99999974E-6 : f32
    %745 = vector.broadcast %cst_271 : f32 to vector<32x1xf32>
    %746 = arith.addf %744, %745 : vector<32x1xf32>
    %747 = math.rsqrt %746 : vector<32x1xf32>
    %748 = vector.broadcast %747 : vector<32x1xf32> to vector<32x32xf32>
    %749 = arith.mulf %739, %748 : vector<32x32xf32>
    %750 = vector.broadcast %732 : vector<1x32xf32> to vector<32x32xf32>
    %751 = arith.mulf %749, %750 : vector<32x32xf32>
    %752 = vector.broadcast %733 : vector<1x32xf32> to vector<32x32xf32>
    %753 = arith.addf %751, %752 : vector<32x32xf32>
    %754 = tpu.concatenate %731, %753 in 0 : vector<8x32xf32>, vector<32x32xf32> -> vector<40x32xf32>
    %c0_272 = arith.constant 0 : index
    %c0_273 = arith.constant 0 : index
    %755 = vector.load %arg3[%c0_272, %c0_273] : memref<32x512xf32, #tpu.memory_space<vmem>>, vector<32x96xf32>
    %cst_274 = arith.constant dense<0.000000e+00> : vector<40x96xf32>
    %756 = tpu.matmul %754, %755, %cst_274 {dimension_numbers = #tpu.dot_dimension_numbers<[1], [0], [0], [1], [0, 0, 1, 1], [], []>} : vector<40x32xf32>, vector<32x96xf32>, vector<40x96xf32> -> vector<40x96xf32>
    %c0_275 = arith.constant 0 : index
    %c768_276 = arith.constant 768 : index
    %757 = vector.load %arg6[%c0_275, %c768_276] : memref<1x3584xf32, #tpu.memory_space<vmem>>, vector<1x96xf32>
    %758 = vector.broadcast %757 : vector<1x96xf32> to vector<40x96xf32>
    %759 = arith.addf %756, %758 : vector<40x96xf32>
    %760 = vector.extract_strided_slice %759 {offsets = [0, 0], sizes = [8, 32], strides = [1, 1]} : vector<40x96xf32> to vector<8x32xf32>
    %761 = vector.shape_cast %760 : vector<8x32xf32> to vector<2x4x32xf32>
    %762 = vector.extract_strided_slice %759 {offsets = [8, 32], sizes = [32, 32], strides = [1, 1]} : vector<40x96xf32> to vector<32x32xf32>
    %763 = vector.shape_cast %762 : vector<32x32xf32> to vector<2x16x32xf32>
    %764 = vector.extract_strided_slice %759 {offsets = [8, 64], sizes = [32, 32], strides = [1, 1]} : vector<40x96xf32> to vector<32x32xf32>
    %765 = vector.shape_cast %764 : vector<32x32xf32> to vector<2x16x32xf32>
    "tpu.trace_start"() <{level = 10 : i32, message = "bid,bjd->bij"}> : () -> ()
    %cst_277 = arith.constant dense<0.000000e+00> : vector<2x4x16xf32>
    %766 = tpu.matmul %761, %763, %cst_277 {dimension_numbers = #tpu.dot_dimension_numbers<[2], [2], [1], [1], [0, 0, 0, 1, 1, 1], [0], [0]>} : vector<2x4x32xf32>, vector<2x16x32xf32>, vector<2x4x16xf32> -> vector<2x4x16xf32>
    "tpu.trace_stop"() : () -> ()
    %cst_278 = arith.constant dense<0xFF800000> : vector<2x16xf32>
    %767 = vector.multi_reduction <maximumf>, %766, %cst_278 [1] : vector<2x4x16xf32> to vector<2x16xf32>
    %768 = vector.shape_cast %767 : vector<2x16xf32> to vector<2x1x16xf32>
    %769 = vector.broadcast %768 : vector<2x1x16xf32> to vector<2x4x16xf32>
    %770 = arith.subf %766, %769 : vector<2x4x16xf32>
    %771 = math.exp %770 : vector<2x4x16xf32>
    %cst_279 = arith.constant dense<0.000000e+00> : vector<2x16xf32>
    %772 = vector.multi_reduction <add>, %771, %cst_279 [1] : vector<2x4x16xf32> to vector<2x16xf32>
    %773 = vector.shape_cast %772 : vector<2x16xf32> to vector<2x1x16xf32>
    %774 = tpu.reciprocal %773 {approx = true} : vector<2x1x16xf32> -> vector<2x1x16xf32>
    %775 = vector.broadcast %774 : vector<2x1x16xf32> to vector<2x4x16xf32>
    %776 = arith.mulf %771, %775 : vector<2x4x16xf32>
    %cst_280 = arith.constant 9.99999993E-9 : f32
    %777 = vector.broadcast %cst_280 : f32 to vector<2x4x16xf32>
    %778 = arith.addf %776, %777 : vector<2x4x16xf32>
    %cst_281 = arith.constant dense<0.000000e+00> : vector<2x4xf32>
    %779 = vector.multi_reduction <add>, %778, %cst_281 [2] : vector<2x4x16xf32> to vector<2x4xf32>
    %780 = vector.shape_cast %779 : vector<2x4xf32> to vector<2x4x1xf32>
    %781 = vector.broadcast %780 : vector<2x4x1xf32> to vector<2x4x16xf32>
    %782 = arith.divf %778, %781 : vector<2x4x16xf32>
    "tpu.trace_start"() <{level = 10 : i32, message = "bij,bjd->bid"}> : () -> ()
    %cst_282 = arith.constant dense<0.000000e+00> : vector<2x4x32xf32>
    %783 = tpu.matmul %782, %765, %cst_282 {dimension_numbers = #tpu.dot_dimension_numbers<[2], [1], [1], [2], [0, 0, 0, 1, 1, 2], [0], [0]>} : vector<2x4x16xf32>, vector<2x16x32xf32>, vector<2x4x32xf32> -> vector<2x4x32xf32>
    "tpu.trace_stop"() : () -> ()
    %784 = vector.shape_cast %783 : vector<2x4x32xf32> to vector<8x32xf32>
    %785 = tpu.concatenate %784, %538 in 1 : vector<8x32xf32>, vector<8x32xf32> -> vector<8x64xf32>
    %c0_283 = arith.constant 0 : index
    %c0_284 = arith.constant 0 : index
    %786 = vector.load %arg5[%c0_283, %c0_284] : memref<64x1024xf32, #tpu.memory_space<vmem>>, vector<64x192xf32>
    %cst_285 = arith.constant dense<0.000000e+00> : vector<8x192xf32>
    %787 = tpu.matmul %785, %786, %cst_285 {dimension_numbers = #tpu.dot_dimension_numbers<[1], [0], [0], [1], [0, 0, 1, 1], [], []>} : vector<8x64xf32>, vector<64x192xf32>, vector<8x192xf32> -> vector<8x192xf32>
    %788 = vector.extract_strided_slice %787 {offsets = [0, 0], sizes = [8, 96], strides = [1, 1]} : vector<8x192xf32> to vector<8x96xf32>
    %c0_286 = arith.constant 0 : index
    %c896_287 = arith.constant 896 : index
    %789 = vector.load %arg6[%c0_286, %c896_287] : memref<1x3584xf32, #tpu.memory_space<vmem>>, vector<1x96xf32>
    %790 = vector.broadcast %789 : vector<1x96xf32> to vector<8x96xf32>
    %791 = arith.addf %788, %790 : vector<8x96xf32>
    %792 = vector.extract_strided_slice %787 {offsets = [0, 96], sizes = [8, 96], strides = [1, 1]} : vector<8x192xf32> to vector<8x96xf32>
    %c0_288 = arith.constant 0 : index
    %c1024_289 = arith.constant 1024 : index
    %793 = vector.load %arg6[%c0_288, %c1024_289] : memref<1x3584xf32, #tpu.memory_space<vmem>>, vector<1x96xf32>
    %794 = vector.broadcast %793 : vector<1x96xf32> to vector<8x96xf32>
    %795 = arith.addf %792, %794 : vector<8x96xf32>
    %796 = vector.extract_strided_slice %791 {offsets = [0, 0], sizes = [8, 64], strides = [1, 1]} : vector<8x96xf32> to vector<8x64xf32>
    %797 = vector.extract_strided_slice %795 {offsets = [0, 0], sizes = [8, 64], strides = [1, 1]} : vector<8x96xf32> to vector<8x64xf32>
    %798 = arith.addf %796, %797 : vector<8x64xf32>
    %799 = arith.negf %798 : vector<8x64xf32>
    %800 = math.exp %799 : vector<8x64xf32>
    %cst_290 = arith.constant 1.000000e+00 : f32
    %801 = vector.broadcast %cst_290 : f32 to vector<8x64xf32>
    %802 = arith.addf %801, %800 : vector<8x64xf32>
    %803 = arith.divf %801, %802 : vector<8x64xf32>
    %804 = vector.extract_strided_slice %803 {offsets = [0, 0], sizes = [8, 32], strides = [1, 1]} : vector<8x64xf32> to vector<8x32xf32>
    %805 = vector.extract_strided_slice %803 {offsets = [0, 32], sizes = [8, 32], strides = [1, 1]} : vector<8x64xf32> to vector<8x32xf32>
    %806 = vector.extract_strided_slice %791 {offsets = [0, 64], sizes = [8, 32], strides = [1, 1]} : vector<8x96xf32> to vector<8x32xf32>
    %807 = vector.extract_strided_slice %795 {offsets = [0, 64], sizes = [8, 32], strides = [1, 1]} : vector<8x96xf32> to vector<8x32xf32>
    %808 = arith.mulf %804, %807 : vector<8x32xf32>
    %809 = arith.addf %806, %808 : vector<8x32xf32>
    %810 = math.tanh %809 : vector<8x32xf32>
    %cst_291 = arith.constant 1.000000e+00 : f32
    %811 = vector.broadcast %cst_291 : f32 to vector<8x32xf32>
    %812 = arith.subf %811, %805 : vector<8x32xf32>
    %813 = arith.mulf %812, %810 : vector<8x32xf32>
    %814 = arith.mulf %805, %538 : vector<8x32xf32>
    %815 = arith.addf %813, %814 : vector<8x32xf32>
    %c0_292 = arith.constant 0 : index
    %c1152_293 = arith.constant 1152 : index
    %816 = vector.load %arg6[%c0_292, %c1152_293] : memref<1x3584xf32, #tpu.memory_space<vmem>>, vector<1x32xf32>
    %c0_294 = arith.constant 0 : index
    %c1280_295 = arith.constant 1280 : index
    %817 = vector.load %arg6[%c0_294, %c1280_295] : memref<1x3584xf32, #tpu.memory_space<vmem>>, vector<1x32xf32>
    %cst_296 = arith.constant dense<0.000000e+00> : vector<8xf32>
    %818 = vector.multi_reduction <add>, %815, %cst_296 [1] : vector<8x32xf32> to vector<8xf32>
    %819 = vector.shape_cast %818 : vector<8xf32> to vector<8x1xf32>
    %cst_297 = arith.constant 3.200000e+01 : f32
    %820 = vector.broadcast %cst_297 : f32 to vector<8x1xf32>
    %821 = arith.divf %819, %820 : vector<8x1xf32>
    %822 = vector.broadcast %821 : vector<8x1xf32> to vector<8x32xf32>
    %823 = arith.subf %815, %822 : vector<8x32xf32>
    %824 = arith.mulf %823, %823 : vector<8x32xf32>
    %cst_298 = arith.constant dense<0.000000e+00> : vector<8xf32>
    %825 = vector.multi_reduction <add>, %824, %cst_298 [1] : vector<8x32xf32> to vector<8xf32>
    %826 = vector.shape_cast %825 : vector<8xf32> to vector<8x1xf32>
    %cst_299 = arith.constant 3.200000e+01 : f32
    %827 = vector.broadcast %cst_299 : f32 to vector<8x1xf32>
    %828 = arith.divf %826, %827 : vector<8x1xf32>
    %cst_300 = arith.constant 9.99999974E-6 : f32
    %829 = vector.broadcast %cst_300 : f32 to vector<8x1xf32>
    %830 = arith.addf %828, %829 : vector<8x1xf32>
    %831 = math.rsqrt %830 : vector<8x1xf32>
    %832 = vector.broadcast %831 : vector<8x1xf32> to vector<8x32xf32>
    %833 = arith.mulf %823, %832 : vector<8x32xf32>
    %834 = vector.broadcast %816 : vector<1x32xf32> to vector<8x32xf32>
    %835 = arith.mulf %833, %834 : vector<8x32xf32>
    %836 = vector.broadcast %817 : vector<1x32xf32> to vector<8x32xf32>
    %837 = arith.addf %835, %836 : vector<8x32xf32>
    %c0_301 = arith.constant 0 : index
    %c128_302 = arith.constant 128 : index
    %838 = vector.load %arg3[%c0_301, %c128_302] : memref<32x512xf32, #tpu.memory_space<vmem>>, vector<32x64xf32>
    %cst_303 = arith.constant dense<0.000000e+00> : vector<8x64xf32>
    %839 = tpu.matmul %837, %838, %cst_303 {dimension_numbers = #tpu.dot_dimension_numbers<[1], [0], [0], [1], [0, 0, 1, 1], [], []>} : vector<8x32xf32>, vector<32x64xf32>, vector<8x64xf32> -> vector<8x64xf32>
    %c0_304 = arith.constant 0 : index
    %c1408_305 = arith.constant 1408 : index
    %840 = vector.load %arg6[%c0_304, %c1408_305] : memref<1x3584xf32, #tpu.memory_space<vmem>>, vector<1x64xf32>
    %841 = vector.broadcast %840 : vector<1x64xf32> to vector<8x64xf32>
    %842 = arith.addf %839, %841 : vector<8x64xf32>
    %cst_306 = arith.constant 0.000000e+00 : f32
    %843 = vector.broadcast %cst_306 : f32 to vector<8x64xf32>
    %844 = arith.maximumf %842, %843 : vector<8x64xf32>
    %c0_307 = arith.constant 0 : index
    %c0_308 = arith.constant 0 : index
    %845 = vector.load %arg4[%c0_307, %c0_308] : memref<64x256xf32, #tpu.memory_space<vmem>>, vector<64x32xf32>
    %cst_309 = arith.constant dense<0.000000e+00> : vector<8x32xf32>
    %846 = tpu.matmul %844, %845, %cst_309 {dimension_numbers = #tpu.dot_dimension_numbers<[1], [0], [0], [1], [0, 0, 1, 1], [], []>} : vector<8x64xf32>, vector<64x32xf32>, vector<8x32xf32> -> vector<8x32xf32>
    %c0_310 = arith.constant 0 : index
    %c1536_311 = arith.constant 1536 : index
    %847 = vector.load %arg6[%c0_310, %c1536_311] : memref<1x3584xf32, #tpu.memory_space<vmem>>, vector<1x32xf32>
    %848 = vector.broadcast %847 : vector<1x32xf32> to vector<8x32xf32>
    %849 = arith.addf %846, %848 : vector<8x32xf32>
    %850 = tpu.concatenate %849, %815 in 1 : vector<8x32xf32>, vector<8x32xf32> -> vector<8x64xf32>
    %c0_312 = arith.constant 0 : index
    %c256_313 = arith.constant 256 : index
    %851 = vector.load %arg5[%c0_312, %c256_313] : memref<64x1024xf32, #tpu.memory_space<vmem>>, vector<64x192xf32>
    %cst_314 = arith.constant dense<0.000000e+00> : vector<8x192xf32>
    %852 = tpu.matmul %850, %851, %cst_314 {dimension_numbers = #tpu.dot_dimension_numbers<[1], [0], [0], [1], [0, 0, 1, 1], [], []>} : vector<8x64xf32>, vector<64x192xf32>, vector<8x192xf32> -> vector<8x192xf32>
    %853 = vector.extract_strided_slice %852 {offsets = [0, 0], sizes = [8, 96], strides = [1, 1]} : vector<8x192xf32> to vector<8x96xf32>
    %c0_315 = arith.constant 0 : index
    %c1664_316 = arith.constant 1664 : index
    %854 = vector.load %arg6[%c0_315, %c1664_316] : memref<1x3584xf32, #tpu.memory_space<vmem>>, vector<1x96xf32>
    %855 = vector.broadcast %854 : vector<1x96xf32> to vector<8x96xf32>
    %856 = arith.addf %853, %855 : vector<8x96xf32>
    %857 = vector.extract_strided_slice %852 {offsets = [0, 96], sizes = [8, 96], strides = [1, 1]} : vector<8x192xf32> to vector<8x96xf32>
    %c0_317 = arith.constant 0 : index
    %c1792_318 = arith.constant 1792 : index
    %858 = vector.load %arg6[%c0_317, %c1792_318] : memref<1x3584xf32, #tpu.memory_space<vmem>>, vector<1x96xf32>
    %859 = vector.broadcast %858 : vector<1x96xf32> to vector<8x96xf32>
    %860 = arith.addf %857, %859 : vector<8x96xf32>
    %861 = vector.extract_strided_slice %856 {offsets = [0, 0], sizes = [8, 64], strides = [1, 1]} : vector<8x96xf32> to vector<8x64xf32>
    %862 = vector.extract_strided_slice %860 {offsets = [0, 0], sizes = [8, 64], strides = [1, 1]} : vector<8x96xf32> to vector<8x64xf32>
    %863 = arith.addf %861, %862 : vector<8x64xf32>
    %864 = arith.negf %863 : vector<8x64xf32>
    %865 = math.exp %864 : vector<8x64xf32>
    %cst_319 = arith.constant 1.000000e+00 : f32
    %866 = vector.broadcast %cst_319 : f32 to vector<8x64xf32>
    %867 = arith.addf %866, %865 : vector<8x64xf32>
    %868 = arith.divf %866, %867 : vector<8x64xf32>
    %869 = vector.extract_strided_slice %868 {offsets = [0, 0], sizes = [8, 32], strides = [1, 1]} : vector<8x64xf32> to vector<8x32xf32>
    %870 = vector.extract_strided_slice %868 {offsets = [0, 32], sizes = [8, 32], strides = [1, 1]} : vector<8x64xf32> to vector<8x32xf32>
    %871 = vector.extract_strided_slice %856 {offsets = [0, 64], sizes = [8, 32], strides = [1, 1]} : vector<8x96xf32> to vector<8x32xf32>
    %872 = vector.extract_strided_slice %860 {offsets = [0, 64], sizes = [8, 32], strides = [1, 1]} : vector<8x96xf32> to vector<8x32xf32>
    %873 = arith.mulf %869, %872 : vector<8x32xf32>
    %874 = arith.addf %871, %873 : vector<8x32xf32>
    %875 = math.tanh %874 : vector<8x32xf32>
    %cst_320 = arith.constant 1.000000e+00 : f32
    %876 = vector.broadcast %cst_320 : f32 to vector<8x32xf32>
    %877 = arith.subf %876, %870 : vector<8x32xf32>
    %878 = arith.mulf %877, %875 : vector<8x32xf32>
    %879 = arith.mulf %870, %815 : vector<8x32xf32>
    %880 = arith.addf %878, %879 : vector<8x32xf32>
    %c0_321 = arith.constant 0 : index
    %c1920_322 = arith.constant 1920 : index
    %881 = vector.load %arg6[%c0_321, %c1920_322] : memref<1x3584xf32, #tpu.memory_space<vmem>>, vector<1x32xf32>
    %c0_323 = arith.constant 0 : index
    %c2048_324 = arith.constant 2048 : index
    %882 = vector.load %arg6[%c0_323, %c2048_324] : memref<1x3584xf32, #tpu.memory_space<vmem>>, vector<1x32xf32>
    %cst_325 = arith.constant dense<0.000000e+00> : vector<32xf32>
    %883 = vector.multi_reduction <add>, %709, %cst_325 [1] : vector<32x32xf32> to vector<32xf32>
    %884 = vector.shape_cast %883 : vector<32xf32> to vector<32x1xf32>
    %cst_326 = arith.constant 3.200000e+01 : f32
    %885 = vector.broadcast %cst_326 : f32 to vector<32x1xf32>
    %886 = arith.divf %884, %885 : vector<32x1xf32>
    %887 = vector.broadcast %886 : vector<32x1xf32> to vector<32x32xf32>
    %888 = arith.subf %709, %887 : vector<32x32xf32>
    %889 = arith.mulf %888, %888 : vector<32x32xf32>
    %cst_327 = arith.constant dense<0.000000e+00> : vector<32xf32>
    %890 = vector.multi_reduction <add>, %889, %cst_327 [1] : vector<32x32xf32> to vector<32xf32>
    %891 = vector.shape_cast %890 : vector<32xf32> to vector<32x1xf32>
    %cst_328 = arith.constant 3.200000e+01 : f32
    %892 = vector.broadcast %cst_328 : f32 to vector<32x1xf32>
    %893 = arith.divf %891, %892 : vector<32x1xf32>
    %cst_329 = arith.constant 9.99999974E-6 : f32
    %894 = vector.broadcast %cst_329 : f32 to vector<32x1xf32>
    %895 = arith.addf %893, %894 : vector<32x1xf32>
    %896 = math.rsqrt %895 : vector<32x1xf32>
    %897 = vector.broadcast %896 : vector<32x1xf32> to vector<32x32xf32>
    %898 = arith.mulf %888, %897 : vector<32x32xf32>
    %899 = vector.broadcast %881 : vector<1x32xf32> to vector<32x32xf32>
    %900 = arith.mulf %898, %899 : vector<32x32xf32>
    %901 = vector.broadcast %882 : vector<1x32xf32> to vector<32x32xf32>
    %902 = arith.addf %900, %901 : vector<32x32xf32>
    %c0_330 = arith.constant 0 : index
    %c2176_331 = arith.constant 2176 : index
    %903 = vector.load %arg6[%c0_330, %c2176_331] : memref<1x3584xf32, #tpu.memory_space<vmem>>, vector<1x32xf32>
    %c0_332 = arith.constant 0 : index
    %c2304_333 = arith.constant 2304 : index
    %904 = vector.load %arg6[%c0_332, %c2304_333] : memref<1x3584xf32, #tpu.memory_space<vmem>>, vector<1x32xf32>
    %cst_334 = arith.constant dense<0.000000e+00> : vector<8xf32>
    %905 = vector.multi_reduction <add>, %880, %cst_334 [1] : vector<8x32xf32> to vector<8xf32>
    %906 = vector.shape_cast %905 : vector<8xf32> to vector<8x1xf32>
    %cst_335 = arith.constant 3.200000e+01 : f32
    %907 = vector.broadcast %cst_335 : f32 to vector<8x1xf32>
    %908 = arith.divf %906, %907 : vector<8x1xf32>
    %909 = vector.broadcast %908 : vector<8x1xf32> to vector<8x32xf32>
    %910 = arith.subf %880, %909 : vector<8x32xf32>
    %911 = arith.mulf %910, %910 : vector<8x32xf32>
    %cst_336 = arith.constant dense<0.000000e+00> : vector<8xf32>
    %912 = vector.multi_reduction <add>, %911, %cst_336 [1] : vector<8x32xf32> to vector<8xf32>
    %913 = vector.shape_cast %912 : vector<8xf32> to vector<8x1xf32>
    %cst_337 = arith.constant 3.200000e+01 : f32
    %914 = vector.broadcast %cst_337 : f32 to vector<8x1xf32>
    %915 = arith.divf %913, %914 : vector<8x1xf32>
    %cst_338 = arith.constant 9.99999974E-6 : f32
    %916 = vector.broadcast %cst_338 : f32 to vector<8x1xf32>
    %917 = arith.addf %915, %916 : vector<8x1xf32>
    %918 = math.rsqrt %917 : vector<8x1xf32>
    %919 = vector.broadcast %918 : vector<8x1xf32> to vector<8x32xf32>
    %920 = arith.mulf %910, %919 : vector<8x32xf32>
    %921 = vector.broadcast %903 : vector<1x32xf32> to vector<8x32xf32>
    %922 = arith.mulf %920, %921 : vector<8x32xf32>
    %923 = vector.broadcast %904 : vector<1x32xf32> to vector<8x32xf32>
    %924 = arith.addf %922, %923 : vector<8x32xf32>
    %925 = tpu.concatenate %902, %924 in 0 : vector<32x32xf32>, vector<8x32xf32> -> vector<40x32xf32>
    %c0_339 = arith.constant 0 : index
    %c256_340 = arith.constant 256 : index
    %926 = vector.load %arg3[%c0_339, %c256_340] : memref<32x512xf32, #tpu.memory_space<vmem>>, vector<32x96xf32>
    %cst_341 = arith.constant dense<0.000000e+00> : vector<40x96xf32>
    %927 = tpu.matmul %925, %926, %cst_341 {dimension_numbers = #tpu.dot_dimension_numbers<[1], [0], [0], [1], [0, 0, 1, 1], [], []>} : vector<40x32xf32>, vector<32x96xf32>, vector<40x96xf32> -> vector<40x96xf32>
    %c0_342 = arith.constant 0 : index
    %c2432_343 = arith.constant 2432 : index
    %928 = vector.load %arg6[%c0_342, %c2432_343] : memref<1x3584xf32, #tpu.memory_space<vmem>>, vector<1x96xf32>
    %929 = vector.broadcast %928 : vector<1x96xf32> to vector<40x96xf32>
    %930 = arith.addf %927, %929 : vector<40x96xf32>
    %931 = vector.extract_strided_slice %930 {offsets = [0, 0], sizes = [32, 32], strides = [1, 1]} : vector<40x96xf32> to vector<32x32xf32>
    %932 = vector.shape_cast %931 : vector<32x32xf32> to vector<2x16x32xf32>
    %933 = vector.extract_strided_slice %930 {offsets = [32, 32], sizes = [8, 32], strides = [1, 1]} : vector<40x96xf32> to vector<8x32xf32>
    %934 = vector.shape_cast %933 : vector<8x32xf32> to vector<2x4x32xf32>
    %935 = vector.extract_strided_slice %930 {offsets = [32, 64], sizes = [8, 32], strides = [1, 1]} : vector<40x96xf32> to vector<8x32xf32>
    %936 = vector.shape_cast %935 : vector<8x32xf32> to vector<2x4x32xf32>
    "tpu.trace_start"() <{level = 10 : i32, message = "bid,bjd->bij"}> : () -> ()
    %cst_344 = arith.constant dense<0.000000e+00> : vector<2x16x4xf32>
    %937 = tpu.matmul %932, %934, %cst_344 {dimension_numbers = #tpu.dot_dimension_numbers<[2], [2], [1], [1], [0, 0, 0, 1, 1, 1], [0], [0]>} : vector<2x16x32xf32>, vector<2x4x32xf32>, vector<2x16x4xf32> -> vector<2x16x4xf32>
    "tpu.trace_stop"() : () -> ()
    %cst_345 = arith.constant dense<0xFF800000> : vector<2x16xf32>
    %938 = vector.multi_reduction <maximumf>, %937, %cst_345 [2] : vector<2x16x4xf32> to vector<2x16xf32>
    %939 = vector.shape_cast %938 : vector<2x16xf32> to vector<2x16x1xf32>
    %940 = vector.broadcast %939 : vector<2x16x1xf32> to vector<2x16x4xf32>
    %941 = arith.subf %937, %940 : vector<2x16x4xf32>
    %942 = math.exp %941 : vector<2x16x4xf32>
    %cst_346 = arith.constant dense<0.000000e+00> : vector<2x16xf32>
    %943 = vector.multi_reduction <add>, %942, %cst_346 [2] : vector<2x16x4xf32> to vector<2x16xf32>
    %944 = vector.shape_cast %943 : vector<2x16xf32> to vector<2x16x1xf32>
    %945 = tpu.reciprocal %944 {approx = true} : vector<2x16x1xf32> -> vector<2x16x1xf32>
    %946 = vector.broadcast %945 : vector<2x16x1xf32> to vector<2x16x4xf32>
    %947 = arith.mulf %942, %946 : vector<2x16x4xf32>
    %cst_347 = arith.constant 9.99999993E-9 : f32
    %948 = vector.broadcast %cst_347 : f32 to vector<2x16x4xf32>
    %949 = arith.addf %947, %948 : vector<2x16x4xf32>
    %cst_348 = arith.constant dense<0.000000e+00> : vector<2x4xf32>
    %950 = vector.multi_reduction <add>, %949, %cst_348 [1] : vector<2x16x4xf32> to vector<2x4xf32>
    %951 = vector.shape_cast %950 : vector<2x4xf32> to vector<2x1x4xf32>
    %952 = vector.broadcast %951 : vector<2x1x4xf32> to vector<2x16x4xf32>
    %953 = arith.divf %949, %952 : vector<2x16x4xf32>
    "tpu.trace_start"() <{level = 10 : i32, message = "bij,bjd->bid"}> : () -> ()
    %cst_349 = arith.constant dense<0.000000e+00> : vector<2x16x32xf32>
    %954 = tpu.matmul %953, %936, %cst_349 {dimension_numbers = #tpu.dot_dimension_numbers<[2], [1], [1], [2], [0, 0, 0, 1, 1, 2], [0], [0]>} : vector<2x16x4xf32>, vector<2x4x32xf32>, vector<2x16x32xf32> -> vector<2x16x32xf32>
    "tpu.trace_stop"() : () -> ()
    %955 = vector.shape_cast %954 : vector<2x16x32xf32> to vector<32x32xf32>
    %956 = tpu.concatenate %955, %709 in 1 : vector<32x32xf32>, vector<32x32xf32> -> vector<32x64xf32>
    %c0_350 = arith.constant 0 : index
    %c512_351 = arith.constant 512 : index
    %957 = vector.load %arg5[%c0_350, %c512_351] : memref<64x1024xf32, #tpu.memory_space<vmem>>, vector<64x192xf32>
    %cst_352 = arith.constant dense<0.000000e+00> : vector<32x192xf32>
    %958 = tpu.matmul %956, %957, %cst_352 {dimension_numbers = #tpu.dot_dimension_numbers<[1], [0], [0], [1], [0, 0, 1, 1], [], []>} : vector<32x64xf32>, vector<64x192xf32>, vector<32x192xf32> -> vector<32x192xf32>
    %959 = vector.extract_strided_slice %958 {offsets = [0, 0], sizes = [32, 96], strides = [1, 1]} : vector<32x192xf32> to vector<32x96xf32>
    %c0_353 = arith.constant 0 : index
    %c2560_354 = arith.constant 2560 : index
    %960 = vector.load %arg6[%c0_353, %c2560_354] : memref<1x3584xf32, #tpu.memory_space<vmem>>, vector<1x96xf32>
    %961 = vector.broadcast %960 : vector<1x96xf32> to vector<32x96xf32>
    %962 = arith.addf %959, %961 : vector<32x96xf32>
    %963 = vector.extract_strided_slice %958 {offsets = [0, 96], sizes = [32, 96], strides = [1, 1]} : vector<32x192xf32> to vector<32x96xf32>
    %c0_355 = arith.constant 0 : index
    %c2688_356 = arith.constant 2688 : index
    %964 = vector.load %arg6[%c0_355, %c2688_356] : memref<1x3584xf32, #tpu.memory_space<vmem>>, vector<1x96xf32>
    %965 = vector.broadcast %964 : vector<1x96xf32> to vector<32x96xf32>
    %966 = arith.addf %963, %965 : vector<32x96xf32>
    %967 = vector.extract_strided_slice %962 {offsets = [0, 0], sizes = [32, 64], strides = [1, 1]} : vector<32x96xf32> to vector<32x64xf32>
    %968 = vector.extract_strided_slice %966 {offsets = [0, 0], sizes = [32, 64], strides = [1, 1]} : vector<32x96xf32> to vector<32x64xf32>
    %969 = arith.addf %967, %968 : vector<32x64xf32>
    %970 = arith.negf %969 : vector<32x64xf32>
    %971 = math.exp %970 : vector<32x64xf32>
    %cst_357 = arith.constant 1.000000e+00 : f32
    %972 = vector.broadcast %cst_357 : f32 to vector<32x64xf32>
    %973 = arith.addf %972, %971 : vector<32x64xf32>
    %974 = arith.divf %972, %973 : vector<32x64xf32>
    %975 = vector.extract_strided_slice %974 {offsets = [0, 0], sizes = [32, 32], strides = [1, 1]} : vector<32x64xf32> to vector<32x32xf32>
    %976 = vector.extract_strided_slice %974 {offsets = [0, 32], sizes = [32, 32], strides = [1, 1]} : vector<32x64xf32> to vector<32x32xf32>
    %977 = vector.extract_strided_slice %962 {offsets = [0, 64], sizes = [32, 32], strides = [1, 1]} : vector<32x96xf32> to vector<32x32xf32>
    %978 = vector.extract_strided_slice %966 {offsets = [0, 64], sizes = [32, 32], strides = [1, 1]} : vector<32x96xf32> to vector<32x32xf32>
    %979 = arith.mulf %975, %978 : vector<32x32xf32>
    %980 = arith.addf %977, %979 : vector<32x32xf32>
    %981 = math.tanh %980 : vector<32x32xf32>
    %cst_358 = arith.constant 1.000000e+00 : f32
    %982 = vector.broadcast %cst_358 : f32 to vector<32x32xf32>
    %983 = arith.subf %982, %976 : vector<32x32xf32>
    %984 = arith.mulf %983, %981 : vector<32x32xf32>
    %985 = arith.mulf %976, %709 : vector<32x32xf32>
    %986 = arith.addf %984, %985 : vector<32x32xf32>
    %c0_359 = arith.constant 0 : index
    %c2816_360 = arith.constant 2816 : index
    %987 = vector.load %arg6[%c0_359, %c2816_360] : memref<1x3584xf32, #tpu.memory_space<vmem>>, vector<1x32xf32>
    %c0_361 = arith.constant 0 : index
    %c2944_362 = arith.constant 2944 : index
    %988 = vector.load %arg6[%c0_361, %c2944_362] : memref<1x3584xf32, #tpu.memory_space<vmem>>, vector<1x32xf32>
    %cst_363 = arith.constant dense<0.000000e+00> : vector<32xf32>
    %989 = vector.multi_reduction <add>, %986, %cst_363 [1] : vector<32x32xf32> to vector<32xf32>
    %990 = vector.shape_cast %989 : vector<32xf32> to vector<32x1xf32>
    %cst_364 = arith.constant 3.200000e+01 : f32
    %991 = vector.broadcast %cst_364 : f32 to vector<32x1xf32>
    %992 = arith.divf %990, %991 : vector<32x1xf32>
    %993 = vector.broadcast %992 : vector<32x1xf32> to vector<32x32xf32>
    %994 = arith.subf %986, %993 : vector<32x32xf32>
    %995 = arith.mulf %994, %994 : vector<32x32xf32>
    %cst_365 = arith.constant dense<0.000000e+00> : vector<32xf32>
    %996 = vector.multi_reduction <add>, %995, %cst_365 [1] : vector<32x32xf32> to vector<32xf32>
    %997 = vector.shape_cast %996 : vector<32xf32> to vector<32x1xf32>
    %cst_366 = arith.constant 3.200000e+01 : f32
    %998 = vector.broadcast %cst_366 : f32 to vector<32x1xf32>
    %999 = arith.divf %997, %998 : vector<32x1xf32>
    %cst_367 = arith.constant 9.99999974E-6 : f32
    %1000 = vector.broadcast %cst_367 : f32 to vector<32x1xf32>
    %1001 = arith.addf %999, %1000 : vector<32x1xf32>
    %1002 = math.rsqrt %1001 : vector<32x1xf32>
    %1003 = vector.broadcast %1002 : vector<32x1xf32> to vector<32x32xf32>
    %1004 = arith.mulf %994, %1003 : vector<32x32xf32>
    %1005 = vector.broadcast %987 : vector<1x32xf32> to vector<32x32xf32>
    %1006 = arith.mulf %1004, %1005 : vector<32x32xf32>
    %1007 = vector.broadcast %988 : vector<1x32xf32> to vector<32x32xf32>
    %1008 = arith.addf %1006, %1007 : vector<32x32xf32>
    %c0_368 = arith.constant 0 : index
    %c384_369 = arith.constant 384 : index
    %1009 = vector.load %arg3[%c0_368, %c384_369] : memref<32x512xf32, #tpu.memory_space<vmem>>, vector<32x64xf32>
    %cst_370 = arith.constant dense<0.000000e+00> : vector<32x64xf32>
    %1010 = tpu.matmul %1008, %1009, %cst_370 {dimension_numbers = #tpu.dot_dimension_numbers<[1], [0], [0], [1], [0, 0, 1, 1], [], []>} : vector<32x32xf32>, vector<32x64xf32>, vector<32x64xf32> -> vector<32x64xf32>
    %c0_371 = arith.constant 0 : index
    %c3072_372 = arith.constant 3072 : index
    %1011 = vector.load %arg6[%c0_371, %c3072_372] : memref<1x3584xf32, #tpu.memory_space<vmem>>, vector<1x64xf32>
    %1012 = vector.broadcast %1011 : vector<1x64xf32> to vector<32x64xf32>
    %1013 = arith.addf %1010, %1012 : vector<32x64xf32>
    %cst_373 = arith.constant 0.000000e+00 : f32
    %1014 = vector.broadcast %cst_373 : f32 to vector<32x64xf32>
    %1015 = arith.maximumf %1013, %1014 : vector<32x64xf32>
    %c0_374 = arith.constant 0 : index
    %c128_375 = arith.constant 128 : index
    %1016 = vector.load %arg4[%c0_374, %c128_375] : memref<64x256xf32, #tpu.memory_space<vmem>>, vector<64x32xf32>
    %cst_376 = arith.constant dense<0.000000e+00> : vector<32x32xf32>
    %1017 = tpu.matmul %1015, %1016, %cst_376 {dimension_numbers = #tpu.dot_dimension_numbers<[1], [0], [0], [1], [0, 0, 1, 1], [], []>} : vector<32x64xf32>, vector<64x32xf32>, vector<32x32xf32> -> vector<32x32xf32>
    %c0_377 = arith.constant 0 : index
    %c3200_378 = arith.constant 3200 : index
    %1018 = vector.load %arg6[%c0_377, %c3200_378] : memref<1x3584xf32, #tpu.memory_space<vmem>>, vector<1x32xf32>
    %1019 = vector.broadcast %1018 : vector<1x32xf32> to vector<32x32xf32>
    %1020 = arith.addf %1017, %1019 : vector<32x32xf32>
    %1021 = tpu.concatenate %1020, %986 in 1 : vector<32x32xf32>, vector<32x32xf32> -> vector<32x64xf32>
    %c0_379 = arith.constant 0 : index
    %c768_380 = arith.constant 768 : index
    %1022 = vector.load %arg5[%c0_379, %c768_380] : memref<64x1024xf32, #tpu.memory_space<vmem>>, vector<64x192xf32>
    %cst_381 = arith.constant dense<0.000000e+00> : vector<32x192xf32>
    %1023 = tpu.matmul %1021, %1022, %cst_381 {dimension_numbers = #tpu.dot_dimension_numbers<[1], [0], [0], [1], [0, 0, 1, 1], [], []>} : vector<32x64xf32>, vector<64x192xf32>, vector<32x192xf32> -> vector<32x192xf32>
    %1024 = vector.extract_strided_slice %1023 {offsets = [0, 0], sizes = [32, 96], strides = [1, 1]} : vector<32x192xf32> to vector<32x96xf32>
    %c0_382 = arith.constant 0 : index
    %c3328_383 = arith.constant 3328 : index
    %1025 = vector.load %arg6[%c0_382, %c3328_383] : memref<1x3584xf32, #tpu.memory_space<vmem>>, vector<1x96xf32>
    %1026 = vector.broadcast %1025 : vector<1x96xf32> to vector<32x96xf32>
    %1027 = arith.addf %1024, %1026 : vector<32x96xf32>
    %1028 = vector.extract_strided_slice %1023 {offsets = [0, 96], sizes = [32, 96], strides = [1, 1]} : vector<32x192xf32> to vector<32x96xf32>
    %c0_384 = arith.constant 0 : index
    %c3456_385 = arith.constant 3456 : index
    %1029 = vector.load %arg6[%c0_384, %c3456_385] : memref<1x3584xf32, #tpu.memory_space<vmem>>, vector<1x96xf32>
    %1030 = vector.broadcast %1029 : vector<1x96xf32> to vector<32x96xf32>
    %1031 = arith.addf %1028, %1030 : vector<32x96xf32>
    %1032 = vector.extract_strided_slice %1027 {offsets = [0, 0], sizes = [32, 64], strides = [1, 1]} : vector<32x96xf32> to vector<32x64xf32>
    %1033 = vector.extract_strided_slice %1031 {offsets = [0, 0], sizes = [32, 64], strides = [1, 1]} : vector<32x96xf32> to vector<32x64xf32>
    %1034 = arith.addf %1032, %1033 : vector<32x64xf32>
    %1035 = arith.negf %1034 : vector<32x64xf32>
    %1036 = math.exp %1035 : vector<32x64xf32>
    %cst_386 = arith.constant 1.000000e+00 : f32
    %1037 = vector.broadcast %cst_386 : f32 to vector<32x64xf32>
    %1038 = arith.addf %1037, %1036 : vector<32x64xf32>
    %1039 = arith.divf %1037, %1038 : vector<32x64xf32>
    %1040 = vector.extract_strided_slice %1039 {offsets = [0, 0], sizes = [32, 32], strides = [1, 1]} : vector<32x64xf32> to vector<32x32xf32>
    %1041 = vector.extract_strided_slice %1039 {offsets = [0, 32], sizes = [32, 32], strides = [1, 1]} : vector<32x64xf32> to vector<32x32xf32>
    %1042 = vector.extract_strided_slice %1027 {offsets = [0, 64], sizes = [32, 32], strides = [1, 1]} : vector<32x96xf32> to vector<32x32xf32>
    %1043 = vector.extract_strided_slice %1031 {offsets = [0, 64], sizes = [32, 32], strides = [1, 1]} : vector<32x96xf32> to vector<32x32xf32>
    %1044 = arith.mulf %1040, %1043 : vector<32x32xf32>
    %1045 = arith.addf %1042, %1044 : vector<32x32xf32>
    %1046 = math.tanh %1045 : vector<32x32xf32>
    %cst_387 = arith.constant 1.000000e+00 : f32
    %1047 = vector.broadcast %cst_387 : f32 to vector<32x32xf32>
    %1048 = arith.subf %1047, %1041 : vector<32x32xf32>
    %1049 = arith.mulf %1048, %1046 : vector<32x32xf32>
    %1050 = arith.mulf %1041, %986 : vector<32x32xf32>
    %1051 = arith.addf %1049, %1050 : vector<32x32xf32>
    %1052 = vector.shape_cast %880 : vector<8x32xf32> to vector<2x4x32xf32>
    %c0_388 = arith.constant 0 : index
    %c0_389 = arith.constant 0 : index
    %c0_390 = arith.constant 0 : index
    %1053 = vector.load %arg7[%c0_388, %c0_389, %c0_390] : memref<2x4x32xf32, #tpu.memory_space<vmem>>, vector<2x4x32xf32>
    tpu.vector_store %arg7[%c0_388, %c0_389, %c0_390], %1052 {strides = array<i32>} : memref<2x4x32xf32, #tpu.memory_space<vmem>>, vector<2x4x32xf32>,
    %1054 = vector.shape_cast %1051 : vector<32x32xf32> to vector<2x16x32xf32>
    %c0_391 = arith.constant 0 : index
    %c0_392 = arith.constant 0 : index
    %c0_393 = arith.constant 0 : index
    %1055 = vector.load %arg8[%c0_391, %c0_392, %c0_393] : memref<2x16x32xf32, #tpu.memory_space<vmem>>, vector<2x16x32xf32>
    tpu.vector_store %arg8[%c0_391, %c0_392, %c0_393], %1054 {strides = array<i32>} : memref<2x16x32xf32, #tpu.memory_space<vmem>>, vector<2x16x32xf32>,
    return
  }
  func.func @transform_0(%arg0: i32) -> (i32, i32, i32) {
    %c0_i32 = arith.constant 0 : i32
    %c0_i32_0 = arith.constant 0 : i32
    %c0_i32_1 = arith.constant 0 : i32
    return %arg0, %c0_i32, %c0_i32_0 : i32, i32, i32
  }
  func.func @transform_1(%arg0: i32) -> (i32, i32, i32) {
    %c0_i32 = arith.constant 0 : i32
    %c0_i32_0 = arith.constant 0 : i32
    %c0_i32_1 = arith.constant 0 : i32
    return %arg0, %c0_i32, %c0_i32_0 : i32, i32, i32
  }
  func.func @transform_2(%arg0: i32) -> (i32, i32) {
    %c0_i32 = arith.constant 0 : i32
    %c0_i32_0 = arith.constant 0 : i32
    %c0_i32_1 = arith.constant 0 : i32
    return %c0_i32, %c0_i32_0 : i32, i32
  }
  func.func @transform_3(%arg0: i32) -> (i32, i32) {
    %c0_i32 = arith.constant 0 : i32
    %c0_i32_0 = arith.constant 0 : i32
    %c0_i32_1 = arith.constant 0 : i32
    return %c0_i32, %c0_i32_0 : i32, i32
  }
  func.func @transform_4(%arg0: i32) -> (i32, i32) {
    %c0_i32 = arith.constant 0 : i32
    %c0_i32_0 = arith.constant 0 : i32
    %c0_i32_1 = arith.constant 0 : i32
    return %c0_i32, %c0_i32_0 : i32, i32
  }
  func.func @transform_5(%arg0: i32) -> (i32, i32) {
    %c0_i32 = arith.constant 0 : i32
    %c0_i32_0 = arith.constant 0 : i32
    %c0_i32_1 = arith.constant 0 : i32
    return %c0_i32, %c0_i32_0 : i32, i32
  }
  func.func @transform_6(%arg0: i32) -> (i32, i32, i32) {
    %c0_i32 = arith.constant 0 : i32
    %c0_i32_0 = arith.constant 0 : i32
    %c0_i32_1 = arith.constant 0 : i32
    return %arg0, %c0_i32, %c0_i32_0 : i32, i32, i32
  }
  func.func @transform_7(%arg0: i32) -> (i32, i32, i32) {
    %c0_i32 = arith.constant 0 : i32
    %c0_i32_0 = arith.constant 0 : i32
    %c0_i32_1 = arith.constant 0 : i32
    return %arg0, %c0_i32, %c0_i32_0 : i32, i32, i32
  }
}

</mosaic_0001>

<llo_original>
// kernel: tpu_custom_call.1
$region0: #{tpu_custom_call.1}
  #allocation0 [shape = 'u32[]', space=smem, size = 0x4, offset = 0x4, fixed_abs, tag = 'smem constant byte address 0x4 - core index']
  #allocation1 [shape = 'u32[144,128]{1,0:T(1,128)}', space=vmem, size = 0x12000, scoped, tag = 'internal scratch']
  %s0 = inlined_call_operand.hbm [shape: f32[2,16,32], index: 0, kind: input, shape index: {}]
  %s1 = inlined_call_operand.hbm [shape: f32[2,4,32], index: 1, kind: input, shape index: {}]
  %s2 = inlined_call_operand.hbm [shape: f32[32,512], index: 2, kind: input, shape index: {}]
  %s3 = inlined_call_operand.hbm [shape: f32[64,256], index: 3, kind: input, shape index: {}]
  %s4 = inlined_call_operand.hbm [shape: f32[64,1024], index: 4, kind: input, shape index: {}]
  %s5 = inlined_call_operand.hbm [shape: f32[1,3584], index: 5, kind: input, shape index: {}]
  %s6 = inlined_call_operand.hbm [shape: f32[2,4,32], index: 6, kind: output, shape index: {0}]
  %s7 = inlined_call_operand.hbm [shape: f32[2,16,32], index: 7, kind: output, shape index: {1}]
  %8 = xla_tuple %s6, %s7
  %s9 = sld [smem:[#allocation0]]
  $region66: #{tpu_custom_call.1} parent=0
    _
  %s11 = ssub.s32 1, %s9
  %s12 = scalar_select 0, %s11, %s9
  $region1: #{tpu_custom_call.1} parent=0
    #allocation2 [shape = 'u8[16384]{0}', space=vmem, size = 0x4000, scoped, tag = 'input window, operand 0, single buffered']
    #allocation3 [shape = 's32[1]{0}', space=sflag, size = 0x4, scoped, tag = 'scoped memory for tpu_custom_call.1']
    #allocation4 [shape = 's32[1]{0}', space=sflag, size = 0x4, scoped, tag = 'scoped memory for tpu_custom_call.1']
    #allocation5 [shape = 'u8[4096]{0}', space=vmem, size = 0x1000, scoped, tag = 'input window, operand 1, single buffered']
    #allocation6 [shape = 's32[1]{0}', space=sflag, size = 0x4, scoped, tag = 'scoped memory for tpu_custom_call.1']
    #allocation7 [shape = 'u8[65536]{0}', space=vmem, size = 0x10000, scoped, tag = 'input window, operand 2, single buffered']
    #allocation8 [shape = 'u8[65536]{0}', space=vmem, size = 0x10000, scoped, tag = 'input window, operand 3, single buffered']
    #allocation9 [shape = 's32[1]{0}', space=sflag, size = 0x4, scoped, tag = 'scoped memory for tpu_custom_call.1']
    #allocation10 [shape = 'u8[262144]{0}', space=vmem, size = 0x40000, scoped, tag = 'input window, operand 4, single buffered']
    #allocation11 [shape = 'u8[14336]{0}', space=vmem, size = 0x3800, scoped, tag = 'input window, operand 5, single buffered']
    #allocation12 [shape = 's32[1]{0}', space=sflag, size = 0x4, scoped, tag = 'scoped memory for tpu_custom_call.1']
    #allocation13 [shape = 'u8[4096]{0}', space=vmem, size = 0x1000, scoped, tag = 'output window, operand 0, single buffered']
    #allocation14 [shape = 'u8[16384]{0}', space=vmem, size = 0x4000, scoped, tag = 'output window, operand 1, single buffered']
    #allocation15 [shape = 's32[1]{0}', space=sflag, size = 0x4, scoped, tag = 'scoped memory for tpu_custom_call.1']
    %13 = vsyncpa [#allocation3], 0
    %14 = vsyncpa [#allocation6], 0
    %15 = vsyncpa [#allocation9], 0
    %16 = vsyncpa [#allocation12], 0
    %17 = vsyncpa [#allocation4], 0
    %18 = vsyncpa [#allocation15], 0
    // Predicated region
    $region2: #{tpu_custom_call.1} parent=1 // pred_check
      _
    $region3: #{tpu_custom_call.1} parent=1 // pred_check_branch
      %20 = sbr.rel (0) target = $region5
    $region4: #{tpu_custom_call.1} parent=1 // pred_region
      %s22 = ssub.s32 512, 512
      %23 = vsyncadd [#allocation3], %s22
      %s24 = sshll.u32 [#allocation2], 4
      %s25 = int_to_ptr.vmem [resolvable:$true] %s24
      %30 = dma.hbm_to_vmem [thread:$0]  %s0, 512, %s25, [#allocation3], 128, 128, 8
    $region5: #{tpu_custom_call.1} parent=1 // pred_fallthru
      _
    // Predicated region
    $region6: #{tpu_custom_call.1} parent=1 // pred_check
      _
    $region7: #{tpu_custom_call.1} parent=1 // pred_check_branch
      %32 = sbr.rel (0) target = $region9
    $region8: #{tpu_custom_call.1} parent=1 // pred_region
      %s34 = ssub.s32 128, 128
      %35 = vsyncadd [#allocation6], %s34
      %s36 = sshll.u32 [#allocation5], 4
      %s37 = int_to_ptr.vmem [resolvable:$true] %s36
      %42 = dma.hbm_to_vmem [thread:$0]  %s1, 128, %s37, [#allocation6], 64, 64, 4
    $region9: #{tpu_custom_call.1} parent=1 // pred_fallthru
      _
    // Predicated region
    $region10: #{tpu_custom_call.1} parent=1 // pred_check
      _
    $region11: #{tpu_custom_call.1} parent=1 // pred_check_branch
      %44 = sbr.rel (0) target = $region13
    $region12: #{tpu_custom_call.1} parent=1 // pred_region
      %s46 = ssub.s32 2048, 2048
      %47 = vsyncadd [#allocation6], %s46
      %s48 = sshll.u32 [#allocation7], 4
      %s49 = int_to_ptr.vmem [resolvable:$true] %s48
      %54 = dma.hbm_to_vmem [thread:$0]  %s2, 2048, %s49, [#allocation6], 512, 512, 32
    $region13: #{tpu_custom_call.1} parent=1 // pred_fallthru
      _
    // Predicated region
    $region14: #{tpu_custom_call.1} parent=1 // pred_check
      _
    $region15: #{tpu_custom_call.1} parent=1 // pred_check_branch
      %56 = sbr.rel (0) target = $region17
    $region16: #{tpu_custom_call.1} parent=1 // pred_region
      %s58 = ssub.s32 2048, 2048
      %59 = vsyncadd [#allocation9], %s58
      %s60 = sshll.u32 [#allocation8], 4
      %s61 = int_to_ptr.vmem [resolvable:$true] %s60
      %66 = dma.hbm_to_vmem [thread:$0]  %s3, 2048, %s61, [#allocation9], 256, 256, 16
    $region17: #{tpu_custom_call.1} parent=1 // pred_fallthru
      _
    // Predicated region
    $region18: #{tpu_custom_call.1} parent=1 // pred_check
      _
    $region19: #{tpu_custom_call.1} parent=1 // pred_check_branch
      %68 = sbr.rel (0) target = $region21
    $region20: #{tpu_custom_call.1} parent=1 // pred_region
      %s70 = ssub.s32 8192, 8192
      %71 = vsyncadd [#allocation9], %s70
      %s72 = sshll.u32 [#allocation10], 4
      %s73 = int_to_ptr.vmem [resolvable:$true] %s72
      %78 = dma.hbm_to_vmem [thread:$0]  %s4, 8192, %s73, [#allocation9], 1024, 1024, 64
    $region21: #{tpu_custom_call.1} parent=1 // pred_fallthru
      _
    // Predicated region
    $region22: #{tpu_custom_call.1} parent=1 // pred_check
      _
    $region23: #{tpu_custom_call.1} parent=1 // pred_check_branch
      %80 = sbr.rel (0) target = $region25
    $region24: #{tpu_custom_call.1} parent=1 // pred_region
      %s82 = ssub.s32 448, 448
      %83 = vsyncadd [#allocation12], %s82
      %s85 = sshll.u32 [#allocation11], 4
      %s86 = int_to_ptr.vmem [resolvable:$true] %s85
      %88 = dma.hbm_to_vmem [thread:$0]  %s5, 448, %s86, [#allocation12]
    $region25: #{tpu_custom_call.1} parent=1 // pred_fallthru
      _
    // Predicated region
    $region26: #{tpu_custom_call.1} parent=1 // pred_check
      _
    $region27: #{tpu_custom_call.1} parent=1 // pred_check_branch
      %90 = sbr.rel (0) target = $region29
    $region28: #{tpu_custom_call.1} parent=1 // pred_region
      %91 = dma.done [#allocation3], 512
    $region29: #{tpu_custom_call.1} parent=1 // pred_fallthru
      _
    // Predicated region
    $region30: #{tpu_custom_call.1} parent=1 // pred_check
      _
    $region31: #{tpu_custom_call.1} parent=1 // pred_check_branch
      %93 = sbr.rel (0) target = $region33
    $region32: #{tpu_custom_call.1} parent=1 // pred_region
      %94 = dma.done [#allocation6], 128
    $region33: #{tpu_custom_call.1} parent=1 // pred_fallthru
      _
    // Predicated region
    $region34: #{tpu_custom_call.1} parent=1 // pred_check
      _
    $region35: #{tpu_custom_call.1} parent=1 // pred_check_branch
      %96 = sbr.rel (0) target = $region37
    $region36: #{tpu_custom_call.1} parent=1 // pred_region
      %97 = dma.done [#allocation6], 2048
    $region37: #{tpu_custom_call.1} parent=1 // pred_fallthru
      _
    // Predicated region
    $region38: #{tpu_custom_call.1} parent=1 // pred_check
      _
    $region39: #{tpu_custom_call.1} parent=1 // pred_check_branch
      %99 = sbr.rel (0) target = $region41
    $region40: #{tpu_custom_call.1} parent=1 // pred_region
      %100 = dma.done [#allocation9], 2048
    $region41: #{tpu_custom_call.1} parent=1 // pred_fallthru
      _
    // Predicated region
    $region42: #{tpu_custom_call.1} parent=1 // pred_check
      _
    $region43: #{tpu_custom_call.1} parent=1 // pred_check_branch
      %102 = sbr.rel (0) target = $region45
    $region44: #{tpu_custom_call.1} parent=1 // pred_region
      %103 = dma.done [#allocation9], 8192
    $region45: #{tpu_custom_call.1} parent=1 // pred_fallthru
      _
    // Predicated region
    $region46: #{tpu_custom_call.1} parent=1 // pred_check
      _
    $region47: #{tpu_custom_call.1} parent=1 // pred_check_branch
      %105 = sbr.rel (0) target = $region49
    $region48: #{tpu_custom_call.1} parent=1 // pred_region
      %106 = dma.done [#allocation12], 448
    $region49: #{tpu_custom_call.1} parent=1 // pred_fallthru
      _
    %v107 = vld [vmem:[#allocation2] sm:$0xff]
    %v108 = vld [vmem:[#allocation2 + $0x8] sm:$0xff]
    %v109 = vld [vmem:[#allocation2 + $0x10] sm:$0xff]
    %v110 = vld [vmem:[#allocation2 + $0x18] sm:$0xff]
    %v111 = vld [vmem:[#allocation5] sm:$0xf]
    %v112 = vld [vmem:[#allocation5 + $0x4] sm:$0xf]
    %v113 = vld [vmem:[#allocation11] sm:$0x1]
    %v114 = vld [vmem:[#allocation11 + $0x1] sm:$0x1]
    %vm115 = vcmask 261120
    %v116 = vsel %vm115, %v107, 0.0
    %117 = vadd.xlane.f32.xlu0 %v116
    %v118 = vpop.xlane.xlu0 %117
    %v119 = vsel %vm115, %v108, 0.0
    %120 = vadd.xlane.f32.xlu0 %v119
    %v121 = vpop.xlane.xlu0 %120
    %v122 = vsel %vm115, %v109, 0.0
    %123 = vadd.xlane.f32.xlu0 %v122
    %v124 = vpop.xlane.xlu0 %123
    %v125 = vsel %vm115, %v110, 0.0
    %126 = vadd.xlane.f32.xlu0 %v125
    %v127 = vpop.xlane.xlu0 %126
    %v128 = vrcp.pop 32.0
    %v129 = vmul.f32 %v118, %v128
    %v130 = vmul.f32 %v121, %v128
    %v131 = vmul.f32 %v124, %v128
    %v132 = vmul.f32 %v127, %v128
    %v133 = vsub.f32 %v107, %v129
    %v134 = vsub.f32 %v108, %v130
    %v135 = vsub.f32 %v109, %v131
    %v136 = vsub.f32 %v110, %v132
    %v137 = vmul.f32 %v133, %v133
    %v138 = vmul.f32 %v134, %v134
    %v139 = vmul.f32 %v135, %v135
    %v140 = vmul.f32 %v136, %v136
    %v141 = vsel %vm115, %v137, 0.0
    %142 = vadd.xlane.f32.xlu0 %v141
    %v143 = vpop.xlane.xlu0 %142
    %v144 = vsel %vm115, %v138, 0.0
    %145 = vadd.xlane.f32.xlu0 %v144
    %v146 = vpop.xlane.xlu0 %145
    %v147 = vsel %vm115, %v139, 0.0
    %148 = vadd.xlane.f32.xlu0 %v147
    %v149 = vpop.xlane.xlu0 %148
    %v150 = vsel %vm115, %v140, 0.0
    %151 = vadd.xlane.f32.xlu0 %v150
    %v152 = vpop.xlane.xlu0 %151
    %v153 = vmul.f32 %v143, %v128
    %v154 = vmul.f32 %v146, %v128
    %v155 = vmul.f32 %v149, %v128
    %v156 = vmul.f32 %v152, %v128
    %v157 = vadd.f32 %v153, 1e-05
    %v158 = vadd.f32 %v154, 1e-05
    %v159 = vadd.f32 %v155, 1e-05
    %v160 = vadd.f32 %v156, 1e-05
    %v161 = vrsqrt.pop %v157
    %v162 = vrsqrt.pop %v158
    %v163 = vrsqrt.pop %v159
    %v164 = vrsqrt.pop %v160
    %v165 = vmul.f32 %v133, %v161
    %v166 = vmul.f32 %v134, %v162
    %v167 = vmul.f32 %v135, %v163
    %v168 = vmul.f32 %v136, %v164
    %v170 = vlaneseq
    %v171 = vshrl.u32 %v170, 7
    %v172 = vsub.s32 0, %v171
    %v173 = vrot.slane %v113, %v172
    %v175 = vmul.f32 %v165, %v173
    %v176 = vmul.f32 %v166, %v173
    %v177 = vmul.f32 %v167, %v173
    %v178 = vmul.f32 %v168, %v173
    %v180 = vlaneseq
    %v181 = vshrl.u32 %v180, 7
    %v182 = vsub.s32 0, %v181
    %v183 = vrot.slane %v114, %v182
    %v185 = vadd.f32 %v175, %v183
    %v186 = vadd.f32 %v176, %v183
    %v187 = vadd.f32 %v177, %v183
    %v188 = vadd.f32 %v178, %v183
    %v189 = vld [vmem:[#allocation11 + $0x2] sm:$0x1]
    %v190 = vld [vmem:[#allocation11 + $0x3] sm:$0x1]
    %v193 = vcombine.low %v111, %v112
    %v195 = vsel %vm115, %v193, 0.0
    %196 = vadd.xlane.f32.xlu0 %v195
    %v197 = vpop.xlane.xlu0 %196
    %v198 = vmul.f32 %v197, %v128
    %v201 = vunpack.c.l.s4 839922192
    %v202 = vunpack.c.0.s8 %v201
    %v203 = vlaneseq
    %v204 = vshrl.u32 %v203, 7
    %v205 = vsub.s32 %v202, %v204
    %v206 = vrot.slane %v198, %v205
    %v208 = vunpack.c.l.s4 1985246804
    %v209 = vunpack.c.0.s8 %v208
    %v210 = vlaneseq
    %v211 = vshrl.u32 %v210, 7
    %v212 = vsub.s32 %v209, %v211
    %v213 = vrot.slane %v198, %v212
    %v216 = vsub.f32 %v111, %v206
    %v217 = vsub.f32 %v112, %v213
    %v218 = vmul.f32 %v216, %v216
    %v219 = vmul.f32 %v217, %v217
    %v222 = vcombine.low %v218, %v219
    %v224 = vsel %vm115, %v222, 0.0
    %225 = vadd.xlane.f32.xlu0 %v224
    %v226 = vpop.xlane.xlu0 %225
    %v227 = vmul.f32 %v226, %v128
    %v228 = vadd.f32 %v227, 1e-05
    %v229 = vrsqrt.pop %v228
    %v232 = vunpack.c.l.s4 839922192
    %v233 = vunpack.c.0.s8 %v232
    %v234 = vlaneseq
    %v235 = vshrl.u32 %v234, 7
    %v236 = vsub.s32 %v233, %v235
    %v237 = vrot.slane %v229, %v236
    %v239 = vunpack.c.l.s4 1985246804
    %v240 = vunpack.c.0.s8 %v239
    %v241 = vlaneseq
    %v242 = vshrl.u32 %v241, 7
    %v243 = vsub.s32 %v240, %v242
    %v244 = vrot.slane %v229, %v243
    %v247 = vmul.f32 %v216, %v237
    %v248 = vmul.f32 %v217, %v244
    %v250 = vlaneseq
    %v251 = vshrl.u32 %v250, 7
    %v252 = vsub.s32 0, %v251
    %v253 = vrot.slane %v189, %v252
    %v255 = vcombine.high %v253, %v253
    %v257 = vmul.f32 %v247, %v253
    %v258 = vmul.f32 %v248, %v255
    %v260 = vlaneseq
    %v261 = vshrl.u32 %v260, 7
    %v262 = vsub.s32 0, %v261
    %v263 = vrot.slane %v190, %v262
    %v265 = vcombine.high %v263, %v263
    %v267 = vadd.f32 %v257, %v263
    %v268 = vadd.f32 %v258, %v265
    %v269 = vld [vmem:[#allocation11 + $0x4] sm:$0x1]
    %v270 = vld [vmem:[#allocation11 + $0x5] sm:$0x1]
    %v271 = vsel %vm115, %v185, 0.0
    %272 = vadd.xlane.f32.xlu0 %v271
    %v273 = vpop.xlane.xlu0 %272
    %v274 = vsel %vm115, %v186, 0.0
    %275 = vadd.xlane.f32.xlu0 %v274
    %v276 = vpop.xlane.xlu0 %275
    %v277 = vsel %vm115, %v187, 0.0
    %278 = vadd.xlane.f32.xlu0 %v277
    %v279 = vpop.xlane.xlu0 %278
    %v280 = vsel %vm115, %v188, 0.0
    %281 = vadd.xlane.f32.xlu0 %v280
    %v282 = vpop.xlane.xlu0 %281
    %v283 = vmul.f32 %v273, %v128
    %v284 = vmul.f32 %v276, %v128
    %v285 = vmul.f32 %v279, %v128
    %v286 = vmul.f32 %v282, %v128
    %v287 = vsub.f32 %v185, %v283
    %v288 = vsub.f32 %v186, %v284
    %v289 = vsub.f32 %v187, %v285
    %v290 = vsub.f32 %v188, %v286
    %v291 = vmul.f32 %v287, %v287
    %v292 = vmul.f32 %v288, %v288
    %v293 = vmul.f32 %v289, %v289
    %v294 = vmul.f32 %v290, %v290
    %v295 = vsel %vm115, %v291, 0.0
    %296 = vadd.xlane.f32.xlu0 %v295
    %v297 = vpop.xlane.xlu0 %296
    %v298 = vsel %vm115, %v292, 0.0
    %299 = vadd.xlane.f32.xlu0 %v298
    %v300 = vpop.xlane.xlu0 %299
    %v301 = vsel %vm115, %v293, 0.0
    %302 = vadd.xlane.f32.xlu0 %v301
    %v303 = vpop.xlane.xlu0 %302
    %v304 = vsel %vm115, %v294, 0.0
    %305 = vadd.xlane.f32.xlu0 %v304
    %v306 = vpop.xlane.xlu0 %305
    %v307 = vmul.f32 %v297, %v128
    %v308 = vmul.f32 %v300, %v128
    %v309 = vmul.f32 %v303, %v128
    %v310 = vmul.f32 %v306, %v128
    %v311 = vadd.f32 %v307, 1e-05
    %v312 = vadd.f32 %v308, 1e-05
    %v313 = vadd.f32 %v309, 1e-05
    %v314 = vadd.f32 %v310, 1e-05
    %v315 = vrsqrt.pop %v311
    %v316 = vrsqrt.pop %v312
    %v317 = vrsqrt.pop %v313
    %v318 = vrsqrt.pop %v314
    %v319 = vmul.f32 %v287, %v315
    %v320 = vmul.f32 %v288, %v316
    %v321 = vmul.f32 %v289, %v317
    %v322 = vmul.f32 %v290, %v318
    %v324 = vlaneseq
    %v325 = vshrl.u32 %v324, 7
    %v326 = vsub.s32 0, %v325
    %v327 = vrot.slane %v269, %v326
    %v329 = vmul.f32 %v319, %v327
    %v330 = vmul.f32 %v320, %v327
    %v331 = vmul.f32 %v321, %v327
    %v332 = vmul.f32 %v322, %v327
    %v334 = vlaneseq
    %v335 = vshrl.u32 %v334, 7
    %v336 = vsub.s32 0, %v335
    %v337 = vrot.slane %v270, %v336
    %v339 = vadd.f32 %v329, %v337
    %v340 = vadd.f32 %v330, %v337
    %v341 = vadd.f32 %v331, %v337
    %v342 = vadd.f32 %v332, %v337
    %v345 = vcombine.low %v267, %v268
    %v346 = vld [vmem:[#allocation7] sm:$0xff]
    %v347 = vld [vmem:[#allocation7 + $0x20] sm:$0xff]
    %v348 = vld [vmem:[#allocation7 + $0x40] sm:$0xff]
    %v349 = vld [vmem:[#allocation7 + $0x60] sm:$0xff]
    %v350 = vld [vmem:[#allocation11 + $0x6] sm:$0x1]
    %v352 = vlaneseq
    %v353 = vshrl.u32 %v352, 7
    %v354 = vsub.s32 0, %v353
    %v355 = vrot.slane %v350, %v354
    %v357 = vsel %vm115, %v345, 0
    %v360 = vsel %vm115, %v339, 0
    %v363 = vsel %vm115, %v340, 0
    %v366 = vsel %vm115, %v341, 0
    %v369 = vsel %vm115, %v342, 0
    %371 = vmatprep.subr.mxu0 0.0
    %372 = vmatpush1.msra.mxu0 %v346
    %373 = vmatprep.subr.mxu0 0.0
    %374 = vmatpush1.msra.mxu0 %v347
    %375 = vmatprep.subr.mxu0 0.0
    %376 = vmatpush1.msra.mxu0 %v348
    %377 = vmatprep.subr.mxu0 0.0
    %378 = vmatpush1.msra.mxu0 %v349
    %379 = vmatprep.subr.mxu0 0.0
    %380 = vmatpush1.msra.mxu0 0.0
    %381 = vmatprep.subr.mxu0 0.0
    %382 = vmatpush1.msra.mxu0 0.0
    %383 = vmatprep.subr.mxu0 0.0
    %384 = vmatpush1.msra.mxu0 0.0
    %385 = vmatprep.subr.mxu0 0.0
    %386 = vmatpush1.msra.mxu0 0.0
    %387 = vmatprep.subr.mxu0 0.0
    %388 = vmatpush1.msra.mxu0 0.0
    %389 = vmatprep.subr.mxu0 0.0
    %390 = vmatpush1.msra.mxu0 0.0
    %391 = vmatprep.subr.mxu0 0.0
    %392 = vmatpush1.msra.mxu0 0.0
    %393 = vmatprep.subr.mxu0 0.0
    %394 = vmatpush1.msra.mxu0 0.0
    %395 = vmatprep.subr.mxu0 0.0
    %396 = vmatpush1.msra.mxu0 0.0
    %397 = vmatprep.subr.mxu0 0.0
    %398 = vmatpush1.msra.mxu0 0.0
    %399 = vmatprep.subr.mxu0 0.0
    %400 = vmatpush1.msra.mxu0 0.0
    %401 = vmatprep.subr.mxu0 0.0
    %402 = vmatpush1.msra.mxu0 0.0
    %403 = vmatprep.subr.mxu0 0.0
    %404 = vmatpush1.msra.mxu0 0.0
    %405 = vmatprep.subr.mxu0 0.0
    %406 = vmatpush1.msra.mxu0 0.0
    %407 = vmatprep.subr.mxu0 0.0
    %408 = vmatpush1.msra.mxu0 0.0
    %409 = vmatprep.subr.mxu0 0.0
    %410 = vmatpush1.msra.mxu0 0.0
    %411 = vmatprep.subr.mxu0 0.0
    %412 = vmatpush1.msra.mxu0 0.0
    %413 = vmatprep.subr.mxu0 0.0
    %414 = vmatpush1.msra.mxu0 0.0
    %415 = vmatprep.subr.mxu0 0.0
    %416 = vmatpush1.msra.mxu0 0.0
    %417 = vmatprep.subr.mxu0 0.0
    %418 = vmatpush1.msra.mxu0 0.0
    %419 = vmatprep.subr.mxu0 0.0
    %420 = vmatpush1.msra.mxu0 0.0
    %421 = vmatprep.subr.mxu0 0.0
    %422 = vmatpush1.msra.mxu0 0.0
    %423 = vmatprep.subr.mxu0 0.0
    %424 = vmatpush1.msra.mxu0 0.0
    %425 = vmatprep.subr.mxu0 0.0
    %426 = vmatpush1.msra.mxu0 0.0
    %427 = vmatprep.subr.mxu0 0.0
    %428 = vmatpush1.msra.mxu0 0.0
    %429 = vmatprep.subr.mxu0 0.0
    %430 = vmatpush1.msra.mxu0 0.0
    %431 = vmatprep.subr.mxu0 0.0
    %432 = vmatpush1.msra.mxu0 0.0
    %433 = vmatprep.subr.mxu0 0.0
    %434 = vmatpush1.msra.mxu0 0.0
    %435 = vmatprep.mubr.f32.mxu0 0.0
    %436 = vmatmul.mubr.f32.gmra.mrb[0].mxu0 %v357
    %v437 = vpop.f32.mrb[0].mxu0
    %v438 = vadd.f32 %v355, %v437
    %v439 = vpop.f32.mrb[0].mxu0
    %440 = vmatprep.mubr.f32.mxu0 0.0
    %441 = vmatmul.mubr.f32.gmra.mrb[0].mxu0 %v360
    %v442 = vpop.f32.mrb[0].mxu0
    %v443 = vadd.f32 %v355, %v442
    %v444 = vpop.f32.mrb[0].mxu0
    %445 = vmatprep.mubr.f32.mxu0 0.0
    %446 = vmatmul.mubr.f32.gmra.mrb[0].mxu0 %v363
    %v447 = vpop.f32.mrb[0].mxu0
    %v448 = vadd.f32 %v355, %v447
    %v449 = vpop.f32.mrb[0].mxu0
    %450 = vmatprep.mubr.f32.mxu0 0.0
    %451 = vmatmul.mubr.f32.gmra.mrb[0].mxu0 %v366
    %v452 = vpop.f32.mrb[0].mxu0
    %v453 = vadd.f32 %v355, %v452
    %v454 = vpop.f32.mrb[0].mxu0
    %455 = vmatprep.mubr.f32.mxu0 0.0
    %456 = vmatmul.mubr.f32.gmra.mrb[0].mxu0 %v369
    %v457 = vpop.f32.mrb[0].mxu0
    %v458 = vadd.f32 %v355, %v457
    %v459 = vpop.f32.mrb[0].mxu0
    %460 = vdwg.mxu0
    %v462 = vcombine.high %v438, %v438
    %465 = vrot.lane.b32.xlu0 %v443, 96
    %v466 = vpop.permute.xlu0 %465
    %467 = vrot.lane.b32.xlu0 %v448, 96
    %v468 = vpop.permute.xlu0 %467
    %v469 = vsel %vm115, %v438, 0
    %v471 = vsel %vm115, %v466, 0
    %v473 = vsel %vm115, %v468, 0
    %475 = vmatprep.subr.mxu0 0.0
    %476 = vmatpush1.xpose.msra.mxu0 %v471
    %477 = vmatprep.subr.mxu0 0.0
    %478 = vmatpush1.xpose.msra.mxu0 %v473
    %479 = vmatprep.subr.mxu0 0.0
    %480 = vmatpush1.xpose.msra.mxu0 0.0
    %481 = vmatprep.subr.mxu0 0.0
    %482 = vmatpush1.xpose.msra.mxu0 0.0
    %483 = vmatprep.subr.mxu0 0.0
    %484 = vmatpush1.xpose.msra.mxu0 0.0
    %485 = vmatprep.subr.mxu0 0.0
    %486 = vmatpush1.xpose.msra.mxu0 0.0
    %487 = vmatprep.subr.mxu0 0.0
    %488 = vmatpush1.xpose.msra.mxu0 0.0
    %489 = vmatprep.subr.mxu0 0.0
    %490 = vmatpush1.xpose.msra.mxu0 0.0
    %491 = vmatprep.subr.mxu0 0.0
    %492 = vmatpush1.xpose.msra.mxu0 0.0
    %493 = vmatprep.subr.mxu0 0.0
    %494 = vmatpush1.xpose.msra.mxu0 0.0
    %495 = vmatprep.subr.mxu0 0.0
    %496 = vmatpush1.xpose.msra.mxu0 0.0
    %497 = vmatprep.subr.mxu0 0.0
    %498 = vmatpush1.xpose.msra.mxu0 0.0
    %499 = vmatprep.subr.mxu0 0.0
    %500 = vmatpush1.xpose.msra.mxu0 0.0
    %501 = vmatprep.subr.mxu0 0.0
    %502 = vmatpush1.xpose.msra.mxu0 0.0
    %503 = vmatprep.subr.mxu0 0.0
    %504 = vmatpush1.xpose.msra.mxu0 0.0
    %505 = vmatprep.subr.mxu0 0.0
    %506 = vmatpush1.xpose.msra.mxu0 0.0
    %507 = vmatprep.subr.mxu0 0.0
    %508 = vmatpush1.xpose.msra.mxu0 0.0
    %509 = vmatprep.subr.mxu0 0.0
    %510 = vmatpush1.xpose.msra.mxu0 0.0
    %511 = vmatprep.subr.mxu0 0.0
    %512 = vmatpush1.xpose.msra.mxu0 0.0
    %513 = vmatprep.subr.mxu0 0.0
    %514 = vmatpush1.xpose.msra.mxu0 0.0
    %515 = vmatprep.subr.mxu0 0.0
    %516 = vmatpush1.xpose.msra.mxu0 0.0
    %517 = vmatprep.subr.mxu0 0.0
    %518 = vmatpush1.xpose.msra.mxu0 0.0
    %519 = vmatprep.subr.mxu0 0.0
    %520 = vmatpush1.xpose.msra.mxu0 0.0
    %521 = vmatprep.subr.mxu0 0.0
    %522 = vmatpush1.xpose.msra.mxu0 0.0
    %523 = vmatprep.subr.mxu0 0.0
    %524 = vmatpush1.xpose.msra.mxu0 0.0
    %525 = vmatprep.subr.mxu0 0.0
    %526 = vmatpush1.xpose.msra.mxu0 0.0
    %527 = vmatprep.subr.mxu0 0.0
    %528 = vmatpush1.xpose.msra.mxu0 0.0
    %529 = vmatprep.subr.mxu0 0.0
    %530 = vmatpush1.xpose.msra.mxu0 0.0
    %531 = vmatprep.subr.mxu0 0.0
    %532 = vmatpush1.xpose.msra.mxu0 0.0
    %533 = vmatprep.subr.mxu0 0.0
    %534 = vmatpush1.xpose.msra.mxu0 0.0
    %535 = vmatprep.subr.mxu0 0.0
    %536 = vmatpush1.xpose.msra.mxu0 0.0
    %537 = vmatprep.subr.mxu0 0.0
    %538 = vmatpush1.xpose.msra.mxu0 0.0
    %539 = vmatprep.mubr.f32.mxu0 0.0
    %540 = vmatmul.mubr.f32.gmra.mrb[0].mxu0 %v469
    %v541 = vpop.f32.mrb[0].mxu0
    %v542 = vadd.f32 0.0, %v541
    %v543 = vpop.f32.mrb[0].mxu0
    %544 = vdwg.mxu0
    %547 = vrot.lane.b32.xlu0 %v453, 96
    %v548 = vpop.permute.xlu0 %547
    %549 = vrot.lane.b32.xlu0 %v458, 96
    %v550 = vpop.permute.xlu0 %549
    %v551 = vsel %vm115, %v462, 0
    %v553 = vsel %vm115, %v548, 0
    %v555 = vsel %vm115, %v550, 0
    %557 = vmatprep.subr.mxu0 0.0
    %558 = vmatpush1.xpose.msra.mxu0 %v553
    %559 = vmatprep.subr.mxu0 0.0
    %560 = vmatpush1.xpose.msra.mxu0 %v555
    %561 = vmatprep.subr.mxu0 0.0
    %562 = vmatpush1.xpose.msra.mxu0 0.0
    %563 = vmatprep.subr.mxu0 0.0
    %564 = vmatpush1.xpose.msra.mxu0 0.0
    %565 = vmatprep.subr.mxu0 0.0
    %566 = vmatpush1.xpose.msra.mxu0 0.0
    %567 = vmatprep.subr.mxu0 0.0
    %568 = vmatpush1.xpose.msra.mxu0 0.0
    %569 = vmatprep.subr.mxu0 0.0
    %570 = vmatpush1.xpose.msra.mxu0 0.0
    %571 = vmatprep.subr.mxu0 0.0
    %572 = vmatpush1.xpose.msra.mxu0 0.0
    %573 = vmatprep.subr.mxu0 0.0
    %574 = vmatpush1.xpose.msra.mxu0 0.0
    %575 = vmatprep.subr.mxu0 0.0
    %576 = vmatpush1.xpose.msra.mxu0 0.0
    %577 = vmatprep.subr.mxu0 0.0
    %578 = vmatpush1.xpose.msra.mxu0 0.0
    %579 = vmatprep.subr.mxu0 0.0
    %580 = vmatpush1.xpose.msra.mxu0 0.0
    %581 = vmatprep.subr.mxu0 0.0
    %582 = vmatpush1.xpose.msra.mxu0 0.0
    %583 = vmatprep.subr.mxu0 0.0
    %584 = vmatpush1.xpose.msra.mxu0 0.0
    %585 = vmatprep.subr.mxu0 0.0
    %586 = vmatpush1.xpose.msra.mxu0 0.0
    %587 = vmatprep.subr.mxu0 0.0
    %588 = vmatpush1.xpose.msra.mxu0 0.0
    %589 = vmatprep.subr.mxu0 0.0
    %590 = vmatpush1.xpose.msra.mxu0 0.0
    %591 = vmatprep.subr.mxu0 0.0
    %592 = vmatpush1.xpose.msra.mxu0 0.0
    %593 = vmatprep.subr.mxu0 0.0
    %594 = vmatpush1.xpose.msra.mxu0 0.0
    %595 = vmatprep.subr.mxu0 0.0
    %596 = vmatpush1.xpose.msra.mxu0 0.0
    %597 = vmatprep.subr.mxu0 0.0
    %598 = vmatpush1.xpose.msra.mxu0 0.0
    %599 = vmatprep.subr.mxu0 0.0
    %600 = vmatpush1.xpose.msra.mxu0 0.0
    %601 = vmatprep.subr.mxu0 0.0
    %602 = vmatpush1.xpose.msra.mxu0 0.0
    %603 = vmatprep.subr.mxu0 0.0
    %604 = vmatpush1.xpose.msra.mxu0 0.0
    %605 = vmatprep.subr.mxu0 0.0
    %606 = vmatpush1.xpose.msra.mxu0 0.0
    %607 = vmatprep.subr.mxu0 0.0
    %608 = vmatpush1.xpose.msra.mxu0 0.0
    %609 = vmatprep.subr.mxu0 0.0
    %610 = vmatpush1.xpose.msra.mxu0 0.0
    %611 = vmatprep.subr.mxu0 0.0
    %612 = vmatpush1.xpose.msra.mxu0 0.0
    %613 = vmatprep.subr.mxu0 0.0
    %614 = vmatpush1.xpose.msra.mxu0 0.0
    %615 = vmatprep.subr.mxu0 0.0
    %616 = vmatpush1.xpose.msra.mxu0 0.0
    %617 = vmatprep.subr.mxu0 0.0
    %618 = vmatpush1.xpose.msra.mxu0 0.0
    %619 = vmatprep.subr.mxu0 0.0
    %620 = vmatpush1.xpose.msra.mxu0 0.0
    %621 = vmatprep.mubr.f32.mxu0 0.0
    %622 = vmatmul.mubr.f32.gmra.mrb[0].mxu0 %v551
    %v623 = vpop.f32.mrb[0].mxu0
    %v624 = vadd.f32 0.0, %v623
    %v625 = vpop.f32.mrb[0].mxu0
    %626 = vdwg.mxu0
    %vm627 = vcmask 125952
    %v628 = vsel %vm627, %v542, -inf
    %v629 = vrot.slane %v628, 4
    %v630 = vmax.f32 %v628, %v629
    %v631 = vrot.slane %v630, 2
    %v632 = vmax.f32 %v630, %v631
    %v633 = vrot.slane %v632, 1
    %v634 = vmax.f32 %v632, %v633
    %v635 = vsel %vm627, %v624, -inf
    %v636 = vrot.slane %v635, 4
    %v637 = vmax.f32 %v635, %v636
    %v638 = vrot.slane %v637, 2
    %v639 = vmax.f32 %v637, %v638
    %v640 = vrot.slane %v639, 1
    %v641 = vmax.f32 %v639, %v640
    %v642 = vsub.f32 %v542, %v634
    %v643 = vsub.f32 %v624, %v641
    %v644 = vmul.f32 %v642, 1.442695
    %v645 = vpow.pop %v644
    %v646 = vmul.f32 %v643, 1.442695
    %v647 = vpow.pop %v646
    %v648 = vsel %vm627, %v645, 0.0
    %v649 = vrot.slane %v648, 4
    %v650 = vadd.f32 %v648, %v649
    %v651 = vrot.slane %v650, 2
    %v652 = vadd.f32 %v650, %v651
    %v653 = vrot.slane %v652, 1
    %v654 = vadd.f32 %v652, %v653
    %v655 = vsel %vm627, %v647, 0.0
    %v656 = vrot.slane %v655, 4
    %v657 = vadd.f32 %v655, %v656
    %v658 = vrot.slane %v657, 2
    %v659 = vadd.f32 %v657, %v658
    %v660 = vrot.slane %v659, 1
    %v661 = vadd.f32 %v659, %v660
    %v662 = vrcp.pop %v654
    %v663 = vrcp.pop %v661
    %v664 = vmul.f32 %v645, %v662
    %v665 = vmul.f32 %v647, %v663
    %v666 = vadd.f32 %v664, 1e-08
    %v667 = vadd.f32 %v665, 1e-08
    %v668 = vsel %vm627, %v666, 0.0
    %669 = vadd.xlane.f32.xlu0 %v668
    %v670 = vpop.xlane.xlu0 %669
    %v671 = vsel %vm627, %v667, 0.0
    %672 = vadd.xlane.f32.xlu0 %v671
    %v673 = vpop.xlane.xlu0 %672
    %v674 = vrcp.pop %v670
    %v675 = vmul.f32 %v666, %v674
    %v676 = vrcp.pop %v673
    %v677 = vmul.f32 %v667, %v676
    %678 = vrot.lane.b32.xlu0 %v443, 64
    %v679 = vpop.permute.xlu0 %678
    %680 = vrot.lane.b32.xlu0 %v448, 64
    %v681 = vpop.permute.xlu0 %680
    %vm684 = vcmask 130048
    %v686 = vsel %vm684, %v675, 0
    %688 = vmatprep.subr.mxu0 0.0
    %689 = vmatpush1.msra.mxu0 %v679
    %690 = vmatprep.subr.mxu0 0.0
    %691 = vmatpush1.msra.mxu0 %v681
    %692 = vmatprep.subr.mxu0 0.0
    %693 = vmatpush1.msra.mxu0 0.0
    %694 = vmatprep.subr.mxu0 0.0
    %695 = vmatpush1.msra.mxu0 0.0
    %696 = vmatprep.subr.mxu0 0.0
    %697 = vmatpush1.msra.mxu0 0.0
    %698 = vmatprep.subr.mxu0 0.0
    %699 = vmatpush1.msra.mxu0 0.0
    %700 = vmatprep.subr.mxu0 0.0
    %701 = vmatpush1.msra.mxu0 0.0
    %702 = vmatprep.subr.mxu0 0.0
    %703 = vmatpush1.msra.mxu0 0.0
    %704 = vmatprep.subr.mxu0 0.0
    %705 = vmatpush1.msra.mxu0 0.0
    %706 = vmatprep.subr.mxu0 0.0
    %707 = vmatpush1.msra.mxu0 0.0
    %708 = vmatprep.subr.mxu0 0.0
    %709 = vmatpush1.msra.mxu0 0.0
    %710 = vmatprep.subr.mxu0 0.0
    %711 = vmatpush1.msra.mxu0 0.0
    %712 = vmatprep.subr.mxu0 0.0
    %713 = vmatpush1.msra.mxu0 0.0
    %714 = vmatprep.subr.mxu0 0.0
    %715 = vmatpush1.msra.mxu0 0.0
    %716 = vmatprep.subr.mxu0 0.0
    %717 = vmatpush1.msra.mxu0 0.0
    %718 = vmatprep.subr.mxu0 0.0
    %719 = vmatpush1.msra.mxu0 0.0
    %720 = vmatprep.subr.mxu0 0.0
    %721 = vmatpush1.msra.mxu0 0.0
    %722 = vmatprep.subr.mxu0 0.0
    %723 = vmatpush1.msra.mxu0 0.0
    %724 = vmatprep.subr.mxu0 0.0
    %725 = vmatpush1.msra.mxu0 0.0
    %726 = vmatprep.subr.mxu0 0.0
    %727 = vmatpush1.msra.mxu0 0.0
    %728 = vmatprep.subr.mxu0 0.0
    %729 = vmatpush1.msra.mxu0 0.0
    %730 = vmatprep.subr.mxu0 0.0
    %731 = vmatpush1.msra.mxu0 0.0
    %732 = vmatprep.subr.mxu0 0.0
    %733 = vmatpush1.msra.mxu0 0.0
    %734 = vmatprep.subr.mxu0 0.0
    %735 = vmatpush1.msra.mxu0 0.0
    %736 = vmatprep.subr.mxu0 0.0
    %737 = vmatpush1.msra.mxu0 0.0
    %738 = vmatprep.subr.mxu0 0.0
    %739 = vmatpush1.msra.mxu0 0.0
    %740 = vmatprep.subr.mxu0 0.0
    %741 = vmatpush1.msra.mxu0 0.0
    %742 = vmatprep.subr.mxu0 0.0
    %743 = vmatpush1.msra.mxu0 0.0
    %744 = vmatprep.subr.mxu0 0.0
    %745 = vmatpush1.msra.mxu0 0.0
    %746 = vmatprep.subr.mxu0 0.0
    %747 = vmatpush1.msra.mxu0 0.0
    %748 = vmatprep.subr.mxu0 0.0
    %749 = vmatpush1.msra.mxu0 0.0
    %750 = vmatprep.subr.mxu0 0.0
    %751 = vmatpush1.msra.mxu0 0.0
    %752 = vmatprep.mubr.f32.mxu0 0.0
    %753 = vmatmul.mubr.f32.gmra.mrb[0].mxu0 %v686
    %v754 = vpop.f32.mrb[0].mxu0
    %v755 = vadd.f32 0.0, %v754
    %v756 = vpop.f32.mrb[0].mxu0
    %757 = vdwg.mxu0
    %758 = vrot.lane.b32.xlu0 %v453, 64
    %v759 = vpop.permute.xlu0 %758
    %760 = vrot.lane.b32.xlu0 %v458, 64
    %v761 = vpop.permute.xlu0 %760
    %v765 = vsel %vm684, %v677, 0
    %767 = vmatprep.subr.mxu0 0.0
    %768 = vmatpush1.msra.mxu0 %v759
    %769 = vmatprep.subr.mxu0 0.0
    %770 = vmatpush1.msra.mxu0 %v761
    %771 = vmatprep.subr.mxu0 0.0
    %772 = vmatpush1.msra.mxu0 0.0
    %773 = vmatprep.subr.mxu0 0.0
    %774 = vmatpush1.msra.mxu0 0.0
    %775 = vmatprep.subr.mxu0 0.0
    %776 = vmatpush1.msra.mxu0 0.0
    %777 = vmatprep.subr.mxu0 0.0
    %778 = vmatpush1.msra.mxu0 0.0
    %779 = vmatprep.subr.mxu0 0.0
    %780 = vmatpush1.msra.mxu0 0.0
    %781 = vmatprep.subr.mxu0 0.0
    %782 = vmatpush1.msra.mxu0 0.0
    %783 = vmatprep.subr.mxu0 0.0
    %784 = vmatpush1.msra.mxu0 0.0
    %785 = vmatprep.subr.mxu0 0.0
    %786 = vmatpush1.msra.mxu0 0.0
    %787 = vmatprep.subr.mxu0 0.0
    %788 = vmatpush1.msra.mxu0 0.0
    %789 = vmatprep.subr.mxu0 0.0
    %790 = vmatpush1.msra.mxu0 0.0
    %791 = vmatprep.subr.mxu0 0.0
    %792 = vmatpush1.msra.mxu0 0.0
    %793 = vmatprep.subr.mxu0 0.0
    %794 = vmatpush1.msra.mxu0 0.0
    %795 = vmatprep.subr.mxu0 0.0
    %796 = vmatpush1.msra.mxu0 0.0
    %797 = vmatprep.subr.mxu0 0.0
    %798 = vmatpush1.msra.mxu0 0.0
    %799 = vmatprep.subr.mxu0 0.0
    %800 = vmatpush1.msra.mxu0 0.0
    %801 = vmatprep.subr.mxu0 0.0
    %802 = vmatpush1.msra.mxu0 0.0
    %803 = vmatprep.subr.mxu0 0.0
    %804 = vmatpush1.msra.mxu0 0.0
    %805 = vmatprep.subr.mxu0 0.0
    %806 = vmatpush1.msra.mxu0 0.0
    %807 = vmatprep.subr.mxu0 0.0
    %808 = vmatpush1.msra.mxu0 0.0
    %809 = vmatprep.subr.mxu0 0.0
    %810 = vmatpush1.msra.mxu0 0.0
    %811 = vmatprep.subr.mxu0 0.0
    %812 = vmatpush1.msra.mxu0 0.0
    %813 = vmatprep.subr.mxu0 0.0
    %814 = vmatpush1.msra.mxu0 0.0
    %815 = vmatprep.subr.mxu0 0.0
    %816 = vmatpush1.msra.mxu0 0.0
    %817 = vmatprep.subr.mxu0 0.0
    %818 = vmatpush1.msra.mxu0 0.0
    %819 = vmatprep.subr.mxu0 0.0
    %820 = vmatpush1.msra.mxu0 0.0
    %821 = vmatprep.subr.mxu0 0.0
    %822 = vmatpush1.msra.mxu0 0.0
    %823 = vmatprep.subr.mxu0 0.0
    %824 = vmatpush1.msra.mxu0 0.0
    %825 = vmatprep.subr.mxu0 0.0
    %826 = vmatpush1.msra.mxu0 0.0
    %827 = vmatprep.subr.mxu0 0.0
    %828 = vmatpush1.msra.mxu0 0.0
    %829 = vmatprep.subr.mxu0 0.0
    %830 = vmatpush1.msra.mxu0 0.0
    %831 = vmatprep.mubr.f32.mxu0 0.0
    %832 = vmatmul.mubr.f32.gmra.mrb[0].mxu0 %v765
    %v833 = vpop.f32.mrb[0].mxu0
    %v834 = vadd.f32 0.0, %v833
    %v835 = vpop.f32.mrb[0].mxu0
    %836 = vdwg.mxu0
    %v839 = vcombine.low %v755, %v834
    %841 = vrot.lane.b32.xlu0 %v193, 32
    %v842 = vpop.permute.xlu0 %841
    %v844 = vsel %vm115, %v839, %v842
    %v845 = vld [vmem:[#allocation10] sm:$0xff]
    %v846 = vld [vmem:[#allocation10 + $0x8] sm:$0xff]
    %v847 = vld [vmem:[#allocation10 + $0x40] sm:$0xff]
    %v848 = vld [vmem:[#allocation10 + $0x48] sm:$0xff]
    %v849 = vld [vmem:[#allocation10 + $0x80] sm:$0xff]
    %v850 = vld [vmem:[#allocation10 + $0x88] sm:$0xff]
    %v851 = vld [vmem:[#allocation10 + $0xc0] sm:$0xff]
    %v852 = vld [vmem:[#allocation10 + $0xc8] sm:$0xff]
    %v853 = vld [vmem:[#allocation10 + $0x100] sm:$0xff]
    %v854 = vld [vmem:[#allocation10 + $0x108] sm:$0xff]
    %v855 = vld [vmem:[#allocation10 + $0x140] sm:$0xff]
    %v856 = vld [vmem:[#allocation10 + $0x148] sm:$0xff]
    %v857 = vld [vmem:[#allocation10 + $0x180] sm:$0xff]
    %v858 = vld [vmem:[#allocation10 + $0x188] sm:$0xff]
    %v859 = vld [vmem:[#allocation10 + $0x1c0] sm:$0xff]
    %v860 = vld [vmem:[#allocation10 + $0x1c8] sm:$0xff]
    %vm861 = vcmask 523264
    %v863 = vsel %vm861, %v844, 0
    %865 = vmatprep.subr.mxu0 %v846
    %866 = vmatpush1.msra.mxu0 %v845
    %867 = vmatprep.subr.mxu0 %v848
    %868 = vmatpush1.msra.mxu0 %v847
    %869 = vmatprep.subr.mxu0 %v850
    %870 = vmatpush1.msra.mxu0 %v849
    %871 = vmatprep.subr.mxu0 %v852
    %872 = vmatpush1.msra.mxu0 %v851
    %873 = vmatprep.subr.mxu0 %v854
    %874 = vmatpush1.msra.mxu0 %v853
    %875 = vmatprep.subr.mxu0 %v856
    %876 = vmatpush1.msra.mxu0 %v855
    %877 = vmatprep.subr.mxu0 %v858
    %878 = vmatpush1.msra.mxu0 %v857
    %879 = vmatprep.subr.mxu0 %v860
    %880 = vmatpush1.msra.mxu0 %v859
    %881 = vmatprep.subr.mxu0 0.0
    %882 = vmatpush1.msra.mxu0 0.0
    %883 = vmatprep.subr.mxu0 0.0
    %884 = vmatpush1.msra.mxu0 0.0
    %885 = vmatprep.subr.mxu0 0.0
    %886 = vmatpush1.msra.mxu0 0.0
    %887 = vmatprep.subr.mxu0 0.0
    %888 = vmatpush1.msra.mxu0 0.0
    %889 = vmatprep.subr.mxu0 0.0
    %890 = vmatpush1.msra.mxu0 0.0
    %891 = vmatprep.subr.mxu0 0.0
    %892 = vmatpush1.msra.mxu0 0.0
    %893 = vmatprep.subr.mxu0 0.0
    %894 = vmatpush1.msra.mxu0 0.0
    %895 = vmatprep.subr.mxu0 0.0
    %896 = vmatpush1.msra.mxu0 0.0
    %897 = vmatprep.subr.mxu0 0.0
    %898 = vmatpush1.msra.mxu0 0.0
    %899 = vmatprep.subr.mxu0 0.0
    %900 = vmatpush1.msra.mxu0 0.0
    %901 = vmatprep.subr.mxu0 0.0
    %902 = vmatpush1.msra.mxu0 0.0
    %903 = vmatprep.subr.mxu0 0.0
    %904 = vmatpush1.msra.mxu0 0.0
    %905 = vmatprep.subr.mxu0 0.0
    %906 = vmatpush1.msra.mxu0 0.0
    %907 = vmatprep.subr.mxu0 0.0
    %908 = vmatpush1.msra.mxu0 0.0
    %909 = vmatprep.subr.mxu0 0.0
    %910 = vmatpush1.msra.mxu0 0.0
    %911 = vmatprep.subr.mxu0 0.0
    %912 = vmatpush1.msra.mxu0 0.0
    %913 = vmatprep.subr.mxu0 0.0
    %914 = vmatpush1.msra.mxu0 0.0
    %915 = vmatprep.subr.mxu0 0.0
    %916 = vmatpush1.msra.mxu0 0.0
    %917 = vmatprep.subr.mxu0 0.0
    %918 = vmatpush1.msra.mxu0 0.0
    %919 = vmatprep.subr.mxu0 0.0
    %920 = vmatpush1.msra.mxu0 0.0
    %921 = vmatprep.subr.mxu0 0.0
    %922 = vmatpush1.msra.mxu0 0.0
    %923 = vmatprep.subr.mxu0 0.0
    %924 = vmatpush1.msra.mxu0 0.0
    %925 = vmatprep.subr.mxu0 0.0
    %926 = vmatpush1.msra.mxu0 0.0
    %927 = vmatprep.subr.mxu0 0.0
    %928 = vmatpush1.msra.mxu0 0.0
    %929 = vmatprep.mubr.f32.mxu0 0.0
    %930 = vmatmul.mubr.f32.gmra.mrb[0].mxu0 %v863
    %v931 = vpop.f32.mrb[0].mxu0
    %v932 = vadd.f32 0.0, %v931
    %v933 = vpop.f32.mrb[0].mxu0
    %v934 = vadd.f32 0.0, %v933
    %935 = vdwg.mxu0
    %v936 = vld [vmem:[#allocation11 + $0x7] sm:$0x1]
    %v938 = vlaneseq
    %v939 = vshrl.u32 %v938, 7
    %v940 = vsub.s32 0, %v939
    %v941 = vrot.slane %v936, %v940
    %v943 = vadd.f32 %v932, %v941
    %v944 = vld [vmem:[#allocation11 + $0x8] sm:$0x1]
    %v946 = vlaneseq
    %v947 = vshrl.u32 %v946, 7
    %v948 = vsub.s32 0, %v947
    %v949 = vrot.slane %v944, %v948
    %950 = vrot.lane.b32.xlu0 %v949, 96
    %v951 = vpop.permute.xlu0 %950
    %v953 = vadd.f32 %v932, %v951
    %v954 = vadd.f32 %v934, %v951
    %957 = vrot.lane.b32.xlu0 %v953, 32
    %v958 = vpop.permute.xlu0 %957
    %959 = vrot.lane.b32.xlu0 %v954, 32
    %v960 = vpop.permute.xlu0 %959
    %v961 = vsel %vm115, %v958, %v960
    %v963 = vadd.f32 %v943, %v961
    %v964 = vxor.u32 %v963, 2147483648
    %v965 = vmul.f32 %v964, 1.442695
    %v966 = vpow.pop %v965
    %v967 = vadd.f32 %v966, 1.0
    %v968 = vrcp.pop %v967
    %v969 = vmul.f32 1.0, %v968
    %970 = vrot.lane.b32.xlu0 %v954, 96
    %v971 = vpop.permute.xlu0 %970
    %v973 = vmul.f32 %v969, %v971
    %975 = vrot.lane.b32.xlu0 %v973, 64
    %v976 = vpop.permute.xlu0 %975
    %v978 = vadd.f32 %v943, %v976
    %v979 = vtanh.pop %v978
    %v980 = vsub.f32 1.0, %v969
    %982 = vrot.lane.b32.xlu0 %v979, 96
    %v983 = vpop.permute.xlu0 %982
    %v985 = vmul.f32 %v980, %v983
    %v986 = vmul.f32 %v969, %v842
    %v987 = vadd.f32 %v985, %v986
    %v988 = vld [vmem:[#allocation11 + $0x9] sm:$0x1]
    %v989 = vld [vmem:[#allocation11 + $0xa] sm:$0x1]
    %991 = vrot.lane.b32.xlu0 %v987, 96
    %v992 = vpop.permute.xlu0 %991
    %v994 = vsel %vm115, %v992, 0.0
    %995 = vadd.xlane.f32.xlu0 %v994
    %v996 = vpop.xlane.xlu0 %995
    %v997 = vmul.f32 %v996, %v128
    %v998 = vsub.f32 %v987, %v997
    %v999 = vmul.f32 %v998, %v998
    %1001 = vrot.lane.b32.xlu0 %v999, 96
    %v1002 = vpop.permute.xlu0 %1001
    %v1004 = vsel %vm115, %v1002, 0.0
    %1005 = vadd.xlane.f32.xlu0 %v1004
    %v1006 = vpop.xlane.xlu0 %1005
    %v1007 = vmul.f32 %v1006, %v128
    %v1008 = vadd.f32 %v1007, 1e-05
    %v1009 = vrsqrt.pop %v1008
    %v1010 = vmul.f32 %v998, %v1009
    %v1012 = vlaneseq
    %v1013 = vshrl.u32 %v1012, 7
    %v1014 = vsub.s32 0, %v1013
    %v1015 = vrot.slane %v988, %v1014
    %1016 = vrot.lane.b32.xlu0 %v1015, 32
    %v1017 = vpop.permute.xlu0 %1016
    %v1019 = vmul.f32 %v1010, %v1017
    %v1021 = vlaneseq
    %v1022 = vshrl.u32 %v1021, 7
    %v1023 = vsub.s32 0, %v1022
    %v1024 = vrot.slane %v989, %v1023
    %1025 = vrot.lane.b32.xlu0 %v1024, 32
    %v1026 = vpop.permute.xlu0 %1025
    %v1028 = vadd.f32 %v1019, %v1026
    %v1029 = vld [vmem:[#allocation7 + $0x8] sm:$0xff]
    %v1030 = vld [vmem:[#allocation7 + $0x28] sm:$0xff]
    %v1031 = vld [vmem:[#allocation7 + $0x48] sm:$0xff]
    %v1032 = vld [vmem:[#allocation7 + $0x68] sm:$0xff]
    %v1033 = vld [vmem:[#allocation11 + $0xb] sm:$0x1]
    %v1035 = vlaneseq
    %v1036 = vshrl.u32 %v1035, 7
    %v1037 = vsub.s32 0, %v1036
    %v1038 = vrot.slane %v1033, %v1037
    %1041 = vrot.lane.b32.xlu0 %v1028, 96
    %v1042 = vpop.permute.xlu0 %1041
    %v1043 = vsel %vm115, %v1042, 0
    %1045 = vmatprep.subr.mxu0 0.0
    %1046 = vmatpush1.msra.mxu0 %v1029
    %1047 = vmatprep.subr.mxu0 0.0
    %1048 = vmatpush1.msra.mxu0 %v1030
    %1049 = vmatprep.subr.mxu0 0.0
    %1050 = vmatpush1.msra.mxu0 %v1031
    %1051 = vmatprep.subr.mxu0 0.0
    %1052 = vmatpush1.msra.mxu0 %v1032
    %1053 = vmatprep.subr.mxu0 0.0
    %1054 = vmatpush1.msra.mxu0 0.0
    %1055 = vmatprep.subr.mxu0 0.0
    %1056 = vmatpush1.msra.mxu0 0.0
    %1057 = vmatprep.subr.mxu0 0.0
    %1058 = vmatpush1.msra.mxu0 0.0
    %1059 = vmatprep.subr.mxu0 0.0
    %1060 = vmatpush1.msra.mxu0 0.0
    %1061 = vmatprep.subr.mxu0 0.0
    %1062 = vmatpush1.msra.mxu0 0.0
    %1063 = vmatprep.subr.mxu0 0.0
    %1064 = vmatpush1.msra.mxu0 0.0
    %1065 = vmatprep.subr.mxu0 0.0
    %1066 = vmatpush1.msra.mxu0 0.0
    %1067 = vmatprep.subr.mxu0 0.0
    %1068 = vmatpush1.msra.mxu0 0.0
    %1069 = vmatprep.subr.mxu0 0.0
    %1070 = vmatpush1.msra.mxu0 0.0
    %1071 = vmatprep.subr.mxu0 0.0
    %1072 = vmatpush1.msra.mxu0 0.0
    %1073 = vmatprep.subr.mxu0 0.0
    %1074 = vmatpush1.msra.mxu0 0.0
    %1075 = vmatprep.subr.mxu0 0.0
    %1076 = vmatpush1.msra.mxu0 0.0
    %1077 = vmatprep.subr.mxu0 0.0
    %1078 = vmatpush1.msra.mxu0 0.0
    %1079 = vmatprep.subr.mxu0 0.0
    %1080 = vmatpush1.msra.mxu0 0.0
    %1081 = vmatprep.subr.mxu0 0.0
    %1082 = vmatpush1.msra.mxu0 0.0
    %1083 = vmatprep.subr.mxu0 0.0
    %1084 = vmatpush1.msra.mxu0 0.0
    %1085 = vmatprep.subr.mxu0 0.0
    %1086 = vmatpush1.msra.mxu0 0.0
    %1087 = vmatprep.subr.mxu0 0.0
    %1088 = vmatpush1.msra.mxu0 0.0
    %1089 = vmatprep.subr.mxu0 0.0
    %1090 = vmatpush1.msra.mxu0 0.0
    %1091 = vmatprep.subr.mxu0 0.0
    %1092 = vmatpush1.msra.mxu0 0.0
    %1093 = vmatprep.subr.mxu0 0.0
    %1094 = vmatpush1.msra.mxu0 0.0
    %1095 = vmatprep.subr.mxu0 0.0
    %1096 = vmatpush1.msra.mxu0 0.0
    %1097 = vmatprep.subr.mxu0 0.0
    %1098 = vmatpush1.msra.mxu0 0.0
    %1099 = vmatprep.subr.mxu0 0.0
    %1100 = vmatpush1.msra.mxu0 0.0
    %1101 = vmatprep.subr.mxu0 0.0
    %1102 = vmatpush1.msra.mxu0 0.0
    %1103 = vmatprep.subr.mxu0 0.0
    %1104 = vmatpush1.msra.mxu0 0.0
    %1105 = vmatprep.subr.mxu0 0.0
    %1106 = vmatpush1.msra.mxu0 0.0
    %1107 = vmatprep.subr.mxu0 0.0
    %1108 = vmatpush1.msra.mxu0 0.0
    %1109 = vmatprep.mubr.f32.mxu0 0.0
    %1110 = vmatmul.mubr.f32.gmra.mrb[0].mxu0 %v1043
    %v1111 = vpop.f32.mrb[0].mxu0
    %v1112 = vadd.f32 %v1038, %v1111
    %v1113 = vpop.f32.mrb[0].mxu0
    %1114 = vdwg.mxu0
    %v1115 = vmax.f32 %v1112, 0.0
    %v1116 = vld [vmem:[#allocation8] sm:$0xff]
    %v1117 = vld [vmem:[#allocation8 + $0x10] sm:$0xff]
    %v1118 = vld [vmem:[#allocation8 + $0x20] sm:$0xff]
    %v1119 = vld [vmem:[#allocation8 + $0x30] sm:$0xff]
    %v1120 = vld [vmem:[#allocation8 + $0x40] sm:$0xff]
    %v1121 = vld [vmem:[#allocation8 + $0x50] sm:$0xff]
    %v1122 = vld [vmem:[#allocation8 + $0x60] sm:$0xff]
    %v1123 = vld [vmem:[#allocation8 + $0x70] sm:$0xff]
    %v1124 = vld [vmem:[#allocation11 + $0xc] sm:$0x1]
    %v1126 = vlaneseq
    %v1127 = vshrl.u32 %v1126, 7
    %v1128 = vsub.s32 0, %v1127
    %v1129 = vrot.slane %v1124, %v1128
    %v1132 = vsel %vm861, %v1115, 0
    %1134 = vmatprep.subr.mxu0 0.0
    %1135 = vmatpush1.msra.mxu0 %v1116
    %1136 = vmatprep.subr.mxu0 0.0
    %1137 = vmatpush1.msra.mxu0 %v1117
    %1138 = vmatprep.subr.mxu0 0.0
    %1139 = vmatpush1.msra.mxu0 %v1118
    %1140 = vmatprep.subr.mxu0 0.0
    %1141 = vmatpush1.msra.mxu0 %v1119
    %1142 = vmatprep.subr.mxu0 0.0
    %1143 = vmatpush1.msra.mxu0 %v1120
    %1144 = vmatprep.subr.mxu0 0.0
    %1145 = vmatpush1.msra.mxu0 %v1121
    %1146 = vmatprep.subr.mxu0 0.0
    %1147 = vmatpush1.msra.mxu0 %v1122
    %1148 = vmatprep.subr.mxu0 0.0
    %1149 = vmatpush1.msra.mxu0 %v1123
    %1150 = vmatprep.subr.mxu0 0.0
    %1151 = vmatpush1.msra.mxu0 0.0
    %1152 = vmatprep.subr.mxu0 0.0
    %1153 = vmatpush1.msra.mxu0 0.0
    %1154 = vmatprep.subr.mxu0 0.0
    %1155 = vmatpush1.msra.mxu0 0.0
    %1156 = vmatprep.subr.mxu0 0.0
    %1157 = vmatpush1.msra.mxu0 0.0
    %1158 = vmatprep.subr.mxu0 0.0
    %1159 = vmatpush1.msra.mxu0 0.0
    %1160 = vmatprep.subr.mxu0 0.0
    %1161 = vmatpush1.msra.mxu0 0.0
    %1162 = vmatprep.subr.mxu0 0.0
    %1163 = vmatpush1.msra.mxu0 0.0
    %1164 = vmatprep.subr.mxu0 0.0
    %1165 = vmatpush1.msra.mxu0 0.0
    %1166 = vmatprep.subr.mxu0 0.0
    %1167 = vmatpush1.msra.mxu0 0.0
    %1168 = vmatprep.subr.mxu0 0.0
    %1169 = vmatpush1.msra.mxu0 0.0
    %1170 = vmatprep.subr.mxu0 0.0
    %1171 = vmatpush1.msra.mxu0 0.0
    %1172 = vmatprep.subr.mxu0 0.0
    %1173 = vmatpush1.msra.mxu0 0.0
    %1174 = vmatprep.subr.mxu0 0.0
    %1175 = vmatpush1.msra.mxu0 0.0
    %1176 = vmatprep.subr.mxu0 0.0
    %1177 = vmatpush1.msra.mxu0 0.0
    %1178 = vmatprep.subr.mxu0 0.0
    %1179 = vmatpush1.msra.mxu0 0.0
    %1180 = vmatprep.subr.mxu0 0.0
    %1181 = vmatpush1.msra.mxu0 0.0
    %1182 = vmatprep.subr.mxu0 0.0
    %1183 = vmatpush1.msra.mxu0 0.0
    %1184 = vmatprep.subr.mxu0 0.0
    %1185 = vmatpush1.msra.mxu0 0.0
    %1186 = vmatprep.subr.mxu0 0.0
    %1187 = vmatpush1.msra.mxu0 0.0
    %1188 = vmatprep.subr.mxu0 0.0
    %1189 = vmatpush1.msra.mxu0 0.0
    %1190 = vmatprep.subr.mxu0 0.0
    %1191 = vmatpush1.msra.mxu0 0.0
    %1192 = vmatprep.subr.mxu0 0.0
    %1193 = vmatpush1.msra.mxu0 0.0
    %1194 = vmatprep.subr.mxu0 0.0
    %1195 = vmatpush1.msra.mxu0 0.0
    %1196 = vmatprep.subr.mxu0 0.0
    %1197 = vmatpush1.msra.mxu0 0.0
    %1198 = vmatprep.mubr.f32.mxu0 0.0
    %1199 = vmatmul.mubr.f32.gmra.mrb[0].mxu0 %v1132
    %v1200 = vpop.f32.mrb[0].mxu0
    %v1201 = vadd.f32 %v1129, %v1200
    %v1202 = vpop.f32.mrb[0].mxu0
    %1203 = vdwg.mxu0
    %v1204 = vsel %vm115, %v1201, %v987
    %v1205 = vld [vmem:[#allocation10 + $0x10] sm:$0xff]
    %v1206 = vld [vmem:[#allocation10 + $0x18] sm:$0xff]
    %v1207 = vld [vmem:[#allocation10 + $0x50] sm:$0xff]
    %v1208 = vld [vmem:[#allocation10 + $0x58] sm:$0xff]
    %v1209 = vld [vmem:[#allocation10 + $0x90] sm:$0xff]
    %v1210 = vld [vmem:[#allocation10 + $0x98] sm:$0xff]
    %v1211 = vld [vmem:[#allocation10 + $0xd0] sm:$0xff]
    %v1212 = vld [vmem:[#allocation10 + $0xd8] sm:$0xff]
    %v1213 = vld [vmem:[#allocation10 + $0x110] sm:$0xff]
    %v1214 = vld [vmem:[#allocation10 + $0x118] sm:$0xff]
    %v1215 = vld [vmem:[#allocation10 + $0x150] sm:$0xff]
    %v1216 = vld [vmem:[#allocation10 + $0x158] sm:$0xff]
    %v1217 = vld [vmem:[#allocation10 + $0x190] sm:$0xff]
    %v1218 = vld [vmem:[#allocation10 + $0x198] sm:$0xff]
    %v1219 = vld [vmem:[#allocation10 + $0x1d0] sm:$0xff]
    %v1220 = vld [vmem:[#allocation10 + $0x1d8] sm:$0xff]
    %v1222 = vsel %vm861, %v1204, 0
    %1224 = vmatprep.subr.mxu0 %v1206
    %1225 = vmatpush1.msra.mxu0 %v1205
    %1226 = vmatprep.subr.mxu0 %v1208
    %1227 = vmatpush1.msra.mxu0 %v1207
    %1228 = vmatprep.subr.mxu0 %v1210
    %1229 = vmatpush1.msra.mxu0 %v1209
    %1230 = vmatprep.subr.mxu0 %v1212
    %1231 = vmatpush1.msra.mxu0 %v1211
    %1232 = vmatprep.subr.mxu0 %v1214
    %1233 = vmatpush1.msra.mxu0 %v1213
    %1234 = vmatprep.subr.mxu0 %v1216
    %1235 = vmatpush1.msra.mxu0 %v1215
    %1236 = vmatprep.subr.mxu0 %v1218
    %1237 = vmatpush1.msra.mxu0 %v1217
    %1238 = vmatprep.subr.mxu0 %v1220
    %1239 = vmatpush1.msra.mxu0 %v1219
    %1240 = vmatprep.subr.mxu0 0.0
    %1241 = vmatpush1.msra.mxu0 0.0
    %1242 = vmatprep.subr.mxu0 0.0
    %1243 = vmatpush1.msra.mxu0 0.0
    %1244 = vmatprep.subr.mxu0 0.0
    %1245 = vmatpush1.msra.mxu0 0.0
    %1246 = vmatprep.subr.mxu0 0.0
    %1247 = vmatpush1.msra.mxu0 0.0
    %1248 = vmatprep.subr.mxu0 0.0
    %1249 = vmatpush1.msra.mxu0 0.0
    %1250 = vmatprep.subr.mxu0 0.0
    %1251 = vmatpush1.msra.mxu0 0.0
    %1252 = vmatprep.subr.mxu0 0.0
    %1253 = vmatpush1.msra.mxu0 0.0
    %1254 = vmatprep.subr.mxu0 0.0
    %1255 = vmatpush1.msra.mxu0 0.0
    %1256 = vmatprep.subr.mxu0 0.0
    %1257 = vmatpush1.msra.mxu0 0.0
    %1258 = vmatprep.subr.mxu0 0.0
    %1259 = vmatpush1.msra.mxu0 0.0
    %1260 = vmatprep.subr.mxu0 0.0
    %1261 = vmatpush1.msra.mxu0 0.0
    %1262 = vmatprep.subr.mxu0 0.0
    %1263 = vmatpush1.msra.mxu0 0.0
    %1264 = vmatprep.subr.mxu0 0.0
    %1265 = vmatpush1.msra.mxu0 0.0
    %1266 = vmatprep.subr.mxu0 0.0
    %1267 = vmatpush1.msra.mxu0 0.0
    %1268 = vmatprep.subr.mxu0 0.0
    %1269 = vmatpush1.msra.mxu0 0.0
    %1270 = vmatprep.subr.mxu0 0.0
    %1271 = vmatpush1.msra.mxu0 0.0
    %1272 = vmatprep.subr.mxu0 0.0
    %1273 = vmatpush1.msra.mxu0 0.0
    %1274 = vmatprep.subr.mxu0 0.0
    %1275 = vmatpush1.msra.mxu0 0.0
    %1276 = vmatprep.subr.mxu0 0.0
    %1277 = vmatpush1.msra.mxu0 0.0
    %1278 = vmatprep.subr.mxu0 0.0
    %1279 = vmatpush1.msra.mxu0 0.0
    %1280 = vmatprep.subr.mxu0 0.0
    %1281 = vmatpush1.msra.mxu0 0.0
    %1282 = vmatprep.subr.mxu0 0.0
    %1283 = vmatpush1.msra.mxu0 0.0
    %1284 = vmatprep.subr.mxu0 0.0
    %1285 = vmatpush1.msra.mxu0 0.0
    %1286 = vmatprep.subr.mxu0 0.0
    %1287 = vmatpush1.msra.mxu0 0.0
    %1288 = vmatprep.mubr.f32.mxu0 0.0
    %1289 = vmatmul.mubr.f32.gmra.mrb[0].mxu0 %v1222
    %v1290 = vpop.f32.mrb[0].mxu0
    %v1291 = vadd.f32 0.0, %v1290
    %v1292 = vpop.f32.mrb[0].mxu0
    %v1293 = vadd.f32 0.0, %v1292
    %1294 = vdwg.mxu0
    %v1295 = vld [vmem:[#allocation11 + $0xd] sm:$0x1]
    %v1297 = vlaneseq
    %v1298 = vshrl.u32 %v1297, 7
    %v1299 = vsub.s32 0, %v1298
    %v1300 = vrot.slane %v1295, %v1299
    %v1302 = vadd.f32 %v1291, %v1300
    %v1303 = vld [vmem:[#allocation11 + $0xe] sm:$0x1]
    %v1305 = vlaneseq
    %v1306 = vshrl.u32 %v1305, 7
    %v1307 = vsub.s32 0, %v1306
    %v1308 = vrot.slane %v1303, %v1307
    %1309 = vrot.lane.b32.xlu0 %v1308, 96
    %v1310 = vpop.permute.xlu0 %1309
    %v1312 = vadd.f32 %v1291, %v1310
    %v1313 = vadd.f32 %v1293, %v1310
    %1316 = vrot.lane.b32.xlu0 %v1312, 32
    %v1317 = vpop.permute.xlu0 %1316
    %1318 = vrot.lane.b32.xlu0 %v1313, 32
    %v1319 = vpop.permute.xlu0 %1318
    %v1320 = vsel %vm115, %v1317, %v1319
    %v1322 = vadd.f32 %v1302, %v1320
    %v1323 = vxor.u32 %v1322, 2147483648
    %v1324 = vmul.f32 %v1323, 1.442695
    %v1325 = vpow.pop %v1324
    %v1326 = vadd.f32 %v1325, 1.0
    %v1327 = vrcp.pop %v1326
    %v1328 = vmul.f32 1.0, %v1327
    %1329 = vrot.lane.b32.xlu0 %v1313, 96
    %v1330 = vpop.permute.xlu0 %1329
    %v1332 = vmul.f32 %v1328, %v1330
    %1334 = vrot.lane.b32.xlu0 %v1332, 64
    %v1335 = vpop.permute.xlu0 %1334
    %v1337 = vadd.f32 %v1302, %v1335
    %v1338 = vtanh.pop %v1337
    %v1339 = vsub.f32 1.0, %v1328
    %1341 = vrot.lane.b32.xlu0 %v1338, 96
    %v1342 = vpop.permute.xlu0 %1341
    %v1344 = vmul.f32 %v1339, %v1342
    %v1345 = vmul.f32 %v1328, %v987
    %v1346 = vadd.f32 %v1344, %v1345
    %v1347 = vld [vmem:[#allocation11 + $0xf] sm:$0x1]
    %v1348 = vld [vmem:[#allocation11 + $0x10] sm:$0x1]
    %v1350 = vlaneseq
    %v1351 = vshrl.u32 %v1350, 7
    %v1352 = vsub.s32 0, %v1351
    %v1353 = vrot.slane %v1347, %v1352
    %v1355 = vmul.f32 %v319, %v1353
    %v1356 = vmul.f32 %v320, %v1353
    %v1357 = vmul.f32 %v321, %v1353
    %v1358 = vmul.f32 %v322, %v1353
    %v1360 = vlaneseq
    %v1361 = vshrl.u32 %v1360, 7
    %v1362 = vsub.s32 0, %v1361
    %v1363 = vrot.slane %v1348, %v1362
    %v1365 = vadd.f32 %v1355, %v1363
    %v1366 = vadd.f32 %v1356, %v1363
    %v1367 = vadd.f32 %v1357, %v1363
    %v1368 = vadd.f32 %v1358, %v1363
    %v1369 = vld [vmem:[#allocation11 + $0x11] sm:$0x1]
    %v1370 = vld [vmem:[#allocation11 + $0x12] sm:$0x1]
    %1372 = vrot.lane.b32.xlu0 %v1346, 96
    %v1373 = vpop.permute.xlu0 %1372
    %v1375 = vsel %vm115, %v1373, 0.0
    %1376 = vadd.xlane.f32.xlu0 %v1375
    %v1377 = vpop.xlane.xlu0 %1376
    %v1378 = vmul.f32 %v1377, %v128
    %v1379 = vsub.f32 %v1346, %v1378
    %v1380 = vmul.f32 %v1379, %v1379
    %1382 = vrot.lane.b32.xlu0 %v1380, 96
    %v1383 = vpop.permute.xlu0 %1382
    %v1385 = vsel %vm115, %v1383, 0.0
    %1386 = vadd.xlane.f32.xlu0 %v1385
    %v1387 = vpop.xlane.xlu0 %1386
    %v1388 = vmul.f32 %v1387, %v128
    %v1389 = vadd.f32 %v1388, 1e-05
    %v1390 = vrsqrt.pop %v1389
    %v1391 = vmul.f32 %v1379, %v1390
    %v1393 = vlaneseq
    %v1394 = vshrl.u32 %v1393, 7
    %v1395 = vsub.s32 0, %v1394
    %v1396 = vrot.slane %v1369, %v1395
    %1397 = vrot.lane.b32.xlu0 %v1396, 32
    %v1398 = vpop.permute.xlu0 %1397
    %v1400 = vmul.f32 %v1391, %v1398
    %v1402 = vlaneseq
    %v1403 = vshrl.u32 %v1402, 7
    %v1404 = vsub.s32 0, %v1403
    %v1405 = vrot.slane %v1370, %v1404
    %1406 = vrot.lane.b32.xlu0 %v1405, 32
    %v1407 = vpop.permute.xlu0 %1406
    %v1409 = vadd.f32 %v1400, %v1407
    %1411 = vrot.lane.b32.xlu0 %v1409, 96
    %v1412 = vpop.permute.xlu0 %1411
    %v1413 = vld [vmem:[#allocation7 + $0x10] sm:$0xff]
    %v1414 = vld [vmem:[#allocation7 + $0x30] sm:$0xff]
    %v1415 = vld [vmem:[#allocation7 + $0x50] sm:$0xff]
    %v1416 = vld [vmem:[#allocation7 + $0x70] sm:$0xff]
    %v1417 = vld [vmem:[#allocation11 + $0x13] sm:$0x1]
    %v1419 = vlaneseq
    %v1420 = vshrl.u32 %v1419, 7
    %v1421 = vsub.s32 0, %v1420
    %v1422 = vrot.slane %v1417, %v1421
    %v1425 = vsel %vm115, %v1365, 0
    %v1428 = vsel %vm115, %v1366, 0
    %v1431 = vsel %vm115, %v1367, 0
    %v1434 = vsel %vm115, %v1368, 0
    %v1436 = vsel %vm115, %v1412, 0
    %1438 = vmatprep.subr.mxu0 0.0
    %1439 = vmatpush1.msra.mxu0 %v1413
    %1440 = vmatprep.subr.mxu0 0.0
    %1441 = vmatpush1.msra.mxu0 %v1414
    %1442 = vmatprep.subr.mxu0 0.0
    %1443 = vmatpush1.msra.mxu0 %v1415
    %1444 = vmatprep.subr.mxu0 0.0
    %1445 = vmatpush1.msra.mxu0 %v1416
    %1446 = vmatprep.subr.mxu0 0.0
    %1447 = vmatpush1.msra.mxu0 0.0
    %1448 = vmatprep.subr.mxu0 0.0
    %1449 = vmatpush1.msra.mxu0 0.0
    %1450 = vmatprep.subr.mxu0 0.0
    %1451 = vmatpush1.msra.mxu0 0.0
    %1452 = vmatprep.subr.mxu0 0.0
    %1453 = vmatpush1.msra.mxu0 0.0
    %1454 = vmatprep.subr.mxu0 0.0
    %1455 = vmatpush1.msra.mxu0 0.0
    %1456 = vmatprep.subr.mxu0 0.0
    %1457 = vmatpush1.msra.mxu0 0.0
    %1458 = vmatprep.subr.mxu0 0.0
    %1459 = vmatpush1.msra.mxu0 0.0
    %1460 = vmatprep.subr.mxu0 0.0
    %1461 = vmatpush1.msra.mxu0 0.0
    %1462 = vmatprep.subr.mxu0 0.0
    %1463 = vmatpush1.msra.mxu0 0.0
    %1464 = vmatprep.subr.mxu0 0.0
    %1465 = vmatpush1.msra.mxu0 0.0
    %1466 = vmatprep.subr.mxu0 0.0
    %1467 = vmatpush1.msra.mxu0 0.0
    %1468 = vmatprep.subr.mxu0 0.0
    %1469 = vmatpush1.msra.mxu0 0.0
    %1470 = vmatprep.subr.mxu0 0.0
    %1471 = vmatpush1.msra.mxu0 0.0
    %1472 = vmatprep.subr.mxu0 0.0
    %1473 = vmatpush1.msra.mxu0 0.0
    %1474 = vmatprep.subr.mxu0 0.0
    %1475 = vmatpush1.msra.mxu0 0.0
    %1476 = vmatprep.subr.mxu0 0.0
    %1477 = vmatpush1.msra.mxu0 0.0
    %1478 = vmatprep.subr.mxu0 0.0
    %1479 = vmatpush1.msra.mxu0 0.0
    %1480 = vmatprep.subr.mxu0 0.0
    %1481 = vmatpush1.msra.mxu0 0.0
    %1482 = vmatprep.subr.mxu0 0.0
    %1483 = vmatpush1.msra.mxu0 0.0
    %1484 = vmatprep.subr.mxu0 0.0
    %1485 = vmatpush1.msra.mxu0 0.0
    %1486 = vmatprep.subr.mxu0 0.0
    %1487 = vmatpush1.msra.mxu0 0.0
    %1488 = vmatprep.subr.mxu0 0.0
    %1489 = vmatpush1.msra.mxu0 0.0
    %1490 = vmatprep.subr.mxu0 0.0
    %1491 = vmatpush1.msra.mxu0 0.0
    %1492 = vmatprep.subr.mxu0 0.0
    %1493 = vmatpush1.msra.mxu0 0.0
    %1494 = vmatprep.subr.mxu0 0.0
    %1495 = vmatpush1.msra.mxu0 0.0
    %1496 = vmatprep.subr.mxu0 0.0
    %1497 = vmatpush1.msra.mxu0 0.0
    %1498 = vmatprep.subr.mxu0 0.0
    %1499 = vmatpush1.msra.mxu0 0.0
    %1500 = vmatprep.subr.mxu0 0.0
    %1501 = vmatpush1.msra.mxu0 0.0
    %1502 = vmatprep.mubr.f32.mxu0 0.0
    %1503 = vmatmul.mubr.f32.gmra.mrb[0].mxu0 %v1425
    %v1504 = vpop.f32.mrb[0].mxu0
    %v1505 = vadd.f32 %v1422, %v1504
    %v1506 = vpop.f32.mrb[0].mxu0
    %1507 = vmatprep.mubr.f32.mxu0 0.0
    %1508 = vmatmul.mubr.f32.gmra.mrb[0].mxu0 %v1428
    %v1509 = vpop.f32.mrb[0].mxu0
    %v1510 = vadd.f32 %v1422, %v1509
    %v1511 = vpop.f32.mrb[0].mxu0
    %1512 = vmatprep.mubr.f32.mxu0 0.0
    %1513 = vmatmul.mubr.f32.gmra.mrb[0].mxu0 %v1431
    %v1514 = vpop.f32.mrb[0].mxu0
    %v1515 = vadd.f32 %v1422, %v1514
    %v1516 = vpop.f32.mrb[0].mxu0
    %1517 = vmatprep.mubr.f32.mxu0 0.0
    %1518 = vmatmul.mubr.f32.gmra.mrb[0].mxu0 %v1434
    %v1519 = vpop.f32.mrb[0].mxu0
    %v1520 = vadd.f32 %v1422, %v1519
    %v1521 = vpop.f32.mrb[0].mxu0
    %1522 = vmatprep.mubr.f32.mxu0 0.0
    %1523 = vmatmul.mubr.f32.gmra.mrb[0].mxu0 %v1436
    %v1524 = vpop.f32.mrb[0].mxu0
    %v1525 = vadd.f32 %v1422, %v1524
    %v1526 = vpop.f32.mrb[0].mxu0
    %1527 = vdwg.mxu0
    %v1529 = vcombine.high %v1525, %v1525
    %1530 = vrot.lane.b32.xlu0 %v1525, 96
    %v1531 = vpop.permute.xlu0 %1530
    %v1533 = vsel %vm115, %v1505, 0
    %v1536 = vsel %vm115, %v1510, 0
    %v1538 = vsel %vm115, %v1531, 0
    %1540 = vmatprep.subr.mxu0 0.0
    %1541 = vmatpush1.xpose.msra.mxu0 %v1538
    %1542 = vmatprep.subr.mxu0 0.0
    %1543 = vmatpush1.xpose.msra.mxu0 0.0
    %1544 = vmatprep.subr.mxu0 0.0
    %1545 = vmatpush1.xpose.msra.mxu0 0.0
    %1546 = vmatprep.subr.mxu0 0.0
    %1547 = vmatpush1.xpose.msra.mxu0 0.0
    %1548 = vmatprep.subr.mxu0 0.0
    %1549 = vmatpush1.xpose.msra.mxu0 0.0
    %1550 = vmatprep.subr.mxu0 0.0
    %1551 = vmatpush1.xpose.msra.mxu0 0.0
    %1552 = vmatprep.subr.mxu0 0.0
    %1553 = vmatpush1.xpose.msra.mxu0 0.0
    %1554 = vmatprep.subr.mxu0 0.0
    %1555 = vmatpush1.xpose.msra.mxu0 0.0
    %1556 = vmatprep.subr.mxu0 0.0
    %1557 = vmatpush1.xpose.msra.mxu0 0.0
    %1558 = vmatprep.subr.mxu0 0.0
    %1559 = vmatpush1.xpose.msra.mxu0 0.0
    %1560 = vmatprep.subr.mxu0 0.0
    %1561 = vmatpush1.xpose.msra.mxu0 0.0
    %1562 = vmatprep.subr.mxu0 0.0
    %1563 = vmatpush1.xpose.msra.mxu0 0.0
    %1564 = vmatprep.subr.mxu0 0.0
    %1565 = vmatpush1.xpose.msra.mxu0 0.0
    %1566 = vmatprep.subr.mxu0 0.0
    %1567 = vmatpush1.xpose.msra.mxu0 0.0
    %1568 = vmatprep.subr.mxu0 0.0
    %1569 = vmatpush1.xpose.msra.mxu0 0.0
    %1570 = vmatprep.subr.mxu0 0.0
    %1571 = vmatpush1.xpose.msra.mxu0 0.0
    %1572 = vmatprep.subr.mxu0 0.0
    %1573 = vmatpush1.xpose.msra.mxu0 0.0
    %1574 = vmatprep.subr.mxu0 0.0
    %1575 = vmatpush1.xpose.msra.mxu0 0.0
    %1576 = vmatprep.subr.mxu0 0.0
    %1577 = vmatpush1.xpose.msra.mxu0 0.0
    %1578 = vmatprep.subr.mxu0 0.0
    %1579 = vmatpush1.xpose.msra.mxu0 0.0
    %1580 = vmatprep.subr.mxu0 0.0
    %1581 = vmatpush1.xpose.msra.mxu0 0.0
    %1582 = vmatprep.subr.mxu0 0.0
    %1583 = vmatpush1.xpose.msra.mxu0 0.0
    %1584 = vmatprep.subr.mxu0 0.0
    %1585 = vmatpush1.xpose.msra.mxu0 0.0
    %1586 = vmatprep.subr.mxu0 0.0
    %1587 = vmatpush1.xpose.msra.mxu0 0.0
    %1588 = vmatprep.subr.mxu0 0.0
    %1589 = vmatpush1.xpose.msra.mxu0 0.0
    %1590 = vmatprep.subr.mxu0 0.0
    %1591 = vmatpush1.xpose.msra.mxu0 0.0
    %1592 = vmatprep.subr.mxu0 0.0
    %1593 = vmatpush1.xpose.msra.mxu0 0.0
    %1594 = vmatprep.subr.mxu0 0.0
    %1595 = vmatpush1.xpose.msra.mxu0 0.0
    %1596 = vmatprep.subr.mxu0 0.0
    %1597 = vmatpush1.xpose.msra.mxu0 0.0
    %1598 = vmatprep.subr.mxu0 0.0
    %1599 = vmatpush1.xpose.msra.mxu0 0.0
    %1600 = vmatprep.subr.mxu0 0.0
    %1601 = vmatpush1.xpose.msra.mxu0 0.0
    %1602 = vmatprep.subr.mxu0 0.0
    %1603 = vmatpush1.xpose.msra.mxu0 0.0
    %1604 = vmatprep.mubr.f32.mxu0 0.0
    %1605 = vmatmul.mubr.f32.gmra.mrb[0].mxu0 %v1533
    %v1606 = vpop.f32.mrb[0].mxu0
    %v1607 = vadd.f32 0.0, %v1606
    %v1608 = vpop.f32.mrb[0].mxu0
    %1609 = vmatprep.mubr.f32.mxu0 0.0
    %1610 = vmatmul.mubr.f32.gmra.mrb[0].mxu0 %v1536
    %v1611 = vpop.f32.mrb[0].mxu0
    %v1612 = vadd.f32 0.0, %v1611
    %v1613 = vpop.f32.mrb[0].mxu0
    %1614 = vdwg.mxu0
    %1615 = vrot.lane.b32.xlu0 %v1529, 96
    %v1616 = vpop.permute.xlu0 %1615
    %v1618 = vsel %vm115, %v1515, 0
    %v1621 = vsel %vm115, %v1520, 0
    %v1623 = vsel %vm115, %v1616, 0
    %1625 = vmatprep.subr.mxu0 0.0
    %1626 = vmatpush1.xpose.msra.mxu0 %v1623
    %1627 = vmatprep.subr.mxu0 0.0
    %1628 = vmatpush1.xpose.msra.mxu0 0.0
    %1629 = vmatprep.subr.mxu0 0.0
    %1630 = vmatpush1.xpose.msra.mxu0 0.0
    %1631 = vmatprep.subr.mxu0 0.0
    %1632 = vmatpush1.xpose.msra.mxu0 0.0
    %1633 = vmatprep.subr.mxu0 0.0
    %1634 = vmatpush1.xpose.msra.mxu0 0.0
    %1635 = vmatprep.subr.mxu0 0.0
    %1636 = vmatpush1.xpose.msra.mxu0 0.0
    %1637 = vmatprep.subr.mxu0 0.0
    %1638 = vmatpush1.xpose.msra.mxu0 0.0
    %1639 = vmatprep.subr.mxu0 0.0
    %1640 = vmatpush1.xpose.msra.mxu0 0.0
    %1641 = vmatprep.subr.mxu0 0.0
    %1642 = vmatpush1.xpose.msra.mxu0 0.0
    %1643 = vmatprep.subr.mxu0 0.0
    %1644 = vmatpush1.xpose.msra.mxu0 0.0
    %1645 = vmatprep.subr.mxu0 0.0
    %1646 = vmatpush1.xpose.msra.mxu0 0.0
    %1647 = vmatprep.subr.mxu0 0.0
    %1648 = vmatpush1.xpose.msra.mxu0 0.0
    %1649 = vmatprep.subr.mxu0 0.0
    %1650 = vmatpush1.xpose.msra.mxu0 0.0
    %1651 = vmatprep.subr.mxu0 0.0
    %1652 = vmatpush1.xpose.msra.mxu0 0.0
    %1653 = vmatprep.subr.mxu0 0.0
    %1654 = vmatpush1.xpose.msra.mxu0 0.0
    %1655 = vmatprep.subr.mxu0 0.0
    %1656 = vmatpush1.xpose.msra.mxu0 0.0
    %1657 = vmatprep.subr.mxu0 0.0
    %1658 = vmatpush1.xpose.msra.mxu0 0.0
    %1659 = vmatprep.subr.mxu0 0.0
    %1660 = vmatpush1.xpose.msra.mxu0 0.0
    %1661 = vmatprep.subr.mxu0 0.0
    %1662 = vmatpush1.xpose.msra.mxu0 0.0
    %1663 = vmatprep.subr.mxu0 0.0
    %1664 = vmatpush1.xpose.msra.mxu0 0.0
    %1665 = vmatprep.subr.mxu0 0.0
    %1666 = vmatpush1.xpose.msra.mxu0 0.0
    %1667 = vmatprep.subr.mxu0 0.0
    %1668 = vmatpush1.xpose.msra.mxu0 0.0
    %1669 = vmatprep.subr.mxu0 0.0
    %1670 = vmatpush1.xpose.msra.mxu0 0.0
    %1671 = vmatprep.subr.mxu0 0.0
    %1672 = vmatpush1.xpose.msra.mxu0 0.0
    %1673 = vmatprep.subr.mxu0 0.0
    %1674 = vmatpush1.xpose.msra.mxu0 0.0
    %1675 = vmatprep.subr.mxu0 0.0
    %1676 = vmatpush1.xpose.msra.mxu0 0.0
    %1677 = vmatprep.subr.mxu0 0.0
    %1678 = vmatpush1.xpose.msra.mxu0 0.0
    %1679 = vmatprep.subr.mxu0 0.0
    %1680 = vmatpush1.xpose.msra.mxu0 0.0
    %1681 = vmatprep.subr.mxu0 0.0
    %1682 = vmatpush1.xpose.msra.mxu0 0.0
    %1683 = vmatprep.subr.mxu0 0.0
    %1684 = vmatpush1.xpose.msra.mxu0 0.0
    %1685 = vmatprep.subr.mxu0 0.0
    %1686 = vmatpush1.xpose.msra.mxu0 0.0
    %1687 = vmatprep.subr.mxu0 0.0
    %1688 = vmatpush1.xpose.msra.mxu0 0.0
    %1689 = vmatprep.mubr.f32.mxu0 0.0
    %1690 = vmatmul.mubr.f32.gmra.mrb[0].mxu0 %v1618
    %v1691 = vpop.f32.mrb[0].mxu0
    %v1692 = vadd.f32 0.0, %v1691
    %v1693 = vpop.f32.mrb[0].mxu0
    %1694 = vmatprep.mubr.f32.mxu0 0.0
    %1695 = vmatmul.mubr.f32.gmra.mrb[0].mxu0 %v1621
    %v1696 = vpop.f32.mrb[0].mxu0
    %v1697 = vadd.f32 0.0, %v1696
    %v1698 = vpop.f32.mrb[0].mxu0
    %1699 = vdwg.mxu0
    %vm1700 = vcmask 31744
    %v1701 = vsel %vm1700, %v1607, -inf
    %1702 = vmax.xlane.f32.xlu0 %v1701
    %v1703 = vpop.xlane.xlu0 %1702
    %v1704 = vsel %vm1700, %v1612, -inf
    %1705 = vmax.xlane.f32.xlu0 %v1704
    %v1706 = vpop.xlane.xlu0 %1705
    %v1707 = vsel %vm1700, %v1692, -inf
    %1708 = vmax.xlane.f32.xlu0 %v1707
    %v1709 = vpop.xlane.xlu0 %1708
    %v1710 = vsel %vm1700, %v1697, -inf
    %1711 = vmax.xlane.f32.xlu0 %v1710
    %v1712 = vpop.xlane.xlu0 %1711
    %v1713 = vsub.f32 %v1607, %v1703
    %v1714 = vsub.f32 %v1612, %v1706
    %v1715 = vsub.f32 %v1692, %v1709
    %v1716 = vsub.f32 %v1697, %v1712
    %v1717 = vmul.f32 %v1713, 1.442695
    %v1718 = vpow.pop %v1717
    %v1719 = vmul.f32 %v1714, 1.442695
    %v1720 = vpow.pop %v1719
    %v1721 = vmul.f32 %v1715, 1.442695
    %v1722 = vpow.pop %v1721
    %v1723 = vmul.f32 %v1716, 1.442695
    %v1724 = vpow.pop %v1723
    %v1725 = vsel %vm1700, %v1718, 0.0
    %1726 = vadd.xlane.f32.xlu0 %v1725
    %v1727 = vpop.xlane.xlu0 %1726
    %v1728 = vsel %vm1700, %v1720, 0.0
    %1729 = vadd.xlane.f32.xlu0 %v1728
    %v1730 = vpop.xlane.xlu0 %1729
    %v1731 = vsel %vm1700, %v1722, 0.0
    %1732 = vadd.xlane.f32.xlu0 %v1731
    %v1733 = vpop.xlane.xlu0 %1732
    %v1734 = vsel %vm1700, %v1724, 0.0
    %1735 = vadd.xlane.f32.xlu0 %v1734
    %v1736 = vpop.xlane.xlu0 %1735
    %v1737 = vrcp.pop %v1727
    %v1738 = vrcp.pop %v1730
    %v1739 = vrcp.pop %v1733
    %v1740 = vrcp.pop %v1736
    %v1741 = vmul.f32 %v1718, %v1737
    %v1742 = vmul.f32 %v1720, %v1738
    %v1743 = vmul.f32 %v1722, %v1739
    %v1744 = vmul.f32 %v1724, %v1740
    %v1745 = vadd.f32 %v1741, 1e-08
    %v1746 = vadd.f32 %v1742, 1e-08
    %v1747 = vadd.f32 %v1743, 1e-08
    %v1748 = vadd.f32 %v1744, 1e-08
    %v1749 = vsel %vm1700, %v1745, 0.0
    %v1750 = vsel %vm1700, %v1746, 0.0
    %v1751 = vadd.f32 %v1749, %v1750
    %v1752 = vrot.slane %v1751, 4
    %v1753 = vadd.f32 %v1751, %v1752
    %v1754 = vrot.slane %v1753, 2
    %v1755 = vadd.f32 %v1753, %v1754
    %v1756 = vrot.slane %v1755, 1
    %v1757 = vadd.f32 %v1755, %v1756
    %v1758 = vsel %vm1700, %v1747, 0.0
    %v1759 = vsel %vm1700, %v1748, 0.0
    %v1760 = vadd.f32 %v1758, %v1759
    %v1761 = vrot.slane %v1760, 4
    %v1762 = vadd.f32 %v1760, %v1761
    %v1763 = vrot.slane %v1762, 2
    %v1764 = vadd.f32 %v1762, %v1763
    %v1765 = vrot.slane %v1764, 1
    %v1766 = vadd.f32 %v1764, %v1765
    %v1767 = vrcp.pop %v1757
    %v1768 = vmul.f32 %v1745, %v1767
    %v1769 = vmul.f32 %v1746, %v1767
    %v1770 = vrcp.pop %v1766
    %v1771 = vmul.f32 %v1747, %v1770
    %v1772 = vmul.f32 %v1748, %v1770
    %1773 = vrot.lane.b32.xlu0 %v1525, 64
    %v1774 = vpop.permute.xlu0 %1773
    %v1776 = vsel %vm1700, %v1768, 0
    %v1779 = vsel %vm1700, %v1769, 0
    %vm1781 = vcmask 1043456
    %v1782 = vsel %vm1781, %v1774, 0
    %1784 = vmatprep.subr.mxu0 0.0
    %1785 = vmatpush1.msra.mxu0 %v1782
    %1786 = vmatprep.subr.mxu0 0.0
    %1787 = vmatpush1.msra.mxu0 0.0
    %1788 = vmatprep.subr.mxu0 0.0
    %1789 = vmatpush1.msra.mxu0 0.0
    %1790 = vmatprep.subr.mxu0 0.0
    %1791 = vmatpush1.msra.mxu0 0.0
    %1792 = vmatprep.subr.mxu0 0.0
    %1793 = vmatpush1.msra.mxu0 0.0
    %1794 = vmatprep.subr.mxu0 0.0
    %1795 = vmatpush1.msra.mxu0 0.0
    %1796 = vmatprep.subr.mxu0 0.0
    %1797 = vmatpush1.msra.mxu0 0.0
    %1798 = vmatprep.subr.mxu0 0.0
    %1799 = vmatpush1.msra.mxu0 0.0
    %1800 = vmatprep.subr.mxu0 0.0
    %1801 = vmatpush1.msra.mxu0 0.0
    %1802 = vmatprep.subr.mxu0 0.0
    %1803 = vmatpush1.msra.mxu0 0.0
    %1804 = vmatprep.subr.mxu0 0.0
    %1805 = vmatpush1.msra.mxu0 0.0
    %1806 = vmatprep.subr.mxu0 0.0
    %1807 = vmatpush1.msra.mxu0 0.0
    %1808 = vmatprep.subr.mxu0 0.0
    %1809 = vmatpush1.msra.mxu0 0.0
    %1810 = vmatprep.subr.mxu0 0.0
    %1811 = vmatpush1.msra.mxu0 0.0
    %1812 = vmatprep.subr.mxu0 0.0
    %1813 = vmatpush1.msra.mxu0 0.0
    %1814 = vmatprep.subr.mxu0 0.0
    %1815 = vmatpush1.msra.mxu0 0.0
    %1816 = vmatprep.subr.mxu0 0.0
    %1817 = vmatpush1.msra.mxu0 0.0
    %1818 = vmatprep.subr.mxu0 0.0
    %1819 = vmatpush1.msra.mxu0 0.0
    %1820 = vmatprep.subr.mxu0 0.0
    %1821 = vmatpush1.msra.mxu0 0.0
    %1822 = vmatprep.subr.mxu0 0.0
    %1823 = vmatpush1.msra.mxu0 0.0
    %1824 = vmatprep.subr.mxu0 0.0
    %1825 = vmatpush1.msra.mxu0 0.0
    %1826 = vmatprep.subr.mxu0 0.0
    %1827 = vmatpush1.msra.mxu0 0.0
    %1828 = vmatprep.subr.mxu0 0.0
    %1829 = vmatpush1.msra.mxu0 0.0
    %1830 = vmatprep.subr.mxu0 0.0
    %1831 = vmatpush1.msra.mxu0 0.0
    %1832 = vmatprep.subr.mxu0 0.0
    %1833 = vmatpush1.msra.mxu0 0.0
    %1834 = vmatprep.subr.mxu0 0.0
    %1835 = vmatpush1.msra.mxu0 0.0
    %1836 = vmatprep.subr.mxu0 0.0
    %1837 = vmatpush1.msra.mxu0 0.0
    %1838 = vmatprep.subr.mxu0 0.0
    %1839 = vmatpush1.msra.mxu0 0.0
    %1840 = vmatprep.subr.mxu0 0.0
    %1841 = vmatpush1.msra.mxu0 0.0
    %1842 = vmatprep.subr.mxu0 0.0
    %1843 = vmatpush1.msra.mxu0 0.0
    %1844 = vmatprep.subr.mxu0 0.0
    %1845 = vmatpush1.msra.mxu0 0.0
    %1846 = vmatprep.subr.mxu0 0.0
    %1847 = vmatpush1.msra.mxu0 0.0
    %1848 = vmatprep.mubr.f32.mxu0 0.0
    %1849 = vmatmul.mubr.f32.gmra.mrb[0].mxu0 %v1776
    %v1850 = vpop.f32.mrb[0].mxu0
    %v1851 = vadd.f32 0.0, %v1850
    %v1852 = vpop.f32.mrb[0].mxu0
    %1853 = vmatprep.mubr.f32.mxu0 0.0
    %1854 = vmatmul.mubr.f32.gmra.mrb[0].mxu0 %v1779
    %v1855 = vpop.f32.mrb[0].mxu0
    %v1856 = vadd.f32 0.0, %v1855
    %v1857 = vpop.f32.mrb[0].mxu0
    %1858 = vdwg.mxu0
    %1859 = vrot.lane.b32.xlu0 %v1529, 64
    %v1860 = vpop.permute.xlu0 %1859
    %v1862 = vsel %vm1700, %v1771, 0
    %v1865 = vsel %vm1700, %v1772, 0
    %v1867 = vsel %vm1781, %v1860, 0
    %1869 = vmatprep.subr.mxu0 0.0
    %1870 = vmatpush1.msra.mxu0 %v1867
    %1871 = vmatprep.subr.mxu0 0.0
    %1872 = vmatpush1.msra.mxu0 0.0
    %1873 = vmatprep.subr.mxu0 0.0
    %1874 = vmatpush1.msra.mxu0 0.0
    %1875 = vmatprep.subr.mxu0 0.0
    %1876 = vmatpush1.msra.mxu0 0.0
    %1877 = vmatprep.subr.mxu0 0.0
    %1878 = vmatpush1.msra.mxu0 0.0
    %1879 = vmatprep.subr.mxu0 0.0
    %1880 = vmatpush1.msra.mxu0 0.0
    %1881 = vmatprep.subr.mxu0 0.0
    %1882 = vmatpush1.msra.mxu0 0.0
    %1883 = vmatprep.subr.mxu0 0.0
    %1884 = vmatpush1.msra.mxu0 0.0
    %1885 = vmatprep.subr.mxu0 0.0
    %1886 = vmatpush1.msra.mxu0 0.0
    %1887 = vmatprep.subr.mxu0 0.0
    %1888 = vmatpush1.msra.mxu0 0.0
    %1889 = vmatprep.subr.mxu0 0.0
    %1890 = vmatpush1.msra.mxu0 0.0
    %1891 = vmatprep.subr.mxu0 0.0
    %1892 = vmatpush1.msra.mxu0 0.0
    %1893 = vmatprep.subr.mxu0 0.0
    %1894 = vmatpush1.msra.mxu0 0.0
    %1895 = vmatprep.subr.mxu0 0.0
    %1896 = vmatpush1.msra.mxu0 0.0
    %1897 = vmatprep.subr.mxu0 0.0
    %1898 = vmatpush1.msra.mxu0 0.0
    %1899 = vmatprep.subr.mxu0 0.0
    %1900 = vmatpush1.msra.mxu0 0.0
    %1901 = vmatprep.subr.mxu0 0.0
    %1902 = vmatpush1.msra.mxu0 0.0
    %1903 = vmatprep.subr.mxu0 0.0
    %1904 = vmatpush1.msra.mxu0 0.0
    %1905 = vmatprep.subr.mxu0 0.0
    %1906 = vmatpush1.msra.mxu0 0.0
    %1907 = vmatprep.subr.mxu0 0.0
    %1908 = vmatpush1.msra.mxu0 0.0
    %1909 = vmatprep.subr.mxu0 0.0
    %1910 = vmatpush1.msra.mxu0 0.0
    %1911 = vmatprep.subr.mxu0 0.0
    %1912 = vmatpush1.msra.mxu0 0.0
    %1913 = vmatprep.subr.mxu0 0.0
    %1914 = vmatpush1.msra.mxu0 0.0
    %1915 = vmatprep.subr.mxu0 0.0
    %1916 = vmatpush1.msra.mxu0 0.0
    %1917 = vmatprep.subr.mxu0 0.0
    %1918 = vmatpush1.msra.mxu0 0.0
    %1919 = vmatprep.subr.mxu0 0.0
    %1920 = vmatpush1.msra.mxu0 0.0
    %1921 = vmatprep.subr.mxu0 0.0
    %1922 = vmatpush1.msra.mxu0 0.0
    %1923 = vmatprep.subr.mxu0 0.0
    %1924 = vmatpush1.msra.mxu0 0.0
    %1925 = vmatprep.subr.mxu0 0.0
    %1926 = vmatpush1.msra.mxu0 0.0
    %1927 = vmatprep.subr.mxu0 0.0
    %1928 = vmatpush1.msra.mxu0 0.0
    %1929 = vmatprep.subr.mxu0 0.0
    %1930 = vmatpush1.msra.mxu0 0.0
    %1931 = vmatprep.subr.mxu0 0.0
    %1932 = vmatpush1.msra.mxu0 0.0
    %1933 = vmatprep.mubr.f32.mxu0 0.0
    %1934 = vmatmul.mubr.f32.gmra.mrb[0].mxu0 %v1862
    %v1935 = vpop.f32.mrb[0].mxu0
    %v1936 = vadd.f32 0.0, %v1935
    %v1937 = vpop.f32.mrb[0].mxu0
    %1938 = vmatprep.mubr.f32.mxu0 0.0
    %1939 = vmatmul.mubr.f32.gmra.mrb[0].mxu0 %v1865
    %v1940 = vpop.f32.mrb[0].mxu0
    %v1941 = vadd.f32 0.0, %v1940
    %v1942 = vpop.f32.mrb[0].mxu0
    %1943 = vdwg.mxu0
    %1948 = vrot.lane.b32.xlu0 %v185, 32
    %v1949 = vpop.permute.xlu0 %1948
    %1950 = vrot.lane.b32.xlu0 %v186, 32
    %v1951 = vpop.permute.xlu0 %1950
    %1952 = vrot.lane.b32.xlu0 %v187, 32
    %v1953 = vpop.permute.xlu0 %1952
    %1954 = vrot.lane.b32.xlu0 %v188, 32
    %v1955 = vpop.permute.xlu0 %1954
    %v1960 = vsel %vm115, %v1851, %v1949
    %v1961 = vsel %vm115, %v1856, %v1951
    %v1962 = vsel %vm115, %v1936, %v1953
    %v1963 = vsel %vm115, %v1941, %v1955
    %v1964 = vld [vmem:[#allocation10 + $0x20] sm:$0xff]
    %v1965 = vld [vmem:[#allocation10 + $0x28] sm:$0xff]
    %v1966 = vld [vmem:[#allocation10 + $0x60] sm:$0xff]
    %v1967 = vld [vmem:[#allocation10 + $0x68] sm:$0xff]
    %v1968 = vld [vmem:[#allocation10 + $0xa0] sm:$0xff]
    %v1969 = vld [vmem:[#allocation10 + $0xa8] sm:$0xff]
    %v1970 = vld [vmem:[#allocation10 + $0xe0] sm:$0xff]
    %v1971 = vld [vmem:[#allocation10 + $0xe8] sm:$0xff]
    %v1972 = vld [vmem:[#allocation10 + $0x120] sm:$0xff]
    %v1973 = vld [vmem:[#allocation10 + $0x128] sm:$0xff]
    %v1974 = vld [vmem:[#allocation10 + $0x160] sm:$0xff]
    %v1975 = vld [vmem:[#allocation10 + $0x168] sm:$0xff]
    %v1976 = vld [vmem:[#allocation10 + $0x1a0] sm:$0xff]
    %v1977 = vld [vmem:[#allocation10 + $0x1a8] sm:$0xff]
    %v1978 = vld [vmem:[#allocation10 + $0x1e0] sm:$0xff]
    %v1979 = vld [vmem:[#allocation10 + $0x1e8] sm:$0xff]
    %v1981 = vsel %vm861, %v1960, 0
    %v1984 = vsel %vm861, %v1961, 0
    %v1987 = vsel %vm861, %v1962, 0
    %v1990 = vsel %vm861, %v1963, 0
    %1992 = vmatprep.subr.mxu0 %v1965
    %1993 = vmatpush1.msra.mxu0 %v1964
    %1994 = vmatprep.subr.mxu0 %v1967
    %1995 = vmatpush1.msra.mxu0 %v1966
    %1996 = vmatprep.subr.mxu0 %v1969
    %1997 = vmatpush1.msra.mxu0 %v1968
    %1998 = vmatprep.subr.mxu0 %v1971
    %1999 = vmatpush1.msra.mxu0 %v1970
    %2000 = vmatprep.subr.mxu0 %v1973
    %2001 = vmatpush1.msra.mxu0 %v1972
    %2002 = vmatprep.subr.mxu0 %v1975
    %2003 = vmatpush1.msra.mxu0 %v1974
    %2004 = vmatprep.subr.mxu0 %v1977
    %2005 = vmatpush1.msra.mxu0 %v1976
    %2006 = vmatprep.subr.mxu0 %v1979
    %2007 = vmatpush1.msra.mxu0 %v1978
    %2008 = vmatprep.subr.mxu0 0.0
    %2009 = vmatpush1.msra.mxu0 0.0
    %2010 = vmatprep.subr.mxu0 0.0
    %2011 = vmatpush1.msra.mxu0 0.0
    %2012 = vmatprep.subr.mxu0 0.0
    %2013 = vmatpush1.msra.mxu0 0.0
    %2014 = vmatprep.subr.mxu0 0.0
    %2015 = vmatpush1.msra.mxu0 0.0
    %2016 = vmatprep.subr.mxu0 0.0
    %2017 = vmatpush1.msra.mxu0 0.0
    %2018 = vmatprep.subr.mxu0 0.0
    %2019 = vmatpush1.msra.mxu0 0.0
    %2020 = vmatprep.subr.mxu0 0.0
    %2021 = vmatpush1.msra.mxu0 0.0
    %2022 = vmatprep.subr.mxu0 0.0
    %2023 = vmatpush1.msra.mxu0 0.0
    %2024 = vmatprep.subr.mxu0 0.0
    %2025 = vmatpush1.msra.mxu0 0.0
    %2026 = vmatprep.subr.mxu0 0.0
    %2027 = vmatpush1.msra.mxu0 0.0
    %2028 = vmatprep.subr.mxu0 0.0
    %2029 = vmatpush1.msra.mxu0 0.0
    %2030 = vmatprep.subr.mxu0 0.0
    %2031 = vmatpush1.msra.mxu0 0.0
    %2032 = vmatprep.subr.mxu0 0.0
    %2033 = vmatpush1.msra.mxu0 0.0
    %2034 = vmatprep.subr.mxu0 0.0
    %2035 = vmatpush1.msra.mxu0 0.0
    %2036 = vmatprep.subr.mxu0 0.0
    %2037 = vmatpush1.msra.mxu0 0.0
    %2038 = vmatprep.subr.mxu0 0.0
    %2039 = vmatpush1.msra.mxu0 0.0
    %2040 = vmatprep.subr.mxu0 0.0
    %2041 = vmatpush1.msra.mxu0 0.0
    %2042 = vmatprep.subr.mxu0 0.0
    %2043 = vmatpush1.msra.mxu0 0.0
    %2044 = vmatprep.subr.mxu0 0.0
    %2045 = vmatpush1.msra.mxu0 0.0
    %2046 = vmatprep.subr.mxu0 0.0
    %2047 = vmatpush1.msra.mxu0 0.0
    %2048 = vmatprep.subr.mxu0 0.0
    %2049 = vmatpush1.msra.mxu0 0.0
    %2050 = vmatprep.subr.mxu0 0.0
    %2051 = vmatpush1.msra.mxu0 0.0
    %2052 = vmatprep.subr.mxu0 0.0
    %2053 = vmatpush1.msra.mxu0 0.0
    %2054 = vmatprep.subr.mxu0 0.0
    %2055 = vmatpush1.msra.mxu0 0.0
    %2056 = vmatprep.mubr.f32.mxu0 0.0
    %2057 = vmatmul.mubr.f32.gmra.mrb[0].mxu0 %v1981
    %v2058 = vpop.f32.mrb[0].mxu0
    %v2059 = vadd.f32 0.0, %v2058
    %v2060 = vpop.f32.mrb[0].mxu0
    %v2061 = vadd.f32 0.0, %v2060
    %2062 = vmatprep.mubr.f32.mxu0 0.0
    %2063 = vmatmul.mubr.f32.gmra.mrb[0].mxu0 %v1984
    %v2064 = vpop.f32.mrb[0].mxu0
    %v2065 = vadd.f32 0.0, %v2064
    %v2066 = vpop.f32.mrb[0].mxu0
    %v2067 = vadd.f32 0.0, %v2066
    %2068 = vmatprep.mubr.f32.mxu0 0.0
    %2069 = vmatmul.mubr.f32.gmra.mrb[0].mxu0 %v1987
    %v2070 = vpop.f32.mrb[0].mxu0
    %v2071 = vadd.f32 0.0, %v2070
    %v2072 = vpop.f32.mrb[0].mxu0
    %v2073 = vadd.f32 0.0, %v2072
    %2074 = vmatprep.mubr.f32.mxu0 0.0
    %2075 = vmatmul.mubr.f32.gmra.mrb[0].mxu0 %v1990
    %v2076 = vpop.f32.mrb[0].mxu0
    %v2077 = vadd.f32 0.0, %v2076
    %v2078 = vpop.f32.mrb[0].mxu0
    %v2079 = vadd.f32 0.0, %v2078
    %2080 = vdwg.mxu0
    %v2081 = vld [vmem:[#allocation11 + $0x14] sm:$0x1]
    %v2083 = vlaneseq
    %v2084 = vshrl.u32 %v2083, 7
    %v2085 = vsub.s32 0, %v2084
    %v2086 = vrot.slane %v2081, %v2085
    %v2088 = vadd.f32 %v2059, %v2086
    %v2089 = vadd.f32 %v2065, %v2086
    %v2090 = vadd.f32 %v2071, %v2086
    %v2091 = vadd.f32 %v2077, %v2086
    %v2092 = vld [vmem:[#allocation11 + $0x15] sm:$0x1]
    %v2094 = vlaneseq
    %v2095 = vshrl.u32 %v2094, 7
    %v2096 = vsub.s32 0, %v2095
    %v2097 = vrot.slane %v2092, %v2096
    %2098 = vrot.lane.b32.xlu0 %v2097, 96
    %v2099 = vpop.permute.xlu0 %2098
    %v2101 = vadd.f32 %v2059, %v2099
    %v2102 = vadd.f32 %v2061, %v2099
    %v2103 = vadd.f32 %v2065, %v2099
    %v2104 = vadd.f32 %v2067, %v2099
    %v2105 = vadd.f32 %v2071, %v2099
    %v2106 = vadd.f32 %v2073, %v2099
    %v2107 = vadd.f32 %v2077, %v2099
    %v2108 = vadd.f32 %v2079, %v2099
    %2117 = vrot.lane.b32.xlu0 %v2101, 32
    %v2118 = vpop.permute.xlu0 %2117
    %2119 = vrot.lane.b32.xlu0 %v2102, 32
    %v2120 = vpop.permute.xlu0 %2119
    %2121 = vrot.lane.b32.xlu0 %v2103, 32
    %v2122 = vpop.permute.xlu0 %2121
    %2123 = vrot.lane.b32.xlu0 %v2104, 32
    %v2124 = vpop.permute.xlu0 %2123
    %2125 = vrot.lane.b32.xlu0 %v2105, 32
    %v2126 = vpop.permute.xlu0 %2125
    %2127 = vrot.lane.b32.xlu0 %v2106, 32
    %v2128 = vpop.permute.xlu0 %2127
    %2129 = vrot.lane.b32.xlu0 %v2107, 32
    %v2130 = vpop.permute.xlu0 %2129
    %2131 = vrot.lane.b32.xlu0 %v2108, 32
    %v2132 = vpop.permute.xlu0 %2131
    %v2133 = vsel %vm115, %v2118, %v2120
    %v2134 = vsel %vm115, %v2122, %v2124
    %v2135 = vsel %vm115, %v2126, %v2128
    %v2136 = vsel %vm115, %v2130, %v2132
    %v2141 = vadd.f32 %v2088, %v2133
    %v2142 = vadd.f32 %v2089, %v2134
    %v2143 = vadd.f32 %v2090, %v2135
    %v2144 = vadd.f32 %v2091, %v2136
    %v2145 = vxor.u32 %v2141, 2147483648
    %v2146 = vxor.u32 %v2142, 2147483648
    %v2147 = vxor.u32 %v2143, 2147483648
    %v2148 = vxor.u32 %v2144, 2147483648
    %v2149 = vmul.f32 %v2145, 1.442695
    %v2150 = vpow.pop %v2149
    %v2151 = vmul.f32 %v2146, 1.442695
    %v2152 = vpow.pop %v2151
    %v2153 = vmul.f32 %v2147, 1.442695
    %v2154 = vpow.pop %v2153
    %v2155 = vmul.f32 %v2148, 1.442695
    %v2156 = vpow.pop %v2155
    %v2157 = vadd.f32 %v2150, 1.0
    %v2158 = vadd.f32 %v2152, 1.0
    %v2159 = vadd.f32 %v2154, 1.0
    %v2160 = vadd.f32 %v2156, 1.0
    %v2161 = vrcp.pop %v2157
    %v2162 = vmul.f32 1.0, %v2161
    %v2163 = vrcp.pop %v2158
    %v2164 = vmul.f32 1.0, %v2163
    %v2165 = vrcp.pop %v2159
    %v2166 = vmul.f32 1.0, %v2165
    %v2167 = vrcp.pop %v2160
    %v2168 = vmul.f32 1.0, %v2167
    %2169 = vrot.lane.b32.xlu0 %v2102, 96
    %v2170 = vpop.permute.xlu0 %2169
    %2171 = vrot.lane.b32.xlu0 %v2104, 96
    %v2172 = vpop.permute.xlu0 %2171
    %2173 = vrot.lane.b32.xlu0 %v2106, 96
    %v2174 = vpop.permute.xlu0 %2173
    %2175 = vrot.lane.b32.xlu0 %v2108, 96
    %v2176 = vpop.permute.xlu0 %2175
    %v2181 = vmul.f32 %v2162, %v2170
    %v2182 = vmul.f32 %v2164, %v2172
    %v2183 = vmul.f32 %v2166, %v2174
    %v2184 = vmul.f32 %v2168, %v2176
    %2189 = vrot.lane.b32.xlu0 %v2181, 64
    %v2190 = vpop.permute.xlu0 %2189
    %2191 = vrot.lane.b32.xlu0 %v2182, 64
    %v2192 = vpop.permute.xlu0 %2191
    %2193 = vrot.lane.b32.xlu0 %v2183, 64
    %v2194 = vpop.permute.xlu0 %2193
    %2195 = vrot.lane.b32.xlu0 %v2184, 64
    %v2196 = vpop.permute.xlu0 %2195
    %v2201 = vadd.f32 %v2088, %v2190
    %v2202 = vadd.f32 %v2089, %v2192
    %v2203 = vadd.f32 %v2090, %v2194
    %v2204 = vadd.f32 %v2091, %v2196
    %v2205 = vtanh.pop %v2201
    %v2206 = vtanh.pop %v2202
    %v2207 = vtanh.pop %v2203
    %v2208 = vtanh.pop %v2204
    %v2209 = vsub.f32 1.0, %v2162
    %v2210 = vsub.f32 1.0, %v2164
    %v2211 = vsub.f32 1.0, %v2166
    %v2212 = vsub.f32 1.0, %v2168
    %2217 = vrot.lane.b32.xlu0 %v2205, 96
    %v2218 = vpop.permute.xlu0 %2217
    %2219 = vrot.lane.b32.xlu0 %v2206, 96
    %v2220 = vpop.permute.xlu0 %2219
    %2221 = vrot.lane.b32.xlu0 %v2207, 96
    %v2222 = vpop.permute.xlu0 %2221
    %2223 = vrot.lane.b32.xlu0 %v2208, 96
    %v2224 = vpop.permute.xlu0 %2223
    %v2229 = vmul.f32 %v2209, %v2218
    %v2230 = vmul.f32 %v2210, %v2220
    %v2231 = vmul.f32 %v2211, %v2222
    %v2232 = vmul.f32 %v2212, %v2224
    %v2233 = vmul.f32 %v2162, %v1949
    %v2234 = vmul.f32 %v2164, %v1951
    %v2235 = vmul.f32 %v2166, %v1953
    %v2236 = vmul.f32 %v2168, %v1955
    %v2237 = vadd.f32 %v2229, %v2233
    %v2238 = vadd.f32 %v2230, %v2234
    %v2239 = vadd.f32 %v2231, %v2235
    %v2240 = vadd.f32 %v2232, %v2236
    %v2241 = vld [vmem:[#allocation11 + $0x16] sm:$0x1]
    %v2242 = vld [vmem:[#allocation11 + $0x17] sm:$0x1]
    %2247 = vrot.lane.b32.xlu0 %v2237, 96
    %v2248 = vpop.permute.xlu0 %2247
    %2249 = vrot.lane.b32.xlu0 %v2238, 96
    %v2250 = vpop.permute.xlu0 %2249
    %2251 = vrot.lane.b32.xlu0 %v2239, 96
    %v2252 = vpop.permute.xlu0 %2251
    %2253 = vrot.lane.b32.xlu0 %v2240, 96
    %v2254 = vpop.permute.xlu0 %2253
    %v2259 = vsel %vm115, %v2248, 0.0
    %2260 = vadd.xlane.f32.xlu0 %v2259
    %v2261 = vpop.xlane.xlu0 %2260
    %v2262 = vsel %vm115, %v2250, 0.0
    %2263 = vadd.xlane.f32.xlu0 %v2262
    %v2264 = vpop.xlane.xlu0 %2263
    %v2265 = vsel %vm115, %v2252, 0.0
    %2266 = vadd.xlane.f32.xlu0 %v2265
    %v2267 = vpop.xlane.xlu0 %2266
    %v2268 = vsel %vm115, %v2254, 0.0
    %2269 = vadd.xlane.f32.xlu0 %v2268
    %v2270 = vpop.xlane.xlu0 %2269
    %v2271 = vmul.f32 %v2261, %v128
    %v2272 = vmul.f32 %v2264, %v128
    %v2273 = vmul.f32 %v2267, %v128
    %v2274 = vmul.f32 %v2270, %v128
    %v2275 = vsub.f32 %v2237, %v2271
    %v2276 = vsub.f32 %v2238, %v2272
    %v2277 = vsub.f32 %v2239, %v2273
    %v2278 = vsub.f32 %v2240, %v2274
    %v2279 = vmul.f32 %v2275, %v2275
    %v2280 = vmul.f32 %v2276, %v2276
    %v2281 = vmul.f32 %v2277, %v2277
    %v2282 = vmul.f32 %v2278, %v2278
    %2287 = vrot.lane.b32.xlu0 %v2279, 96
    %v2288 = vpop.permute.xlu0 %2287
    %2289 = vrot.lane.b32.xlu0 %v2280, 96
    %v2290 = vpop.permute.xlu0 %2289
    %2291 = vrot.lane.b32.xlu0 %v2281, 96
    %v2292 = vpop.permute.xlu0 %2291
    %2293 = vrot.lane.b32.xlu0 %v2282, 96
    %v2294 = vpop.permute.xlu0 %2293
    %v2299 = vsel %vm115, %v2288, 0.0
    %2300 = vadd.xlane.f32.xlu0 %v2299
    %v2301 = vpop.xlane.xlu0 %2300
    %v2302 = vsel %vm115, %v2290, 0.0
    %2303 = vadd.xlane.f32.xlu0 %v2302
    %v2304 = vpop.xlane.xlu0 %2303
    %v2305 = vsel %vm115, %v2292, 0.0
    %2306 = vadd.xlane.f32.xlu0 %v2305
    %v2307 = vpop.xlane.xlu0 %2306
    %v2308 = vsel %vm115, %v2294, 0.0
    %2309 = vadd.xlane.f32.xlu0 %v2308
    %v2310 = vpop.xlane.xlu0 %2309
    %v2311 = vmul.f32 %v2301, %v128
    %v2312 = vmul.f32 %v2304, %v128
    %v2313 = vmul.f32 %v2307, %v128
    %v2314 = vmul.f32 %v2310, %v128
    %v2315 = vadd.f32 %v2311, 1e-05
    %v2316 = vadd.f32 %v2312, 1e-05
    %v2317 = vadd.f32 %v2313, 1e-05
    %v2318 = vadd.f32 %v2314, 1e-05
    %v2319 = vrsqrt.pop %v2315
    %v2320 = vrsqrt.pop %v2316
    %v2321 = vrsqrt.pop %v2317
    %v2322 = vrsqrt.pop %v2318
    %v2323 = vmul.f32 %v2275, %v2319
    %v2324 = vmul.f32 %v2276, %v2320
    %v2325 = vmul.f32 %v2277, %v2321
    %v2326 = vmul.f32 %v2278, %v2322
    %v2328 = vlaneseq
    %v2329 = vshrl.u32 %v2328, 7
    %v2330 = vsub.s32 0, %v2329
    %v2331 = vrot.slane %v2241, %v2330
    %2332 = vrot.lane.b32.xlu0 %v2331, 32
    %v2333 = vpop.permute.xlu0 %2332
    %v2335 = vmul.f32 %v2323, %v2333
    %v2336 = vmul.f32 %v2324, %v2333
    %v2337 = vmul.f32 %v2325, %v2333
    %v2338 = vmul.f32 %v2326, %v2333
    %v2340 = vlaneseq
    %v2341 = vshrl.u32 %v2340, 7
    %v2342 = vsub.s32 0, %v2341
    %v2343 = vrot.slane %v2242, %v2342
    %2344 = vrot.lane.b32.xlu0 %v2343, 32
    %v2345 = vpop.permute.xlu0 %2344
    %v2347 = vadd.f32 %v2335, %v2345
    %v2348 = vadd.f32 %v2336, %v2345
    %v2349 = vadd.f32 %v2337, %v2345
    %v2350 = vadd.f32 %v2338, %v2345
    %v2351 = vld [vmem:[#allocation7 + $0x18] sm:$0xff]
    %v2352 = vld [vmem:[#allocation7 + $0x38] sm:$0xff]
    %v2353 = vld [vmem:[#allocation7 + $0x58] sm:$0xff]
    %v2354 = vld [vmem:[#allocation7 + $0x78] sm:$0xff]
    %v2355 = vld [vmem:[#allocation11 + $0x18] sm:$0x1]
    %v2357 = vlaneseq
    %v2358 = vshrl.u32 %v2357, 7
    %v2359 = vsub.s32 0, %v2358
    %v2360 = vrot.slane %v2355, %v2359
    %2366 = vrot.lane.b32.xlu0 %v2347, 96
    %v2367 = vpop.permute.xlu0 %2366
    %2368 = vrot.lane.b32.xlu0 %v2348, 96
    %v2369 = vpop.permute.xlu0 %2368
    %2370 = vrot.lane.b32.xlu0 %v2349, 96
    %v2371 = vpop.permute.xlu0 %2370
    %2372 = vrot.lane.b32.xlu0 %v2350, 96
    %v2373 = vpop.permute.xlu0 %2372
    %v2374 = vsel %vm115, %v2367, 0
    %v2376 = vsel %vm115, %v2369, 0
    %v2378 = vsel %vm115, %v2371, 0
    %v2380 = vsel %vm115, %v2373, 0
    %2382 = vmatprep.subr.mxu0 0.0
    %2383 = vmatpush1.msra.mxu0 %v2351
    %2384 = vmatprep.subr.mxu0 0.0
    %2385 = vmatpush1.msra.mxu0 %v2352
    %2386 = vmatprep.subr.mxu0 0.0
    %2387 = vmatpush1.msra.mxu0 %v2353
    %2388 = vmatprep.subr.mxu0 0.0
    %2389 = vmatpush1.msra.mxu0 %v2354
    %2390 = vmatprep.subr.mxu0 0.0
    %2391 = vmatpush1.msra.mxu0 0.0
    %2392 = vmatprep.subr.mxu0 0.0
    %2393 = vmatpush1.msra.mxu0 0.0
    %2394 = vmatprep.subr.mxu0 0.0
    %2395 = vmatpush1.msra.mxu0 0.0
    %2396 = vmatprep.subr.mxu0 0.0
    %2397 = vmatpush1.msra.mxu0 0.0
    %2398 = vmatprep.subr.mxu0 0.0
    %2399 = vmatpush1.msra.mxu0 0.0
    %2400 = vmatprep.subr.mxu0 0.0
    %2401 = vmatpush1.msra.mxu0 0.0
    %2402 = vmatprep.subr.mxu0 0.0
    %2403 = vmatpush1.msra.mxu0 0.0
    %2404 = vmatprep.subr.mxu0 0.0
    %2405 = vmatpush1.msra.mxu0 0.0
    %2406 = vmatprep.subr.mxu0 0.0
    %2407 = vmatpush1.msra.mxu0 0.0
    %2408 = vmatprep.subr.mxu0 0.0
    %2409 = vmatpush1.msra.mxu0 0.0
    %2410 = vmatprep.subr.mxu0 0.0
    %2411 = vmatpush1.msra.mxu0 0.0
    %2412 = vmatprep.subr.mxu0 0.0
    %2413 = vmatpush1.msra.mxu0 0.0
    %2414 = vmatprep.subr.mxu0 0.0
    %2415 = vmatpush1.msra.mxu0 0.0
    %2416 = vmatprep.subr.mxu0 0.0
    %2417 = vmatpush1.msra.mxu0 0.0
    %2418 = vmatprep.subr.mxu0 0.0
    %2419 = vmatpush1.msra.mxu0 0.0
    %2420 = vmatprep.subr.mxu0 0.0
    %2421 = vmatpush1.msra.mxu0 0.0
    %2422 = vmatprep.subr.mxu0 0.0
    %2423 = vmatpush1.msra.mxu0 0.0
    %2424 = vmatprep.subr.mxu0 0.0
    %2425 = vmatpush1.msra.mxu0 0.0
    %2426 = vmatprep.subr.mxu0 0.0
    %2427 = vmatpush1.msra.mxu0 0.0
    %2428 = vmatprep.subr.mxu0 0.0
    %2429 = vmatpush1.msra.mxu0 0.0
    %2430 = vmatprep.subr.mxu0 0.0
    %2431 = vmatpush1.msra.mxu0 0.0
    %2432 = vmatprep.subr.mxu0 0.0
    %2433 = vmatpush1.msra.mxu0 0.0
    %2434 = vmatprep.subr.mxu0 0.0
    %2435 = vmatpush1.msra.mxu0 0.0
    %2436 = vmatprep.subr.mxu0 0.0
    %2437 = vmatpush1.msra.mxu0 0.0
    %2438 = vmatprep.subr.mxu0 0.0
    %2439 = vmatpush1.msra.mxu0 0.0
    %2440 = vmatprep.subr.mxu0 0.0
    %2441 = vmatpush1.msra.mxu0 0.0
    %2442 = vmatprep.subr.mxu0 0.0
    %2443 = vmatpush1.msra.mxu0 0.0
    %2444 = vmatprep.subr.mxu0 0.0
    %2445 = vmatpush1.msra.mxu0 0.0
    %2446 = vmatprep.mubr.f32.mxu0 0.0
    %2447 = vmatmul.mubr.f32.gmra.mrb[0].mxu0 %v2374
    %v2448 = vpop.f32.mrb[0].mxu0
    %v2449 = vadd.f32 %v2360, %v2448
    %v2450 = vpop.f32.mrb[0].mxu0
    %2451 = vmatprep.mubr.f32.mxu0 0.0
    %2452 = vmatmul.mubr.f32.gmra.mrb[0].mxu0 %v2376
    %v2453 = vpop.f32.mrb[0].mxu0
    %v2454 = vadd.f32 %v2360, %v2453
    %v2455 = vpop.f32.mrb[0].mxu0
    %2456 = vmatprep.mubr.f32.mxu0 0.0
    %2457 = vmatmul.mubr.f32.gmra.mrb[0].mxu0 %v2378
    %v2458 = vpop.f32.mrb[0].mxu0
    %v2459 = vadd.f32 %v2360, %v2458
    %v2460 = vpop.f32.mrb[0].mxu0
    %2461 = vmatprep.mubr.f32.mxu0 0.0
    %2462 = vmatmul.mubr.f32.gmra.mrb[0].mxu0 %v2380
    %v2463 = vpop.f32.mrb[0].mxu0
    %v2464 = vadd.f32 %v2360, %v2463
    %v2465 = vpop.f32.mrb[0].mxu0
    %2466 = vdwg.mxu0
    %v2467 = vmax.f32 %v2449, 0.0
    %v2468 = vmax.f32 %v2454, 0.0
    %v2469 = vmax.f32 %v2459, 0.0
    %v2470 = vmax.f32 %v2464, 0.0
    %v2471 = vld [vmem:[#allocation8 + $0x8] sm:$0xff]
    %v2472 = vld [vmem:[#allocation8 + $0x18] sm:$0xff]
    %v2473 = vld [vmem:[#allocation8 + $0x28] sm:$0xff]
    %v2474 = vld [vmem:[#allocation8 + $0x38] sm:$0xff]
    %v2475 = vld [vmem:[#allocation8 + $0x48] sm:$0xff]
    %v2476 = vld [vmem:[#allocation8 + $0x58] sm:$0xff]
    %v2477 = vld [vmem:[#allocation8 + $0x68] sm:$0xff]
    %v2478 = vld [vmem:[#allocation8 + $0x78] sm:$0xff]
    %v2479 = vld [vmem:[#allocation11 + $0x19] sm:$0x1]
    %v2481 = vlaneseq
    %v2482 = vshrl.u32 %v2481, 7
    %v2483 = vsub.s32 0, %v2482
    %v2484 = vrot.slane %v2479, %v2483
    %v2487 = vsel %vm861, %v2467, 0
    %v2490 = vsel %vm861, %v2468, 0
    %v2493 = vsel %vm861, %v2469, 0
    %v2496 = vsel %vm861, %v2470, 0
    %2498 = vmatprep.subr.mxu0 0.0
    %2499 = vmatpush1.msra.mxu0 %v2471
    %2500 = vmatprep.subr.mxu0 0.0
    %2501 = vmatpush1.msra.mxu0 %v2472
    %2502 = vmatprep.subr.mxu0 0.0
    %2503 = vmatpush1.msra.mxu0 %v2473
    %2504 = vmatprep.subr.mxu0 0.0
    %2505 = vmatpush1.msra.mxu0 %v2474
    %2506 = vmatprep.subr.mxu0 0.0
    %2507 = vmatpush1.msra.mxu0 %v2475
    %2508 = vmatprep.subr.mxu0 0.0
    %2509 = vmatpush1.msra.mxu0 %v2476
    %2510 = vmatprep.subr.mxu0 0.0
    %2511 = vmatpush1.msra.mxu0 %v2477
    %2512 = vmatprep.subr.mxu0 0.0
    %2513 = vmatpush1.msra.mxu0 %v2478
    %2514 = vmatprep.subr.mxu0 0.0
    %2515 = vmatpush1.msra.mxu0 0.0
    %2516 = vmatprep.subr.mxu0 0.0
    %2517 = vmatpush1.msra.mxu0 0.0
    %2518 = vmatprep.subr.mxu0 0.0
    %2519 = vmatpush1.msra.mxu0 0.0
    %2520 = vmatprep.subr.mxu0 0.0
    %2521 = vmatpush1.msra.mxu0 0.0
    %2522 = vmatprep.subr.mxu0 0.0
    %2523 = vmatpush1.msra.mxu0 0.0
    %2524 = vmatprep.subr.mxu0 0.0
    %2525 = vmatpush1.msra.mxu0 0.0
    %2526 = vmatprep.subr.mxu0 0.0
    %2527 = vmatpush1.msra.mxu0 0.0
    %2528 = vmatprep.subr.mxu0 0.0
    %2529 = vmatpush1.msra.mxu0 0.0
    %2530 = vmatprep.subr.mxu0 0.0
    %2531 = vmatpush1.msra.mxu0 0.0
    %2532 = vmatprep.subr.mxu0 0.0
    %2533 = vmatpush1.msra.mxu0 0.0
    %2534 = vmatprep.subr.mxu0 0.0
    %2535 = vmatpush1.msra.mxu0 0.0
    %2536 = vmatprep.subr.mxu0 0.0
    %2537 = vmatpush1.msra.mxu0 0.0
    %2538 = vmatprep.subr.mxu0 0.0
    %2539 = vmatpush1.msra.mxu0 0.0
    %2540 = vmatprep.subr.mxu0 0.0
    %2541 = vmatpush1.msra.mxu0 0.0
    %2542 = vmatprep.subr.mxu0 0.0
    %2543 = vmatpush1.msra.mxu0 0.0
    %2544 = vmatprep.subr.mxu0 0.0
    %2545 = vmatpush1.msra.mxu0 0.0
    %2546 = vmatprep.subr.mxu0 0.0
    %2547 = vmatpush1.msra.mxu0 0.0
    %2548 = vmatprep.subr.mxu0 0.0
    %2549 = vmatpush1.msra.mxu0 0.0
    %2550 = vmatprep.subr.mxu0 0.0
    %2551 = vmatpush1.msra.mxu0 0.0
    %2552 = vmatprep.subr.mxu0 0.0
    %2553 = vmatpush1.msra.mxu0 0.0
    %2554 = vmatprep.subr.mxu0 0.0
    %2555 = vmatpush1.msra.mxu0 0.0
    %2556 = vmatprep.subr.mxu0 0.0
    %2557 = vmatpush1.msra.mxu0 0.0
    %2558 = vmatprep.subr.mxu0 0.0
    %2559 = vmatpush1.msra.mxu0 0.0
    %2560 = vmatprep.subr.mxu0 0.0
    %2561 = vmatpush1.msra.mxu0 0.0
    %2562 = vmatprep.mubr.f32.mxu0 0.0
    %2563 = vmatmul.mubr.f32.gmra.mrb[0].mxu0 %v2487
    %v2564 = vpop.f32.mrb[0].mxu0
    %v2565 = vadd.f32 %v2484, %v2564
    %v2566 = vpop.f32.mrb[0].mxu0
    %2567 = vmatprep.mubr.f32.mxu0 0.0
    %2568 = vmatmul.mubr.f32.gmra.mrb[0].mxu0 %v2490
    %v2569 = vpop.f32.mrb[0].mxu0
    %v2570 = vadd.f32 %v2484, %v2569
    %v2571 = vpop.f32.mrb[0].mxu0
    %2572 = vmatprep.mubr.f32.mxu0 0.0
    %2573 = vmatmul.mubr.f32.gmra.mrb[0].mxu0 %v2493
    %v2574 = vpop.f32.mrb[0].mxu0
    %v2575 = vadd.f32 %v2484, %v2574
    %v2576 = vpop.f32.mrb[0].mxu0
    %2577 = vmatprep.mubr.f32.mxu0 0.0
    %2578 = vmatmul.mubr.f32.gmra.mrb[0].mxu0 %v2496
    %v2579 = vpop.f32.mrb[0].mxu0
    %v2580 = vadd.f32 %v2484, %v2579
    %v2581 = vpop.f32.mrb[0].mxu0
    %2582 = vdwg.mxu0
    %v2583 = vsel %vm115, %v2565, %v2237
    %v2584 = vsel %vm115, %v2570, %v2238
    %v2585 = vsel %vm115, %v2575, %v2239
    %v2586 = vsel %vm115, %v2580, %v2240
    %v2587 = vld [vmem:[#allocation10 + $0x30] sm:$0xff]
    %v2588 = vld [vmem:[#allocation10 + $0x38] sm:$0xff]
    %v2589 = vld [vmem:[#allocation10 + $0x70] sm:$0xff]
    %v2590 = vld [vmem:[#allocation10 + $0x78] sm:$0xff]
    %v2591 = vld [vmem:[#allocation10 + $0xb0] sm:$0xff]
    %v2592 = vld [vmem:[#allocation10 + $0xb8] sm:$0xff]
    %v2593 = vld [vmem:[#allocation10 + $0xf0] sm:$0xff]
    %v2594 = vld [vmem:[#allocation10 + $0xf8] sm:$0xff]
    %v2595 = vld [vmem:[#allocation10 + $0x130] sm:$0xff]
    %v2596 = vld [vmem:[#allocation10 + $0x138] sm:$0xff]
    %v2597 = vld [vmem:[#allocation10 + $0x170] sm:$0xff]
    %v2598 = vld [vmem:[#allocation10 + $0x178] sm:$0xff]
    %v2599 = vld [vmem:[#allocation10 + $0x1b0] sm:$0xff]
    %v2600 = vld [vmem:[#allocation10 + $0x1b8] sm:$0xff]
    %v2601 = vld [vmem:[#allocation10 + $0x1f0] sm:$0xff]
    %v2602 = vld [vmem:[#allocation10 + $0x1f8] sm:$0xff]
    %v2604 = vsel %vm861, %v2583, 0
    %v2607 = vsel %vm861, %v2584, 0
    %v2610 = vsel %vm861, %v2585, 0
    %v2613 = vsel %vm861, %v2586, 0
    %2615 = vmatprep.subr.mxu0 %v2588
    %2616 = vmatpush1.msra.mxu0 %v2587
    %2617 = vmatprep.subr.mxu0 %v2590
    %2618 = vmatpush1.msra.mxu0 %v2589
    %2619 = vmatprep.subr.mxu0 %v2592
    %2620 = vmatpush1.msra.mxu0 %v2591
    %2621 = vmatprep.subr.mxu0 %v2594
    %2622 = vmatpush1.msra.mxu0 %v2593
    %2623 = vmatprep.subr.mxu0 %v2596
    %2624 = vmatpush1.msra.mxu0 %v2595
    %2625 = vmatprep.subr.mxu0 %v2598
    %2626 = vmatpush1.msra.mxu0 %v2597
    %2627 = vmatprep.subr.mxu0 %v2600
    %2628 = vmatpush1.msra.mxu0 %v2599
    %2629 = vmatprep.subr.mxu0 %v2602
    %2630 = vmatpush1.msra.mxu0 %v2601
    %2631 = vmatprep.subr.mxu0 0.0
    %2632 = vmatpush1.msra.mxu0 0.0
    %2633 = vmatprep.subr.mxu0 0.0
    %2634 = vmatpush1.msra.mxu0 0.0
    %2635 = vmatprep.subr.mxu0 0.0
    %2636 = vmatpush1.msra.mxu0 0.0
    %2637 = vmatprep.subr.mxu0 0.0
    %2638 = vmatpush1.msra.mxu0 0.0
    %2639 = vmatprep.subr.mxu0 0.0
    %2640 = vmatpush1.msra.mxu0 0.0
    %2641 = vmatprep.subr.mxu0 0.0
    %2642 = vmatpush1.msra.mxu0 0.0
    %2643 = vmatprep.subr.mxu0 0.0
    %2644 = vmatpush1.msra.mxu0 0.0
    %2645 = vmatprep.subr.mxu0 0.0
    %2646 = vmatpush1.msra.mxu0 0.0
    %2647 = vmatprep.subr.mxu0 0.0
    %2648 = vmatpush1.msra.mxu0 0.0
    %2649 = vmatprep.subr.mxu0 0.0
    %2650 = vmatpush1.msra.mxu0 0.0
    %2651 = vmatprep.subr.mxu0 0.0
    %2652 = vmatpush1.msra.mxu0 0.0
    %2653 = vmatprep.subr.mxu0 0.0
    %2654 = vmatpush1.msra.mxu0 0.0
    %2655 = vmatprep.subr.mxu0 0.0
    %2656 = vmatpush1.msra.mxu0 0.0
    %2657 = vmatprep.subr.mxu0 0.0
    %2658 = vmatpush1.msra.mxu0 0.0
    %2659 = vmatprep.subr.mxu0 0.0
    %2660 = vmatpush1.msra.mxu0 0.0
    %2661 = vmatprep.subr.mxu0 0.0
    %2662 = vmatpush1.msra.mxu0 0.0
    %2663 = vmatprep.subr.mxu0 0.0
    %2664 = vmatpush1.msra.mxu0 0.0
    %2665 = vmatprep.subr.mxu0 0.0
    %2666 = vmatpush1.msra.mxu0 0.0
    %2667 = vmatprep.subr.mxu0 0.0
    %2668 = vmatpush1.msra.mxu0 0.0
    %2669 = vmatprep.subr.mxu0 0.0
    %2670 = vmatpush1.msra.mxu0 0.0
    %2671 = vmatprep.subr.mxu0 0.0
    %2672 = vmatpush1.msra.mxu0 0.0
    %2673 = vmatprep.subr.mxu0 0.0
    %2674 = vmatpush1.msra.mxu0 0.0
    %2675 = vmatprep.subr.mxu0 0.0
    %2676 = vmatpush1.msra.mxu0 0.0
    %2677 = vmatprep.subr.mxu0 0.0
    %2678 = vmatpush1.msra.mxu0 0.0
    %2679 = vmatprep.mubr.f32.mxu0 0.0
    %2680 = vmatmul.mubr.f32.gmra.mrb[0].mxu0 %v2604
    %v2681 = vpop.f32.mrb[0].mxu0
    %v2682 = vadd.f32 0.0, %v2681
    %v2683 = vpop.f32.mrb[0].mxu0
    %v2684 = vadd.f32 0.0, %v2683
    %2685 = vmatprep.mubr.f32.mxu0 0.0
    %2686 = vmatmul.mubr.f32.gmra.mrb[0].mxu0 %v2607
    %v2687 = vpop.f32.mrb[0].mxu0
    %v2688 = vadd.f32 0.0, %v2687
    %v2689 = vpop.f32.mrb[0].mxu0
    %v2690 = vadd.f32 0.0, %v2689
    %2691 = vmatprep.mubr.f32.mxu0 0.0
    %2692 = vmatmul.mubr.f32.gmra.mrb[0].mxu0 %v2610
    %v2693 = vpop.f32.mrb[0].mxu0
    %v2694 = vadd.f32 0.0, %v2693
    %v2695 = vpop.f32.mrb[0].mxu0
    %v2696 = vadd.f32 0.0, %v2695
    %2697 = vmatprep.mubr.f32.mxu0 0.0
    %2698 = vmatmul.mubr.f32.gmra.mrb[0].mxu0 %v2613
    %v2699 = vpop.f32.mrb[0].mxu0
    %v2700 = vadd.f32 0.0, %v2699
    %v2701 = vpop.f32.mrb[0].mxu0
    %v2702 = vadd.f32 0.0, %v2701
    %2703 = vdwg.mxu0
    %v2704 = vld [vmem:[#allocation11 + $0x1a] sm:$0x1]
    %v2706 = vlaneseq
    %v2707 = vshrl.u32 %v2706, 7
    %v2708 = vsub.s32 0, %v2707
    %v2709 = vrot.slane %v2704, %v2708
    %v2711 = vadd.f32 %v2682, %v2709
    %v2712 = vadd.f32 %v2688, %v2709
    %v2713 = vadd.f32 %v2694, %v2709
    %v2714 = vadd.f32 %v2700, %v2709
    %v2715 = vld [vmem:[#allocation11 + $0x1b] sm:$0x1]
    %v2717 = vlaneseq
    %v2718 = vshrl.u32 %v2717, 7
    %v2719 = vsub.s32 0, %v2718
    %v2720 = vrot.slane %v2715, %v2719
    %2721 = vrot.lane.b32.xlu0 %v2720, 96
    %v2722 = vpop.permute.xlu0 %2721
    %v2724 = vadd.f32 %v2682, %v2722
    %v2725 = vadd.f32 %v2684, %v2722
    %v2726 = vadd.f32 %v2688, %v2722
    %v2727 = vadd.f32 %v2690, %v2722
    %v2728 = vadd.f32 %v2694, %v2722
    %v2729 = vadd.f32 %v2696, %v2722
    %v2730 = vadd.f32 %v2700, %v2722
    %v2731 = vadd.f32 %v2702, %v2722
    %2740 = vrot.lane.b32.xlu0 %v2724, 32
    %v2741 = vpop.permute.xlu0 %2740
    %2742 = vrot.lane.b32.xlu0 %v2725, 32
    %v2743 = vpop.permute.xlu0 %2742
    %2744 = vrot.lane.b32.xlu0 %v2726, 32
    %v2745 = vpop.permute.xlu0 %2744
    %2746 = vrot.lane.b32.xlu0 %v2727, 32
    %v2747 = vpop.permute.xlu0 %2746
    %2748 = vrot.lane.b32.xlu0 %v2728, 32
    %v2749 = vpop.permute.xlu0 %2748
    %2750 = vrot.lane.b32.xlu0 %v2729, 32
    %v2751 = vpop.permute.xlu0 %2750
    %2752 = vrot.lane.b32.xlu0 %v2730, 32
    %v2753 = vpop.permute.xlu0 %2752
    %2754 = vrot.lane.b32.xlu0 %v2731, 32
    %v2755 = vpop.permute.xlu0 %2754
    %v2756 = vsel %vm115, %v2741, %v2743
    %v2757 = vsel %vm115, %v2745, %v2747
    %v2758 = vsel %vm115, %v2749, %v2751
    %v2759 = vsel %vm115, %v2753, %v2755
    %v2764 = vadd.f32 %v2711, %v2756
    %v2765 = vadd.f32 %v2712, %v2757
    %v2766 = vadd.f32 %v2713, %v2758
    %v2767 = vadd.f32 %v2714, %v2759
    %v2768 = vxor.u32 %v2764, 2147483648
    %v2769 = vxor.u32 %v2765, 2147483648
    %v2770 = vxor.u32 %v2766, 2147483648
    %v2771 = vxor.u32 %v2767, 2147483648
    %v2772 = vmul.f32 %v2768, 1.442695
    %v2773 = vpow.pop %v2772
    %v2774 = vmul.f32 %v2769, 1.442695
    %v2775 = vpow.pop %v2774
    %v2776 = vmul.f32 %v2770, 1.442695
    %v2777 = vpow.pop %v2776
    %v2778 = vmul.f32 %v2771, 1.442695
    %v2779 = vpow.pop %v2778
    %v2780 = vadd.f32 %v2773, 1.0
    %v2781 = vadd.f32 %v2775, 1.0
    %v2782 = vadd.f32 %v2777, 1.0
    %v2783 = vadd.f32 %v2779, 1.0
    %v2784 = vrcp.pop %v2780
    %v2785 = vmul.f32 1.0, %v2784
    %v2786 = vrcp.pop %v2781
    %v2787 = vmul.f32 1.0, %v2786
    %v2788 = vrcp.pop %v2782
    %v2789 = vmul.f32 1.0, %v2788
    %v2790 = vrcp.pop %v2783
    %v2791 = vmul.f32 1.0, %v2790
    %2792 = vrot.lane.b32.xlu0 %v2725, 96
    %v2793 = vpop.permute.xlu0 %2792
    %2794 = vrot.lane.b32.xlu0 %v2727, 96
    %v2795 = vpop.permute.xlu0 %2794
    %2796 = vrot.lane.b32.xlu0 %v2729, 96
    %v2797 = vpop.permute.xlu0 %2796
    %2798 = vrot.lane.b32.xlu0 %v2731, 96
    %v2799 = vpop.permute.xlu0 %2798
    %v2804 = vmul.f32 %v2785, %v2793
    %v2805 = vmul.f32 %v2787, %v2795
    %v2806 = vmul.f32 %v2789, %v2797
    %v2807 = vmul.f32 %v2791, %v2799
    %2812 = vrot.lane.b32.xlu0 %v2804, 64
    %v2813 = vpop.permute.xlu0 %2812
    %2814 = vrot.lane.b32.xlu0 %v2805, 64
    %v2815 = vpop.permute.xlu0 %2814
    %2816 = vrot.lane.b32.xlu0 %v2806, 64
    %v2817 = vpop.permute.xlu0 %2816
    %2818 = vrot.lane.b32.xlu0 %v2807, 64
    %v2819 = vpop.permute.xlu0 %2818
    %v2824 = vadd.f32 %v2711, %v2813
    %v2825 = vadd.f32 %v2712, %v2815
    %v2826 = vadd.f32 %v2713, %v2817
    %v2827 = vadd.f32 %v2714, %v2819
    %v2828 = vtanh.pop %v2824
    %v2829 = vtanh.pop %v2825
    %v2830 = vtanh.pop %v2826
    %v2831 = vtanh.pop %v2827
    %v2832 = vsub.f32 1.0, %v2785
    %v2833 = vsub.f32 1.0, %v2787
    %v2834 = vsub.f32 1.0, %v2789
    %v2835 = vsub.f32 1.0, %v2791
    %2840 = vrot.lane.b32.xlu0 %v2828, 96
    %v2841 = vpop.permute.xlu0 %2840
    %2842 = vrot.lane.b32.xlu0 %v2829, 96
    %v2843 = vpop.permute.xlu0 %2842
    %2844 = vrot.lane.b32.xlu0 %v2830, 96
    %v2845 = vpop.permute.xlu0 %2844
    %2846 = vrot.lane.b32.xlu0 %v2831, 96
    %v2847 = vpop.permute.xlu0 %2846
    %v2852 = vmul.f32 %v2832, %v2841
    %v2853 = vmul.f32 %v2833, %v2843
    %v2854 = vmul.f32 %v2834, %v2845
    %v2855 = vmul.f32 %v2835, %v2847
    %v2856 = vmul.f32 %v2785, %v2237
    %v2857 = vmul.f32 %v2787, %v2238
    %v2858 = vmul.f32 %v2789, %v2239
    %v2859 = vmul.f32 %v2791, %v2240
    %v2860 = vadd.f32 %v2852, %v2856
    %v2861 = vadd.f32 %v2853, %v2857
    %v2862 = vadd.f32 %v2854, %v2858
    %v2863 = vadd.f32 %v2855, %v2859
    %v2864 = vld [vmem:[#allocation11 + $0x2] sm:$0x1]
    %v2865 = vld [vmem:[#allocation11 + $0x3] sm:$0x1]
    %v2867 = vlaneseq
    %v2868 = vshrl.u32 %v2867, 7
    %v2869 = vsub.s32 0, %v2868
    %v2870 = vrot.slane %v2864, %v2869
    %2871 = vrot.lane.b32.xlu0 %v2870, 32
    %v2872 = vpop.permute.xlu0 %2871
    %v2874 = vmul.f32 %v1391, %v2872
    %v2876 = vlaneseq
    %v2877 = vshrl.u32 %v2876, 7
    %v2878 = vsub.s32 0, %v2877
    %v2879 = vrot.slane %v2865, %v2878
    %2880 = vrot.lane.b32.xlu0 %v2879, 32
    %v2881 = vpop.permute.xlu0 %2880
    %v2883 = vadd.f32 %v2874, %v2881
    %v2884 = vld [vmem:[#allocation11 + $0x4] sm:$0x1]
    %v2885 = vld [vmem:[#allocation11 + $0x5] sm:$0x1]
    %2890 = vrot.lane.b32.xlu0 %v2860, 96
    %v2891 = vpop.permute.xlu0 %2890
    %2892 = vrot.lane.b32.xlu0 %v2861, 96
    %v2893 = vpop.permute.xlu0 %2892
    %2894 = vrot.lane.b32.xlu0 %v2862, 96
    %v2895 = vpop.permute.xlu0 %2894
    %2896 = vrot.lane.b32.xlu0 %v2863, 96
    %v2897 = vpop.permute.xlu0 %2896
    %v2902 = vsel %vm115, %v2891, 0.0
    %2903 = vadd.xlane.f32.xlu0 %v2902
    %v2904 = vpop.xlane.xlu0 %2903
    %v2905 = vsel %vm115, %v2893, 0.0
    %2906 = vadd.xlane.f32.xlu0 %v2905
    %v2907 = vpop.xlane.xlu0 %2906
    %v2908 = vsel %vm115, %v2895, 0.0
    %2909 = vadd.xlane.f32.xlu0 %v2908
    %v2910 = vpop.xlane.xlu0 %2909
    %v2911 = vsel %vm115, %v2897, 0.0
    %2912 = vadd.xlane.f32.xlu0 %v2911
    %v2913 = vpop.xlane.xlu0 %2912
    %v2914 = vmul.f32 %v2904, %v128
    %v2915 = vmul.f32 %v2907, %v128
    %v2916 = vmul.f32 %v2910, %v128
    %v2917 = vmul.f32 %v2913, %v128
    %v2918 = vsub.f32 %v2860, %v2914
    %v2919 = vsub.f32 %v2861, %v2915
    %v2920 = vsub.f32 %v2862, %v2916
    %v2921 = vsub.f32 %v2863, %v2917
    %v2922 = vmul.f32 %v2918, %v2918
    %v2923 = vmul.f32 %v2919, %v2919
    %v2924 = vmul.f32 %v2920, %v2920
    %v2925 = vmul.f32 %v2921, %v2921
    %2930 = vrot.lane.b32.xlu0 %v2922, 96
    %v2931 = vpop.permute.xlu0 %2930
    %2932 = vrot.lane.b32.xlu0 %v2923, 96
    %v2933 = vpop.permute.xlu0 %2932
    %2934 = vrot.lane.b32.xlu0 %v2924, 96
    %v2935 = vpop.permute.xlu0 %2934
    %2936 = vrot.lane.b32.xlu0 %v2925, 96
    %v2937 = vpop.permute.xlu0 %2936
    %v2942 = vsel %vm115, %v2931, 0.0
    %2943 = vadd.xlane.f32.xlu0 %v2942
    %v2944 = vpop.xlane.xlu0 %2943
    %v2945 = vsel %vm115, %v2933, 0.0
    %2946 = vadd.xlane.f32.xlu0 %v2945
    %v2947 = vpop.xlane.xlu0 %2946
    %v2948 = vsel %vm115, %v2935, 0.0
    %2949 = vadd.xlane.f32.xlu0 %v2948
    %v2950 = vpop.xlane.xlu0 %2949
    %v2951 = vsel %vm115, %v2937, 0.0
    %2952 = vadd.xlane.f32.xlu0 %v2951
    %v2953 = vpop.xlane.xlu0 %2952
    %v2954 = vmul.f32 %v2944, %v128
    %v2955 = vmul.f32 %v2947, %v128
    %v2956 = vmul.f32 %v2950, %v128
    %v2957 = vmul.f32 %v2953, %v128
    %v2958 = vadd.f32 %v2954, 1e-05
    %v2959 = vadd.f32 %v2955, 1e-05
    %v2960 = vadd.f32 %v2956, 1e-05
    %v2961 = vadd.f32 %v2957, 1e-05
    %v2962 = vrsqrt.pop %v2958
    %v2963 = vrsqrt.pop %v2959
    %v2964 = vrsqrt.pop %v2960
    %v2965 = vrsqrt.pop %v2961
    %v2966 = vmul.f32 %v2918, %v2962
    %v2967 = vmul.f32 %v2919, %v2963
    %v2968 = vmul.f32 %v2920, %v2964
    %v2969 = vmul.f32 %v2921, %v2965
    %v2971 = vlaneseq
    %v2972 = vshrl.u32 %v2971, 7
    %v2973 = vsub.s32 0, %v2972
    %v2974 = vrot.slane %v2884, %v2973
    %2975 = vrot.lane.b32.xlu0 %v2974, 32
    %v2976 = vpop.permute.xlu0 %2975
    %v2978 = vmul.f32 %v2966, %v2976
    %v2979 = vmul.f32 %v2967, %v2976
    %v2980 = vmul.f32 %v2968, %v2976
    %v2981 = vmul.f32 %v2969, %v2976
    %v2983 = vlaneseq
    %v2984 = vshrl.u32 %v2983, 7
    %v2985 = vsub.s32 0, %v2984
    %v2986 = vrot.slane %v2885, %v2985
    %2987 = vrot.lane.b32.xlu0 %v2986, 32
    %v2988 = vpop.permute.xlu0 %2987
    %v2990 = vadd.f32 %v2978, %v2988
    %v2991 = vadd.f32 %v2979, %v2988
    %v2992 = vadd.f32 %v2980, %v2988
    %v2993 = vadd.f32 %v2981, %v2988
    %v2994 = vld [vmem:[#allocation7] sm:$0xff]
    %v2995 = vld [vmem:[#allocation7 + $0x20] sm:$0xff]
    %v2996 = vld [vmem:[#allocation7 + $0x40] sm:$0xff]
    %v2997 = vld [vmem:[#allocation7 + $0x60] sm:$0xff]
    %v2998 = vld [vmem:[#allocation11 + $0x6] sm:$0x1]
    %v3000 = vlaneseq
    %v3001 = vshrl.u32 %v3000, 7
    %v3002 = vsub.s32 0, %v3001
    %v3003 = vrot.slane %v2998, %v3002
    %3010 = vrot.lane.b32.xlu0 %v2883, 96
    %v3011 = vpop.permute.xlu0 %3010
    %3012 = vrot.lane.b32.xlu0 %v2990, 96
    %v3013 = vpop.permute.xlu0 %3012
    %3014 = vrot.lane.b32.xlu0 %v2991, 96
    %v3015 = vpop.permute.xlu0 %3014
    %3016 = vrot.lane.b32.xlu0 %v2992, 96
    %v3017 = vpop.permute.xlu0 %3016
    %3018 = vrot.lane.b32.xlu0 %v2993, 96
    %v3019 = vpop.permute.xlu0 %3018
    %v3020 = vsel %vm115, %v3011, 0
    %v3022 = vsel %vm115, %v3013, 0
    %v3024 = vsel %vm115, %v3015, 0
    %v3026 = vsel %vm115, %v3017, 0
    %v3028 = vsel %vm115, %v3019, 0
    %3030 = vmatprep.subr.mxu0 0.0
    %3031 = vmatpush1.msra.mxu0 %v2994
    %3032 = vmatprep.subr.mxu0 0.0
    %3033 = vmatpush1.msra.mxu0 %v2995
    %3034 = vmatprep.subr.mxu0 0.0
    %3035 = vmatpush1.msra.mxu0 %v2996
    %3036 = vmatprep.subr.mxu0 0.0
    %3037 = vmatpush1.msra.mxu0 %v2997
    %3038 = vmatprep.subr.mxu0 0.0
    %3039 = vmatpush1.msra.mxu0 0.0
    %3040 = vmatprep.subr.mxu0 0.0
    %3041 = vmatpush1.msra.mxu0 0.0
    %3042 = vmatprep.subr.mxu0 0.0
    %3043 = vmatpush1.msra.mxu0 0.0
    %3044 = vmatprep.subr.mxu0 0.0
    %3045 = vmatpush1.msra.mxu0 0.0
    %3046 = vmatprep.subr.mxu0 0.0
    %3047 = vmatpush1.msra.mxu0 0.0
    %3048 = vmatprep.subr.mxu0 0.0
    %3049 = vmatpush1.msra.mxu0 0.0
    %3050 = vmatprep.subr.mxu0 0.0
    %3051 = vmatpush1.msra.mxu0 0.0
    %3052 = vmatprep.subr.mxu0 0.0
    %3053 = vmatpush1.msra.mxu0 0.0
    %3054 = vmatprep.subr.mxu0 0.0
    %3055 = vmatpush1.msra.mxu0 0.0
    %3056 = vmatprep.subr.mxu0 0.0
    %3057 = vmatpush1.msra.mxu0 0.0
    %3058 = vmatprep.subr.mxu0 0.0
    %3059 = vmatpush1.msra.mxu0 0.0
    %3060 = vmatprep.subr.mxu0 0.0
    %3061 = vmatpush1.msra.mxu0 0.0
    %3062 = vmatprep.subr.mxu0 0.0
    %3063 = vmatpush1.msra.mxu0 0.0
    %3064 = vmatprep.subr.mxu0 0.0
    %3065 = vmatpush1.msra.mxu0 0.0
    %3066 = vmatprep.subr.mxu0 0.0
    %3067 = vmatpush1.msra.mxu0 0.0
    %3068 = vmatprep.subr.mxu0 0.0
    %3069 = vmatpush1.msra.mxu0 0.0
    %3070 = vmatprep.subr.mxu0 0.0
    %3071 = vmatpush1.msra.mxu0 0.0
    %3072 = vmatprep.subr.mxu0 0.0
    %3073 = vmatpush1.msra.mxu0 0.0
    %3074 = vmatprep.subr.mxu0 0.0
    %3075 = vmatpush1.msra.mxu0 0.0
    %3076 = vmatprep.subr.mxu0 0.0
    %3077 = vmatpush1.msra.mxu0 0.0
    %3078 = vmatprep.subr.mxu0 0.0
    %3079 = vmatpush1.msra.mxu0 0.0
    %3080 = vmatprep.subr.mxu0 0.0
    %3081 = vmatpush1.msra.mxu0 0.0
    %3082 = vmatprep.subr.mxu0 0.0
    %3083 = vmatpush1.msra.mxu0 0.0
    %3084 = vmatprep.subr.mxu0 0.0
    %3085 = vmatpush1.msra.mxu0 0.0
    %3086 = vmatprep.subr.mxu0 0.0
    %3087 = vmatpush1.msra.mxu0 0.0
    %3088 = vmatprep.subr.mxu0 0.0
    %3089 = vmatpush1.msra.mxu0 0.0
    %3090 = vmatprep.subr.mxu0 0.0
    %3091 = vmatpush1.msra.mxu0 0.0
    %3092 = vmatprep.subr.mxu0 0.0
    %3093 = vmatpush1.msra.mxu0 0.0
    %3094 = vmatprep.mubr.f32.mxu0 0.0
    %3095 = vmatmul.mubr.f32.gmra.mrb[0].mxu0 %v3020
    %v3096 = vpop.f32.mrb[0].mxu0
    %v3097 = vadd.f32 %v3003, %v3096
    %v3098 = vpop.f32.mrb[0].mxu0
    %3099 = vmatprep.mubr.f32.mxu0 0.0
    %3100 = vmatmul.mubr.f32.gmra.mrb[0].mxu0 %v3022
    %v3101 = vpop.f32.mrb[0].mxu0
    %v3102 = vadd.f32 %v3003, %v3101
    %v3103 = vpop.f32.mrb[0].mxu0
    %3104 = vmatprep.mubr.f32.mxu0 0.0
    %3105 = vmatmul.mubr.f32.gmra.mrb[0].mxu0 %v3024
    %v3106 = vpop.f32.mrb[0].mxu0
    %v3107 = vadd.f32 %v3003, %v3106
    %v3108 = vpop.f32.mrb[0].mxu0
    %3109 = vmatprep.mubr.f32.mxu0 0.0
    %3110 = vmatmul.mubr.f32.gmra.mrb[0].mxu0 %v3026
    %v3111 = vpop.f32.mrb[0].mxu0
    %v3112 = vadd.f32 %v3003, %v3111
    %v3113 = vpop.f32.mrb[0].mxu0
    %3114 = vmatprep.mubr.f32.mxu0 0.0
    %3115 = vmatmul.mubr.f32.gmra.mrb[0].mxu0 %v3028
    %v3116 = vpop.f32.mrb[0].mxu0
    %v3117 = vadd.f32 %v3003, %v3116
    %v3118 = vpop.f32.mrb[0].mxu0
    %3119 = vdwg.mxu0
    %v3121 = vcombine.high %v3097, %v3097
    %3124 = vrot.lane.b32.xlu0 %v3102, 96
    %v3125 = vpop.permute.xlu0 %3124
    %3126 = vrot.lane.b32.xlu0 %v3107, 96
    %v3127 = vpop.permute.xlu0 %3126
    %v3128 = vsel %vm115, %v3097, 0
    %v3130 = vsel %vm115, %v3125, 0
    %v3132 = vsel %vm115, %v3127, 0
    %3134 = vmatprep.subr.mxu0 0.0
    %3135 = vmatpush1.xpose.msra.mxu0 %v3130
    %3136 = vmatprep.subr.mxu0 0.0
    %3137 = vmatpush1.xpose.msra.mxu0 %v3132
    %3138 = vmatprep.subr.mxu0 0.0
    %3139 = vmatpush1.xpose.msra.mxu0 0.0
    %3140 = vmatprep.subr.mxu0 0.0
    %3141 = vmatpush1.xpose.msra.mxu0 0.0
    %3142 = vmatprep.subr.mxu0 0.0
    %3143 = vmatpush1.xpose.msra.mxu0 0.0
    %3144 = vmatprep.subr.mxu0 0.0
    %3145 = vmatpush1.xpose.msra.mxu0 0.0
    %3146 = vmatprep.subr.mxu0 0.0
    %3147 = vmatpush1.xpose.msra.mxu0 0.0
    %3148 = vmatprep.subr.mxu0 0.0
    %3149 = vmatpush1.xpose.msra.mxu0 0.0
    %3150 = vmatprep.subr.mxu0 0.0
    %3151 = vmatpush1.xpose.msra.mxu0 0.0
    %3152 = vmatprep.subr.mxu0 0.0
    %3153 = vmatpush1.xpose.msra.mxu0 0.0
    %3154 = vmatprep.subr.mxu0 0.0
    %3155 = vmatpush1.xpose.msra.mxu0 0.0
    %3156 = vmatprep.subr.mxu0 0.0
    %3157 = vmatpush1.xpose.msra.mxu0 0.0
    %3158 = vmatprep.subr.mxu0 0.0
    %3159 = vmatpush1.xpose.msra.mxu0 0.0
    %3160 = vmatprep.subr.mxu0 0.0
    %3161 = vmatpush1.xpose.msra.mxu0 0.0
    %3162 = vmatprep.subr.mxu0 0.0
    %3163 = vmatpush1.xpose.msra.mxu0 0.0
    %3164 = vmatprep.subr.mxu0 0.0
    %3165 = vmatpush1.xpose.msra.mxu0 0.0
    %3166 = vmatprep.subr.mxu0 0.0
    %3167 = vmatpush1.xpose.msra.mxu0 0.0
    %3168 = vmatprep.subr.mxu0 0.0
    %3169 = vmatpush1.xpose.msra.mxu0 0.0
    %3170 = vmatprep.subr.mxu0 0.0
    %3171 = vmatpush1.xpose.msra.mxu0 0.0
    %3172 = vmatprep.subr.mxu0 0.0
    %3173 = vmatpush1.xpose.msra.mxu0 0.0
    %3174 = vmatprep.subr.mxu0 0.0
    %3175 = vmatpush1.xpose.msra.mxu0 0.0
    %3176 = vmatprep.subr.mxu0 0.0
    %3177 = vmatpush1.xpose.msra.mxu0 0.0
    %3178 = vmatprep.subr.mxu0 0.0
    %3179 = vmatpush1.xpose.msra.mxu0 0.0
    %3180 = vmatprep.subr.mxu0 0.0
    %3181 = vmatpush1.xpose.msra.mxu0 0.0
    %3182 = vmatprep.subr.mxu0 0.0
    %3183 = vmatpush1.xpose.msra.mxu0 0.0
    %3184 = vmatprep.subr.mxu0 0.0
    %3185 = vmatpush1.xpose.msra.mxu0 0.0
    %3186 = vmatprep.subr.mxu0 0.0
    %3187 = vmatpush1.xpose.msra.mxu0 0.0
    %3188 = vmatprep.subr.mxu0 0.0
    %3189 = vmatpush1.xpose.msra.mxu0 0.0
    %3190 = vmatprep.subr.mxu0 0.0
    %3191 = vmatpush1.xpose.msra.mxu0 0.0
    %3192 = vmatprep.subr.mxu0 0.0
    %3193 = vmatpush1.xpose.msra.mxu0 0.0
    %3194 = vmatprep.subr.mxu0 0.0
    %3195 = vmatpush1.xpose.msra.mxu0 0.0
    %3196 = vmatprep.subr.mxu0 0.0
    %3197 = vmatpush1.xpose.msra.mxu0 0.0
    %3198 = vmatprep.mubr.f32.mxu0 0.0
    %3199 = vmatmul.mubr.f32.gmra.mrb[0].mxu0 %v3128
    %v3200 = vpop.f32.mrb[0].mxu0
    %v3201 = vadd.f32 0.0, %v3200
    %v3202 = vpop.f32.mrb[0].mxu0
    %3203 = vdwg.mxu0
    %3206 = vrot.lane.b32.xlu0 %v3112, 96
    %v3207 = vpop.permute.xlu0 %3206
    %3208 = vrot.lane.b32.xlu0 %v3117, 96
    %v3209 = vpop.permute.xlu0 %3208
    %v3210 = vsel %vm115, %v3121, 0
    %v3212 = vsel %vm115, %v3207, 0
    %v3214 = vsel %vm115, %v3209, 0
    %3216 = vmatprep.subr.mxu0 0.0
    %3217 = vmatpush1.xpose.msra.mxu0 %v3212
    %3218 = vmatprep.subr.mxu0 0.0
    %3219 = vmatpush1.xpose.msra.mxu0 %v3214
    %3220 = vmatprep.subr.mxu0 0.0
    %3221 = vmatpush1.xpose.msra.mxu0 0.0
    %3222 = vmatprep.subr.mxu0 0.0
    %3223 = vmatpush1.xpose.msra.mxu0 0.0
    %3224 = vmatprep.subr.mxu0 0.0
    %3225 = vmatpush1.xpose.msra.mxu0 0.0
    %3226 = vmatprep.subr.mxu0 0.0
    %3227 = vmatpush1.xpose.msra.mxu0 0.0
    %3228 = vmatprep.subr.mxu0 0.0
    %3229 = vmatpush1.xpose.msra.mxu0 0.0
    %3230 = vmatprep.subr.mxu0 0.0
    %3231 = vmatpush1.xpose.msra.mxu0 0.0
    %3232 = vmatprep.subr.mxu0 0.0
    %3233 = vmatpush1.xpose.msra.mxu0 0.0
    %3234 = vmatprep.subr.mxu0 0.0
    %3235 = vmatpush1.xpose.msra.mxu0 0.0
    %3236 = vmatprep.subr.mxu0 0.0
    %3237 = vmatpush1.xpose.msra.mxu0 0.0
    %3238 = vmatprep.subr.mxu0 0.0
    %3239 = vmatpush1.xpose.msra.mxu0 0.0
    %3240 = vmatprep.subr.mxu0 0.0
    %3241 = vmatpush1.xpose.msra.mxu0 0.0
    %3242 = vmatprep.subr.mxu0 0.0
    %3243 = vmatpush1.xpose.msra.mxu0 0.0
    %3244 = vmatprep.subr.mxu0 0.0
    %3245 = vmatpush1.xpose.msra.mxu0 0.0
    %3246 = vmatprep.subr.mxu0 0.0
    %3247 = vmatpush1.xpose.msra.mxu0 0.0
    %3248 = vmatprep.subr.mxu0 0.0
    %3249 = vmatpush1.xpose.msra.mxu0 0.0
    %3250 = vmatprep.subr.mxu0 0.0
    %3251 = vmatpush1.xpose.msra.mxu0 0.0
    %3252 = vmatprep.subr.mxu0 0.0
    %3253 = vmatpush1.xpose.msra.mxu0 0.0
    %3254 = vmatprep.subr.mxu0 0.0
    %3255 = vmatpush1.xpose.msra.mxu0 0.0
    %3256 = vmatprep.subr.mxu0 0.0
    %3257 = vmatpush1.xpose.msra.mxu0 0.0
    %3258 = vmatprep.subr.mxu0 0.0
    %3259 = vmatpush1.xpose.msra.mxu0 0.0
    %3260 = vmatprep.subr.mxu0 0.0
    %3261 = vmatpush1.xpose.msra.mxu0 0.0
    %3262 = vmatprep.subr.mxu0 0.0
    %3263 = vmatpush1.xpose.msra.mxu0 0.0
    %3264 = vmatprep.subr.mxu0 0.0
    %3265 = vmatpush1.xpose.msra.mxu0 0.0
    %3266 = vmatprep.subr.mxu0 0.0
    %3267 = vmatpush1.xpose.msra.mxu0 0.0
    %3268 = vmatprep.subr.mxu0 0.0
    %3269 = vmatpush1.xpose.msra.mxu0 0.0
    %3270 = vmatprep.subr.mxu0 0.0
    %3271 = vmatpush1.xpose.msra.mxu0 0.0
    %3272 = vmatprep.subr.mxu0 0.0
    %3273 = vmatpush1.xpose.msra.mxu0 0.0
    %3274 = vmatprep.subr.mxu0 0.0
    %3275 = vmatpush1.xpose.msra.mxu0 0.0
    %3276 = vmatprep.subr.mxu0 0.0
    %3277 = vmatpush1.xpose.msra.mxu0 0.0
    %3278 = vmatprep.subr.mxu0 0.0
    %3279 = vmatpush1.xpose.msra.mxu0 0.0
    %3280 = vmatprep.mubr.f32.mxu0 0.0
    %3281 = vmatmul.mubr.f32.gmra.mrb[0].mxu0 %v3210
    %v3282 = vpop.f32.mrb[0].mxu0
    %v3283 = vadd.f32 0.0, %v3282
    %v3284 = vpop.f32.mrb[0].mxu0
    %3285 = vdwg.mxu0
    %v3286 = vsel %vm627, %v3201, -inf
    %v3287 = vrot.slane %v3286, 4
    %v3288 = vmax.f32 %v3286, %v3287
    %v3289 = vrot.slane %v3288, 2
    %v3290 = vmax.f32 %v3288, %v3289
    %v3291 = vrot.slane %v3290, 1
    %v3292 = vmax.f32 %v3290, %v3291
    %v3293 = vsel %vm627, %v3283, -inf
    %v3294 = vrot.slane %v3293, 4
    %v3295 = vmax.f32 %v3293, %v3294
    %v3296 = vrot.slane %v3295, 2
    %v3297 = vmax.f32 %v3295, %v3296
    %v3298 = vrot.slane %v3297, 1
    %v3299 = vmax.f32 %v3297, %v3298
    %v3300 = vsub.f32 %v3201, %v3292
    %v3301 = vsub.f32 %v3283, %v3299
    %v3302 = vmul.f32 %v3300, 1.442695
    %v3303 = vpow.pop %v3302
    %v3304 = vmul.f32 %v3301, 1.442695
    %v3305 = vpow.pop %v3304
    %v3306 = vsel %vm627, %v3303, 0.0
    %v3307 = vrot.slane %v3306, 4
    %v3308 = vadd.f32 %v3306, %v3307
    %v3309 = vrot.slane %v3308, 2
    %v3310 = vadd.f32 %v3308, %v3309
    %v3311 = vrot.slane %v3310, 1
    %v3312 = vadd.f32 %v3310, %v3311
    %v3313 = vsel %vm627, %v3305, 0.0
    %v3314 = vrot.slane %v3313, 4
    %v3315 = vadd.f32 %v3313, %v3314
    %v3316 = vrot.slane %v3315, 2
    %v3317 = vadd.f32 %v3315, %v3316
    %v3318 = vrot.slane %v3317, 1
    %v3319 = vadd.f32 %v3317, %v3318
    %v3320 = vrcp.pop %v3312
    %v3321 = vrcp.pop %v3319
    %v3322 = vmul.f32 %v3303, %v3320
    %v3323 = vmul.f32 %v3305, %v3321
    %v3324 = vadd.f32 %v3322, 1e-08
    %v3325 = vadd.f32 %v3323, 1e-08
    %v3326 = vsel %vm627, %v3324, 0.0
    %3327 = vadd.xlane.f32.xlu0 %v3326
    %v3328 = vpop.xlane.xlu0 %3327
    %v3329 = vsel %vm627, %v3325, 0.0
    %3330 = vadd.xlane.f32.xlu0 %v3329
    %v3331 = vpop.xlane.xlu0 %3330
    %v3332 = vrcp.pop %v3328
    %v3333 = vmul.f32 %v3324, %v3332
    %v3334 = vrcp.pop %v3331
    %v3335 = vmul.f32 %v3325, %v3334
    %3336 = vrot.lane.b32.xlu0 %v3102, 64
    %v3337 = vpop.permute.xlu0 %3336
    %3338 = vrot.lane.b32.xlu0 %v3107, 64
    %v3339 = vpop.permute.xlu0 %3338
    %v3343 = vsel %vm684, %v3333, 0
    %3345 = vmatprep.subr.mxu0 0.0
    %3346 = vmatpush1.msra.mxu0 %v3337
    %3347 = vmatprep.subr.mxu0 0.0
    %3348 = vmatpush1.msra.mxu0 %v3339
    %3349 = vmatprep.subr.mxu0 0.0
    %3350 = vmatpush1.msra.mxu0 0.0
    %3351 = vmatprep.subr.mxu0 0.0
    %3352 = vmatpush1.msra.mxu0 0.0
    %3353 = vmatprep.subr.mxu0 0.0
    %3354 = vmatpush1.msra.mxu0 0.0
    %3355 = vmatprep.subr.mxu0 0.0
    %3356 = vmatpush1.msra.mxu0 0.0
    %3357 = vmatprep.subr.mxu0 0.0
    %3358 = vmatpush1.msra.mxu0 0.0
    %3359 = vmatprep.subr.mxu0 0.0
    %3360 = vmatpush1.msra.mxu0 0.0
    %3361 = vmatprep.subr.mxu0 0.0
    %3362 = vmatpush1.msra.mxu0 0.0
    %3363 = vmatprep.subr.mxu0 0.0
    %3364 = vmatpush1.msra.mxu0 0.0
    %3365 = vmatprep.subr.mxu0 0.0
    %3366 = vmatpush1.msra.mxu0 0.0
    %3367 = vmatprep.subr.mxu0 0.0
    %3368 = vmatpush1.msra.mxu0 0.0
    %3369 = vmatprep.subr.mxu0 0.0
    %3370 = vmatpush1.msra.mxu0 0.0
    %3371 = vmatprep.subr.mxu0 0.0
    %3372 = vmatpush1.msra.mxu0 0.0
    %3373 = vmatprep.subr.mxu0 0.0
    %3374 = vmatpush1.msra.mxu0 0.0
    %3375 = vmatprep.subr.mxu0 0.0
    %3376 = vmatpush1.msra.mxu0 0.0
    %3377 = vmatprep.subr.mxu0 0.0
    %3378 = vmatpush1.msra.mxu0 0.0
    %3379 = vmatprep.subr.mxu0 0.0
    %3380 = vmatpush1.msra.mxu0 0.0
    %3381 = vmatprep.subr.mxu0 0.0
    %3382 = vmatpush1.msra.mxu0 0.0
    %3383 = vmatprep.subr.mxu0 0.0
    %3384 = vmatpush1.msra.mxu0 0.0
    %3385 = vmatprep.subr.mxu0 0.0
    %3386 = vmatpush1.msra.mxu0 0.0
    %3387 = vmatprep.subr.mxu0 0.0
    %3388 = vmatpush1.msra.mxu0 0.0
    %3389 = vmatprep.subr.mxu0 0.0
    %3390 = vmatpush1.msra.mxu0 0.0
    %3391 = vmatprep.subr.mxu0 0.0
    %3392 = vmatpush1.msra.mxu0 0.0
    %3393 = vmatprep.subr.mxu0 0.0
    %3394 = vmatpush1.msra.mxu0 0.0
    %3395 = vmatprep.subr.mxu0 0.0
    %3396 = vmatpush1.msra.mxu0 0.0
    %3397 = vmatprep.subr.mxu0 0.0
    %3398 = vmatpush1.msra.mxu0 0.0
    %3399 = vmatprep.subr.mxu0 0.0
    %3400 = vmatpush1.msra.mxu0 0.0
    %3401 = vmatprep.subr.mxu0 0.0
    %3402 = vmatpush1.msra.mxu0 0.0
    %3403 = vmatprep.subr.mxu0 0.0
    %3404 = vmatpush1.msra.mxu0 0.0
    %3405 = vmatprep.subr.mxu0 0.0
    %3406 = vmatpush1.msra.mxu0 0.0
    %3407 = vmatprep.subr.mxu0 0.0
    %3408 = vmatpush1.msra.mxu0 0.0
    %3409 = vmatprep.mubr.f32.mxu0 0.0
    %3410 = vmatmul.mubr.f32.gmra.mrb[0].mxu0 %v3343
    %v3411 = vpop.f32.mrb[0].mxu0
    %v3412 = vadd.f32 0.0, %v3411
    %v3413 = vpop.f32.mrb[0].mxu0
    %3414 = vdwg.mxu0
    %3415 = vrot.lane.b32.xlu0 %v3112, 64
    %v3416 = vpop.permute.xlu0 %3415
    %3417 = vrot.lane.b32.xlu0 %v3117, 64
    %v3418 = vpop.permute.xlu0 %3417
    %v3422 = vsel %vm684, %v3335, 0
    %3424 = vmatprep.subr.mxu0 0.0
    %3425 = vmatpush1.msra.mxu0 %v3416
    %3426 = vmatprep.subr.mxu0 0.0
    %3427 = vmatpush1.msra.mxu0 %v3418
    %3428 = vmatprep.subr.mxu0 0.0
    %3429 = vmatpush1.msra.mxu0 0.0
    %3430 = vmatprep.subr.mxu0 0.0
    %3431 = vmatpush1.msra.mxu0 0.0
    %3432 = vmatprep.subr.mxu0 0.0
    %3433 = vmatpush1.msra.mxu0 0.0
    %3434 = vmatprep.subr.mxu0 0.0
    %3435 = vmatpush1.msra.mxu0 0.0
    %3436 = vmatprep.subr.mxu0 0.0
    %3437 = vmatpush1.msra.mxu0 0.0
    %3438 = vmatprep.subr.mxu0 0.0
    %3439 = vmatpush1.msra.mxu0 0.0
    %3440 = vmatprep.subr.mxu0 0.0
    %3441 = vmatpush1.msra.mxu0 0.0
    %3442 = vmatprep.subr.mxu0 0.0
    %3443 = vmatpush1.msra.mxu0 0.0
    %3444 = vmatprep.subr.mxu0 0.0
    %3445 = vmatpush1.msra.mxu0 0.0
    %3446 = vmatprep.subr.mxu0 0.0
    %3447 = vmatpush1.msra.mxu0 0.0
    %3448 = vmatprep.subr.mxu0 0.0
    %3449 = vmatpush1.msra.mxu0 0.0
    %3450 = vmatprep.subr.mxu0 0.0
    %3451 = vmatpush1.msra.mxu0 0.0
    %3452 = vmatprep.subr.mxu0 0.0
    %3453 = vmatpush1.msra.mxu0 0.0
    %3454 = vmatprep.subr.mxu0 0.0
    %3455 = vmatpush1.msra.mxu0 0.0
    %3456 = vmatprep.subr.mxu0 0.0
    %3457 = vmatpush1.msra.mxu0 0.0
    %3458 = vmatprep.subr.mxu0 0.0
    %3459 = vmatpush1.msra.mxu0 0.0
    %3460 = vmatprep.subr.mxu0 0.0
    %3461 = vmatpush1.msra.mxu0 0.0
    %3462 = vmatprep.subr.mxu0 0.0
    %3463 = vmatpush1.msra.mxu0 0.0
    %3464 = vmatprep.subr.mxu0 0.0
    %3465 = vmatpush1.msra.mxu0 0.0
    %3466 = vmatprep.subr.mxu0 0.0
    %3467 = vmatpush1.msra.mxu0 0.0
    %3468 = vmatprep.subr.mxu0 0.0
    %3469 = vmatpush1.msra.mxu0 0.0
    %3470 = vmatprep.subr.mxu0 0.0
    %3471 = vmatpush1.msra.mxu0 0.0
    %3472 = vmatprep.subr.mxu0 0.0
    %3473 = vmatpush1.msra.mxu0 0.0
    %3474 = vmatprep.subr.mxu0 0.0
    %3475 = vmatpush1.msra.mxu0 0.0
    %3476 = vmatprep.subr.mxu0 0.0
    %3477 = vmatpush1.msra.mxu0 0.0
    %3478 = vmatprep.subr.mxu0 0.0
    %3479 = vmatpush1.msra.mxu0 0.0
    %3480 = vmatprep.subr.mxu0 0.0
    %3481 = vmatpush1.msra.mxu0 0.0
    %3482 = vmatprep.subr.mxu0 0.0
    %3483 = vmatpush1.msra.mxu0 0.0
    %3484 = vmatprep.subr.mxu0 0.0
    %3485 = vmatpush1.msra.mxu0 0.0
    %3486 = vmatprep.subr.mxu0 0.0
    %3487 = vmatpush1.msra.mxu0 0.0
    %3488 = vmatprep.mubr.f32.mxu0 0.0
    %3489 = vmatmul.mubr.f32.gmra.mrb[0].mxu0 %v3422
    %v3490 = vpop.f32.mrb[0].mxu0
    %v3491 = vadd.f32 0.0, %v3490
    %v3492 = vpop.f32.mrb[0].mxu0
    %3493 = vdwg.mxu0
    %v3496 = vcombine.low %v3412, %v3491
    %v3498 = vsel %vm115, %v3496, %v1346
    %v3499 = vld [vmem:[#allocation10] sm:$0xff]
    %v3500 = vld [vmem:[#allocation10 + $0x8] sm:$0xff]
    %v3501 = vld [vmem:[#allocation10 + $0x40] sm:$0xff]
    %v3502 = vld [vmem:[#allocation10 + $0x48] sm:$0xff]
    %v3503 = vld [vmem:[#allocation10 + $0x80] sm:$0xff]
    %v3504 = vld [vmem:[#allocation10 + $0x88] sm:$0xff]
    %v3505 = vld [vmem:[#allocation10 + $0xc0] sm:$0xff]
    %v3506 = vld [vmem:[#allocation10 + $0xc8] sm:$0xff]
    %v3507 = vld [vmem:[#allocation10 + $0x100] sm:$0xff]
    %v3508 = vld [vmem:[#allocation10 + $0x108] sm:$0xff]
    %v3509 = vld [vmem:[#allocation10 + $0x140] sm:$0xff]
    %v3510 = vld [vmem:[#allocation10 + $0x148] sm:$0xff]
    %v3511 = vld [vmem:[#allocation10 + $0x180] sm:$0xff]
    %v3512 = vld [vmem:[#allocation10 + $0x188] sm:$0xff]
    %v3513 = vld [vmem:[#allocation10 + $0x1c0] sm:$0xff]
    %v3514 = vld [vmem:[#allocation10 + $0x1c8] sm:$0xff]
    %v3516 = vsel %vm861, %v3498, 0
    %3518 = vmatprep.subr.mxu0 %v3500
    %3519 = vmatpush1.msra.mxu0 %v3499
    %3520 = vmatprep.subr.mxu0 %v3502
    %3521 = vmatpush1.msra.mxu0 %v3501
    %3522 = vmatprep.subr.mxu0 %v3504
    %3523 = vmatpush1.msra.mxu0 %v3503
    %3524 = vmatprep.subr.mxu0 %v3506
    %3525 = vmatpush1.msra.mxu0 %v3505
    %3526 = vmatprep.subr.mxu0 %v3508
    %3527 = vmatpush1.msra.mxu0 %v3507
    %3528 = vmatprep.subr.mxu0 %v3510
    %3529 = vmatpush1.msra.mxu0 %v3509
    %3530 = vmatprep.subr.mxu0 %v3512
    %3531 = vmatpush1.msra.mxu0 %v3511
    %3532 = vmatprep.subr.mxu0 %v3514
    %3533 = vmatpush1.msra.mxu0 %v3513
    %3534 = vmatprep.subr.mxu0 0.0
    %3535 = vmatpush1.msra.mxu0 0.0
    %3536 = vmatprep.subr.mxu0 0.0
    %3537 = vmatpush1.msra.mxu0 0.0
    %3538 = vmatprep.subr.mxu0 0.0
    %3539 = vmatpush1.msra.mxu0 0.0
    %3540 = vmatprep.subr.mxu0 0.0
    %3541 = vmatpush1.msra.mxu0 0.0
    %3542 = vmatprep.subr.mxu0 0.0
    %3543 = vmatpush1.msra.mxu0 0.0
    %3544 = vmatprep.subr.mxu0 0.0
    %3545 = vmatpush1.msra.mxu0 0.0
    %3546 = vmatprep.subr.mxu0 0.0
    %3547 = vmatpush1.msra.mxu0 0.0
    %3548 = vmatprep.subr.mxu0 0.0
    %3549 = vmatpush1.msra.mxu0 0.0
    %3550 = vmatprep.subr.mxu0 0.0
    %3551 = vmatpush1.msra.mxu0 0.0
    %3552 = vmatprep.subr.mxu0 0.0
    %3553 = vmatpush1.msra.mxu0 0.0
    %3554 = vmatprep.subr.mxu0 0.0
    %3555 = vmatpush1.msra.mxu0 0.0
    %3556 = vmatprep.subr.mxu0 0.0
    %3557 = vmatpush1.msra.mxu0 0.0
    %3558 = vmatprep.subr.mxu0 0.0
    %3559 = vmatpush1.msra.mxu0 0.0
    %3560 = vmatprep.subr.mxu0 0.0
    %3561 = vmatpush1.msra.mxu0 0.0
    %3562 = vmatprep.subr.mxu0 0.0
    %3563 = vmatpush1.msra.mxu0 0.0
    %3564 = vmatprep.subr.mxu0 0.0
    %3565 = vmatpush1.msra.mxu0 0.0
    %3566 = vmatprep.subr.mxu0 0.0
    %3567 = vmatpush1.msra.mxu0 0.0
    %3568 = vmatprep.subr.mxu0 0.0
    %3569 = vmatpush1.msra.mxu0 0.0
    %3570 = vmatprep.subr.mxu0 0.0
    %3571 = vmatpush1.msra.mxu0 0.0
    %3572 = vmatprep.subr.mxu0 0.0
    %3573 = vmatpush1.msra.mxu0 0.0
    %3574 = vmatprep.subr.mxu0 0.0
    %3575 = vmatpush1.msra.mxu0 0.0
    %3576 = vmatprep.subr.mxu0 0.0
    %3577 = vmatpush1.msra.mxu0 0.0
    %3578 = vmatprep.subr.mxu0 0.0
    %3579 = vmatpush1.msra.mxu0 0.0
    %3580 = vmatprep.subr.mxu0 0.0
    %3581 = vmatpush1.msra.mxu0 0.0
    %3582 = vmatprep.mubr.f32.mxu0 0.0
    %3583 = vmatmul.mubr.f32.gmra.mrb[0].mxu0 %v3516
    %v3584 = vpop.f32.mrb[0].mxu0
    %v3585 = vadd.f32 0.0, %v3584
    %v3586 = vpop.f32.mrb[0].mxu0
    %v3587 = vadd.f32 0.0, %v3586
    %3588 = vdwg.mxu0
    %v3589 = vld [vmem:[#allocation11 + $0x7] sm:$0x1]
    %v3591 = vlaneseq
    %v3592 = vshrl.u32 %v3591, 7
    %v3593 = vsub.s32 0, %v3592
    %v3594 = vrot.slane %v3589, %v3593
    %v3596 = vadd.f32 %v3585, %v3594
    %v3597 = vld [vmem:[#allocation11 + $0x8] sm:$0x1]
    %v3599 = vlaneseq
    %v3600 = vshrl.u32 %v3599, 7
    %v3601 = vsub.s32 0, %v3600
    %v3602 = vrot.slane %v3597, %v3601
    %3603 = vrot.lane.b32.xlu0 %v3602, 96
    %v3604 = vpop.permute.xlu0 %3603
    %v3606 = vadd.f32 %v3585, %v3604
    %v3607 = vadd.f32 %v3587, %v3604
    %3610 = vrot.lane.b32.xlu0 %v3606, 32
    %v3611 = vpop.permute.xlu0 %3610
    %3612 = vrot.lane.b32.xlu0 %v3607, 32
    %v3613 = vpop.permute.xlu0 %3612
    %v3614 = vsel %vm115, %v3611, %v3613
    %v3616 = vadd.f32 %v3596, %v3614
    %v3617 = vxor.u32 %v3616, 2147483648
    %v3618 = vmul.f32 %v3617, 1.442695
    %v3619 = vpow.pop %v3618
    %v3620 = vadd.f32 %v3619, 1.0
    %v3621 = vrcp.pop %v3620
    %v3622 = vmul.f32 1.0, %v3621
    %3623 = vrot.lane.b32.xlu0 %v3607, 96
    %v3624 = vpop.permute.xlu0 %3623
    %v3626 = vmul.f32 %v3622, %v3624
    %3628 = vrot.lane.b32.xlu0 %v3626, 64
    %v3629 = vpop.permute.xlu0 %3628
    %v3631 = vadd.f32 %v3596, %v3629
    %v3632 = vtanh.pop %v3631
    %v3633 = vsub.f32 1.0, %v3622
    %3635 = vrot.lane.b32.xlu0 %v3632, 96
    %v3636 = vpop.permute.xlu0 %3635
    %v3638 = vmul.f32 %v3633, %v3636
    %v3639 = vmul.f32 %v3622, %v1346
    %v3640 = vadd.f32 %v3638, %v3639
    %v3641 = vld [vmem:[#allocation11 + $0x9] sm:$0x1]
    %v3642 = vld [vmem:[#allocation11 + $0xa] sm:$0x1]
    %3644 = vrot.lane.b32.xlu0 %v3640, 96
    %v3645 = vpop.permute.xlu0 %3644
    %v3647 = vsel %vm115, %v3645, 0.0
    %3648 = vadd.xlane.f32.xlu0 %v3647
    %v3649 = vpop.xlane.xlu0 %3648
    %v3650 = vmul.f32 %v3649, %v128
    %v3651 = vsub.f32 %v3640, %v3650
    %v3652 = vmul.f32 %v3651, %v3651
    %3654 = vrot.lane.b32.xlu0 %v3652, 96
    %v3655 = vpop.permute.xlu0 %3654
    %v3657 = vsel %vm115, %v3655, 0.0
    %3658 = vadd.xlane.f32.xlu0 %v3657
    %v3659 = vpop.xlane.xlu0 %3658
    %v3660 = vmul.f32 %v3659, %v128
    %v3661 = vadd.f32 %v3660, 1e-05
    %v3662 = vrsqrt.pop %v3661
    %v3663 = vmul.f32 %v3651, %v3662
    %v3665 = vlaneseq
    %v3666 = vshrl.u32 %v3665, 7
    %v3667 = vsub.s32 0, %v3666
    %v3668 = vrot.slane %v3641, %v3667
    %3669 = vrot.lane.b32.xlu0 %v3668, 32
    %v3670 = vpop.permute.xlu0 %3669
    %v3672 = vmul.f32 %v3663, %v3670
    %v3674 = vlaneseq
    %v3675 = vshrl.u32 %v3674, 7
    %v3676 = vsub.s32 0, %v3675
    %v3677 = vrot.slane %v3642, %v3676
    %3678 = vrot.lane.b32.xlu0 %v3677, 32
    %v3679 = vpop.permute.xlu0 %3678
    %v3681 = vadd.f32 %v3672, %v3679
    %v3682 = vld [vmem:[#allocation7 + $0x8] sm:$0xff]
    %v3683 = vld [vmem:[#allocation7 + $0x28] sm:$0xff]
    %v3684 = vld [vmem:[#allocation7 + $0x48] sm:$0xff]
    %v3685 = vld [vmem:[#allocation7 + $0x68] sm:$0xff]
    %v3686 = vld [vmem:[#allocation11 + $0xb] sm:$0x1]
    %v3688 = vlaneseq
    %v3689 = vshrl.u32 %v3688, 7
    %v3690 = vsub.s32 0, %v3689
    %v3691 = vrot.slane %v3686, %v3690
    %3694 = vrot.lane.b32.xlu0 %v3681, 96
    %v3695 = vpop.permute.xlu0 %3694
    %v3696 = vsel %vm115, %v3695, 0
    %3698 = vmatprep.subr.mxu0 0.0
    %3699 = vmatpush1.msra.mxu0 %v3682
    %3700 = vmatprep.subr.mxu0 0.0
    %3701 = vmatpush1.msra.mxu0 %v3683
    %3702 = vmatprep.subr.mxu0 0.0
    %3703 = vmatpush1.msra.mxu0 %v3684
    %3704 = vmatprep.subr.mxu0 0.0
    %3705 = vmatpush1.msra.mxu0 %v3685
    %3706 = vmatprep.subr.mxu0 0.0
    %3707 = vmatpush1.msra.mxu0 0.0
    %3708 = vmatprep.subr.mxu0 0.0
    %3709 = vmatpush1.msra.mxu0 0.0
    %3710 = vmatprep.subr.mxu0 0.0
    %3711 = vmatpush1.msra.mxu0 0.0
    %3712 = vmatprep.subr.mxu0 0.0
    %3713 = vmatpush1.msra.mxu0 0.0
    %3714 = vmatprep.subr.mxu0 0.0
    %3715 = vmatpush1.msra.mxu0 0.0
    %3716 = vmatprep.subr.mxu0 0.0
    %3717 = vmatpush1.msra.mxu0 0.0
    %3718 = vmatprep.subr.mxu0 0.0
    %3719 = vmatpush1.msra.mxu0 0.0
    %3720 = vmatprep.subr.mxu0 0.0
    %3721 = vmatpush1.msra.mxu0 0.0
    %3722 = vmatprep.subr.mxu0 0.0
    %3723 = vmatpush1.msra.mxu0 0.0
    %3724 = vmatprep.subr.mxu0 0.0
    %3725 = vmatpush1.msra.mxu0 0.0
    %3726 = vmatprep.subr.mxu0 0.0
    %3727 = vmatpush1.msra.mxu0 0.0
    %3728 = vmatprep.subr.mxu0 0.0
    %3729 = vmatpush1.msra.mxu0 0.0
    %3730 = vmatprep.subr.mxu0 0.0
    %3731 = vmatpush1.msra.mxu0 0.0
    %3732 = vmatprep.subr.mxu0 0.0
    %3733 = vmatpush1.msra.mxu0 0.0
    %3734 = vmatprep.subr.mxu0 0.0
    %3735 = vmatpush1.msra.mxu0 0.0
    %3736 = vmatprep.subr.mxu0 0.0
    %3737 = vmatpush1.msra.mxu0 0.0
    %3738 = vmatprep.subr.mxu0 0.0
    %3739 = vmatpush1.msra.mxu0 0.0
    %3740 = vmatprep.subr.mxu0 0.0
    %3741 = vmatpush1.msra.mxu0 0.0
    %3742 = vmatprep.subr.mxu0 0.0
    %3743 = vmatpush1.msra.mxu0 0.0
    %3744 = vmatprep.subr.mxu0 0.0
    %3745 = vmatpush1.msra.mxu0 0.0
    %3746 = vmatprep.subr.mxu0 0.0
    %3747 = vmatpush1.msra.mxu0 0.0
    %3748 = vmatprep.subr.mxu0 0.0
    %3749 = vmatpush1.msra.mxu0 0.0
    %3750 = vmatprep.subr.mxu0 0.0
    %3751 = vmatpush1.msra.mxu0 0.0
    %3752 = vmatprep.subr.mxu0 0.0
    %3753 = vmatpush1.msra.mxu0 0.0
    %3754 = vmatprep.subr.mxu0 0.0
    %3755 = vmatpush1.msra.mxu0 0.0
    %3756 = vmatprep.subr.mxu0 0.0
    %3757 = vmatpush1.msra.mxu0 0.0
    %3758 = vmatprep.subr.mxu0 0.0
    %3759 = vmatpush1.msra.mxu0 0.0
    %3760 = vmatprep.subr.mxu0 0.0
    %3761 = vmatpush1.msra.mxu0 0.0
    %3762 = vmatprep.mubr.f32.mxu0 0.0
    %3763 = vmatmul.mubr.f32.gmra.mrb[0].mxu0 %v3696
    %v3764 = vpop.f32.mrb[0].mxu0
    %v3765 = vadd.f32 %v3691, %v3764
    %v3766 = vpop.f32.mrb[0].mxu0
    %3767 = vdwg.mxu0
    %v3768 = vmax.f32 %v3765, 0.0
    %v3769 = vld [vmem:[#allocation8] sm:$0xff]
    %v3770 = vld [vmem:[#allocation8 + $0x10] sm:$0xff]
    %v3771 = vld [vmem:[#allocation8 + $0x20] sm:$0xff]
    %v3772 = vld [vmem:[#allocation8 + $0x30] sm:$0xff]
    %v3773 = vld [vmem:[#allocation8 + $0x40] sm:$0xff]
    %v3774 = vld [vmem:[#allocation8 + $0x50] sm:$0xff]
    %v3775 = vld [vmem:[#allocation8 + $0x60] sm:$0xff]
    %v3776 = vld [vmem:[#allocation8 + $0x70] sm:$0xff]
    %v3777 = vld [vmem:[#allocation11 + $0xc] sm:$0x1]
    %v3779 = vlaneseq
    %v3780 = vshrl.u32 %v3779, 7
    %v3781 = vsub.s32 0, %v3780
    %v3782 = vrot.slane %v3777, %v3781
    %v3785 = vsel %vm861, %v3768, 0
    %3787 = vmatprep.subr.mxu0 0.0
    %3788 = vmatpush1.msra.mxu0 %v3769
    %3789 = vmatprep.subr.mxu0 0.0
    %3790 = vmatpush1.msra.mxu0 %v3770
    %3791 = vmatprep.subr.mxu0 0.0
    %3792 = vmatpush1.msra.mxu0 %v3771
    %3793 = vmatprep.subr.mxu0 0.0
    %3794 = vmatpush1.msra.mxu0 %v3772
    %3795 = vmatprep.subr.mxu0 0.0
    %3796 = vmatpush1.msra.mxu0 %v3773
    %3797 = vmatprep.subr.mxu0 0.0
    %3798 = vmatpush1.msra.mxu0 %v3774
    %3799 = vmatprep.subr.mxu0 0.0
    %3800 = vmatpush1.msra.mxu0 %v3775
    %3801 = vmatprep.subr.mxu0 0.0
    %3802 = vmatpush1.msra.mxu0 %v3776
    %3803 = vmatprep.subr.mxu0 0.0
    %3804 = vmatpush1.msra.mxu0 0.0
    %3805 = vmatprep.subr.mxu0 0.0
    %3806 = vmatpush1.msra.mxu0 0.0
    %3807 = vmatprep.subr.mxu0 0.0
    %3808 = vmatpush1.msra.mxu0 0.0
    %3809 = vmatprep.subr.mxu0 0.0
    %3810 = vmatpush1.msra.mxu0 0.0
    %3811 = vmatprep.subr.mxu0 0.0
    %3812 = vmatpush1.msra.mxu0 0.0
    %3813 = vmatprep.subr.mxu0 0.0
    %3814 = vmatpush1.msra.mxu0 0.0
    %3815 = vmatprep.subr.mxu0 0.0
    %3816 = vmatpush1.msra.mxu0 0.0
    %3817 = vmatprep.subr.mxu0 0.0
    %3818 = vmatpush1.msra.mxu0 0.0
    %3819 = vmatprep.subr.mxu0 0.0
    %3820 = vmatpush1.msra.mxu0 0.0
    %3821 = vmatprep.subr.mxu0 0.0
    %3822 = vmatpush1.msra.mxu0 0.0
    %3823 = vmatprep.subr.mxu0 0.0
    %3824 = vmatpush1.msra.mxu0 0.0
    %3825 = vmatprep.subr.mxu0 0.0
    %3826 = vmatpush1.msra.mxu0 0.0
    %3827 = vmatprep.subr.mxu0 0.0
    %3828 = vmatpush1.msra.mxu0 0.0
    %3829 = vmatprep.subr.mxu0 0.0
    %3830 = vmatpush1.msra.mxu0 0.0
    %3831 = vmatprep.subr.mxu0 0.0
    %3832 = vmatpush1.msra.mxu0 0.0
    %3833 = vmatprep.subr.mxu0 0.0
    %3834 = vmatpush1.msra.mxu0 0.0
    %3835 = vmatprep.subr.mxu0 0.0
    %3836 = vmatpush1.msra.mxu0 0.0
    %3837 = vmatprep.subr.mxu0 0.0
    %3838 = vmatpush1.msra.mxu0 0.0
    %3839 = vmatprep.subr.mxu0 0.0
    %3840 = vmatpush1.msra.mxu0 0.0
    %3841 = vmatprep.subr.mxu0 0.0
    %3842 = vmatpush1.msra.mxu0 0.0
    %3843 = vmatprep.subr.mxu0 0.0
    %3844 = vmatpush1.msra.mxu0 0.0
    %3845 = vmatprep.subr.mxu0 0.0
    %3846 = vmatpush1.msra.mxu0 0.0
    %3847 = vmatprep.subr.mxu0 0.0
    %3848 = vmatpush1.msra.mxu0 0.0
    %3849 = vmatprep.subr.mxu0 0.0
    %3850 = vmatpush1.msra.mxu0 0.0
    %3851 = vmatprep.mubr.f32.mxu0 0.0
    %3852 = vmatmul.mubr.f32.gmra.mrb[0].mxu0 %v3785
    %v3853 = vpop.f32.mrb[0].mxu0
    %v3854 = vadd.f32 %v3782, %v3853
    %v3855 = vpop.f32.mrb[0].mxu0
    %3856 = vdwg.mxu0
    %v3857 = vsel %vm115, %v3854, %v3640
    %v3858 = vld [vmem:[#allocation10 + $0x10] sm:$0xff]
    %v3859 = vld [vmem:[#allocation10 + $0x18] sm:$0xff]
    %v3860 = vld [vmem:[#allocation10 + $0x50] sm:$0xff]
    %v3861 = vld [vmem:[#allocation10 + $0x58] sm:$0xff]
    %v3862 = vld [vmem:[#allocation10 + $0x90] sm:$0xff]
    %v3863 = vld [vmem:[#allocation10 + $0x98] sm:$0xff]
    %v3864 = vld [vmem:[#allocation10 + $0xd0] sm:$0xff]
    %v3865 = vld [vmem:[#allocation10 + $0xd8] sm:$0xff]
    %v3866 = vld [vmem:[#allocation10 + $0x110] sm:$0xff]
    %v3867 = vld [vmem:[#allocation10 + $0x118] sm:$0xff]
    %v3868 = vld [vmem:[#allocation10 + $0x150] sm:$0xff]
    %v3869 = vld [vmem:[#allocation10 + $0x158] sm:$0xff]
    %v3870 = vld [vmem:[#allocation10 + $0x190] sm:$0xff]
    %v3871 = vld [vmem:[#allocation10 + $0x198] sm:$0xff]
    %v3872 = vld [vmem:[#allocation10 + $0x1d0] sm:$0xff]
    %v3873 = vld [vmem:[#allocation10 + $0x1d8] sm:$0xff]
    %v3875 = vsel %vm861, %v3857, 0
    %3877 = vmatprep.subr.mxu0 %v3859
    %3878 = vmatpush1.msra.mxu0 %v3858
    %3879 = vmatprep.subr.mxu0 %v3861
    %3880 = vmatpush1.msra.mxu0 %v3860
    %3881 = vmatprep.subr.mxu0 %v3863
    %3882 = vmatpush1.msra.mxu0 %v3862
    %3883 = vmatprep.subr.mxu0 %v3865
    %3884 = vmatpush1.msra.mxu0 %v3864
    %3885 = vmatprep.subr.mxu0 %v3867
    %3886 = vmatpush1.msra.mxu0 %v3866
    %3887 = vmatprep.subr.mxu0 %v3869
    %3888 = vmatpush1.msra.mxu0 %v3868
    %3889 = vmatprep.subr.mxu0 %v3871
    %3890 = vmatpush1.msra.mxu0 %v3870
    %3891 = vmatprep.subr.mxu0 %v3873
    %3892 = vmatpush1.msra.mxu0 %v3872
    %3893 = vmatprep.subr.mxu0 0.0
    %3894 = vmatpush1.msra.mxu0 0.0
    %3895 = vmatprep.subr.mxu0 0.0
    %3896 = vmatpush1.msra.mxu0 0.0
    %3897 = vmatprep.subr.mxu0 0.0
    %3898 = vmatpush1.msra.mxu0 0.0
    %3899 = vmatprep.subr.mxu0 0.0
    %3900 = vmatpush1.msra.mxu0 0.0
    %3901 = vmatprep.subr.mxu0 0.0
    %3902 = vmatpush1.msra.mxu0 0.0
    %3903 = vmatprep.subr.mxu0 0.0
    %3904 = vmatpush1.msra.mxu0 0.0
    %3905 = vmatprep.subr.mxu0 0.0
    %3906 = vmatpush1.msra.mxu0 0.0
    %3907 = vmatprep.subr.mxu0 0.0
    %3908 = vmatpush1.msra.mxu0 0.0
    %3909 = vmatprep.subr.mxu0 0.0
    %3910 = vmatpush1.msra.mxu0 0.0
    %3911 = vmatprep.subr.mxu0 0.0
    %3912 = vmatpush1.msra.mxu0 0.0
    %3913 = vmatprep.subr.mxu0 0.0
    %3914 = vmatpush1.msra.mxu0 0.0
    %3915 = vmatprep.subr.mxu0 0.0
    %3916 = vmatpush1.msra.mxu0 0.0
    %3917 = vmatprep.subr.mxu0 0.0
    %3918 = vmatpush1.msra.mxu0 0.0
    %3919 = vmatprep.subr.mxu0 0.0
    %3920 = vmatpush1.msra.mxu0 0.0
    %3921 = vmatprep.subr.mxu0 0.0
    %3922 = vmatpush1.msra.mxu0 0.0
    %3923 = vmatprep.subr.mxu0 0.0
    %3924 = vmatpush1.msra.mxu0 0.0
    %3925 = vmatprep.subr.mxu0 0.0
    %3926 = vmatpush1.msra.mxu0 0.0
    %3927 = vmatprep.subr.mxu0 0.0
    %3928 = vmatpush1.msra.mxu0 0.0
    %3929 = vmatprep.subr.mxu0 0.0
    %3930 = vmatpush1.msra.mxu0 0.0
    %3931 = vmatprep.subr.mxu0 0.0
    %3932 = vmatpush1.msra.mxu0 0.0
    %3933 = vmatprep.subr.mxu0 0.0
    %3934 = vmatpush1.msra.mxu0 0.0
    %3935 = vmatprep.subr.mxu0 0.0
    %3936 = vmatpush1.msra.mxu0 0.0
    %3937 = vmatprep.subr.mxu0 0.0
    %3938 = vmatpush1.msra.mxu0 0.0
    %3939 = vmatprep.subr.mxu0 0.0
    %3940 = vmatpush1.msra.mxu0 0.0
    %3941 = vmatprep.mubr.f32.mxu0 0.0
    %3942 = vmatmul.mubr.f32.gmra.mrb[0].mxu0 %v3875
    %v3943 = vpop.f32.mrb[0].mxu0
    %v3944 = vadd.f32 0.0, %v3943
    %v3945 = vpop.f32.mrb[0].mxu0
    %v3946 = vadd.f32 0.0, %v3945
    %3947 = vdwg.mxu0
    %v3948 = vld [vmem:[#allocation11 + $0xd] sm:$0x1]
    %v3950 = vlaneseq
    %v3951 = vshrl.u32 %v3950, 7
    %v3952 = vsub.s32 0, %v3951
    %v3953 = vrot.slane %v3948, %v3952
    %v3955 = vadd.f32 %v3944, %v3953
    %v3956 = vld [vmem:[#allocation11 + $0xe] sm:$0x1]
    %v3958 = vlaneseq
    %v3959 = vshrl.u32 %v3958, 7
    %v3960 = vsub.s32 0, %v3959
    %v3961 = vrot.slane %v3956, %v3960
    %3962 = vrot.lane.b32.xlu0 %v3961, 96
    %v3963 = vpop.permute.xlu0 %3962
    %v3965 = vadd.f32 %v3944, %v3963
    %v3966 = vadd.f32 %v3946, %v3963
    %3969 = vrot.lane.b32.xlu0 %v3965, 32
    %v3970 = vpop.permute.xlu0 %3969
    %3971 = vrot.lane.b32.xlu0 %v3966, 32
    %v3972 = vpop.permute.xlu0 %3971
    %v3973 = vsel %vm115, %v3970, %v3972
    %v3975 = vadd.f32 %v3955, %v3973
    %v3976 = vxor.u32 %v3975, 2147483648
    %v3977 = vmul.f32 %v3976, 1.442695
    %v3978 = vpow.pop %v3977
    %v3979 = vadd.f32 %v3978, 1.0
    %v3980 = vrcp.pop %v3979
    %v3981 = vmul.f32 1.0, %v3980
    %3982 = vrot.lane.b32.xlu0 %v3966, 96
    %v3983 = vpop.permute.xlu0 %3982
    %v3985 = vmul.f32 %v3981, %v3983
    %3987 = vrot.lane.b32.xlu0 %v3985, 64
    %v3988 = vpop.permute.xlu0 %3987
    %v3990 = vadd.f32 %v3955, %v3988
    %v3991 = vtanh.pop %v3990
    %v3992 = vsub.f32 1.0, %v3981
    %3994 = vrot.lane.b32.xlu0 %v3991, 96
    %v3995 = vpop.permute.xlu0 %3994
    %v3997 = vmul.f32 %v3992, %v3995
    %v3998 = vmul.f32 %v3981, %v3640
    %v3999 = vadd.f32 %v3997, %v3998
    %v4000 = vld [vmem:[#allocation11 + $0xf] sm:$0x1]
    %v4001 = vld [vmem:[#allocation11 + $0x10] sm:$0x1]
    %v4003 = vlaneseq
    %v4004 = vshrl.u32 %v4003, 7
    %v4005 = vsub.s32 0, %v4004
    %v4006 = vrot.slane %v4000, %v4005
    %4007 = vrot.lane.b32.xlu0 %v4006, 32
    %v4008 = vpop.permute.xlu0 %4007
    %v4010 = vmul.f32 %v2966, %v4008
    %v4011 = vmul.f32 %v2967, %v4008
    %v4012 = vmul.f32 %v2968, %v4008
    %v4013 = vmul.f32 %v2969, %v4008
    %v4015 = vlaneseq
    %v4016 = vshrl.u32 %v4015, 7
    %v4017 = vsub.s32 0, %v4016
    %v4018 = vrot.slane %v4001, %v4017
    %4019 = vrot.lane.b32.xlu0 %v4018, 32
    %v4020 = vpop.permute.xlu0 %4019
    %v4022 = vadd.f32 %v4010, %v4020
    %v4023 = vadd.f32 %v4011, %v4020
    %v4024 = vadd.f32 %v4012, %v4020
    %v4025 = vadd.f32 %v4013, %v4020
    %v4026 = vld [vmem:[#allocation11 + $0x11] sm:$0x1]
    %v4027 = vld [vmem:[#allocation11 + $0x12] sm:$0x1]
    %4029 = vrot.lane.b32.xlu0 %v3999, 96
    %v4030 = vpop.permute.xlu0 %4029
    %v4032 = vsel %vm115, %v4030, 0.0
    %4033 = vadd.xlane.f32.xlu0 %v4032
    %v4034 = vpop.xlane.xlu0 %4033
    %v4035 = vmul.f32 %v4034, %v128
    %v4036 = vsub.f32 %v3999, %v4035
    %v4037 = vmul.f32 %v4036, %v4036
    %4039 = vrot.lane.b32.xlu0 %v4037, 96
    %v4040 = vpop.permute.xlu0 %4039
    %v4042 = vsel %vm115, %v4040, 0.0
    %4043 = vadd.xlane.f32.xlu0 %v4042
    %v4044 = vpop.xlane.xlu0 %4043
    %v4045 = vmul.f32 %v4044, %v128
    %v4046 = vadd.f32 %v4045, 1e-05
    %v4047 = vrsqrt.pop %v4046
    %v4048 = vmul.f32 %v4036, %v4047
    %v4050 = vlaneseq
    %v4051 = vshrl.u32 %v4050, 7
    %v4052 = vsub.s32 0, %v4051
    %v4053 = vrot.slane %v4026, %v4052
    %4054 = vrot.lane.b32.xlu0 %v4053, 32
    %v4055 = vpop.permute.xlu0 %4054
    %v4057 = vmul.f32 %v4048, %v4055
    %v4059 = vlaneseq
    %v4060 = vshrl.u32 %v4059, 7
    %v4061 = vsub.s32 0, %v4060
    %v4062 = vrot.slane %v4027, %v4061
    %4063 = vrot.lane.b32.xlu0 %v4062, 32
    %v4064 = vpop.permute.xlu0 %4063
    %v4066 = vadd.f32 %v4057, %v4064
    %v4067 = vld [vmem:[#allocation7 + $0x10] sm:$0xff]
    %v4068 = vld [vmem:[#allocation7 + $0x30] sm:$0xff]
    %v4069 = vld [vmem:[#allocation7 + $0x50] sm:$0xff]
    %v4070 = vld [vmem:[#allocation7 + $0x70] sm:$0xff]
    %v4071 = vld [vmem:[#allocation11 + $0x13] sm:$0x1]
    %v4073 = vlaneseq
    %v4074 = vshrl.u32 %v4073, 7
    %v4075 = vsub.s32 0, %v4074
    %v4076 = vrot.slane %v4071, %v4075
    %4083 = vrot.lane.b32.xlu0 %v4022, 96
    %v4084 = vpop.permute.xlu0 %4083
    %4085 = vrot.lane.b32.xlu0 %v4023, 96
    %v4086 = vpop.permute.xlu0 %4085
    %4087 = vrot.lane.b32.xlu0 %v4024, 96
    %v4088 = vpop.permute.xlu0 %4087
    %4089 = vrot.lane.b32.xlu0 %v4025, 96
    %v4090 = vpop.permute.xlu0 %4089
    %4091 = vrot.lane.b32.xlu0 %v4066, 96
    %v4092 = vpop.permute.xlu0 %4091
    %v4093 = vsel %vm115, %v4084, 0
    %v4095 = vsel %vm115, %v4086, 0
    %v4097 = vsel %vm115, %v4088, 0
    %v4099 = vsel %vm115, %v4090, 0
    %v4101 = vsel %vm115, %v4092, 0
    %4103 = vmatprep.subr.mxu0 0.0
    %4104 = vmatpush1.msra.mxu0 %v4067
    %4105 = vmatprep.subr.mxu0 0.0
    %4106 = vmatpush1.msra.mxu0 %v4068
    %4107 = vmatprep.subr.mxu0 0.0
    %4108 = vmatpush1.msra.mxu0 %v4069
    %4109 = vmatprep.subr.mxu0 0.0
    %4110 = vmatpush1.msra.mxu0 %v4070
    %4111 = vmatprep.subr.mxu0 0.0
    %4112 = vmatpush1.msra.mxu0 0.0
    %4113 = vmatprep.subr.mxu0 0.0
    %4114 = vmatpush1.msra.mxu0 0.0
    %4115 = vmatprep.subr.mxu0 0.0
    %4116 = vmatpush1.msra.mxu0 0.0
    %4117 = vmatprep.subr.mxu0 0.0
    %4118 = vmatpush1.msra.mxu0 0.0
    %4119 = vmatprep.subr.mxu0 0.0
    %4120 = vmatpush1.msra.mxu0 0.0
    %4121 = vmatprep.subr.mxu0 0.0
    %4122 = vmatpush1.msra.mxu0 0.0
    %4123 = vmatprep.subr.mxu0 0.0
    %4124 = vmatpush1.msra.mxu0 0.0
    %4125 = vmatprep.subr.mxu0 0.0
    %4126 = vmatpush1.msra.mxu0 0.0
    %4127 = vmatprep.subr.mxu0 0.0
    %4128 = vmatpush1.msra.mxu0 0.0
    %4129 = vmatprep.subr.mxu0 0.0
    %4130 = vmatpush1.msra.mxu0 0.0
    %4131 = vmatprep.subr.mxu0 0.0
    %4132 = vmatpush1.msra.mxu0 0.0
    %4133 = vmatprep.subr.mxu0 0.0
    %4134 = vmatpush1.msra.mxu0 0.0
    %4135 = vmatprep.subr.mxu0 0.0
    %4136 = vmatpush1.msra.mxu0 0.0
    %4137 = vmatprep.subr.mxu0 0.0
    %4138 = vmatpush1.msra.mxu0 0.0
    %4139 = vmatprep.subr.mxu0 0.0
    %4140 = vmatpush1.msra.mxu0 0.0
    %4141 = vmatprep.subr.mxu0 0.0
    %4142 = vmatpush1.msra.mxu0 0.0
    %4143 = vmatprep.subr.mxu0 0.0
    %4144 = vmatpush1.msra.mxu0 0.0
    %4145 = vmatprep.subr.mxu0 0.0
    %4146 = vmatpush1.msra.mxu0 0.0
    %4147 = vmatprep.subr.mxu0 0.0
    %4148 = vmatpush1.msra.mxu0 0.0
    %4149 = vmatprep.subr.mxu0 0.0
    %4150 = vmatpush1.msra.mxu0 0.0
    %4151 = vmatprep.subr.mxu0 0.0
    %4152 = vmatpush1.msra.mxu0 0.0
    %4153 = vmatprep.subr.mxu0 0.0
    %4154 = vmatpush1.msra.mxu0 0.0
    %4155 = vmatprep.subr.mxu0 0.0
    %4156 = vmatpush1.msra.mxu0 0.0
    %4157 = vmatprep.subr.mxu0 0.0
    %4158 = vmatpush1.msra.mxu0 0.0
    %4159 = vmatprep.subr.mxu0 0.0
    %4160 = vmatpush1.msra.mxu0 0.0
    %4161 = vmatprep.subr.mxu0 0.0
    %4162 = vmatpush1.msra.mxu0 0.0
    %4163 = vmatprep.subr.mxu0 0.0
    %4164 = vmatpush1.msra.mxu0 0.0
    %4165 = vmatprep.subr.mxu0 0.0
    %4166 = vmatpush1.msra.mxu0 0.0
    %4167 = vmatprep.mubr.f32.mxu0 0.0
    %4168 = vmatmul.mubr.f32.gmra.mrb[0].mxu0 %v4093
    %v4169 = vpop.f32.mrb[0].mxu0
    %v4170 = vadd.f32 %v4076, %v4169
    %v4171 = vpop.f32.mrb[0].mxu0
    %4172 = vmatprep.mubr.f32.mxu0 0.0
    %4173 = vmatmul.mubr.f32.gmra.mrb[0].mxu0 %v4095
    %v4174 = vpop.f32.mrb[0].mxu0
    %v4175 = vadd.f32 %v4076, %v4174
    %v4176 = vpop.f32.mrb[0].mxu0
    %4177 = vmatprep.mubr.f32.mxu0 0.0
    %4178 = vmatmul.mubr.f32.gmra.mrb[0].mxu0 %v4097
    %v4179 = vpop.f32.mrb[0].mxu0
    %v4180 = vadd.f32 %v4076, %v4179
    %v4181 = vpop.f32.mrb[0].mxu0
    %4182 = vmatprep.mubr.f32.mxu0 0.0
    %4183 = vmatmul.mubr.f32.gmra.mrb[0].mxu0 %v4099
    %v4184 = vpop.f32.mrb[0].mxu0
    %v4185 = vadd.f32 %v4076, %v4184
    %v4186 = vpop.f32.mrb[0].mxu0
    %4187 = vmatprep.mubr.f32.mxu0 0.0
    %4188 = vmatmul.mubr.f32.gmra.mrb[0].mxu0 %v4101
    %v4189 = vpop.f32.mrb[0].mxu0
    %v4190 = vadd.f32 %v4076, %v4189
    %v4191 = vpop.f32.mrb[0].mxu0
    %4192 = vdwg.mxu0
    %v4194 = vcombine.high %v4190, %v4190
    %4195 = vrot.lane.b32.xlu0 %v4190, 96
    %v4196 = vpop.permute.xlu0 %4195
    %v4198 = vsel %vm115, %v4170, 0
    %v4201 = vsel %vm115, %v4175, 0
    %v4203 = vsel %vm115, %v4196, 0
    %4205 = vmatprep.subr.mxu0 0.0
    %4206 = vmatpush1.xpose.msra.mxu0 %v4203
    %4207 = vmatprep.subr.mxu0 0.0
    %4208 = vmatpush1.xpose.msra.mxu0 0.0
    %4209 = vmatprep.subr.mxu0 0.0
    %4210 = vmatpush1.xpose.msra.mxu0 0.0
    %4211 = vmatprep.subr.mxu0 0.0
    %4212 = vmatpush1.xpose.msra.mxu0 0.0
    %4213 = vmatprep.subr.mxu0 0.0
    %4214 = vmatpush1.xpose.msra.mxu0 0.0
    %4215 = vmatprep.subr.mxu0 0.0
    %4216 = vmatpush1.xpose.msra.mxu0 0.0
    %4217 = vmatprep.subr.mxu0 0.0
    %4218 = vmatpush1.xpose.msra.mxu0 0.0
    %4219 = vmatprep.subr.mxu0 0.0
    %4220 = vmatpush1.xpose.msra.mxu0 0.0
    %4221 = vmatprep.subr.mxu0 0.0
    %4222 = vmatpush1.xpose.msra.mxu0 0.0
    %4223 = vmatprep.subr.mxu0 0.0
    %4224 = vmatpush1.xpose.msra.mxu0 0.0
    %4225 = vmatprep.subr.mxu0 0.0
    %4226 = vmatpush1.xpose.msra.mxu0 0.0
    %4227 = vmatprep.subr.mxu0 0.0
    %4228 = vmatpush1.xpose.msra.mxu0 0.0
    %4229 = vmatprep.subr.mxu0 0.0
    %4230 = vmatpush1.xpose.msra.mxu0 0.0
    %4231 = vmatprep.subr.mxu0 0.0
    %4232 = vmatpush1.xpose.msra.mxu0 0.0
    %4233 = vmatprep.subr.mxu0 0.0
    %4234 = vmatpush1.xpose.msra.mxu0 0.0
    %4235 = vmatprep.subr.mxu0 0.0
    %4236 = vmatpush1.xpose.msra.mxu0 0.0
    %4237 = vmatprep.subr.mxu0 0.0
    %4238 = vmatpush1.xpose.msra.mxu0 0.0
    %4239 = vmatprep.subr.mxu0 0.0
    %4240 = vmatpush1.xpose.msra.mxu0 0.0
    %4241 = vmatprep.subr.mxu0 0.0
    %4242 = vmatpush1.xpose.msra.mxu0 0.0
    %4243 = vmatprep.subr.mxu0 0.0
    %4244 = vmatpush1.xpose.msra.mxu0 0.0
    %4245 = vmatprep.subr.mxu0 0.0
    %4246 = vmatpush1.xpose.msra.mxu0 0.0
    %4247 = vmatprep.subr.mxu0 0.0
    %4248 = vmatpush1.xpose.msra.mxu0 0.0
    %4249 = vmatprep.subr.mxu0 0.0
    %4250 = vmatpush1.xpose.msra.mxu0 0.0
    %4251 = vmatprep.subr.mxu0 0.0
    %4252 = vmatpush1.xpose.msra.mxu0 0.0
    %4253 = vmatprep.subr.mxu0 0.0
    %4254 = vmatpush1.xpose.msra.mxu0 0.0
    %4255 = vmatprep.subr.mxu0 0.0
    %4256 = vmatpush1.xpose.msra.mxu0 0.0
    %4257 = vmatprep.subr.mxu0 0.0
    %4258 = vmatpush1.xpose.msra.mxu0 0.0
    %4259 = vmatprep.subr.mxu0 0.0
    %4260 = vmatpush1.xpose.msra.mxu0 0.0
    %4261 = vmatprep.subr.mxu0 0.0
    %4262 = vmatpush1.xpose.msra.mxu0 0.0
    %4263 = vmatprep.subr.mxu0 0.0
    %4264 = vmatpush1.xpose.msra.mxu0 0.0
    %4265 = vmatprep.subr.mxu0 0.0
    %4266 = vmatpush1.xpose.msra.mxu0 0.0
    %4267 = vmatprep.subr.mxu0 0.0
    %4268 = vmatpush1.xpose.msra.mxu0 0.0
    %4269 = vmatprep.mubr.f32.mxu0 0.0
    %4270 = vmatmul.mubr.f32.gmra.mrb[0].mxu0 %v4198
    %v4271 = vpop.f32.mrb[0].mxu0
    %v4272 = vadd.f32 0.0, %v4271
    %v4273 = vpop.f32.mrb[0].mxu0
    %4274 = vmatprep.mubr.f32.mxu0 0.0
    %4275 = vmatmul.mubr.f32.gmra.mrb[0].mxu0 %v4201
    %v4276 = vpop.f32.mrb[0].mxu0
    %v4277 = vadd.f32 0.0, %v4276
    %v4278 = vpop.f32.mrb[0].mxu0
    %4279 = vdwg.mxu0
    %4280 = vrot.lane.b32.xlu0 %v4194, 96
    %v4281 = vpop.permute.xlu0 %4280
    %v4283 = vsel %vm115, %v4180, 0
    %v4286 = vsel %vm115, %v4185, 0
    %v4288 = vsel %vm115, %v4281, 0
    %4290 = vmatprep.subr.mxu0 0.0
    %4291 = vmatpush1.xpose.msra.mxu0 %v4288
    %4292 = vmatprep.subr.mxu0 0.0
    %4293 = vmatpush1.xpose.msra.mxu0 0.0
    %4294 = vmatprep.subr.mxu0 0.0
    %4295 = vmatpush1.xpose.msra.mxu0 0.0
    %4296 = vmatprep.subr.mxu0 0.0
    %4297 = vmatpush1.xpose.msra.mxu0 0.0
    %4298 = vmatprep.subr.mxu0 0.0
    %4299 = vmatpush1.xpose.msra.mxu0 0.0
    %4300 = vmatprep.subr.mxu0 0.0
    %4301 = vmatpush1.xpose.msra.mxu0 0.0
    %4302 = vmatprep.subr.mxu0 0.0
    %4303 = vmatpush1.xpose.msra.mxu0 0.0
    %4304 = vmatprep.subr.mxu0 0.0
    %4305 = vmatpush1.xpose.msra.mxu0 0.0
    %4306 = vmatprep.subr.mxu0 0.0
    %4307 = vmatpush1.xpose.msra.mxu0 0.0
    %4308 = vmatprep.subr.mxu0 0.0
    %4309 = vmatpush1.xpose.msra.mxu0 0.0
    %4310 = vmatprep.subr.mxu0 0.0
    %4311 = vmatpush1.xpose.msra.mxu0 0.0
    %4312 = vmatprep.subr.mxu0 0.0
    %4313 = vmatpush1.xpose.msra.mxu0 0.0
    %4314 = vmatprep.subr.mxu0 0.0
    %4315 = vmatpush1.xpose.msra.mxu0 0.0
    %4316 = vmatprep.subr.mxu0 0.0
    %4317 = vmatpush1.xpose.msra.mxu0 0.0
    %4318 = vmatprep.subr.mxu0 0.0
    %4319 = vmatpush1.xpose.msra.mxu0 0.0
    %4320 = vmatprep.subr.mxu0 0.0
    %4321 = vmatpush1.xpose.msra.mxu0 0.0
    %4322 = vmatprep.subr.mxu0 0.0
    %4323 = vmatpush1.xpose.msra.mxu0 0.0
    %4324 = vmatprep.subr.mxu0 0.0
    %4325 = vmatpush1.xpose.msra.mxu0 0.0
    %4326 = vmatprep.subr.mxu0 0.0
    %4327 = vmatpush1.xpose.msra.mxu0 0.0
    %4328 = vmatprep.subr.mxu0 0.0
    %4329 = vmatpush1.xpose.msra.mxu0 0.0
    %4330 = vmatprep.subr.mxu0 0.0
    %4331 = vmatpush1.xpose.msra.mxu0 0.0
    %4332 = vmatprep.subr.mxu0 0.0
    %4333 = vmatpush1.xpose.msra.mxu0 0.0
    %4334 = vmatprep.subr.mxu0 0.0
    %4335 = vmatpush1.xpose.msra.mxu0 0.0
    %4336 = vmatprep.subr.mxu0 0.0
    %4337 = vmatpush1.xpose.msra.mxu0 0.0
    %4338 = vmatprep.subr.mxu0 0.0
    %4339 = vmatpush1.xpose.msra.mxu0 0.0
    %4340 = vmatprep.subr.mxu0 0.0
    %4341 = vmatpush1.xpose.msra.mxu0 0.0
    %4342 = vmatprep.subr.mxu0 0.0
    %4343 = vmatpush1.xpose.msra.mxu0 0.0
    %4344 = vmatprep.subr.mxu0 0.0
    %4345 = vmatpush1.xpose.msra.mxu0 0.0
    %4346 = vmatprep.subr.mxu0 0.0
    %4347 = vmatpush1.xpose.msra.mxu0 0.0
    %4348 = vmatprep.subr.mxu0 0.0
    %4349 = vmatpush1.xpose.msra.mxu0 0.0
    %4350 = vmatprep.subr.mxu0 0.0
    %4351 = vmatpush1.xpose.msra.mxu0 0.0
    %4352 = vmatprep.subr.mxu0 0.0
    %4353 = vmatpush1.xpose.msra.mxu0 0.0
    %4354 = vmatprep.mubr.f32.mxu0 0.0
    %4355 = vmatmul.mubr.f32.gmra.mrb[0].mxu0 %v4283
    %v4356 = vpop.f32.mrb[0].mxu0
    %v4357 = vadd.f32 0.0, %v4356
    %v4358 = vpop.f32.mrb[0].mxu0
    %4359 = vmatprep.mubr.f32.mxu0 0.0
    %4360 = vmatmul.mubr.f32.gmra.mrb[0].mxu0 %v4286
    %v4361 = vpop.f32.mrb[0].mxu0
    %v4362 = vadd.f32 0.0, %v4361
    %v4363 = vpop.f32.mrb[0].mxu0
    %4364 = vdwg.mxu0
    %v4365 = vsel %vm1700, %v4272, -inf
    %4366 = vmax.xlane.f32.xlu0 %v4365
    %v4367 = vpop.xlane.xlu0 %4366
    %v4368 = vsel %vm1700, %v4277, -inf
    %4369 = vmax.xlane.f32.xlu0 %v4368
    %v4370 = vpop.xlane.xlu0 %4369
    %v4371 = vsel %vm1700, %v4357, -inf
    %4372 = vmax.xlane.f32.xlu0 %v4371
    %v4373 = vpop.xlane.xlu0 %4372
    %v4374 = vsel %vm1700, %v4362, -inf
    %4375 = vmax.xlane.f32.xlu0 %v4374
    %v4376 = vpop.xlane.xlu0 %4375
    %v4377 = vsub.f32 %v4272, %v4367
    %v4378 = vsub.f32 %v4277, %v4370
    %v4379 = vsub.f32 %v4357, %v4373
    %v4380 = vsub.f32 %v4362, %v4376
    %v4381 = vmul.f32 %v4377, 1.442695
    %v4382 = vpow.pop %v4381
    %v4383 = vmul.f32 %v4378, 1.442695
    %v4384 = vpow.pop %v4383
    %v4385 = vmul.f32 %v4379, 1.442695
    %v4386 = vpow.pop %v4385
    %v4387 = vmul.f32 %v4380, 1.442695
    %v4388 = vpow.pop %v4387
    %v4389 = vsel %vm1700, %v4382, 0.0
    %4390 = vadd.xlane.f32.xlu0 %v4389
    %v4391 = vpop.xlane.xlu0 %4390
    %v4392 = vsel %vm1700, %v4384, 0.0
    %4393 = vadd.xlane.f32.xlu0 %v4392
    %v4394 = vpop.xlane.xlu0 %4393
    %v4395 = vsel %vm1700, %v4386, 0.0
    %4396 = vadd.xlane.f32.xlu0 %v4395
    %v4397 = vpop.xlane.xlu0 %4396
    %v4398 = vsel %vm1700, %v4388, 0.0
    %4399 = vadd.xlane.f32.xlu0 %v4398
    %v4400 = vpop.xlane.xlu0 %4399
    %v4401 = vrcp.pop %v4391
    %v4402 = vrcp.pop %v4394
    %v4403 = vrcp.pop %v4397
    %v4404 = vrcp.pop %v4400
    %v4405 = vmul.f32 %v4382, %v4401
    %v4406 = vmul.f32 %v4384, %v4402
    %v4407 = vmul.f32 %v4386, %v4403
    %v4408 = vmul.f32 %v4388, %v4404
    %v4409 = vadd.f32 %v4405, 1e-08
    %v4410 = vadd.f32 %v4406, 1e-08
    %v4411 = vadd.f32 %v4407, 1e-08
    %v4412 = vadd.f32 %v4408, 1e-08
    %v4413 = vsel %vm1700, %v4409, 0.0
    %v4414 = vsel %vm1700, %v4410, 0.0
    %v4415 = vadd.f32 %v4413, %v4414
    %v4416 = vrot.slane %v4415, 4
    %v4417 = vadd.f32 %v4415, %v4416
    %v4418 = vrot.slane %v4417, 2
    %v4419 = vadd.f32 %v4417, %v4418
    %v4420 = vrot.slane %v4419, 1
    %v4421 = vadd.f32 %v4419, %v4420
    %v4422 = vsel %vm1700, %v4411, 0.0
    %v4423 = vsel %vm1700, %v4412, 0.0
    %v4424 = vadd.f32 %v4422, %v4423
    %v4425 = vrot.slane %v4424, 4
    %v4426 = vadd.f32 %v4424, %v4425
    %v4427 = vrot.slane %v4426, 2
    %v4428 = vadd.f32 %v4426, %v4427
    %v4429 = vrot.slane %v4428, 1
    %v4430 = vadd.f32 %v4428, %v4429
    %v4431 = vrcp.pop %v4421
    %v4432 = vmul.f32 %v4409, %v4431
    %v4433 = vmul.f32 %v4410, %v4431
    %v4434 = vrcp.pop %v4430
    %v4435 = vmul.f32 %v4411, %v4434
    %v4436 = vmul.f32 %v4412, %v4434
    %4437 = vrot.lane.b32.xlu0 %v4190, 64
    %v4438 = vpop.permute.xlu0 %4437
    %v4440 = vsel %vm1700, %v4432, 0
    %v4443 = vsel %vm1700, %v4433, 0
    %v4445 = vsel %vm1781, %v4438, 0
    %4447 = vmatprep.subr.mxu0 0.0
    %4448 = vmatpush1.msra.mxu0 %v4445
    %4449 = vmatprep.subr.mxu0 0.0
    %4450 = vmatpush1.msra.mxu0 0.0
    %4451 = vmatprep.subr.mxu0 0.0
    %4452 = vmatpush1.msra.mxu0 0.0
    %4453 = vmatprep.subr.mxu0 0.0
    %4454 = vmatpush1.msra.mxu0 0.0
    %4455 = vmatprep.subr.mxu0 0.0
    %4456 = vmatpush1.msra.mxu0 0.0
    %4457 = vmatprep.subr.mxu0 0.0
    %4458 = vmatpush1.msra.mxu0 0.0
    %4459 = vmatprep.subr.mxu0 0.0
    %4460 = vmatpush1.msra.mxu0 0.0
    %4461 = vmatprep.subr.mxu0 0.0
    %4462 = vmatpush1.msra.mxu0 0.0
    %4463 = vmatprep.subr.mxu0 0.0
    %4464 = vmatpush1.msra.mxu0 0.0
    %4465 = vmatprep.subr.mxu0 0.0
    %4466 = vmatpush1.msra.mxu0 0.0
    %4467 = vmatprep.subr.mxu0 0.0
    %4468 = vmatpush1.msra.mxu0 0.0
    %4469 = vmatprep.subr.mxu0 0.0
    %4470 = vmatpush1.msra.mxu0 0.0
    %4471 = vmatprep.subr.mxu0 0.0
    %4472 = vmatpush1.msra.mxu0 0.0
    %4473 = vmatprep.subr.mxu0 0.0
    %4474 = vmatpush1.msra.mxu0 0.0
    %4475 = vmatprep.subr.mxu0 0.0
    %4476 = vmatpush1.msra.mxu0 0.0
    %4477 = vmatprep.subr.mxu0 0.0
    %4478 = vmatpush1.msra.mxu0 0.0
    %4479 = vmatprep.subr.mxu0 0.0
    %4480 = vmatpush1.msra.mxu0 0.0
    %4481 = vmatprep.subr.mxu0 0.0
    %4482 = vmatpush1.msra.mxu0 0.0
    %4483 = vmatprep.subr.mxu0 0.0
    %4484 = vmatpush1.msra.mxu0 0.0
    %4485 = vmatprep.subr.mxu0 0.0
    %4486 = vmatpush1.msra.mxu0 0.0
    %4487 = vmatprep.subr.mxu0 0.0
    %4488 = vmatpush1.msra.mxu0 0.0
    %4489 = vmatprep.subr.mxu0 0.0
    %4490 = vmatpush1.msra.mxu0 0.0
    %4491 = vmatprep.subr.mxu0 0.0
    %4492 = vmatpush1.msra.mxu0 0.0
    %4493 = vmatprep.subr.mxu0 0.0
    %4494 = vmatpush1.msra.mxu0 0.0
    %4495 = vmatprep.subr.mxu0 0.0
    %4496 = vmatpush1.msra.mxu0 0.0
    %4497 = vmatprep.subr.mxu0 0.0
    %4498 = vmatpush1.msra.mxu0 0.0
    %4499 = vmatprep.subr.mxu0 0.0
    %4500 = vmatpush1.msra.mxu0 0.0
    %4501 = vmatprep.subr.mxu0 0.0
    %4502 = vmatpush1.msra.mxu0 0.0
    %4503 = vmatprep.subr.mxu0 0.0
    %4504 = vmatpush1.msra.mxu0 0.0
    %4505 = vmatprep.subr.mxu0 0.0
    %4506 = vmatpush1.msra.mxu0 0.0
    %4507 = vmatprep.subr.mxu0 0.0
    %4508 = vmatpush1.msra.mxu0 0.0
    %4509 = vmatprep.subr.mxu0 0.0
    %4510 = vmatpush1.msra.mxu0 0.0
    %4511 = vmatprep.mubr.f32.mxu0 0.0
    %4512 = vmatmul.mubr.f32.gmra.mrb[0].mxu0 %v4440
    %v4513 = vpop.f32.mrb[0].mxu0
    %v4514 = vadd.f32 0.0, %v4513
    %v4515 = vpop.f32.mrb[0].mxu0
    %4516 = vmatprep.mubr.f32.mxu0 0.0
    %4517 = vmatmul.mubr.f32.gmra.mrb[0].mxu0 %v4443
    %v4518 = vpop.f32.mrb[0].mxu0
    %v4519 = vadd.f32 0.0, %v4518
    %v4520 = vpop.f32.mrb[0].mxu0
    %4521 = vdwg.mxu0
    %4522 = vrot.lane.b32.xlu0 %v4194, 64
    %v4523 = vpop.permute.xlu0 %4522
    %v4525 = vsel %vm1700, %v4435, 0
    %v4528 = vsel %vm1700, %v4436, 0
    %v4530 = vsel %vm1781, %v4523, 0
    %4532 = vmatprep.subr.mxu0 0.0
    %4533 = vmatpush1.msra.mxu0 %v4530
    %4534 = vmatprep.subr.mxu0 0.0
    %4535 = vmatpush1.msra.mxu0 0.0
    %4536 = vmatprep.subr.mxu0 0.0
    %4537 = vmatpush1.msra.mxu0 0.0
    %4538 = vmatprep.subr.mxu0 0.0
    %4539 = vmatpush1.msra.mxu0 0.0
    %4540 = vmatprep.subr.mxu0 0.0
    %4541 = vmatpush1.msra.mxu0 0.0
    %4542 = vmatprep.subr.mxu0 0.0
    %4543 = vmatpush1.msra.mxu0 0.0
    %4544 = vmatprep.subr.mxu0 0.0
    %4545 = vmatpush1.msra.mxu0 0.0
    %4546 = vmatprep.subr.mxu0 0.0
    %4547 = vmatpush1.msra.mxu0 0.0
    %4548 = vmatprep.subr.mxu0 0.0
    %4549 = vmatpush1.msra.mxu0 0.0
    %4550 = vmatprep.subr.mxu0 0.0
    %4551 = vmatpush1.msra.mxu0 0.0
    %4552 = vmatprep.subr.mxu0 0.0
    %4553 = vmatpush1.msra.mxu0 0.0
    %4554 = vmatprep.subr.mxu0 0.0
    %4555 = vmatpush1.msra.mxu0 0.0
    %4556 = vmatprep.subr.mxu0 0.0
    %4557 = vmatpush1.msra.mxu0 0.0
    %4558 = vmatprep.subr.mxu0 0.0
    %4559 = vmatpush1.msra.mxu0 0.0
    %4560 = vmatprep.subr.mxu0 0.0
    %4561 = vmatpush1.msra.mxu0 0.0
    %4562 = vmatprep.subr.mxu0 0.0
    %4563 = vmatpush1.msra.mxu0 0.0
    %4564 = vmatprep.subr.mxu0 0.0
    %4565 = vmatpush1.msra.mxu0 0.0
    %4566 = vmatprep.subr.mxu0 0.0
    %4567 = vmatpush1.msra.mxu0 0.0
    %4568 = vmatprep.subr.mxu0 0.0
    %4569 = vmatpush1.msra.mxu0 0.0
    %4570 = vmatprep.subr.mxu0 0.0
    %4571 = vmatpush1.msra.mxu0 0.0
    %4572 = vmatprep.subr.mxu0 0.0
    %4573 = vmatpush1.msra.mxu0 0.0
    %4574 = vmatprep.subr.mxu0 0.0
    %4575 = vmatpush1.msra.mxu0 0.0
    %4576 = vmatprep.subr.mxu0 0.0
    %4577 = vmatpush1.msra.mxu0 0.0
    %4578 = vmatprep.subr.mxu0 0.0
    %4579 = vmatpush1.msra.mxu0 0.0
    %4580 = vmatprep.subr.mxu0 0.0
    %4581 = vmatpush1.msra.mxu0 0.0
    %4582 = vmatprep.subr.mxu0 0.0
    %4583 = vmatpush1.msra.mxu0 0.0
    %4584 = vmatprep.subr.mxu0 0.0
    %4585 = vmatpush1.msra.mxu0 0.0
    %4586 = vmatprep.subr.mxu0 0.0
    %4587 = vmatpush1.msra.mxu0 0.0
    %4588 = vmatprep.subr.mxu0 0.0
    %4589 = vmatpush1.msra.mxu0 0.0
    %4590 = vmatprep.subr.mxu0 0.0
    %4591 = vmatpush1.msra.mxu0 0.0
    %4592 = vmatprep.subr.mxu0 0.0
    %4593 = vmatpush1.msra.mxu0 0.0
    %4594 = vmatprep.subr.mxu0 0.0
    %4595 = vmatpush1.msra.mxu0 0.0
    %4596 = vmatprep.mubr.f32.mxu0 0.0
    %4597 = vmatmul.mubr.f32.gmra.mrb[0].mxu0 %v4525
    %v4598 = vpop.f32.mrb[0].mxu0
    %v4599 = vadd.f32 0.0, %v4598
    %v4600 = vpop.f32.mrb[0].mxu0
    %4601 = vmatprep.mubr.f32.mxu0 0.0
    %4602 = vmatmul.mubr.f32.gmra.mrb[0].mxu0 %v4528
    %v4603 = vpop.f32.mrb[0].mxu0
    %v4604 = vadd.f32 0.0, %v4603
    %v4605 = vpop.f32.mrb[0].mxu0
    %4606 = vdwg.mxu0
    %v4607 = vsel %vm115, %v4514, %v2860
    %v4608 = vsel %vm115, %v4519, %v2861
    %v4609 = vsel %vm115, %v4599, %v2862
    %v4610 = vsel %vm115, %v4604, %v2863
    %v4611 = vld [vmem:[#allocation10 + $0x20] sm:$0xff]
    %v4612 = vld [vmem:[#allocation10 + $0x28] sm:$0xff]
    %v4613 = vld [vmem:[#allocation10 + $0x60] sm:$0xff]
    %v4614 = vld [vmem:[#allocation10 + $0x68] sm:$0xff]
    %v4615 = vld [vmem:[#allocation10 + $0xa0] sm:$0xff]
    %v4616 = vld [vmem:[#allocation10 + $0xa8] sm:$0xff]
    %v4617 = vld [vmem:[#allocation10 + $0xe0] sm:$0xff]
    %v4618 = vld [vmem:[#allocation10 + $0xe8] sm:$0xff]
    %v4619 = vld [vmem:[#allocation10 + $0x120] sm:$0xff]
    %v4620 = vld [vmem:[#allocation10 + $0x128] sm:$0xff]
    %v4621 = vld [vmem:[#allocation10 + $0x160] sm:$0xff]
    %v4622 = vld [vmem:[#allocation10 + $0x168] sm:$0xff]
    %v4623 = vld [vmem:[#allocation10 + $0x1a0] sm:$0xff]
    %v4624 = vld [vmem:[#allocation10 + $0x1a8] sm:$0xff]
    %v4625 = vld [vmem:[#allocation10 + $0x1e0] sm:$0xff]
    %v4626 = vld [vmem:[#allocation10 + $0x1e8] sm:$0xff]
    %v4628 = vsel %vm861, %v4607, 0
    %v4631 = vsel %vm861, %v4608, 0
    %v4634 = vsel %vm861, %v4609, 0
    %v4637 = vsel %vm861, %v4610, 0
    %4639 = vmatprep.subr.mxu0 %v4612
    %4640 = vmatpush1.msra.mxu0 %v4611
    %4641 = vmatprep.subr.mxu0 %v4614
    %4642 = vmatpush1.msra.mxu0 %v4613
    %4643 = vmatprep.subr.mxu0 %v4616
    %4644 = vmatpush1.msra.mxu0 %v4615
    %4645 = vmatprep.subr.mxu0 %v4618
    %4646 = vmatpush1.msra.mxu0 %v4617
    %4647 = vmatprep.subr.mxu0 %v4620
    %4648 = vmatpush1.msra.mxu0 %v4619
    %4649 = vmatprep.subr.mxu0 %v4622
    %4650 = vmatpush1.msra.mxu0 %v4621
    %4651 = vmatprep.subr.mxu0 %v4624
    %4652 = vmatpush1.msra.mxu0 %v4623
    %4653 = vmatprep.subr.mxu0 %v4626
    %4654 = vmatpush1.msra.mxu0 %v4625
    %4655 = vmatprep.subr.mxu0 0.0
    %4656 = vmatpush1.msra.mxu0 0.0
    %4657 = vmatprep.subr.mxu0 0.0
    %4658 = vmatpush1.msra.mxu0 0.0
    %4659 = vmatprep.subr.mxu0 0.0
    %4660 = vmatpush1.msra.mxu0 0.0
    %4661 = vmatprep.subr.mxu0 0.0
    %4662 = vmatpush1.msra.mxu0 0.0
    %4663 = vmatprep.subr.mxu0 0.0
    %4664 = vmatpush1.msra.mxu0 0.0
    %4665 = vmatprep.subr.mxu0 0.0
    %4666 = vmatpush1.msra.mxu0 0.0
    %4667 = vmatprep.subr.mxu0 0.0
    %4668 = vmatpush1.msra.mxu0 0.0
    %4669 = vmatprep.subr.mxu0 0.0
    %4670 = vmatpush1.msra.mxu0 0.0
    %4671 = vmatprep.subr.mxu0 0.0
    %4672 = vmatpush1.msra.mxu0 0.0
    %4673 = vmatprep.subr.mxu0 0.0
    %4674 = vmatpush1.msra.mxu0 0.0
    %4675 = vmatprep.subr.mxu0 0.0
    %4676 = vmatpush1.msra.mxu0 0.0
    %4677 = vmatprep.subr.mxu0 0.0
    %4678 = vmatpush1.msra.mxu0 0.0
    %4679 = vmatprep.subr.mxu0 0.0
    %4680 = vmatpush1.msra.mxu0 0.0
    %4681 = vmatprep.subr.mxu0 0.0
    %4682 = vmatpush1.msra.mxu0 0.0
    %4683 = vmatprep.subr.mxu0 0.0
    %4684 = vmatpush1.msra.mxu0 0.0
    %4685 = vmatprep.subr.mxu0 0.0
    %4686 = vmatpush1.msra.mxu0 0.0
    %4687 = vmatprep.subr.mxu0 0.0
    %4688 = vmatpush1.msra.mxu0 0.0
    %4689 = vmatprep.subr.mxu0 0.0
    %4690 = vmatpush1.msra.mxu0 0.0
    %4691 = vmatprep.subr.mxu0 0.0
    %4692 = vmatpush1.msra.mxu0 0.0
    %4693 = vmatprep.subr.mxu0 0.0
    %4694 = vmatpush1.msra.mxu0 0.0
    %4695 = vmatprep.subr.mxu0 0.0
    %4696 = vmatpush1.msra.mxu0 0.0
    %4697 = vmatprep.subr.mxu0 0.0
    %4698 = vmatpush1.msra.mxu0 0.0
    %4699 = vmatprep.subr.mxu0 0.0
    %4700 = vmatpush1.msra.mxu0 0.0
    %4701 = vmatprep.subr.mxu0 0.0
    %4702 = vmatpush1.msra.mxu0 0.0
    %4703 = vmatprep.mubr.f32.mxu0 0.0
    %4704 = vmatmul.mubr.f32.gmra.mrb[0].mxu0 %v4628
    %v4705 = vpop.f32.mrb[0].mxu0
    %v4706 = vadd.f32 0.0, %v4705
    %v4707 = vpop.f32.mrb[0].mxu0
    %v4708 = vadd.f32 0.0, %v4707
    %4709 = vmatprep.mubr.f32.mxu0 0.0
    %4710 = vmatmul.mubr.f32.gmra.mrb[0].mxu0 %v4631
    %v4711 = vpop.f32.mrb[0].mxu0
    %v4712 = vadd.f32 0.0, %v4711
    %v4713 = vpop.f32.mrb[0].mxu0
    %v4714 = vadd.f32 0.0, %v4713
    %4715 = vmatprep.mubr.f32.mxu0 0.0
    %4716 = vmatmul.mubr.f32.gmra.mrb[0].mxu0 %v4634
    %v4717 = vpop.f32.mrb[0].mxu0
    %v4718 = vadd.f32 0.0, %v4717
    %v4719 = vpop.f32.mrb[0].mxu0
    %v4720 = vadd.f32 0.0, %v4719
    %4721 = vmatprep.mubr.f32.mxu0 0.0
    %4722 = vmatmul.mubr.f32.gmra.mrb[0].mxu0 %v4637
    %v4723 = vpop.f32.mrb[0].mxu0
    %v4724 = vadd.f32 0.0, %v4723
    %v4725 = vpop.f32.mrb[0].mxu0
    %v4726 = vadd.f32 0.0, %v4725
    %4727 = vdwg.mxu0
    %v4728 = vld [vmem:[#allocation11 + $0x14] sm:$0x1]
    %v4730 = vlaneseq
    %v4731 = vshrl.u32 %v4730, 7
    %v4732 = vsub.s32 0, %v4731
    %v4733 = vrot.slane %v4728, %v4732
    %v4735 = vadd.f32 %v4706, %v4733
    %v4736 = vadd.f32 %v4712, %v4733
    %v4737 = vadd.f32 %v4718, %v4733
    %v4738 = vadd.f32 %v4724, %v4733
    %v4739 = vld [vmem:[#allocation11 + $0x15] sm:$0x1]
    %v4741 = vlaneseq
    %v4742 = vshrl.u32 %v4741, 7
    %v4743 = vsub.s32 0, %v4742
    %v4744 = vrot.slane %v4739, %v4743
    %4745 = vrot.lane.b32.xlu0 %v4744, 96
    %v4746 = vpop.permute.xlu0 %4745
    %v4748 = vadd.f32 %v4706, %v4746
    %v4749 = vadd.f32 %v4708, %v4746
    %v4750 = vadd.f32 %v4712, %v4746
    %v4751 = vadd.f32 %v4714, %v4746
    %v4752 = vadd.f32 %v4718, %v4746
    %v4753 = vadd.f32 %v4720, %v4746
    %v4754 = vadd.f32 %v4724, %v4746
    %v4755 = vadd.f32 %v4726, %v4746
    %4764 = vrot.lane.b32.xlu0 %v4748, 32
    %v4765 = vpop.permute.xlu0 %4764
    %4766 = vrot.lane.b32.xlu0 %v4749, 32
    %v4767 = vpop.permute.xlu0 %4766
    %4768 = vrot.lane.b32.xlu0 %v4750, 32
    %v4769 = vpop.permute.xlu0 %4768
    %4770 = vrot.lane.b32.xlu0 %v4751, 32
    %v4771 = vpop.permute.xlu0 %4770
    %4772 = vrot.lane.b32.xlu0 %v4752, 32
    %v4773 = vpop.permute.xlu0 %4772
    %4774 = vrot.lane.b32.xlu0 %v4753, 32
    %v4775 = vpop.permute.xlu0 %4774
    %4776 = vrot.lane.b32.xlu0 %v4754, 32
    %v4777 = vpop.permute.xlu0 %4776
    %4778 = vrot.lane.b32.xlu0 %v4755, 32
    %v4779 = vpop.permute.xlu0 %4778
    %v4780 = vsel %vm115, %v4765, %v4767
    %v4781 = vsel %vm115, %v4769, %v4771
    %v4782 = vsel %vm115, %v4773, %v4775
    %v4783 = vsel %vm115, %v4777, %v4779
    %v4788 = vadd.f32 %v4735, %v4780
    %v4789 = vadd.f32 %v4736, %v4781
    %v4790 = vadd.f32 %v4737, %v4782
    %v4791 = vadd.f32 %v4738, %v4783
    %v4792 = vxor.u32 %v4788, 2147483648
    %v4793 = vxor.u32 %v4789, 2147483648
    %v4794 = vxor.u32 %v4790, 2147483648
    %v4795 = vxor.u32 %v4791, 2147483648
    %v4796 = vmul.f32 %v4792, 1.442695
    %v4797 = vpow.pop %v4796
    %v4798 = vmul.f32 %v4793, 1.442695
    %v4799 = vpow.pop %v4798
    %v4800 = vmul.f32 %v4794, 1.442695
    %v4801 = vpow.pop %v4800
    %v4802 = vmul.f32 %v4795, 1.442695
    %v4803 = vpow.pop %v4802
    %v4804 = vadd.f32 %v4797, 1.0
    %v4805 = vadd.f32 %v4799, 1.0
    %v4806 = vadd.f32 %v4801, 1.0
    %v4807 = vadd.f32 %v4803, 1.0
    %v4808 = vrcp.pop %v4804
    %v4809 = vmul.f32 1.0, %v4808
    %v4810 = vrcp.pop %v4805
    %v4811 = vmul.f32 1.0, %v4810
    %v4812 = vrcp.pop %v4806
    %v4813 = vmul.f32 1.0, %v4812
    %v4814 = vrcp.pop %v4807
    %v4815 = vmul.f32 1.0, %v4814
    %4816 = vrot.lane.b32.xlu0 %v4749, 96
    %v4817 = vpop.permute.xlu0 %4816
    %4818 = vrot.lane.b32.xlu0 %v4751, 96
    %v4819 = vpop.permute.xlu0 %4818
    %4820 = vrot.lane.b32.xlu0 %v4753, 96
    %v4821 = vpop.permute.xlu0 %4820
    %4822 = vrot.lane.b32.xlu0 %v4755, 96
    %v4823 = vpop.permute.xlu0 %4822
    %v4828 = vmul.f32 %v4809, %v4817
    %v4829 = vmul.f32 %v4811, %v4819
    %v4830 = vmul.f32 %v4813, %v4821
    %v4831 = vmul.f32 %v4815, %v4823
    %4836 = vrot.lane.b32.xlu0 %v4828, 64
    %v4837 = vpop.permute.xlu0 %4836
    %4838 = vrot.lane.b32.xlu0 %v4829, 64
    %v4839 = vpop.permute.xlu0 %4838
    %4840 = vrot.lane.b32.xlu0 %v4830, 64
    %v4841 = vpop.permute.xlu0 %4840
    %4842 = vrot.lane.b32.xlu0 %v4831, 64
    %v4843 = vpop.permute.xlu0 %4842
    %v4848 = vadd.f32 %v4735, %v4837
    %v4849 = vadd.f32 %v4736, %v4839
    %v4850 = vadd.f32 %v4737, %v4841
    %v4851 = vadd.f32 %v4738, %v4843
    %v4852 = vtanh.pop %v4848
    %v4853 = vtanh.pop %v4849
    %v4854 = vtanh.pop %v4850
    %v4855 = vtanh.pop %v4851
    %v4856 = vsub.f32 1.0, %v4809
    %v4857 = vsub.f32 1.0, %v4811
    %v4858 = vsub.f32 1.0, %v4813
    %v4859 = vsub.f32 1.0, %v4815
    %4864 = vrot.lane.b32.xlu0 %v4852, 96
    %v4865 = vpop.permute.xlu0 %4864
    %4866 = vrot.lane.b32.xlu0 %v4853, 96
    %v4867 = vpop.permute.xlu0 %4866
    %4868 = vrot.lane.b32.xlu0 %v4854, 96
    %v4869 = vpop.permute.xlu0 %4868
    %4870 = vrot.lane.b32.xlu0 %v4855, 96
    %v4871 = vpop.permute.xlu0 %4870
    %v4876 = vmul.f32 %v4856, %v4865
    %v4877 = vmul.f32 %v4857, %v4867
    %v4878 = vmul.f32 %v4858, %v4869
    %v4879 = vmul.f32 %v4859, %v4871
    %v4880 = vmul.f32 %v4809, %v2860
    %v4881 = vmul.f32 %v4811, %v2861
    %v4882 = vmul.f32 %v4813, %v2862
    %v4883 = vmul.f32 %v4815, %v2863
    %v4884 = vadd.f32 %v4876, %v4880
    %v4885 = vadd.f32 %v4877, %v4881
    %v4886 = vadd.f32 %v4878, %v4882
    %v4887 = vadd.f32 %v4879, %v4883
    %v4888 = vld [vmem:[#allocation11 + $0x16] sm:$0x1]
    %v4889 = vld [vmem:[#allocation11 + $0x17] sm:$0x1]
    %4894 = vrot.lane.b32.xlu0 %v4884, 96
    %v4895 = vpop.permute.xlu0 %4894
    %4896 = vrot.lane.b32.xlu0 %v4885, 96
    %v4897 = vpop.permute.xlu0 %4896
    %4898 = vrot.lane.b32.xlu0 %v4886, 96
    %v4899 = vpop.permute.xlu0 %4898
    %4900 = vrot.lane.b32.xlu0 %v4887, 96
    %v4901 = vpop.permute.xlu0 %4900
    %v4906 = vsel %vm115, %v4895, 0.0
    %4907 = vadd.xlane.f32.xlu0 %v4906
    %v4908 = vpop.xlane.xlu0 %4907
    %v4909 = vsel %vm115, %v4897, 0.0
    %4910 = vadd.xlane.f32.xlu0 %v4909
    %v4911 = vpop.xlane.xlu0 %4910
    %v4912 = vsel %vm115, %v4899, 0.0
    %4913 = vadd.xlane.f32.xlu0 %v4912
    %v4914 = vpop.xlane.xlu0 %4913
    %v4915 = vsel %vm115, %v4901, 0.0
    %4916 = vadd.xlane.f32.xlu0 %v4915
    %v4917 = vpop.xlane.xlu0 %4916
    %v4918 = vmul.f32 %v4908, %v128
    %v4919 = vmul.f32 %v4911, %v128
    %v4920 = vmul.f32 %v4914, %v128
    %v4921 = vmul.f32 %v4917, %v128
    %v4922 = vsub.f32 %v4884, %v4918
    %v4923 = vsub.f32 %v4885, %v4919
    %v4924 = vsub.f32 %v4886, %v4920
    %v4925 = vsub.f32 %v4887, %v4921
    %v4926 = vmul.f32 %v4922, %v4922
    %v4927 = vmul.f32 %v4923, %v4923
    %v4928 = vmul.f32 %v4924, %v4924
    %v4929 = vmul.f32 %v4925, %v4925
    %4934 = vrot.lane.b32.xlu0 %v4926, 96
    %v4935 = vpop.permute.xlu0 %4934
    %4936 = vrot.lane.b32.xlu0 %v4927, 96
    %v4937 = vpop.permute.xlu0 %4936
    %4938 = vrot.lane.b32.xlu0 %v4928, 96
    %v4939 = vpop.permute.xlu0 %4938
    %4940 = vrot.lane.b32.xlu0 %v4929, 96
    %v4941 = vpop.permute.xlu0 %4940
    %v4946 = vsel %vm115, %v4935, 0.0
    %4947 = vadd.xlane.f32.xlu0 %v4946
    %v4948 = vpop.xlane.xlu0 %4947
    %v4949 = vsel %vm115, %v4937, 0.0
    %4950 = vadd.xlane.f32.xlu0 %v4949
    %v4951 = vpop.xlane.xlu0 %4950
    %v4952 = vsel %vm115, %v4939, 0.0
    %4953 = vadd.xlane.f32.xlu0 %v4952
    %v4954 = vpop.xlane.xlu0 %4953
    %v4955 = vsel %vm115, %v4941, 0.0
    %4956 = vadd.xlane.f32.xlu0 %v4955
    %v4957 = vpop.xlane.xlu0 %4956
    %v4958 = vmul.f32 %v4948, %v128
    %v4959 = vmul.f32 %v4951, %v128
    %v4960 = vmul.f32 %v4954, %v128
    %v4961 = vmul.f32 %v4957, %v128
    %v4962 = vadd.f32 %v4958, 1e-05
    %v4963 = vadd.f32 %v4959, 1e-05
    %v4964 = vadd.f32 %v4960, 1e-05
    %v4965 = vadd.f32 %v4961, 1e-05
    %v4966 = vrsqrt.pop %v4962
    %v4967 = vrsqrt.pop %v4963
    %v4968 = vrsqrt.pop %v4964
    %v4969 = vrsqrt.pop %v4965
    %v4970 = vmul.f32 %v4922, %v4966
    %v4971 = vmul.f32 %v4923, %v4967
    %v4972 = vmul.f32 %v4924, %v4968
    %v4973 = vmul.f32 %v4925, %v4969
    %v4975 = vlaneseq
    %v4976 = vshrl.u32 %v4975, 7
    %v4977 = vsub.s32 0, %v4976
    %v4978 = vrot.slane %v4888, %v4977
    %4979 = vrot.lane.b32.xlu0 %v4978, 32
    %v4980 = vpop.permute.xlu0 %4979
    %v4982 = vmul.f32 %v4970, %v4980
    %v4983 = vmul.f32 %v4971, %v4980
    %v4984 = vmul.f32 %v4972, %v4980
    %v4985 = vmul.f32 %v4973, %v4980
    %v4987 = vlaneseq
    %v4988 = vshrl.u32 %v4987, 7
    %v4989 = vsub.s32 0, %v4988
    %v4990 = vrot.slane %v4889, %v4989
    %4991 = vrot.lane.b32.xlu0 %v4990, 32
    %v4992 = vpop.permute.xlu0 %4991
    %v4994 = vadd.f32 %v4982, %v4992
    %v4995 = vadd.f32 %v4983, %v4992
    %v4996 = vadd.f32 %v4984, %v4992
    %v4997 = vadd.f32 %v4985, %v4992
    %v4998 = vld [vmem:[#allocation7 + $0x18] sm:$0xff]
    %v4999 = vld [vmem:[#allocation7 + $0x38] sm:$0xff]
    %v5000 = vld [vmem:[#allocation7 + $0x58] sm:$0xff]
    %v5001 = vld [vmem:[#allocation7 + $0x78] sm:$0xff]
    %v5002 = vld [vmem:[#allocation11 + $0x18] sm:$0x1]
    %v5004 = vlaneseq
    %v5005 = vshrl.u32 %v5004, 7
    %v5006 = vsub.s32 0, %v5005
    %v5007 = vrot.slane %v5002, %v5006
    %5013 = vrot.lane.b32.xlu0 %v4994, 96
    %v5014 = vpop.permute.xlu0 %5013
    %5015 = vrot.lane.b32.xlu0 %v4995, 96
    %v5016 = vpop.permute.xlu0 %5015
    %5017 = vrot.lane.b32.xlu0 %v4996, 96
    %v5018 = vpop.permute.xlu0 %5017
    %5019 = vrot.lane.b32.xlu0 %v4997, 96
    %v5020 = vpop.permute.xlu0 %5019
    %v5021 = vsel %vm115, %v5014, 0
    %v5023 = vsel %vm115, %v5016, 0
    %v5025 = vsel %vm115, %v5018, 0
    %v5027 = vsel %vm115, %v5020, 0
    %5029 = vmatprep.subr.mxu0 0.0
    %5030 = vmatpush1.msra.mxu0 %v4998
    %5031 = vmatprep.subr.mxu0 0.0
    %5032 = vmatpush1.msra.mxu0 %v4999
    %5033 = vmatprep.subr.mxu0 0.0
    %5034 = vmatpush1.msra.mxu0 %v5000
    %5035 = vmatprep.subr.mxu0 0.0
    %5036 = vmatpush1.msra.mxu0 %v5001
    %5037 = vmatprep.subr.mxu0 0.0
    %5038 = vmatpush1.msra.mxu0 0.0
    %5039 = vmatprep.subr.mxu0 0.0
    %5040 = vmatpush1.msra.mxu0 0.0
    %5041 = vmatprep.subr.mxu0 0.0
    %5042 = vmatpush1.msra.mxu0 0.0
    %5043 = vmatprep.subr.mxu0 0.0
    %5044 = vmatpush1.msra.mxu0 0.0
    %5045 = vmatprep.subr.mxu0 0.0
    %5046 = vmatpush1.msra.mxu0 0.0
    %5047 = vmatprep.subr.mxu0 0.0
    %5048 = vmatpush1.msra.mxu0 0.0
    %5049 = vmatprep.subr.mxu0 0.0
    %5050 = vmatpush1.msra.mxu0 0.0
    %5051 = vmatprep.subr.mxu0 0.0
    %5052 = vmatpush1.msra.mxu0 0.0
    %5053 = vmatprep.subr.mxu0 0.0
    %5054 = vmatpush1.msra.mxu0 0.0
    %5055 = vmatprep.subr.mxu0 0.0
    %5056 = vmatpush1.msra.mxu0 0.0
    %5057 = vmatprep.subr.mxu0 0.0
    %5058 = vmatpush1.msra.mxu0 0.0
    %5059 = vmatprep.subr.mxu0 0.0
    %5060 = vmatpush1.msra.mxu0 0.0
    %5061 = vmatprep.subr.mxu0 0.0
    %5062 = vmatpush1.msra.mxu0 0.0
    %5063 = vmatprep.subr.mxu0 0.0
    %5064 = vmatpush1.msra.mxu0 0.0
    %5065 = vmatprep.subr.mxu0 0.0
    %5066 = vmatpush1.msra.mxu0 0.0
    %5067 = vmatprep.subr.mxu0 0.0
    %5068 = vmatpush1.msra.mxu0 0.0
    %5069 = vmatprep.subr.mxu0 0.0
    %5070 = vmatpush1.msra.mxu0 0.0
    %5071 = vmatprep.subr.mxu0 0.0
    %5072 = vmatpush1.msra.mxu0 0.0
    %5073 = vmatprep.subr.mxu0 0.0
    %5074 = vmatpush1.msra.mxu0 0.0
    %5075 = vmatprep.subr.mxu0 0.0
    %5076 = vmatpush1.msra.mxu0 0.0
    %5077 = vmatprep.subr.mxu0 0.0
    %5078 = vmatpush1.msra.mxu0 0.0
    %5079 = vmatprep.subr.mxu0 0.0
    %5080 = vmatpush1.msra.mxu0 0.0
    %5081 = vmatprep.subr.mxu0 0.0
    %5082 = vmatpush1.msra.mxu0 0.0
    %5083 = vmatprep.subr.mxu0 0.0
    %5084 = vmatpush1.msra.mxu0 0.0
    %5085 = vmatprep.subr.mxu0 0.0
    %5086 = vmatpush1.msra.mxu0 0.0
    %5087 = vmatprep.subr.mxu0 0.0
    %5088 = vmatpush1.msra.mxu0 0.0
    %5089 = vmatprep.subr.mxu0 0.0
    %5090 = vmatpush1.msra.mxu0 0.0
    %5091 = vmatprep.subr.mxu0 0.0
    %5092 = vmatpush1.msra.mxu0 0.0
    %5093 = vmatprep.mubr.f32.mxu0 0.0
    %5094 = vmatmul.mubr.f32.gmra.mrb[0].mxu0 %v5021
    %v5095 = vpop.f32.mrb[0].mxu0
    %v5096 = vadd.f32 %v5007, %v5095
    %v5097 = vpop.f32.mrb[0].mxu0
    %5098 = vmatprep.mubr.f32.mxu0 0.0
    %5099 = vmatmul.mubr.f32.gmra.mrb[0].mxu0 %v5023
    %v5100 = vpop.f32.mrb[0].mxu0
    %v5101 = vadd.f32 %v5007, %v5100
    %v5102 = vpop.f32.mrb[0].mxu0
    %5103 = vmatprep.mubr.f32.mxu0 0.0
    %5104 = vmatmul.mubr.f32.gmra.mrb[0].mxu0 %v5025
    %v5105 = vpop.f32.mrb[0].mxu0
    %v5106 = vadd.f32 %v5007, %v5105
    %v5107 = vpop.f32.mrb[0].mxu0
    %5108 = vmatprep.mubr.f32.mxu0 0.0
    %5109 = vmatmul.mubr.f32.gmra.mrb[0].mxu0 %v5027
    %v5110 = vpop.f32.mrb[0].mxu0
    %v5111 = vadd.f32 %v5007, %v5110
    %v5112 = vpop.f32.mrb[0].mxu0
    %5113 = vdwg.mxu0
    %v5114 = vmax.f32 %v5096, 0.0
    %v5115 = vmax.f32 %v5101, 0.0
    %v5116 = vmax.f32 %v5106, 0.0
    %v5117 = vmax.f32 %v5111, 0.0
    %v5118 = vld [vmem:[#allocation8 + $0x8] sm:$0xff]
    %v5119 = vld [vmem:[#allocation8 + $0x18] sm:$0xff]
    %v5120 = vld [vmem:[#allocation8 + $0x28] sm:$0xff]
    %v5121 = vld [vmem:[#allocation8 + $0x38] sm:$0xff]
    %v5122 = vld [vmem:[#allocation8 + $0x48] sm:$0xff]
    %v5123 = vld [vmem:[#allocation8 + $0x58] sm:$0xff]
    %v5124 = vld [vmem:[#allocation8 + $0x68] sm:$0xff]
    %v5125 = vld [vmem:[#allocation8 + $0x78] sm:$0xff]
    %v5126 = vld [vmem:[#allocation11 + $0x19] sm:$0x1]
    %v5128 = vlaneseq
    %v5129 = vshrl.u32 %v5128, 7
    %v5130 = vsub.s32 0, %v5129
    %v5131 = vrot.slane %v5126, %v5130
    %v5134 = vsel %vm861, %v5114, 0
    %v5137 = vsel %vm861, %v5115, 0
    %v5140 = vsel %vm861, %v5116, 0
    %v5143 = vsel %vm861, %v5117, 0
    %5145 = vmatprep.subr.mxu0 0.0
    %5146 = vmatpush1.msra.mxu0 %v5118
    %5147 = vmatprep.subr.mxu0 0.0
    %5148 = vmatpush1.msra.mxu0 %v5119
    %5149 = vmatprep.subr.mxu0 0.0
    %5150 = vmatpush1.msra.mxu0 %v5120
    %5151 = vmatprep.subr.mxu0 0.0
    %5152 = vmatpush1.msra.mxu0 %v5121
    %5153 = vmatprep.subr.mxu0 0.0
    %5154 = vmatpush1.msra.mxu0 %v5122
    %5155 = vmatprep.subr.mxu0 0.0
    %5156 = vmatpush1.msra.mxu0 %v5123
    %5157 = vmatprep.subr.mxu0 0.0
    %5158 = vmatpush1.msra.mxu0 %v5124
    %5159 = vmatprep.subr.mxu0 0.0
    %5160 = vmatpush1.msra.mxu0 %v5125
    %5161 = vmatprep.subr.mxu0 0.0
    %5162 = vmatpush1.msra.mxu0 0.0
    %5163 = vmatprep.subr.mxu0 0.0
    %5164 = vmatpush1.msra.mxu0 0.0
    %5165 = vmatprep.subr.mxu0 0.0
    %5166 = vmatpush1.msra.mxu0 0.0
    %5167 = vmatprep.subr.mxu0 0.0
    %5168 = vmatpush1.msra.mxu0 0.0
    %5169 = vmatprep.subr.mxu0 0.0
    %5170 = vmatpush1.msra.mxu0 0.0
    %5171 = vmatprep.subr.mxu0 0.0
    %5172 = vmatpush1.msra.mxu0 0.0
    %5173 = vmatprep.subr.mxu0 0.0
    %5174 = vmatpush1.msra.mxu0 0.0
    %5175 = vmatprep.subr.mxu0 0.0
    %5176 = vmatpush1.msra.mxu0 0.0
    %5177 = vmatprep.subr.mxu0 0.0
    %5178 = vmatpush1.msra.mxu0 0.0
    %5179 = vmatprep.subr.mxu0 0.0
    %5180 = vmatpush1.msra.mxu0 0.0
    %5181 = vmatprep.subr.mxu0 0.0
    %5182 = vmatpush1.msra.mxu0 0.0
    %5183 = vmatprep.subr.mxu0 0.0
    %5184 = vmatpush1.msra.mxu0 0.0
    %5185 = vmatprep.subr.mxu0 0.0
    %5186 = vmatpush1.msra.mxu0 0.0
    %5187 = vmatprep.subr.mxu0 0.0
    %5188 = vmatpush1.msra.mxu0 0.0
    %5189 = vmatprep.subr.mxu0 0.0
    %5190 = vmatpush1.msra.mxu0 0.0
    %5191 = vmatprep.subr.mxu0 0.0
    %5192 = vmatpush1.msra.mxu0 0.0
    %5193 = vmatprep.subr.mxu0 0.0
    %5194 = vmatpush1.msra.mxu0 0.0
    %5195 = vmatprep.subr.mxu0 0.0
    %5196 = vmatpush1.msra.mxu0 0.0
    %5197 = vmatprep.subr.mxu0 0.0
    %5198 = vmatpush1.msra.mxu0 0.0
    %5199 = vmatprep.subr.mxu0 0.0
    %5200 = vmatpush1.msra.mxu0 0.0
    %5201 = vmatprep.subr.mxu0 0.0
    %5202 = vmatpush1.msra.mxu0 0.0
    %5203 = vmatprep.subr.mxu0 0.0
    %5204 = vmatpush1.msra.mxu0 0.0
    %5205 = vmatprep.subr.mxu0 0.0
    %5206 = vmatpush1.msra.mxu0 0.0
    %5207 = vmatprep.subr.mxu0 0.0
    %5208 = vmatpush1.msra.mxu0 0.0
    %5209 = vmatprep.mubr.f32.mxu0 0.0
    %5210 = vmatmul.mubr.f32.gmra.mrb[0].mxu0 %v5134
    %v5211 = vpop.f32.mrb[0].mxu0
    %v5212 = vadd.f32 %v5131, %v5211
    %v5213 = vpop.f32.mrb[0].mxu0
    %5214 = vmatprep.mubr.f32.mxu0 0.0
    %5215 = vmatmul.mubr.f32.gmra.mrb[0].mxu0 %v5137
    %v5216 = vpop.f32.mrb[0].mxu0
    %v5217 = vadd.f32 %v5131, %v5216
    %v5218 = vpop.f32.mrb[0].mxu0
    %5219 = vmatprep.mubr.f32.mxu0 0.0
    %5220 = vmatmul.mubr.f32.gmra.mrb[0].mxu0 %v5140
    %v5221 = vpop.f32.mrb[0].mxu0
    %v5222 = vadd.f32 %v5131, %v5221
    %v5223 = vpop.f32.mrb[0].mxu0
    %5224 = vmatprep.mubr.f32.mxu0 0.0
    %5225 = vmatmul.mubr.f32.gmra.mrb[0].mxu0 %v5143
    %v5226 = vpop.f32.mrb[0].mxu0
    %v5227 = vadd.f32 %v5131, %v5226
    %v5228 = vpop.f32.mrb[0].mxu0
    %5229 = vdwg.mxu0
    %v5230 = vsel %vm115, %v5212, %v4884
    %v5231 = vsel %vm115, %v5217, %v4885
    %v5232 = vsel %vm115, %v5222, %v4886
    %v5233 = vsel %vm115, %v5227, %v4887
    %v5234 = vld [vmem:[#allocation10 + $0x30] sm:$0xff]
    %v5235 = vld [vmem:[#allocation10 + $0x38] sm:$0xff]
    %v5236 = vld [vmem:[#allocation10 + $0x70] sm:$0xff]
    %v5237 = vld [vmem:[#allocation10 + $0x78] sm:$0xff]
    %v5238 = vld [vmem:[#allocation10 + $0xb0] sm:$0xff]
    %v5239 = vld [vmem:[#allocation10 + $0xb8] sm:$0xff]
    %v5240 = vld [vmem:[#allocation10 + $0xf0] sm:$0xff]
    %v5241 = vld [vmem:[#allocation10 + $0xf8] sm:$0xff]
    %v5242 = vld [vmem:[#allocation10 + $0x130] sm:$0xff]
    %v5243 = vld [vmem:[#allocation10 + $0x138] sm:$0xff]
    %v5244 = vld [vmem:[#allocation10 + $0x170] sm:$0xff]
    %v5245 = vld [vmem:[#allocation10 + $0x178] sm:$0xff]
    %v5246 = vld [vmem:[#allocation10 + $0x1b0] sm:$0xff]
    %v5247 = vld [vmem:[#allocation10 + $0x1b8] sm:$0xff]
    %v5248 = vld [vmem:[#allocation10 + $0x1f0] sm:$0xff]
    %v5249 = vld [vmem:[#allocation10 + $0x1f8] sm:$0xff]
    %v5251 = vsel %vm861, %v5230, 0
    %v5254 = vsel %vm861, %v5231, 0
    %v5257 = vsel %vm861, %v5232, 0
    %v5260 = vsel %vm861, %v5233, 0
    %5262 = vmatprep.subr.mxu0 %v5235
    %5263 = vmatpush1.msra.mxu0 %v5234
    %5264 = vmatprep.subr.mxu0 %v5237
    %5265 = vmatpush1.msra.mxu0 %v5236
    %5266 = vmatprep.subr.mxu0 %v5239
    %5267 = vmatpush1.msra.mxu0 %v5238
    %5268 = vmatprep.subr.mxu0 %v5241
    %5269 = vmatpush1.msra.mxu0 %v5240
    %5270 = vmatprep.subr.mxu0 %v5243
    %5271 = vmatpush1.msra.mxu0 %v5242
    %5272 = vmatprep.subr.mxu0 %v5245
    %5273 = vmatpush1.msra.mxu0 %v5244
    %5274 = vmatprep.subr.mxu0 %v5247
    %5275 = vmatpush1.msra.mxu0 %v5246
    %5276 = vmatprep.subr.mxu0 %v5249
    %5277 = vmatpush1.msra.mxu0 %v5248
    %5278 = vmatprep.subr.mxu0 0.0
    %5279 = vmatpush1.msra.mxu0 0.0
    %5280 = vmatprep.subr.mxu0 0.0
    %5281 = vmatpush1.msra.mxu0 0.0
    %5282 = vmatprep.subr.mxu0 0.0
    %5283 = vmatpush1.msra.mxu0 0.0
    %5284 = vmatprep.subr.mxu0 0.0
    %5285 = vmatpush1.msra.mxu0 0.0
    %5286 = vmatprep.subr.mxu0 0.0
    %5287 = vmatpush1.msra.mxu0 0.0
    %5288 = vmatprep.subr.mxu0 0.0
    %5289 = vmatpush1.msra.mxu0 0.0
    %5290 = vmatprep.subr.mxu0 0.0
    %5291 = vmatpush1.msra.mxu0 0.0
    %5292 = vmatprep.subr.mxu0 0.0
    %5293 = vmatpush1.msra.mxu0 0.0
    %5294 = vmatprep.subr.mxu0 0.0
    %5295 = vmatpush1.msra.mxu0 0.0
    %5296 = vmatprep.subr.mxu0 0.0
    %5297 = vmatpush1.msra.mxu0 0.0
    %5298 = vmatprep.subr.mxu0 0.0
    %5299 = vmatpush1.msra.mxu0 0.0
    %5300 = vmatprep.subr.mxu0 0.0
    %5301 = vmatpush1.msra.mxu0 0.0
    %5302 = vmatprep.subr.mxu0 0.0
    %5303 = vmatpush1.msra.mxu0 0.0
    %5304 = vmatprep.subr.mxu0 0.0
    %5305 = vmatpush1.msra.mxu0 0.0
    %5306 = vmatprep.subr.mxu0 0.0
    %5307 = vmatpush1.msra.mxu0 0.0
    %5308 = vmatprep.subr.mxu0 0.0
    %5309 = vmatpush1.msra.mxu0 0.0
    %5310 = vmatprep.subr.mxu0 0.0
    %5311 = vmatpush1.msra.mxu0 0.0
    %5312 = vmatprep.subr.mxu0 0.0
    %5313 = vmatpush1.msra.mxu0 0.0
    %5314 = vmatprep.subr.mxu0 0.0
    %5315 = vmatpush1.msra.mxu0 0.0
    %5316 = vmatprep.subr.mxu0 0.0
    %5317 = vmatpush1.msra.mxu0 0.0
    %5318 = vmatprep.subr.mxu0 0.0
    %5319 = vmatpush1.msra.mxu0 0.0
    %5320 = vmatprep.subr.mxu0 0.0
    %5321 = vmatpush1.msra.mxu0 0.0
    %5322 = vmatprep.subr.mxu0 0.0
    %5323 = vmatpush1.msra.mxu0 0.0
    %5324 = vmatprep.subr.mxu0 0.0
    %5325 = vmatpush1.msra.mxu0 0.0
    %5326 = vmatprep.mubr.f32.mxu0 0.0
    %5327 = vmatmul.mubr.f32.gmra.mrb[0].mxu0 %v5251
    %v5328 = vpop.f32.mrb[0].mxu0
    %v5329 = vadd.f32 0.0, %v5328
    %v5330 = vpop.f32.mrb[0].mxu0
    %v5331 = vadd.f32 0.0, %v5330
    %5332 = vmatprep.mubr.f32.mxu0 0.0
    %5333 = vmatmul.mubr.f32.gmra.mrb[0].mxu0 %v5254
    %v5334 = vpop.f32.mrb[0].mxu0
    %v5335 = vadd.f32 0.0, %v5334
    %v5336 = vpop.f32.mrb[0].mxu0
    %v5337 = vadd.f32 0.0, %v5336
    %5338 = vmatprep.mubr.f32.mxu0 0.0
    %5339 = vmatmul.mubr.f32.gmra.mrb[0].mxu0 %v5257
    %v5340 = vpop.f32.mrb[0].mxu0
    %v5341 = vadd.f32 0.0, %v5340
    %v5342 = vpop.f32.mrb[0].mxu0
    %v5343 = vadd.f32 0.0, %v5342
    %5344 = vmatprep.mubr.f32.mxu0 0.0
    %5345 = vmatmul.mubr.f32.gmra.mrb[0].mxu0 %v5260
    %v5346 = vpop.f32.mrb[0].mxu0
    %v5347 = vadd.f32 0.0, %v5346
    %v5348 = vpop.f32.mrb[0].mxu0
    %v5349 = vadd.f32 0.0, %v5348
    %5350 = vdwg.mxu0
    %v5351 = vld [vmem:[#allocation11 + $0x1a] sm:$0x1]
    %v5353 = vlaneseq
    %v5354 = vshrl.u32 %v5353, 7
    %v5355 = vsub.s32 0, %v5354
    %v5356 = vrot.slane %v5351, %v5355
    %v5358 = vadd.f32 %v5329, %v5356
    %v5359 = vadd.f32 %v5335, %v5356
    %v5360 = vadd.f32 %v5341, %v5356
    %v5361 = vadd.f32 %v5347, %v5356
    %v5362 = vld [vmem:[#allocation11 + $0x1b] sm:$0x1]
    %v5364 = vlaneseq
    %v5365 = vshrl.u32 %v5364, 7
    %v5366 = vsub.s32 0, %v5365
    %v5367 = vrot.slane %v5362, %v5366
    %5368 = vrot.lane.b32.xlu0 %v5367, 96
    %v5369 = vpop.permute.xlu0 %5368
    %v5371 = vadd.f32 %v5329, %v5369
    %v5372 = vadd.f32 %v5331, %v5369
    %v5373 = vadd.f32 %v5335, %v5369
    %v5374 = vadd.f32 %v5337, %v5369
    %v5375 = vadd.f32 %v5341, %v5369
    %v5376 = vadd.f32 %v5343, %v5369
    %v5377 = vadd.f32 %v5347, %v5369
    %v5378 = vadd.f32 %v5349, %v5369
    %5387 = vrot.lane.b32.xlu0 %v5371, 32
    %v5388 = vpop.permute.xlu0 %5387
    %5389 = vrot.lane.b32.xlu0 %v5372, 32
    %v5390 = vpop.permute.xlu0 %5389
    %5391 = vrot.lane.b32.xlu0 %v5373, 32
    %v5392 = vpop.permute.xlu0 %5391
    %5393 = vrot.lane.b32.xlu0 %v5374, 32
    %v5394 = vpop.permute.xlu0 %5393
    %5395 = vrot.lane.b32.xlu0 %v5375, 32
    %v5396 = vpop.permute.xlu0 %5395
    %5397 = vrot.lane.b32.xlu0 %v5376, 32
    %v5398 = vpop.permute.xlu0 %5397
    %5399 = vrot.lane.b32.xlu0 %v5377, 32
    %v5400 = vpop.permute.xlu0 %5399
    %5401 = vrot.lane.b32.xlu0 %v5378, 32
    %v5402 = vpop.permute.xlu0 %5401
    %v5403 = vsel %vm115, %v5388, %v5390
    %v5404 = vsel %vm115, %v5392, %v5394
    %v5405 = vsel %vm115, %v5396, %v5398
    %v5406 = vsel %vm115, %v5400, %v5402
    %v5411 = vadd.f32 %v5358, %v5403
    %v5412 = vadd.f32 %v5359, %v5404
    %v5413 = vadd.f32 %v5360, %v5405
    %v5414 = vadd.f32 %v5361, %v5406
    %v5415 = vxor.u32 %v5411, 2147483648
    %v5416 = vxor.u32 %v5412, 2147483648
    %v5417 = vxor.u32 %v5413, 2147483648
    %v5418 = vxor.u32 %v5414, 2147483648
    %v5419 = vmul.f32 %v5415, 1.442695
    %v5420 = vpow.pop %v5419
    %v5421 = vmul.f32 %v5416, 1.442695
    %v5422 = vpow.pop %v5421
    %v5423 = vmul.f32 %v5417, 1.442695
    %v5424 = vpow.pop %v5423
    %v5425 = vmul.f32 %v5418, 1.442695
    %v5426 = vpow.pop %v5425
    %v5427 = vadd.f32 %v5420, 1.0
    %v5428 = vadd.f32 %v5422, 1.0
    %v5429 = vadd.f32 %v5424, 1.0
    %v5430 = vadd.f32 %v5426, 1.0
    %v5431 = vrcp.pop %v5427
    %v5432 = vmul.f32 1.0, %v5431
    %v5433 = vrcp.pop %v5428
    %v5434 = vmul.f32 1.0, %v5433
    %v5435 = vrcp.pop %v5429
    %v5436 = vmul.f32 1.0, %v5435
    %v5437 = vrcp.pop %v5430
    %v5438 = vmul.f32 1.0, %v5437
    %5439 = vrot.lane.b32.xlu0 %v5372, 96
    %v5440 = vpop.permute.xlu0 %5439
    %5441 = vrot.lane.b32.xlu0 %v5374, 96
    %v5442 = vpop.permute.xlu0 %5441
    %5443 = vrot.lane.b32.xlu0 %v5376, 96
    %v5444 = vpop.permute.xlu0 %5443
    %5445 = vrot.lane.b32.xlu0 %v5378, 96
    %v5446 = vpop.permute.xlu0 %5445
    %v5451 = vmul.f32 %v5432, %v5440
    %v5452 = vmul.f32 %v5434, %v5442
    %v5453 = vmul.f32 %v5436, %v5444
    %v5454 = vmul.f32 %v5438, %v5446
    %5459 = vrot.lane.b32.xlu0 %v5451, 64
    %v5460 = vpop.permute.xlu0 %5459
    %5461 = vrot.lane.b32.xlu0 %v5452, 64
    %v5462 = vpop.permute.xlu0 %5461
    %5463 = vrot.lane.b32.xlu0 %v5453, 64
    %v5464 = vpop.permute.xlu0 %5463
    %5465 = vrot.lane.b32.xlu0 %v5454, 64
    %v5466 = vpop.permute.xlu0 %5465
    %v5471 = vadd.f32 %v5358, %v5460
    %v5472 = vadd.f32 %v5359, %v5462
    %v5473 = vadd.f32 %v5360, %v5464
    %v5474 = vadd.f32 %v5361, %v5466
    %v5475 = vtanh.pop %v5471
    %v5476 = vtanh.pop %v5472
    %v5477 = vtanh.pop %v5473
    %v5478 = vtanh.pop %v5474
    %v5479 = vsub.f32 1.0, %v5432
    %v5480 = vsub.f32 1.0, %v5434
    %v5481 = vsub.f32 1.0, %v5436
    %v5482 = vsub.f32 1.0, %v5438
    %5487 = vrot.lane.b32.xlu0 %v5475, 96
    %v5488 = vpop.permute.xlu0 %5487
    %5489 = vrot.lane.b32.xlu0 %v5476, 96
    %v5490 = vpop.permute.xlu0 %5489
    %5491 = vrot.lane.b32.xlu0 %v5477, 96
    %v5492 = vpop.permute.xlu0 %5491
    %5493 = vrot.lane.b32.xlu0 %v5478, 96
    %v5494 = vpop.permute.xlu0 %5493
    %v5499 = vmul.f32 %v5479, %v5488
    %v5500 = vmul.f32 %v5480, %v5490
    %v5501 = vmul.f32 %v5481, %v5492
    %v5502 = vmul.f32 %v5482, %v5494
    %v5503 = vmul.f32 %v5432, %v4884
    %v5504 = vmul.f32 %v5434, %v4885
    %v5505 = vmul.f32 %v5436, %v4886
    %v5506 = vmul.f32 %v5438, %v4887
    %v5507 = vadd.f32 %v5499, %v5503
    %v5508 = vadd.f32 %v5500, %v5504
    %v5509 = vadd.f32 %v5501, %v5505
    %v5510 = vadd.f32 %v5502, %v5506
    %v5511 = vld [vmem:[#allocation11 + $0x2] sm:$0x1]
    %v5512 = vld [vmem:[#allocation11 + $0x3] sm:$0x1]
    %v5514 = vlaneseq
    %v5515 = vshrl.u32 %v5514, 7
    %v5516 = vsub.s32 0, %v5515
    %v5517 = vrot.slane %v5511, %v5516
    %5518 = vrot.lane.b32.xlu0 %v5517, 32
    %v5519 = vpop.permute.xlu0 %5518
    %v5521 = vmul.f32 %v4048, %v5519
    %v5523 = vlaneseq
    %v5524 = vshrl.u32 %v5523, 7
    %v5525 = vsub.s32 0, %v5524
    %v5526 = vrot.slane %v5512, %v5525
    %5527 = vrot.lane.b32.xlu0 %v5526, 32
    %v5528 = vpop.permute.xlu0 %5527
    %v5530 = vadd.f32 %v5521, %v5528
    %v5531 = vld [vmem:[#allocation11 + $0x4] sm:$0x1]
    %v5532 = vld [vmem:[#allocation11 + $0x5] sm:$0x1]
    %5537 = vrot.lane.b32.xlu0 %v5507, 96
    %v5538 = vpop.permute.xlu0 %5537
    %5539 = vrot.lane.b32.xlu0 %v5508, 96
    %v5540 = vpop.permute.xlu0 %5539
    %5541 = vrot.lane.b32.xlu0 %v5509, 96
    %v5542 = vpop.permute.xlu0 %5541
    %5543 = vrot.lane.b32.xlu0 %v5510, 96
    %v5544 = vpop.permute.xlu0 %5543
    %v5549 = vsel %vm115, %v5538, 0.0
    %5550 = vadd.xlane.f32.xlu0 %v5549
    %v5551 = vpop.xlane.xlu0 %5550
    %v5552 = vsel %vm115, %v5540, 0.0
    %5553 = vadd.xlane.f32.xlu0 %v5552
    %v5554 = vpop.xlane.xlu0 %5553
    %v5555 = vsel %vm115, %v5542, 0.0
    %5556 = vadd.xlane.f32.xlu0 %v5555
    %v5557 = vpop.xlane.xlu0 %5556
    %v5558 = vsel %vm115, %v5544, 0.0
    %5559 = vadd.xlane.f32.xlu0 %v5558
    %v5560 = vpop.xlane.xlu0 %5559
    %v5561 = vmul.f32 %v5551, %v128
    %v5562 = vmul.f32 %v5554, %v128
    %v5563 = vmul.f32 %v5557, %v128
    %v5564 = vmul.f32 %v5560, %v128
    %v5565 = vsub.f32 %v5507, %v5561
    %v5566 = vsub.f32 %v5508, %v5562
    %v5567 = vsub.f32 %v5509, %v5563
    %v5568 = vsub.f32 %v5510, %v5564
    %v5569 = vmul.f32 %v5565, %v5565
    %v5570 = vmul.f32 %v5566, %v5566
    %v5571 = vmul.f32 %v5567, %v5567
    %v5572 = vmul.f32 %v5568, %v5568
    %5577 = vrot.lane.b32.xlu0 %v5569, 96
    %v5578 = vpop.permute.xlu0 %5577
    %5579 = vrot.lane.b32.xlu0 %v5570, 96
    %v5580 = vpop.permute.xlu0 %5579
    %5581 = vrot.lane.b32.xlu0 %v5571, 96
    %v5582 = vpop.permute.xlu0 %5581
    %5583 = vrot.lane.b32.xlu0 %v5572, 96
    %v5584 = vpop.permute.xlu0 %5583
    %v5589 = vsel %vm115, %v5578, 0.0
    %5590 = vadd.xlane.f32.xlu0 %v5589
    %v5591 = vpop.xlane.xlu0 %5590
    %v5592 = vsel %vm115, %v5580, 0.0
    %5593 = vadd.xlane.f32.xlu0 %v5592
    %v5594 = vpop.xlane.xlu0 %5593
    %v5595 = vsel %vm115, %v5582, 0.0
    %5596 = vadd.xlane.f32.xlu0 %v5595
    %v5597 = vpop.xlane.xlu0 %5596
    %v5598 = vsel %vm115, %v5584, 0.0
    %5599 = vadd.xlane.f32.xlu0 %v5598
    %v5600 = vpop.xlane.xlu0 %5599
    %v5601 = vmul.f32 %v5591, %v128
    %v5602 = vmul.f32 %v5594, %v128
    %v5603 = vmul.f32 %v5597, %v128
    %v5604 = vmul.f32 %v5600, %v128
    %v5605 = vadd.f32 %v5601, 1e-05
    %v5606 = vadd.f32 %v5602, 1e-05
    %v5607 = vadd.f32 %v5603, 1e-05
    %v5608 = vadd.f32 %v5604, 1e-05
    %v5609 = vrsqrt.pop %v5605
    %v5610 = vrsqrt.pop %v5606
    %v5611 = vrsqrt.pop %v5607
    %v5612 = vrsqrt.pop %v5608
    %v5613 = vmul.f32 %v5565, %v5609
    %v5614 = vmul.f32 %v5566, %v5610
    %v5615 = vmul.f32 %v5567, %v5611
    %v5616 = vmul.f32 %v5568, %v5612
    %v5618 = vlaneseq
    %v5619 = vshrl.u32 %v5618, 7
    %v5620 = vsub.s32 0, %v5619
    %v5621 = vrot.slane %v5531, %v5620
    %5622 = vrot.lane.b32.xlu0 %v5621, 32
    %v5623 = vpop.permute.xlu0 %5622
    %v5625 = vmul.f32 %v5613, %v5623
    %v5626 = vmul.f32 %v5614, %v5623
    %v5627 = vmul.f32 %v5615, %v5623
    %v5628 = vmul.f32 %v5616, %v5623
    %v5630 = vlaneseq
    %v5631 = vshrl.u32 %v5630, 7
    %v5632 = vsub.s32 0, %v5631
    %v5633 = vrot.slane %v5532, %v5632
    %5634 = vrot.lane.b32.xlu0 %v5633, 32
    %v5635 = vpop.permute.xlu0 %5634
    %v5637 = vadd.f32 %v5625, %v5635
    %v5638 = vadd.f32 %v5626, %v5635
    %v5639 = vadd.f32 %v5627, %v5635
    %v5640 = vadd.f32 %v5628, %v5635
    %v5641 = vld [vmem:[#allocation7] sm:$0xff]
    %v5642 = vld [vmem:[#allocation7 + $0x20] sm:$0xff]
    %v5643 = vld [vmem:[#allocation7 + $0x40] sm:$0xff]
    %v5644 = vld [vmem:[#allocation7 + $0x60] sm:$0xff]
    %v5645 = vld [vmem:[#allocation11 + $0x6] sm:$0x1]
    %v5647 = vlaneseq
    %v5648 = vshrl.u32 %v5647, 7
    %v5649 = vsub.s32 0, %v5648
    %v5650 = vrot.slane %v5645, %v5649
    %5657 = vrot.lane.b32.xlu0 %v5530, 96
    %v5658 = vpop.permute.xlu0 %5657
    %5659 = vrot.lane.b32.xlu0 %v5637, 96
    %v5660 = vpop.permute.xlu0 %5659
    %5661 = vrot.lane.b32.xlu0 %v5638, 96
    %v5662 = vpop.permute.xlu0 %5661
    %5663 = vrot.lane.b32.xlu0 %v5639, 96
    %v5664 = vpop.permute.xlu0 %5663
    %5665 = vrot.lane.b32.xlu0 %v5640, 96
    %v5666 = vpop.permute.xlu0 %5665
    %v5667 = vsel %vm115, %v5658, 0
    %v5669 = vsel %vm115, %v5660, 0
    %v5671 = vsel %vm115, %v5662, 0
    %v5673 = vsel %vm115, %v5664, 0
    %v5675 = vsel %vm115, %v5666, 0
    %5677 = vmatprep.subr.mxu0 0.0
    %5678 = vmatpush1.msra.mxu0 %v5641
    %5679 = vmatprep.subr.mxu0 0.0
    %5680 = vmatpush1.msra.mxu0 %v5642
    %5681 = vmatprep.subr.mxu0 0.0
    %5682 = vmatpush1.msra.mxu0 %v5643
    %5683 = vmatprep.subr.mxu0 0.0
    %5684 = vmatpush1.msra.mxu0 %v5644
    %5685 = vmatprep.subr.mxu0 0.0
    %5686 = vmatpush1.msra.mxu0 0.0
    %5687 = vmatprep.subr.mxu0 0.0
    %5688 = vmatpush1.msra.mxu0 0.0
    %5689 = vmatprep.subr.mxu0 0.0
    %5690 = vmatpush1.msra.mxu0 0.0
    %5691 = vmatprep.subr.mxu0 0.0
    %5692 = vmatpush1.msra.mxu0 0.0
    %5693 = vmatprep.subr.mxu0 0.0
    %5694 = vmatpush1.msra.mxu0 0.0
    %5695 = vmatprep.subr.mxu0 0.0
    %5696 = vmatpush1.msra.mxu0 0.0
    %5697 = vmatprep.subr.mxu0 0.0
    %5698 = vmatpush1.msra.mxu0 0.0
    %5699 = vmatprep.subr.mxu0 0.0
    %5700 = vmatpush1.msra.mxu0 0.0
    %5701 = vmatprep.subr.mxu0 0.0
    %5702 = vmatpush1.msra.mxu0 0.0
    %5703 = vmatprep.subr.mxu0 0.0
    %5704 = vmatpush1.msra.mxu0 0.0
    %5705 = vmatprep.subr.mxu0 0.0
    %5706 = vmatpush1.msra.mxu0 0.0
    %5707 = vmatprep.subr.mxu0 0.0
    %5708 = vmatpush1.msra.mxu0 0.0
    %5709 = vmatprep.subr.mxu0 0.0
    %5710 = vmatpush1.msra.mxu0 0.0
    %5711 = vmatprep.subr.mxu0 0.0
    %5712 = vmatpush1.msra.mxu0 0.0
    %5713 = vmatprep.subr.mxu0 0.0
    %5714 = vmatpush1.msra.mxu0 0.0
    %5715 = vmatprep.subr.mxu0 0.0
    %5716 = vmatpush1.msra.mxu0 0.0
    %5717 = vmatprep.subr.mxu0 0.0
    %5718 = vmatpush1.msra.mxu0 0.0
    %5719 = vmatprep.subr.mxu0 0.0
    %5720 = vmatpush1.msra.mxu0 0.0
    %5721 = vmatprep.subr.mxu0 0.0
    %5722 = vmatpush1.msra.mxu0 0.0
    %5723 = vmatprep.subr.mxu0 0.0
    %5724 = vmatpush1.msra.mxu0 0.0
    %5725 = vmatprep.subr.mxu0 0.0
    %5726 = vmatpush1.msra.mxu0 0.0
    %5727 = vmatprep.subr.mxu0 0.0
    %5728 = vmatpush1.msra.mxu0 0.0
    %5729 = vmatprep.subr.mxu0 0.0
    %5730 = vmatpush1.msra.mxu0 0.0
    %5731 = vmatprep.subr.mxu0 0.0
    %5732 = vmatpush1.msra.mxu0 0.0
    %5733 = vmatprep.subr.mxu0 0.0
    %5734 = vmatpush1.msra.mxu0 0.0
    %5735 = vmatprep.subr.mxu0 0.0
    %5736 = vmatpush1.msra.mxu0 0.0
    %5737 = vmatprep.subr.mxu0 0.0
    %5738 = vmatpush1.msra.mxu0 0.0
    %5739 = vmatprep.subr.mxu0 0.0
    %5740 = vmatpush1.msra.mxu0 0.0
    %5741 = vmatprep.mubr.f32.mxu0 0.0
    %5742 = vmatmul.mubr.f32.gmra.mrb[0].mxu0 %v5667
    %v5743 = vpop.f32.mrb[0].mxu0
    %v5744 = vadd.f32 %v5650, %v5743
    %v5745 = vpop.f32.mrb[0].mxu0
    %5746 = vmatprep.mubr.f32.mxu0 0.0
    %5747 = vmatmul.mubr.f32.gmra.mrb[0].mxu0 %v5669
    %v5748 = vpop.f32.mrb[0].mxu0
    %v5749 = vadd.f32 %v5650, %v5748
    %v5750 = vpop.f32.mrb[0].mxu0
    %5751 = vmatprep.mubr.f32.mxu0 0.0
    %5752 = vmatmul.mubr.f32.gmra.mrb[0].mxu0 %v5671
    %v5753 = vpop.f32.mrb[0].mxu0
    %v5754 = vadd.f32 %v5650, %v5753
    %v5755 = vpop.f32.mrb[0].mxu0
    %5756 = vmatprep.mubr.f32.mxu0 0.0
    %5757 = vmatmul.mubr.f32.gmra.mrb[0].mxu0 %v5673
    %v5758 = vpop.f32.mrb[0].mxu0
    %v5759 = vadd.f32 %v5650, %v5758
    %v5760 = vpop.f32.mrb[0].mxu0
    %5761 = vmatprep.mubr.f32.mxu0 0.0
    %5762 = vmatmul.mubr.f32.gmra.mrb[0].mxu0 %v5675
    %v5763 = vpop.f32.mrb[0].mxu0
    %v5764 = vadd.f32 %v5650, %v5763
    %v5765 = vpop.f32.mrb[0].mxu0
    %5766 = vdwg.mxu0
    %v5768 = vcombine.high %v5744, %v5744
    %5771 = vrot.lane.b32.xlu0 %v5749, 96
    %v5772 = vpop.permute.xlu0 %5771
    %5773 = vrot.lane.b32.xlu0 %v5754, 96
    %v5774 = vpop.permute.xlu0 %5773
    %v5775 = vsel %vm115, %v5744, 0
    %v5777 = vsel %vm115, %v5772, 0
    %v5779 = vsel %vm115, %v5774, 0
    %5781 = vmatprep.subr.mxu0 0.0
    %5782 = vmatpush1.xpose.msra.mxu0 %v5777
    %5783 = vmatprep.subr.mxu0 0.0
    %5784 = vmatpush1.xpose.msra.mxu0 %v5779
    %5785 = vmatprep.subr.mxu0 0.0
    %5786 = vmatpush1.xpose.msra.mxu0 0.0
    %5787 = vmatprep.subr.mxu0 0.0
    %5788 = vmatpush1.xpose.msra.mxu0 0.0
    %5789 = vmatprep.subr.mxu0 0.0
    %5790 = vmatpush1.xpose.msra.mxu0 0.0
    %5791 = vmatprep.subr.mxu0 0.0
    %5792 = vmatpush1.xpose.msra.mxu0 0.0
    %5793 = vmatprep.subr.mxu0 0.0
    %5794 = vmatpush1.xpose.msra.mxu0 0.0
    %5795 = vmatprep.subr.mxu0 0.0
    %5796 = vmatpush1.xpose.msra.mxu0 0.0
    %5797 = vmatprep.subr.mxu0 0.0
    %5798 = vmatpush1.xpose.msra.mxu0 0.0
    %5799 = vmatprep.subr.mxu0 0.0
    %5800 = vmatpush1.xpose.msra.mxu0 0.0
    %5801 = vmatprep.subr.mxu0 0.0
    %5802 = vmatpush1.xpose.msra.mxu0 0.0
    %5803 = vmatprep.subr.mxu0 0.0
    %5804 = vmatpush1.xpose.msra.mxu0 0.0
    %5805 = vmatprep.subr.mxu0 0.0
    %5806 = vmatpush1.xpose.msra.mxu0 0.0
    %5807 = vmatprep.subr.mxu0 0.0
    %5808 = vmatpush1.xpose.msra.mxu0 0.0
    %5809 = vmatprep.subr.mxu0 0.0
    %5810 = vmatpush1.xpose.msra.mxu0 0.0
    %5811 = vmatprep.subr.mxu0 0.0
    %5812 = vmatpush1.xpose.msra.mxu0 0.0
    %5813 = vmatprep.subr.mxu0 0.0
    %5814 = vmatpush1.xpose.msra.mxu0 0.0
    %5815 = vmatprep.subr.mxu0 0.0
    %5816 = vmatpush1.xpose.msra.mxu0 0.0
    %5817 = vmatprep.subr.mxu0 0.0
    %5818 = vmatpush1.xpose.msra.mxu0 0.0
    %5819 = vmatprep.subr.mxu0 0.0
    %5820 = vmatpush1.xpose.msra.mxu0 0.0
    %5821 = vmatprep.subr.mxu0 0.0
    %5822 = vmatpush1.xpose.msra.mxu0 0.0
    %5823 = vmatprep.subr.mxu0 0.0
    %5824 = vmatpush1.xpose.msra.mxu0 0.0
    %5825 = vmatprep.subr.mxu0 0.0
    %5826 = vmatpush1.xpose.msra.mxu0 0.0
    %5827 = vmatprep.subr.mxu0 0.0
    %5828 = vmatpush1.xpose.msra.mxu0 0.0
    %5829 = vmatprep.subr.mxu0 0.0
    %5830 = vmatpush1.xpose.msra.mxu0 0.0
    %5831 = vmatprep.subr.mxu0 0.0
    %5832 = vmatpush1.xpose.msra.mxu0 0.0
    %5833 = vmatprep.subr.mxu0 0.0
    %5834 = vmatpush1.xpose.msra.mxu0 0.0
    %5835 = vmatprep.subr.mxu0 0.0
    %5836 = vmatpush1.xpose.msra.mxu0 0.0
    %5837 = vmatprep.subr.mxu0 0.0
    %5838 = vmatpush1.xpose.msra.mxu0 0.0
    %5839 = vmatprep.subr.mxu0 0.0
    %5840 = vmatpush1.xpose.msra.mxu0 0.0
    %5841 = vmatprep.subr.mxu0 0.0
    %5842 = vmatpush1.xpose.msra.mxu0 0.0
    %5843 = vmatprep.subr.mxu0 0.0
    %5844 = vmatpush1.xpose.msra.mxu0 0.0
    %5845 = vmatprep.mubr.f32.mxu0 0.0
    %5846 = vmatmul.mubr.f32.gmra.mrb[0].mxu0 %v5775
    %v5847 = vpop.f32.mrb[0].mxu0
    %v5848 = vadd.f32 0.0, %v5847
    %v5849 = vpop.f32.mrb[0].mxu0
    %5850 = vdwg.mxu0
    %5853 = vrot.lane.b32.xlu0 %v5759, 96
    %v5854 = vpop.permute.xlu0 %5853
    %5855 = vrot.lane.b32.xlu0 %v5764, 96
    %v5856 = vpop.permute.xlu0 %5855
    %v5857 = vsel %vm115, %v5768, 0
    %v5859 = vsel %vm115, %v5854, 0
    %v5861 = vsel %vm115, %v5856, 0
    %5863 = vmatprep.subr.mxu0 0.0
    %5864 = vmatpush1.xpose.msra.mxu0 %v5859
    %5865 = vmatprep.subr.mxu0 0.0
    %5866 = vmatpush1.xpose.msra.mxu0 %v5861
    %5867 = vmatprep.subr.mxu0 0.0
    %5868 = vmatpush1.xpose.msra.mxu0 0.0
    %5869 = vmatprep.subr.mxu0 0.0
    %5870 = vmatpush1.xpose.msra.mxu0 0.0
    %5871 = vmatprep.subr.mxu0 0.0
    %5872 = vmatpush1.xpose.msra.mxu0 0.0
    %5873 = vmatprep.subr.mxu0 0.0
    %5874 = vmatpush1.xpose.msra.mxu0 0.0
    %5875 = vmatprep.subr.mxu0 0.0
    %5876 = vmatpush1.xpose.msra.mxu0 0.0
    %5877 = vmatprep.subr.mxu0 0.0
    %5878 = vmatpush1.xpose.msra.mxu0 0.0
    %5879 = vmatprep.subr.mxu0 0.0
    %5880 = vmatpush1.xpose.msra.mxu0 0.0
    %5881 = vmatprep.subr.mxu0 0.0
    %5882 = vmatpush1.xpose.msra.mxu0 0.0
    %5883 = vmatprep.subr.mxu0 0.0
    %5884 = vmatpush1.xpose.msra.mxu0 0.0
    %5885 = vmatprep.subr.mxu0 0.0
    %5886 = vmatpush1.xpose.msra.mxu0 0.0
    %5887 = vmatprep.subr.mxu0 0.0
    %5888 = vmatpush1.xpose.msra.mxu0 0.0
    %5889 = vmatprep.subr.mxu0 0.0
    %5890 = vmatpush1.xpose.msra.mxu0 0.0
    %5891 = vmatprep.subr.mxu0 0.0
    %5892 = vmatpush1.xpose.msra.mxu0 0.0
    %5893 = vmatprep.subr.mxu0 0.0
    %5894 = vmatpush1.xpose.msra.mxu0 0.0
    %5895 = vmatprep.subr.mxu0 0.0
    %5896 = vmatpush1.xpose.msra.mxu0 0.0
    %5897 = vmatprep.subr.mxu0 0.0
    %5898 = vmatpush1.xpose.msra.mxu0 0.0
    %5899 = vmatprep.subr.mxu0 0.0
    %5900 = vmatpush1.xpose.msra.mxu0 0.0
    %5901 = vmatprep.subr.mxu0 0.0
    %5902 = vmatpush1.xpose.msra.mxu0 0.0
    %5903 = vmatprep.subr.mxu0 0.0
    %5904 = vmatpush1.xpose.msra.mxu0 0.0
    %5905 = vmatprep.subr.mxu0 0.0
    %5906 = vmatpush1.xpose.msra.mxu0 0.0
    %5907 = vmatprep.subr.mxu0 0.0
    %5908 = vmatpush1.xpose.msra.mxu0 0.0
    %5909 = vmatprep.subr.mxu0 0.0
    %5910 = vmatpush1.xpose.msra.mxu0 0.0
    %5911 = vmatprep.subr.mxu0 0.0
    %5912 = vmatpush1.xpose.msra.mxu0 0.0
    %5913 = vmatprep.subr.mxu0 0.0
    %5914 = vmatpush1.xpose.msra.mxu0 0.0
    %5915 = vmatprep.subr.mxu0 0.0
    %5916 = vmatpush1.xpose.msra.mxu0 0.0
    %5917 = vmatprep.subr.mxu0 0.0
    %5918 = vmatpush1.xpose.msra.mxu0 0.0
    %5919 = vmatprep.subr.mxu0 0.0
    %5920 = vmatpush1.xpose.msra.mxu0 0.0
    %5921 = vmatprep.subr.mxu0 0.0
    %5922 = vmatpush1.xpose.msra.mxu0 0.0
    %5923 = vmatprep.subr.mxu0 0.0
    %5924 = vmatpush1.xpose.msra.mxu0 0.0
    %5925 = vmatprep.subr.mxu0 0.0
    %5926 = vmatpush1.xpose.msra.mxu0 0.0
    %5927 = vmatprep.mubr.f32.mxu0 0.0
    %5928 = vmatmul.mubr.f32.gmra.mrb[0].mxu0 %v5857
    %v5929 = vpop.f32.mrb[0].mxu0
    %v5930 = vadd.f32 0.0, %v5929
    %v5931 = vpop.f32.mrb[0].mxu0
    %5932 = vdwg.mxu0
    %v5933 = vsel %vm627, %v5848, -inf
    %v5934 = vrot.slane %v5933, 4
    %v5935 = vmax.f32 %v5933, %v5934
    %v5936 = vrot.slane %v5935, 2
    %v5937 = vmax.f32 %v5935, %v5936
    %v5938 = vrot.slane %v5937, 1
    %v5939 = vmax.f32 %v5937, %v5938
    %v5940 = vsel %vm627, %v5930, -inf
    %v5941 = vrot.slane %v5940, 4
    %v5942 = vmax.f32 %v5940, %v5941
    %v5943 = vrot.slane %v5942, 2
    %v5944 = vmax.f32 %v5942, %v5943
    %v5945 = vrot.slane %v5944, 1
    %v5946 = vmax.f32 %v5944, %v5945
    %v5947 = vsub.f32 %v5848, %v5939
    %v5948 = vsub.f32 %v5930, %v5946
    %v5949 = vmul.f32 %v5947, 1.442695
    %v5950 = vpow.pop %v5949
    %v5951 = vmul.f32 %v5948, 1.442695
    %v5952 = vpow.pop %v5951
    %v5953 = vsel %vm627, %v5950, 0.0
    %v5954 = vrot.slane %v5953, 4
    %v5955 = vadd.f32 %v5953, %v5954
    %v5956 = vrot.slane %v5955, 2
    %v5957 = vadd.f32 %v5955, %v5956
    %v5958 = vrot.slane %v5957, 1
    %v5959 = vadd.f32 %v5957, %v5958
    %v5960 = vsel %vm627, %v5952, 0.0
    %v5961 = vrot.slane %v5960, 4
    %v5962 = vadd.f32 %v5960, %v5961
    %v5963 = vrot.slane %v5962, 2
    %v5964 = vadd.f32 %v5962, %v5963
    %v5965 = vrot.slane %v5964, 1
    %v5966 = vadd.f32 %v5964, %v5965
    %v5967 = vrcp.pop %v5959
    %v5968 = vrcp.pop %v5966
    %v5969 = vmul.f32 %v5950, %v5967
    %v5970 = vmul.f32 %v5952, %v5968
    %v5971 = vadd.f32 %v5969, 1e-08
    %v5972 = vadd.f32 %v5970, 1e-08
    %v5973 = vsel %vm627, %v5971, 0.0
    %5974 = vadd.xlane.f32.xlu0 %v5973
    %v5975 = vpop.xlane.xlu0 %5974
    %v5976 = vsel %vm627, %v5972, 0.0
    %5977 = vadd.xlane.f32.xlu0 %v5976
    %v5978 = vpop.xlane.xlu0 %5977
    %v5979 = vrcp.pop %v5975
    %v5980 = vmul.f32 %v5971, %v5979
    %v5981 = vrcp.pop %v5978
    %v5982 = vmul.f32 %v5972, %v5981
    %5983 = vrot.lane.b32.xlu0 %v5749, 64
    %v5984 = vpop.permute.xlu0 %5983
    %5985 = vrot.lane.b32.xlu0 %v5754, 64
    %v5986 = vpop.permute.xlu0 %5985
    %v5990 = vsel %vm684, %v5980, 0
    %5992 = vmatprep.subr.mxu0 0.0
    %5993 = vmatpush1.msra.mxu0 %v5984
    %5994 = vmatprep.subr.mxu0 0.0
    %5995 = vmatpush1.msra.mxu0 %v5986
    %5996 = vmatprep.subr.mxu0 0.0
    %5997 = vmatpush1.msra.mxu0 0.0
    %5998 = vmatprep.subr.mxu0 0.0
    %5999 = vmatpush1.msra.mxu0 0.0
    %6000 = vmatprep.subr.mxu0 0.0
    %6001 = vmatpush1.msra.mxu0 0.0
    %6002 = vmatprep.subr.mxu0 0.0
    %6003 = vmatpush1.msra.mxu0 0.0
    %6004 = vmatprep.subr.mxu0 0.0
    %6005 = vmatpush1.msra.mxu0 0.0
    %6006 = vmatprep.subr.mxu0 0.0
    %6007 = vmatpush1.msra.mxu0 0.0
    %6008 = vmatprep.subr.mxu0 0.0
    %6009 = vmatpush1.msra.mxu0 0.0
    %6010 = vmatprep.subr.mxu0 0.0
    %6011 = vmatpush1.msra.mxu0 0.0
    %6012 = vmatprep.subr.mxu0 0.0
    %6013 = vmatpush1.msra.mxu0 0.0
    %6014 = vmatprep.subr.mxu0 0.0
    %6015 = vmatpush1.msra.mxu0 0.0
    %6016 = vmatprep.subr.mxu0 0.0
    %6017 = vmatpush1.msra.mxu0 0.0
    %6018 = vmatprep.subr.mxu0 0.0
    %6019 = vmatpush1.msra.mxu0 0.0
    %6020 = vmatprep.subr.mxu0 0.0
    %6021 = vmatpush1.msra.mxu0 0.0
    %6022 = vmatprep.subr.mxu0 0.0
    %6023 = vmatpush1.msra.mxu0 0.0
    %6024 = vmatprep.subr.mxu0 0.0
    %6025 = vmatpush1.msra.mxu0 0.0
    %6026 = vmatprep.subr.mxu0 0.0
    %6027 = vmatpush1.msra.mxu0 0.0
    %6028 = vmatprep.subr.mxu0 0.0
    %6029 = vmatpush1.msra.mxu0 0.0
    %6030 = vmatprep.subr.mxu0 0.0
    %6031 = vmatpush1.msra.mxu0 0.0
    %6032 = vmatprep.subr.mxu0 0.0
    %6033 = vmatpush1.msra.mxu0 0.0
    %6034 = vmatprep.subr.mxu0 0.0
    %6035 = vmatpush1.msra.mxu0 0.0
    %6036 = vmatprep.subr.mxu0 0.0
    %6037 = vmatpush1.msra.mxu0 0.0
    %6038 = vmatprep.subr.mxu0 0.0
    %6039 = vmatpush1.msra.mxu0 0.0
    %6040 = vmatprep.subr.mxu0 0.0
    %6041 = vmatpush1.msra.mxu0 0.0
    %6042 = vmatprep.subr.mxu0 0.0
    %6043 = vmatpush1.msra.mxu0 0.0
    %6044 = vmatprep.subr.mxu0 0.0
    %6045 = vmatpush1.msra.mxu0 0.0
    %6046 = vmatprep.subr.mxu0 0.0
    %6047 = vmatpush1.msra.mxu0 0.0
    %6048 = vmatprep.subr.mxu0 0.0
    %6049 = vmatpush1.msra.mxu0 0.0
    %6050 = vmatprep.subr.mxu0 0.0
    %6051 = vmatpush1.msra.mxu0 0.0
    %6052 = vmatprep.subr.mxu0 0.0
    %6053 = vmatpush1.msra.mxu0 0.0
    %6054 = vmatprep.subr.mxu0 0.0
    %6055 = vmatpush1.msra.mxu0 0.0
    %6056 = vmatprep.mubr.f32.mxu0 0.0
    %6057 = vmatmul.mubr.f32.gmra.mrb[0].mxu0 %v5990
    %v6058 = vpop.f32.mrb[0].mxu0
    %v6059 = vadd.f32 0.0, %v6058
    %v6060 = vpop.f32.mrb[0].mxu0
    %6061 = vdwg.mxu0
    %6062 = vrot.lane.b32.xlu0 %v5759, 64
    %v6063 = vpop.permute.xlu0 %6062
    %6064 = vrot.lane.b32.xlu0 %v5764, 64
    %v6065 = vpop.permute.xlu0 %6064
    %v6069 = vsel %vm684, %v5982, 0
    %6071 = vmatprep.subr.mxu0 0.0
    %6072 = vmatpush1.msra.mxu0 %v6063
    %6073 = vmatprep.subr.mxu0 0.0
    %6074 = vmatpush1.msra.mxu0 %v6065
    %6075 = vmatprep.subr.mxu0 0.0
    %6076 = vmatpush1.msra.mxu0 0.0
    %6077 = vmatprep.subr.mxu0 0.0
    %6078 = vmatpush1.msra.mxu0 0.0
    %6079 = vmatprep.subr.mxu0 0.0
    %6080 = vmatpush1.msra.mxu0 0.0
    %6081 = vmatprep.subr.mxu0 0.0
    %6082 = vmatpush1.msra.mxu0 0.0
    %6083 = vmatprep.subr.mxu0 0.0
    %6084 = vmatpush1.msra.mxu0 0.0
    %6085 = vmatprep.subr.mxu0 0.0
    %6086 = vmatpush1.msra.mxu0 0.0
    %6087 = vmatprep.subr.mxu0 0.0
    %6088 = vmatpush1.msra.mxu0 0.0
    %6089 = vmatprep.subr.mxu0 0.0
    %6090 = vmatpush1.msra.mxu0 0.0
    %6091 = vmatprep.subr.mxu0 0.0
    %6092 = vmatpush1.msra.mxu0 0.0
    %6093 = vmatprep.subr.mxu0 0.0
    %6094 = vmatpush1.msra.mxu0 0.0
    %6095 = vmatprep.subr.mxu0 0.0
    %6096 = vmatpush1.msra.mxu0 0.0
    %6097 = vmatprep.subr.mxu0 0.0
    %6098 = vmatpush1.msra.mxu0 0.0
    %6099 = vmatprep.subr.mxu0 0.0
    %6100 = vmatpush1.msra.mxu0 0.0
    %6101 = vmatprep.subr.mxu0 0.0
    %6102 = vmatpush1.msra.mxu0 0.0
    %6103 = vmatprep.subr.mxu0 0.0
    %6104 = vmatpush1.msra.mxu0 0.0
    %6105 = vmatprep.subr.mxu0 0.0
    %6106 = vmatpush1.msra.mxu0 0.0
    %6107 = vmatprep.subr.mxu0 0.0
    %6108 = vmatpush1.msra.mxu0 0.0
    %6109 = vmatprep.subr.mxu0 0.0
    %6110 = vmatpush1.msra.mxu0 0.0
    %6111 = vmatprep.subr.mxu0 0.0
    %6112 = vmatpush1.msra.mxu0 0.0
    %6113 = vmatprep.subr.mxu0 0.0
    %6114 = vmatpush1.msra.mxu0 0.0
    %6115 = vmatprep.subr.mxu0 0.0
    %6116 = vmatpush1.msra.mxu0 0.0
    %6117 = vmatprep.subr.mxu0 0.0
    %6118 = vmatpush1.msra.mxu0 0.0
    %6119 = vmatprep.subr.mxu0 0.0
    %6120 = vmatpush1.msra.mxu0 0.0
    %6121 = vmatprep.subr.mxu0 0.0
    %6122 = vmatpush1.msra.mxu0 0.0
    %6123 = vmatprep.subr.mxu0 0.0
    %6124 = vmatpush1.msra.mxu0 0.0
    %6125 = vmatprep.subr.mxu0 0.0
    %6126 = vmatpush1.msra.mxu0 0.0
    %6127 = vmatprep.subr.mxu0 0.0
    %6128 = vmatpush1.msra.mxu0 0.0
    %6129 = vmatprep.subr.mxu0 0.0
    %6130 = vmatpush1.msra.mxu0 0.0
    %6131 = vmatprep.subr.mxu0 0.0
    %6132 = vmatpush1.msra.mxu0 0.0
    %6133 = vmatprep.subr.mxu0 0.0
    %6134 = vmatpush1.msra.mxu0 0.0
    %6135 = vmatprep.mubr.f32.mxu0 0.0
    %6136 = vmatmul.mubr.f32.gmra.mrb[0].mxu0 %v6069
    %v6137 = vpop.f32.mrb[0].mxu0
    %v6138 = vadd.f32 0.0, %v6137
    %v6139 = vpop.f32.mrb[0].mxu0
    %6140 = vdwg.mxu0
    %v6143 = vcombine.low %v6059, %v6138
    %v6145 = vsel %vm115, %v6143, %v3999
    %v6146 = vld [vmem:[#allocation10] sm:$0xff]
    %v6147 = vld [vmem:[#allocation10 + $0x8] sm:$0xff]
    %v6148 = vld [vmem:[#allocation10 + $0x40] sm:$0xff]
    %v6149 = vld [vmem:[#allocation10 + $0x48] sm:$0xff]
    %v6150 = vld [vmem:[#allocation10 + $0x80] sm:$0xff]
    %v6151 = vld [vmem:[#allocation10 + $0x88] sm:$0xff]
    %v6152 = vld [vmem:[#allocation10 + $0xc0] sm:$0xff]
    %v6153 = vld [vmem:[#allocation10 + $0xc8] sm:$0xff]
    %v6154 = vld [vmem:[#allocation10 + $0x100] sm:$0xff]
    %v6155 = vld [vmem:[#allocation10 + $0x108] sm:$0xff]
    %v6156 = vld [vmem:[#allocation10 + $0x140] sm:$0xff]
    %v6157 = vld [vmem:[#allocation10 + $0x148] sm:$0xff]
    %v6158 = vld [vmem:[#allocation10 + $0x180] sm:$0xff]
    %v6159 = vld [vmem:[#allocation10 + $0x188] sm:$0xff]
    %v6160 = vld [vmem:[#allocation10 + $0x1c0] sm:$0xff]
    %v6161 = vld [vmem:[#allocation10 + $0x1c8] sm:$0xff]
    %v6163 = vsel %vm861, %v6145, 0
    %6165 = vmatprep.subr.mxu0 %v6147
    %6166 = vmatpush1.msra.mxu0 %v6146
    %6167 = vmatprep.subr.mxu0 %v6149
    %6168 = vmatpush1.msra.mxu0 %v6148
    %6169 = vmatprep.subr.mxu0 %v6151
    %6170 = vmatpush1.msra.mxu0 %v6150
    %6171 = vmatprep.subr.mxu0 %v6153
    %6172 = vmatpush1.msra.mxu0 %v6152
    %6173 = vmatprep.subr.mxu0 %v6155
    %6174 = vmatpush1.msra.mxu0 %v6154
    %6175 = vmatprep.subr.mxu0 %v6157
    %6176 = vmatpush1.msra.mxu0 %v6156
    %6177 = vmatprep.subr.mxu0 %v6159
    %6178 = vmatpush1.msra.mxu0 %v6158
    %6179 = vmatprep.subr.mxu0 %v6161
    %6180 = vmatpush1.msra.mxu0 %v6160
    %6181 = vmatprep.subr.mxu0 0.0
    %6182 = vmatpush1.msra.mxu0 0.0
    %6183 = vmatprep.subr.mxu0 0.0
    %6184 = vmatpush1.msra.mxu0 0.0
    %6185 = vmatprep.subr.mxu0 0.0
    %6186 = vmatpush1.msra.mxu0 0.0
    %6187 = vmatprep.subr.mxu0 0.0
    %6188 = vmatpush1.msra.mxu0 0.0
    %6189 = vmatprep.subr.mxu0 0.0
    %6190 = vmatpush1.msra.mxu0 0.0
    %6191 = vmatprep.subr.mxu0 0.0
    %6192 = vmatpush1.msra.mxu0 0.0
    %6193 = vmatprep.subr.mxu0 0.0
    %6194 = vmatpush1.msra.mxu0 0.0
    %6195 = vmatprep.subr.mxu0 0.0
    %6196 = vmatpush1.msra.mxu0 0.0
    %6197 = vmatprep.subr.mxu0 0.0
    %6198 = vmatpush1.msra.mxu0 0.0
    %6199 = vmatprep.subr.mxu0 0.0
    %6200 = vmatpush1.msra.mxu0 0.0
    %6201 = vmatprep.subr.mxu0 0.0
    %6202 = vmatpush1.msra.mxu0 0.0
    %6203 = vmatprep.subr.mxu0 0.0
    %6204 = vmatpush1.msra.mxu0 0.0
    %6205 = vmatprep.subr.mxu0 0.0
    %6206 = vmatpush1.msra.mxu0 0.0
    %6207 = vmatprep.subr.mxu0 0.0
    %6208 = vmatpush1.msra.mxu0 0.0
    %6209 = vmatprep.subr.mxu0 0.0
    %6210 = vmatpush1.msra.mxu0 0.0
    %6211 = vmatprep.subr.mxu0 0.0
    %6212 = vmatpush1.msra.mxu0 0.0
    %6213 = vmatprep.subr.mxu0 0.0
    %6214 = vmatpush1.msra.mxu0 0.0
    %6215 = vmatprep.subr.mxu0 0.0
    %6216 = vmatpush1.msra.mxu0 0.0
    %6217 = vmatprep.subr.mxu0 0.0
    %6218 = vmatpush1.msra.mxu0 0.0
    %6219 = vmatprep.subr.mxu0 0.0
    %6220 = vmatpush1.msra.mxu0 0.0
    %6221 = vmatprep.subr.mxu0 0.0
    %6222 = vmatpush1.msra.mxu0 0.0
    %6223 = vmatprep.subr.mxu0 0.0
    %6224 = vmatpush1.msra.mxu0 0.0
    %6225 = vmatprep.subr.mxu0 0.0
    %6226 = vmatpush1.msra.mxu0 0.0
    %6227 = vmatprep.subr.mxu0 0.0
    %6228 = vmatpush1.msra.mxu0 0.0
    %6229 = vmatprep.mubr.f32.mxu0 0.0
    %6230 = vmatmul.mubr.f32.gmra.mrb[0].mxu0 %v6163
    %v6231 = vpop.f32.mrb[0].mxu0
    %v6232 = vadd.f32 0.0, %v6231
    %v6233 = vpop.f32.mrb[0].mxu0
    %v6234 = vadd.f32 0.0, %v6233
    %6235 = vdwg.mxu0
    %v6236 = vld [vmem:[#allocation11 + $0x7] sm:$0x1]
    %v6238 = vlaneseq
    %v6239 = vshrl.u32 %v6238, 7
    %v6240 = vsub.s32 0, %v6239
    %v6241 = vrot.slane %v6236, %v6240
    %v6243 = vadd.f32 %v6232, %v6241
    %v6244 = vld [vmem:[#allocation11 + $0x8] sm:$0x1]
    %v6246 = vlaneseq
    %v6247 = vshrl.u32 %v6246, 7
    %v6248 = vsub.s32 0, %v6247
    %v6249 = vrot.slane %v6244, %v6248
    %6250 = vrot.lane.b32.xlu0 %v6249, 96
    %v6251 = vpop.permute.xlu0 %6250
    %v6253 = vadd.f32 %v6232, %v6251
    %v6254 = vadd.f32 %v6234, %v6251
    %6257 = vrot.lane.b32.xlu0 %v6253, 32
    %v6258 = vpop.permute.xlu0 %6257
    %6259 = vrot.lane.b32.xlu0 %v6254, 32
    %v6260 = vpop.permute.xlu0 %6259
    %v6261 = vsel %vm115, %v6258, %v6260
    %v6263 = vadd.f32 %v6243, %v6261
    %v6264 = vxor.u32 %v6263, 2147483648
    %v6265 = vmul.f32 %v6264, 1.442695
    %v6266 = vpow.pop %v6265
    %v6267 = vadd.f32 %v6266, 1.0
    %v6268 = vrcp.pop %v6267
    %v6269 = vmul.f32 1.0, %v6268
    %6270 = vrot.lane.b32.xlu0 %v6254, 96
    %v6271 = vpop.permute.xlu0 %6270
    %v6273 = vmul.f32 %v6269, %v6271
    %6275 = vrot.lane.b32.xlu0 %v6273, 64
    %v6276 = vpop.permute.xlu0 %6275
    %v6278 = vadd.f32 %v6243, %v6276
    %v6279 = vtanh.pop %v6278
    %v6280 = vsub.f32 1.0, %v6269
    %6282 = vrot.lane.b32.xlu0 %v6279, 96
    %v6283 = vpop.permute.xlu0 %6282
    %v6285 = vmul.f32 %v6280, %v6283
    %v6286 = vmul.f32 %v6269, %v3999
    %v6287 = vadd.f32 %v6285, %v6286
    %v6288 = vld [vmem:[#allocation11 + $0x9] sm:$0x1]
    %v6289 = vld [vmem:[#allocation11 + $0xa] sm:$0x1]
    %6291 = vrot.lane.b32.xlu0 %v6287, 96
    %v6292 = vpop.permute.xlu0 %6291
    %v6294 = vsel %vm115, %v6292, 0.0
    %6295 = vadd.xlane.f32.xlu0 %v6294
    %v6296 = vpop.xlane.xlu0 %6295
    %v6297 = vmul.f32 %v6296, %v128
    %v6298 = vsub.f32 %v6287, %v6297
    %v6299 = vmul.f32 %v6298, %v6298
    %6301 = vrot.lane.b32.xlu0 %v6299, 96
    %v6302 = vpop.permute.xlu0 %6301
    %v6304 = vsel %vm115, %v6302, 0.0
    %6305 = vadd.xlane.f32.xlu0 %v6304
    %v6306 = vpop.xlane.xlu0 %6305
    %v6307 = vmul.f32 %v6306, %v128
    %v6308 = vadd.f32 %v6307, 1e-05
    %v6309 = vrsqrt.pop %v6308
    %v6310 = vmul.f32 %v6298, %v6309
    %v6312 = vlaneseq
    %v6313 = vshrl.u32 %v6312, 7
    %v6314 = vsub.s32 0, %v6313
    %v6315 = vrot.slane %v6288, %v6314
    %6316 = vrot.lane.b32.xlu0 %v6315, 32
    %v6317 = vpop.permute.xlu0 %6316
    %v6319 = vmul.f32 %v6310, %v6317
    %v6321 = vlaneseq
    %v6322 = vshrl.u32 %v6321, 7
    %v6323 = vsub.s32 0, %v6322
    %v6324 = vrot.slane %v6289, %v6323
    %6325 = vrot.lane.b32.xlu0 %v6324, 32
    %v6326 = vpop.permute.xlu0 %6325
    %v6328 = vadd.f32 %v6319, %v6326
    %v6329 = vld [vmem:[#allocation7 + $0x8] sm:$0xff]
    %v6330 = vld [vmem:[#allocation7 + $0x28] sm:$0xff]
    %v6331 = vld [vmem:[#allocation7 + $0x48] sm:$0xff]
    %v6332 = vld [vmem:[#allocation7 + $0x68] sm:$0xff]
    %v6333 = vld [vmem:[#allocation11 + $0xb] sm:$0x1]
    %v6335 = vlaneseq
    %v6336 = vshrl.u32 %v6335, 7
    %v6337 = vsub.s32 0, %v6336
    %v6338 = vrot.slane %v6333, %v6337
    %6341 = vrot.lane.b32.xlu0 %v6328, 96
    %v6342 = vpop.permute.xlu0 %6341
    %v6343 = vsel %vm115, %v6342, 0
    %6345 = vmatprep.subr.mxu0 0.0
    %6346 = vmatpush1.msra.mxu0 %v6329
    %6347 = vmatprep.subr.mxu0 0.0
    %6348 = vmatpush1.msra.mxu0 %v6330
    %6349 = vmatprep.subr.mxu0 0.0
    %6350 = vmatpush1.msra.mxu0 %v6331
    %6351 = vmatprep.subr.mxu0 0.0
    %6352 = vmatpush1.msra.mxu0 %v6332
    %6353 = vmatprep.subr.mxu0 0.0
    %6354 = vmatpush1.msra.mxu0 0.0
    %6355 = vmatprep.subr.mxu0 0.0
    %6356 = vmatpush1.msra.mxu0 0.0
    %6357 = vmatprep.subr.mxu0 0.0
    %6358 = vmatpush1.msra.mxu0 0.0
    %6359 = vmatprep.subr.mxu0 0.0
    %6360 = vmatpush1.msra.mxu0 0.0
    %6361 = vmatprep.subr.mxu0 0.0
    %6362 = vmatpush1.msra.mxu0 0.0
    %6363 = vmatprep.subr.mxu0 0.0
    %6364 = vmatpush1.msra.mxu0 0.0
    %6365 = vmatprep.subr.mxu0 0.0
    %6366 = vmatpush1.msra.mxu0 0.0
    %6367 = vmatprep.subr.mxu0 0.0
    %6368 = vmatpush1.msra.mxu0 0.0
    %6369 = vmatprep.subr.mxu0 0.0
    %6370 = vmatpush1.msra.mxu0 0.0
    %6371 = vmatprep.subr.mxu0 0.0
    %6372 = vmatpush1.msra.mxu0 0.0
    %6373 = vmatprep.subr.mxu0 0.0
    %6374 = vmatpush1.msra.mxu0 0.0
    %6375 = vmatprep.subr.mxu0 0.0
    %6376 = vmatpush1.msra.mxu0 0.0
    %6377 = vmatprep.subr.mxu0 0.0
    %6378 = vmatpush1.msra.mxu0 0.0
    %6379 = vmatprep.subr.mxu0 0.0
    %6380 = vmatpush1.msra.mxu0 0.0
    %6381 = vmatprep.subr.mxu0 0.0
    %6382 = vmatpush1.msra.mxu0 0.0
    %6383 = vmatprep.subr.mxu0 0.0
    %6384 = vmatpush1.msra.mxu0 0.0
    %6385 = vmatprep.subr.mxu0 0.0
    %6386 = vmatpush1.msra.mxu0 0.0
    %6387 = vmatprep.subr.mxu0 0.0
    %6388 = vmatpush1.msra.mxu0 0.0
    %6389 = vmatprep.subr.mxu0 0.0
    %6390 = vmatpush1.msra.mxu0 0.0
    %6391 = vmatprep.subr.mxu0 0.0
    %6392 = vmatpush1.msra.mxu0 0.0
    %6393 = vmatprep.subr.mxu0 0.0
    %6394 = vmatpush1.msra.mxu0 0.0
    %6395 = vmatprep.subr.mxu0 0.0
    %6396 = vmatpush1.msra.mxu0 0.0
    %6397 = vmatprep.subr.mxu0 0.0
    %6398 = vmatpush1.msra.mxu0 0.0
    %6399 = vmatprep.subr.mxu0 0.0
    %6400 = vmatpush1.msra.mxu0 0.0
    %6401 = vmatprep.subr.mxu0 0.0
    %6402 = vmatpush1.msra.mxu0 0.0
    %6403 = vmatprep.subr.mxu0 0.0
    %6404 = vmatpush1.msra.mxu0 0.0
    %6405 = vmatprep.subr.mxu0 0.0
    %6406 = vmatpush1.msra.mxu0 0.0
    %6407 = vmatprep.subr.mxu0 0.0
    %6408 = vmatpush1.msra.mxu0 0.0
    %6409 = vmatprep.mubr.f32.mxu0 0.0
    %6410 = vmatmul.mubr.f32.gmra.mrb[0].mxu0 %v6343
    %v6411 = vpop.f32.mrb[0].mxu0
    %v6412 = vadd.f32 %v6338, %v6411
    %v6413 = vpop.f32.mrb[0].mxu0
    %6414 = vdwg.mxu0
    %v6415 = vmax.f32 %v6412, 0.0
    %v6416 = vld [vmem:[#allocation8] sm:$0xff]
    %v6417 = vld [vmem:[#allocation8 + $0x10] sm:$0xff]
    %v6418 = vld [vmem:[#allocation8 + $0x20] sm:$0xff]
    %v6419 = vld [vmem:[#allocation8 + $0x30] sm:$0xff]
    %v6420 = vld [vmem:[#allocation8 + $0x40] sm:$0xff]
    %v6421 = vld [vmem:[#allocation8 + $0x50] sm:$0xff]
    %v6422 = vld [vmem:[#allocation8 + $0x60] sm:$0xff]
    %v6423 = vld [vmem:[#allocation8 + $0x70] sm:$0xff]
    %v6424 = vld [vmem:[#allocation11 + $0xc] sm:$0x1]
    %v6426 = vlaneseq
    %v6427 = vshrl.u32 %v6426, 7
    %v6428 = vsub.s32 0, %v6427
    %v6429 = vrot.slane %v6424, %v6428
    %v6432 = vsel %vm861, %v6415, 0
    %6434 = vmatprep.subr.mxu0 0.0
    %6435 = vmatpush1.msra.mxu0 %v6416
    %6436 = vmatprep.subr.mxu0 0.0
    %6437 = vmatpush1.msra.mxu0 %v6417
    %6438 = vmatprep.subr.mxu0 0.0
    %6439 = vmatpush1.msra.mxu0 %v6418
    %6440 = vmatprep.subr.mxu0 0.0
    %6441 = vmatpush1.msra.mxu0 %v6419
    %6442 = vmatprep.subr.mxu0 0.0
    %6443 = vmatpush1.msra.mxu0 %v6420
    %6444 = vmatprep.subr.mxu0 0.0
    %6445 = vmatpush1.msra.mxu0 %v6421
    %6446 = vmatprep.subr.mxu0 0.0
    %6447 = vmatpush1.msra.mxu0 %v6422
    %6448 = vmatprep.subr.mxu0 0.0
    %6449 = vmatpush1.msra.mxu0 %v6423
    %6450 = vmatprep.subr.mxu0 0.0
    %6451 = vmatpush1.msra.mxu0 0.0
    %6452 = vmatprep.subr.mxu0 0.0
    %6453 = vmatpush1.msra.mxu0 0.0
    %6454 = vmatprep.subr.mxu0 0.0
    %6455 = vmatpush1.msra.mxu0 0.0
    %6456 = vmatprep.subr.mxu0 0.0
    %6457 = vmatpush1.msra.mxu0 0.0
    %6458 = vmatprep.subr.mxu0 0.0
    %6459 = vmatpush1.msra.mxu0 0.0
    %6460 = vmatprep.subr.mxu0 0.0
    %6461 = vmatpush1.msra.mxu0 0.0
    %6462 = vmatprep.subr.mxu0 0.0
    %6463 = vmatpush1.msra.mxu0 0.0
    %6464 = vmatprep.subr.mxu0 0.0
    %6465 = vmatpush1.msra.mxu0 0.0
    %6466 = vmatprep.subr.mxu0 0.0
    %6467 = vmatpush1.msra.mxu0 0.0
    %6468 = vmatprep.subr.mxu0 0.0
    %6469 = vmatpush1.msra.mxu0 0.0
    %6470 = vmatprep.subr.mxu0 0.0
    %6471 = vmatpush1.msra.mxu0 0.0
    %6472 = vmatprep.subr.mxu0 0.0
    %6473 = vmatpush1.msra.mxu0 0.0
    %6474 = vmatprep.subr.mxu0 0.0
    %6475 = vmatpush1.msra.mxu0 0.0
    %6476 = vmatprep.subr.mxu0 0.0
    %6477 = vmatpush1.msra.mxu0 0.0
    %6478 = vmatprep.subr.mxu0 0.0
    %6479 = vmatpush1.msra.mxu0 0.0
    %6480 = vmatprep.subr.mxu0 0.0
    %6481 = vmatpush1.msra.mxu0 0.0
    %6482 = vmatprep.subr.mxu0 0.0
    %6483 = vmatpush1.msra.mxu0 0.0
    %6484 = vmatprep.subr.mxu0 0.0
    %6485 = vmatpush1.msra.mxu0 0.0
    %6486 = vmatprep.subr.mxu0 0.0
    %6487 = vmatpush1.msra.mxu0 0.0
    %6488 = vmatprep.subr.mxu0 0.0
    %6489 = vmatpush1.msra.mxu0 0.0
    %6490 = vmatprep.subr.mxu0 0.0
    %6491 = vmatpush1.msra.mxu0 0.0
    %6492 = vmatprep.subr.mxu0 0.0
    %6493 = vmatpush1.msra.mxu0 0.0
    %6494 = vmatprep.subr.mxu0 0.0
    %6495 = vmatpush1.msra.mxu0 0.0
    %6496 = vmatprep.subr.mxu0 0.0
    %6497 = vmatpush1.msra.mxu0 0.0
    %6498 = vmatprep.mubr.f32.mxu0 0.0
    %6499 = vmatmul.mubr.f32.gmra.mrb[0].mxu0 %v6432
    %v6500 = vpop.f32.mrb[0].mxu0
    %v6501 = vadd.f32 %v6429, %v6500
    %v6502 = vpop.f32.mrb[0].mxu0
    %6503 = vdwg.mxu0
    %v6504 = vsel %vm115, %v6501, %v6287
    %v6505 = vld [vmem:[#allocation10 + $0x10] sm:$0xff]
    %v6506 = vld [vmem:[#allocation10 + $0x18] sm:$0xff]
    %v6507 = vld [vmem:[#allocation10 + $0x50] sm:$0xff]
    %v6508 = vld [vmem:[#allocation10 + $0x58] sm:$0xff]
    %v6509 = vld [vmem:[#allocation10 + $0x90] sm:$0xff]
    %v6510 = vld [vmem:[#allocation10 + $0x98] sm:$0xff]
    %v6511 = vld [vmem:[#allocation10 + $0xd0] sm:$0xff]
    %v6512 = vld [vmem:[#allocation10 + $0xd8] sm:$0xff]
    %v6513 = vld [vmem:[#allocation10 + $0x110] sm:$0xff]
    %v6514 = vld [vmem:[#allocation10 + $0x118] sm:$0xff]
    %v6515 = vld [vmem:[#allocation10 + $0x150] sm:$0xff]
    %v6516 = vld [vmem:[#allocation10 + $0x158] sm:$0xff]
    %v6517 = vld [vmem:[#allocation10 + $0x190] sm:$0xff]
    %v6518 = vld [vmem:[#allocation10 + $0x198] sm:$0xff]
    %v6519 = vld [vmem:[#allocation10 + $0x1d0] sm:$0xff]
    %v6520 = vld [vmem:[#allocation10 + $0x1d8] sm:$0xff]
    %v6522 = vsel %vm861, %v6504, 0
    %6524 = vmatprep.subr.mxu0 %v6506
    %6525 = vmatpush1.msra.mxu0 %v6505
    %6526 = vmatprep.subr.mxu0 %v6508
    %6527 = vmatpush1.msra.mxu0 %v6507
    %6528 = vmatprep.subr.mxu0 %v6510
    %6529 = vmatpush1.msra.mxu0 %v6509
    %6530 = vmatprep.subr.mxu0 %v6512
    %6531 = vmatpush1.msra.mxu0 %v6511
    %6532 = vmatprep.subr.mxu0 %v6514
    %6533 = vmatpush1.msra.mxu0 %v6513
    %6534 = vmatprep.subr.mxu0 %v6516
    %6535 = vmatpush1.msra.mxu0 %v6515
    %6536 = vmatprep.subr.mxu0 %v6518
    %6537 = vmatpush1.msra.mxu0 %v6517
    %6538 = vmatprep.subr.mxu0 %v6520
    %6539 = vmatpush1.msra.mxu0 %v6519
    %6540 = vmatprep.subr.mxu0 0.0
    %6541 = vmatpush1.msra.mxu0 0.0
    %6542 = vmatprep.subr.mxu0 0.0
    %6543 = vmatpush1.msra.mxu0 0.0
    %6544 = vmatprep.subr.mxu0 0.0
    %6545 = vmatpush1.msra.mxu0 0.0
    %6546 = vmatprep.subr.mxu0 0.0
    %6547 = vmatpush1.msra.mxu0 0.0
    %6548 = vmatprep.subr.mxu0 0.0
    %6549 = vmatpush1.msra.mxu0 0.0
    %6550 = vmatprep.subr.mxu0 0.0
    %6551 = vmatpush1.msra.mxu0 0.0
    %6552 = vmatprep.subr.mxu0 0.0
    %6553 = vmatpush1.msra.mxu0 0.0
    %6554 = vmatprep.subr.mxu0 0.0
    %6555 = vmatpush1.msra.mxu0 0.0
    %6556 = vmatprep.subr.mxu0 0.0
    %6557 = vmatpush1.msra.mxu0 0.0
    %6558 = vmatprep.subr.mxu0 0.0
    %6559 = vmatpush1.msra.mxu0 0.0
    %6560 = vmatprep.subr.mxu0 0.0
    %6561 = vmatpush1.msra.mxu0 0.0
    %6562 = vmatprep.subr.mxu0 0.0
    %6563 = vmatpush1.msra.mxu0 0.0
    %6564 = vmatprep.subr.mxu0 0.0
    %6565 = vmatpush1.msra.mxu0 0.0
    %6566 = vmatprep.subr.mxu0 0.0
    %6567 = vmatpush1.msra.mxu0 0.0
    %6568 = vmatprep.subr.mxu0 0.0
    %6569 = vmatpush1.msra.mxu0 0.0
    %6570 = vmatprep.subr.mxu0 0.0
    %6571 = vmatpush1.msra.mxu0 0.0
    %6572 = vmatprep.subr.mxu0 0.0
    %6573 = vmatpush1.msra.mxu0 0.0
    %6574 = vmatprep.subr.mxu0 0.0
    %6575 = vmatpush1.msra.mxu0 0.0
    %6576 = vmatprep.subr.mxu0 0.0
    %6577 = vmatpush1.msra.mxu0 0.0
    %6578 = vmatprep.subr.mxu0 0.0
    %6579 = vmatpush1.msra.mxu0 0.0
    %6580 = vmatprep.subr.mxu0 0.0
    %6581 = vmatpush1.msra.mxu0 0.0
    %6582 = vmatprep.subr.mxu0 0.0
    %6583 = vmatpush1.msra.mxu0 0.0
    %6584 = vmatprep.subr.mxu0 0.0
    %6585 = vmatpush1.msra.mxu0 0.0
    %6586 = vmatprep.subr.mxu0 0.0
    %6587 = vmatpush1.msra.mxu0 0.0
    %6588 = vmatprep.mubr.f32.mxu0 0.0
    %6589 = vmatmul.mubr.f32.gmra.mrb[0].mxu0 %v6522
    %v6590 = vpop.f32.mrb[0].mxu0
    %v6591 = vadd.f32 0.0, %v6590
    %v6592 = vpop.f32.mrb[0].mxu0
    %v6593 = vadd.f32 0.0, %v6592
    %6594 = vdwg.mxu0
    %v6595 = vld [vmem:[#allocation11 + $0xd] sm:$0x1]
    %v6597 = vlaneseq
    %v6598 = vshrl.u32 %v6597, 7
    %v6599 = vsub.s32 0, %v6598
    %v6600 = vrot.slane %v6595, %v6599
    %v6602 = vadd.f32 %v6591, %v6600
    %v6603 = vld [vmem:[#allocation11 + $0xe] sm:$0x1]
    %v6605 = vlaneseq
    %v6606 = vshrl.u32 %v6605, 7
    %v6607 = vsub.s32 0, %v6606
    %v6608 = vrot.slane %v6603, %v6607
    %6609 = vrot.lane.b32.xlu0 %v6608, 96
    %v6610 = vpop.permute.xlu0 %6609
    %v6612 = vadd.f32 %v6591, %v6610
    %v6613 = vadd.f32 %v6593, %v6610
    %6616 = vrot.lane.b32.xlu0 %v6612, 32
    %v6617 = vpop.permute.xlu0 %6616
    %6618 = vrot.lane.b32.xlu0 %v6613, 32
    %v6619 = vpop.permute.xlu0 %6618
    %v6620 = vsel %vm115, %v6617, %v6619
    %v6622 = vadd.f32 %v6602, %v6620
    %v6623 = vxor.u32 %v6622, 2147483648
    %v6624 = vmul.f32 %v6623, 1.442695
    %v6625 = vpow.pop %v6624
    %v6626 = vadd.f32 %v6625, 1.0
    %v6627 = vrcp.pop %v6626
    %v6628 = vmul.f32 1.0, %v6627
    %6629 = vrot.lane.b32.xlu0 %v6613, 96
    %v6630 = vpop.permute.xlu0 %6629
    %v6632 = vmul.f32 %v6628, %v6630
    %6634 = vrot.lane.b32.xlu0 %v6632, 64
    %v6635 = vpop.permute.xlu0 %6634
    %v6637 = vadd.f32 %v6602, %v6635
    %v6638 = vtanh.pop %v6637
    %v6639 = vsub.f32 1.0, %v6628
    %6641 = vrot.lane.b32.xlu0 %v6638, 96
    %v6642 = vpop.permute.xlu0 %6641
    %v6644 = vmul.f32 %v6639, %v6642
    %v6645 = vmul.f32 %v6628, %v6287
    %v6646 = vadd.f32 %v6644, %v6645
    %v6647 = vld [vmem:[#allocation11 + $0xf] sm:$0x1]
    %v6648 = vld [vmem:[#allocation11 + $0x10] sm:$0x1]
    %v6650 = vlaneseq
    %v6651 = vshrl.u32 %v6650, 7
    %v6652 = vsub.s32 0, %v6651
    %v6653 = vrot.slane %v6647, %v6652
    %6654 = vrot.lane.b32.xlu0 %v6653, 32
    %v6655 = vpop.permute.xlu0 %6654
    %v6657 = vmul.f32 %v5613, %v6655
    %v6658 = vmul.f32 %v5614, %v6655
    %v6659 = vmul.f32 %v5615, %v6655
    %v6660 = vmul.f32 %v5616, %v6655
    %v6662 = vlaneseq
    %v6663 = vshrl.u32 %v6662, 7
    %v6664 = vsub.s32 0, %v6663
    %v6665 = vrot.slane %v6648, %v6664
    %6666 = vrot.lane.b32.xlu0 %v6665, 32
    %v6667 = vpop.permute.xlu0 %6666
    %v6669 = vadd.f32 %v6657, %v6667
    %v6670 = vadd.f32 %v6658, %v6667
    %v6671 = vadd.f32 %v6659, %v6667
    %v6672 = vadd.f32 %v6660, %v6667
    %v6673 = vld [vmem:[#allocation11 + $0x11] sm:$0x1]
    %v6674 = vld [vmem:[#allocation11 + $0x12] sm:$0x1]
    %6676 = vrot.lane.b32.xlu0 %v6646, 96
    %v6677 = vpop.permute.xlu0 %6676
    %v6679 = vsel %vm115, %v6677, 0.0
    %6680 = vadd.xlane.f32.xlu0 %v6679
    %v6681 = vpop.xlane.xlu0 %6680
    %v6682 = vmul.f32 %v6681, %v128
    %v6683 = vsub.f32 %v6646, %v6682
    %v6684 = vmul.f32 %v6683, %v6683
    %6686 = vrot.lane.b32.xlu0 %v6684, 96
    %v6687 = vpop.permute.xlu0 %6686
    %v6689 = vsel %vm115, %v6687, 0.0
    %6690 = vadd.xlane.f32.xlu0 %v6689
    %v6691 = vpop.xlane.xlu0 %6690
    %v6692 = vmul.f32 %v6691, %v128
    %v6693 = vadd.f32 %v6692, 1e-05
    %v6694 = vrsqrt.pop %v6693
    %v6695 = vmul.f32 %v6683, %v6694
    %v6697 = vlaneseq
    %v6698 = vshrl.u32 %v6697, 7
    %v6699 = vsub.s32 0, %v6698
    %v6700 = vrot.slane %v6673, %v6699
    %6701 = vrot.lane.b32.xlu0 %v6700, 32
    %v6702 = vpop.permute.xlu0 %6701
    %v6704 = vmul.f32 %v6695, %v6702
    %v6706 = vlaneseq
    %v6707 = vshrl.u32 %v6706, 7
    %v6708 = vsub.s32 0, %v6707
    %v6709 = vrot.slane %v6674, %v6708
    %6710 = vrot.lane.b32.xlu0 %v6709, 32
    %v6711 = vpop.permute.xlu0 %6710
    %v6713 = vadd.f32 %v6704, %v6711
    %v6714 = vld [vmem:[#allocation7 + $0x10] sm:$0xff]
    %v6715 = vld [vmem:[#allocation7 + $0x30] sm:$0xff]
    %v6716 = vld [vmem:[#allocation7 + $0x50] sm:$0xff]
    %v6717 = vld [vmem:[#allocation7 + $0x70] sm:$0xff]
    %v6718 = vld [vmem:[#allocation11 + $0x13] sm:$0x1]
    %v6720 = vlaneseq
    %v6721 = vshrl.u32 %v6720, 7
    %v6722 = vsub.s32 0, %v6721
    %v6723 = vrot.slane %v6718, %v6722
    %6730 = vrot.lane.b32.xlu0 %v6669, 96
    %v6731 = vpop.permute.xlu0 %6730
    %6732 = vrot.lane.b32.xlu0 %v6670, 96
    %v6733 = vpop.permute.xlu0 %6732
    %6734 = vrot.lane.b32.xlu0 %v6671, 96
    %v6735 = vpop.permute.xlu0 %6734
    %6736 = vrot.lane.b32.xlu0 %v6672, 96
    %v6737 = vpop.permute.xlu0 %6736
    %6738 = vrot.lane.b32.xlu0 %v6713, 96
    %v6739 = vpop.permute.xlu0 %6738
    %v6740 = vsel %vm115, %v6731, 0
    %v6742 = vsel %vm115, %v6733, 0
    %v6744 = vsel %vm115, %v6735, 0
    %v6746 = vsel %vm115, %v6737, 0
    %v6748 = vsel %vm115, %v6739, 0
    %6750 = vmatprep.subr.mxu0 0.0
    %6751 = vmatpush1.msra.mxu0 %v6714
    %6752 = vmatprep.subr.mxu0 0.0
    %6753 = vmatpush1.msra.mxu0 %v6715
    %6754 = vmatprep.subr.mxu0 0.0
    %6755 = vmatpush1.msra.mxu0 %v6716
    %6756 = vmatprep.subr.mxu0 0.0
    %6757 = vmatpush1.msra.mxu0 %v6717
    %6758 = vmatprep.subr.mxu0 0.0
    %6759 = vmatpush1.msra.mxu0 0.0
    %6760 = vmatprep.subr.mxu0 0.0
    %6761 = vmatpush1.msra.mxu0 0.0
    %6762 = vmatprep.subr.mxu0 0.0
    %6763 = vmatpush1.msra.mxu0 0.0
    %6764 = vmatprep.subr.mxu0 0.0
    %6765 = vmatpush1.msra.mxu0 0.0
    %6766 = vmatprep.subr.mxu0 0.0
    %6767 = vmatpush1.msra.mxu0 0.0
    %6768 = vmatprep.subr.mxu0 0.0
    %6769 = vmatpush1.msra.mxu0 0.0
    %6770 = vmatprep.subr.mxu0 0.0
    %6771 = vmatpush1.msra.mxu0 0.0
    %6772 = vmatprep.subr.mxu0 0.0
    %6773 = vmatpush1.msra.mxu0 0.0
    %6774 = vmatprep.subr.mxu0 0.0
    %6775 = vmatpush1.msra.mxu0 0.0
    %6776 = vmatprep.subr.mxu0 0.0
    %6777 = vmatpush1.msra.mxu0 0.0
    %6778 = vmatprep.subr.mxu0 0.0
    %6779 = vmatpush1.msra.mxu0 0.0
    %6780 = vmatprep.subr.mxu0 0.0
    %6781 = vmatpush1.msra.mxu0 0.0
    %6782 = vmatprep.subr.mxu0 0.0
    %6783 = vmatpush1.msra.mxu0 0.0
    %6784 = vmatprep.subr.mxu0 0.0
    %6785 = vmatpush1.msra.mxu0 0.0
    %6786 = vmatprep.subr.mxu0 0.0
    %6787 = vmatpush1.msra.mxu0 0.0
    %6788 = vmatprep.subr.mxu0 0.0
    %6789 = vmatpush1.msra.mxu0 0.0
    %6790 = vmatprep.subr.mxu0 0.0
    %6791 = vmatpush1.msra.mxu0 0.0
    %6792 = vmatprep.subr.mxu0 0.0
    %6793 = vmatpush1.msra.mxu0 0.0
    %6794 = vmatprep.subr.mxu0 0.0
    %6795 = vmatpush1.msra.mxu0 0.0
    %6796 = vmatprep.subr.mxu0 0.0
    %6797 = vmatpush1.msra.mxu0 0.0
    %6798 = vmatprep.subr.mxu0 0.0
    %6799 = vmatpush1.msra.mxu0 0.0
    %6800 = vmatprep.subr.mxu0 0.0
    %6801 = vmatpush1.msra.mxu0 0.0
    %6802 = vmatprep.subr.mxu0 0.0
    %6803 = vmatpush1.msra.mxu0 0.0
    %6804 = vmatprep.subr.mxu0 0.0
    %6805 = vmatpush1.msra.mxu0 0.0
    %6806 = vmatprep.subr.mxu0 0.0
    %6807 = vmatpush1.msra.mxu0 0.0
    %6808 = vmatprep.subr.mxu0 0.0
    %6809 = vmatpush1.msra.mxu0 0.0
    %6810 = vmatprep.subr.mxu0 0.0
    %6811 = vmatpush1.msra.mxu0 0.0
    %6812 = vmatprep.subr.mxu0 0.0
    %6813 = vmatpush1.msra.mxu0 0.0
    %6814 = vmatprep.mubr.f32.mxu0 0.0
    %6815 = vmatmul.mubr.f32.gmra.mrb[0].mxu0 %v6740
    %v6816 = vpop.f32.mrb[0].mxu0
    %v6817 = vadd.f32 %v6723, %v6816
    %v6818 = vpop.f32.mrb[0].mxu0
    %6819 = vmatprep.mubr.f32.mxu0 0.0
    %6820 = vmatmul.mubr.f32.gmra.mrb[0].mxu0 %v6742
    %v6821 = vpop.f32.mrb[0].mxu0
    %v6822 = vadd.f32 %v6723, %v6821
    %v6823 = vpop.f32.mrb[0].mxu0
    %6824 = vmatprep.mubr.f32.mxu0 0.0
    %6825 = vmatmul.mubr.f32.gmra.mrb[0].mxu0 %v6744
    %v6826 = vpop.f32.mrb[0].mxu0
    %v6827 = vadd.f32 %v6723, %v6826
    %v6828 = vpop.f32.mrb[0].mxu0
    %6829 = vmatprep.mubr.f32.mxu0 0.0
    %6830 = vmatmul.mubr.f32.gmra.mrb[0].mxu0 %v6746
    %v6831 = vpop.f32.mrb[0].mxu0
    %v6832 = vadd.f32 %v6723, %v6831
    %v6833 = vpop.f32.mrb[0].mxu0
    %6834 = vmatprep.mubr.f32.mxu0 0.0
    %6835 = vmatmul.mubr.f32.gmra.mrb[0].mxu0 %v6748
    %v6836 = vpop.f32.mrb[0].mxu0
    %v6837 = vadd.f32 %v6723, %v6836
    %v6838 = vpop.f32.mrb[0].mxu0
    %6839 = vdwg.mxu0
    %v6841 = vcombine.high %v6837, %v6837
    %6842 = vrot.lane.b32.xlu0 %v6837, 96
    %v6843 = vpop.permute.xlu0 %6842
    %v6845 = vsel %vm115, %v6817, 0
    %v6848 = vsel %vm115, %v6822, 0
    %v6850 = vsel %vm115, %v6843, 0
    %6852 = vmatprep.subr.mxu0 0.0
    %6853 = vmatpush1.xpose.msra.mxu0 %v6850
    %6854 = vmatprep.subr.mxu0 0.0
    %6855 = vmatpush1.xpose.msra.mxu0 0.0
    %6856 = vmatprep.subr.mxu0 0.0
    %6857 = vmatpush1.xpose.msra.mxu0 0.0
    %6858 = vmatprep.subr.mxu0 0.0
    %6859 = vmatpush1.xpose.msra.mxu0 0.0
    %6860 = vmatprep.subr.mxu0 0.0
    %6861 = vmatpush1.xpose.msra.mxu0 0.0
    %6862 = vmatprep.subr.mxu0 0.0
    %6863 = vmatpush1.xpose.msra.mxu0 0.0
    %6864 = vmatprep.subr.mxu0 0.0
    %6865 = vmatpush1.xpose.msra.mxu0 0.0
    %6866 = vmatprep.subr.mxu0 0.0
    %6867 = vmatpush1.xpose.msra.mxu0 0.0
    %6868 = vmatprep.subr.mxu0 0.0
    %6869 = vmatpush1.xpose.msra.mxu0 0.0
    %6870 = vmatprep.subr.mxu0 0.0
    %6871 = vmatpush1.xpose.msra.mxu0 0.0
    %6872 = vmatprep.subr.mxu0 0.0
    %6873 = vmatpush1.xpose.msra.mxu0 0.0
    %6874 = vmatprep.subr.mxu0 0.0
    %6875 = vmatpush1.xpose.msra.mxu0 0.0
    %6876 = vmatprep.subr.mxu0 0.0
    %6877 = vmatpush1.xpose.msra.mxu0 0.0
    %6878 = vmatprep.subr.mxu0 0.0
    %6879 = vmatpush1.xpose.msra.mxu0 0.0
    %6880 = vmatprep.subr.mxu0 0.0
    %6881 = vmatpush1.xpose.msra.mxu0 0.0
    %6882 = vmatprep.subr.mxu0 0.0
    %6883 = vmatpush1.xpose.msra.mxu0 0.0
    %6884 = vmatprep.subr.mxu0 0.0
    %6885 = vmatpush1.xpose.msra.mxu0 0.0
    %6886 = vmatprep.subr.mxu0 0.0
    %6887 = vmatpush1.xpose.msra.mxu0 0.0
    %6888 = vmatprep.subr.mxu0 0.0
    %6889 = vmatpush1.xpose.msra.mxu0 0.0
    %6890 = vmatprep.subr.mxu0 0.0
    %6891 = vmatpush1.xpose.msra.mxu0 0.0
    %6892 = vmatprep.subr.mxu0 0.0
    %6893 = vmatpush1.xpose.msra.mxu0 0.0
    %6894 = vmatprep.subr.mxu0 0.0
    %6895 = vmatpush1.xpose.msra.mxu0 0.0
    %6896 = vmatprep.subr.mxu0 0.0
    %6897 = vmatpush1.xpose.msra.mxu0 0.0
    %6898 = vmatprep.subr.mxu0 0.0
    %6899 = vmatpush1.xpose.msra.mxu0 0.0
    %6900 = vmatprep.subr.mxu0 0.0
    %6901 = vmatpush1.xpose.msra.mxu0 0.0
    %6902 = vmatprep.subr.mxu0 0.0
    %6903 = vmatpush1.xpose.msra.mxu0 0.0
    %6904 = vmatprep.subr.mxu0 0.0
    %6905 = vmatpush1.xpose.msra.mxu0 0.0
    %6906 = vmatprep.subr.mxu0 0.0
    %6907 = vmatpush1.xpose.msra.mxu0 0.0
    %6908 = vmatprep.subr.mxu0 0.0
    %6909 = vmatpush1.xpose.msra.mxu0 0.0
    %6910 = vmatprep.subr.mxu0 0.0
    %6911 = vmatpush1.xpose.msra.mxu0 0.0
    %6912 = vmatprep.subr.mxu0 0.0
    %6913 = vmatpush1.xpose.msra.mxu0 0.0
    %6914 = vmatprep.subr.mxu0 0.0
    %6915 = vmatpush1.xpose.msra.mxu0 0.0
    %6916 = vmatprep.mubr.f32.mxu0 0.0
    %6917 = vmatmul.mubr.f32.gmra.mrb[0].mxu0 %v6845
    %v6918 = vpop.f32.mrb[0].mxu0
    %v6919 = vadd.f32 0.0, %v6918
    %v6920 = vpop.f32.mrb[0].mxu0
    %6921 = vmatprep.mubr.f32.mxu0 0.0
    %6922 = vmatmul.mubr.f32.gmra.mrb[0].mxu0 %v6848
    %v6923 = vpop.f32.mrb[0].mxu0
    %v6924 = vadd.f32 0.0, %v6923
    %v6925 = vpop.f32.mrb[0].mxu0
    %6926 = vdwg.mxu0
    %6927 = vrot.lane.b32.xlu0 %v6841, 96
    %v6928 = vpop.permute.xlu0 %6927
    %v6930 = vsel %vm115, %v6827, 0
    %v6933 = vsel %vm115, %v6832, 0
    %v6935 = vsel %vm115, %v6928, 0
    %6937 = vmatprep.subr.mxu0 0.0
    %6938 = vmatpush1.xpose.msra.mxu0 %v6935
    %6939 = vmatprep.subr.mxu0 0.0
    %6940 = vmatpush1.xpose.msra.mxu0 0.0
    %6941 = vmatprep.subr.mxu0 0.0
    %6942 = vmatpush1.xpose.msra.mxu0 0.0
    %6943 = vmatprep.subr.mxu0 0.0
    %6944 = vmatpush1.xpose.msra.mxu0 0.0
    %6945 = vmatprep.subr.mxu0 0.0
    %6946 = vmatpush1.xpose.msra.mxu0 0.0
    %6947 = vmatprep.subr.mxu0 0.0
    %6948 = vmatpush1.xpose.msra.mxu0 0.0
    %6949 = vmatprep.subr.mxu0 0.0
    %6950 = vmatpush1.xpose.msra.mxu0 0.0
    %6951 = vmatprep.subr.mxu0 0.0
    %6952 = vmatpush1.xpose.msra.mxu0 0.0
    %6953 = vmatprep.subr.mxu0 0.0
    %6954 = vmatpush1.xpose.msra.mxu0 0.0
    %6955 = vmatprep.subr.mxu0 0.0
    %6956 = vmatpush1.xpose.msra.mxu0 0.0
    %6957 = vmatprep.subr.mxu0 0.0
    %6958 = vmatpush1.xpose.msra.mxu0 0.0
    %6959 = vmatprep.subr.mxu0 0.0
    %6960 = vmatpush1.xpose.msra.mxu0 0.0
    %6961 = vmatprep.subr.mxu0 0.0
    %6962 = vmatpush1.xpose.msra.mxu0 0.0
    %6963 = vmatprep.subr.mxu0 0.0
    %6964 = vmatpush1.xpose.msra.mxu0 0.0
    %6965 = vmatprep.subr.mxu0 0.0
    %6966 = vmatpush1.xpose.msra.mxu0 0.0
    %6967 = vmatprep.subr.mxu0 0.0
    %6968 = vmatpush1.xpose.msra.mxu0 0.0
    %6969 = vmatprep.subr.mxu0 0.0
    %6970 = vmatpush1.xpose.msra.mxu0 0.0
    %6971 = vmatprep.subr.mxu0 0.0
    %6972 = vmatpush1.xpose.msra.mxu0 0.0
    %6973 = vmatprep.subr.mxu0 0.0
    %6974 = vmatpush1.xpose.msra.mxu0 0.0
    %6975 = vmatprep.subr.mxu0 0.0
    %6976 = vmatpush1.xpose.msra.mxu0 0.0
    %6977 = vmatprep.subr.mxu0 0.0
    %6978 = vmatpush1.xpose.msra.mxu0 0.0
    %6979 = vmatprep.subr.mxu0 0.0
    %6980 = vmatpush1.xpose.msra.mxu0 0.0
    %6981 = vmatprep.subr.mxu0 0.0
    %6982 = vmatpush1.xpose.msra.mxu0 0.0
    %6983 = vmatprep.subr.mxu0 0.0
    %6984 = vmatpush1.xpose.msra.mxu0 0.0
    %6985 = vmatprep.subr.mxu0 0.0
    %6986 = vmatpush1.xpose.msra.mxu0 0.0
    %6987 = vmatprep.subr.mxu0 0.0
    %6988 = vmatpush1.xpose.msra.mxu0 0.0
    %6989 = vmatprep.subr.mxu0 0.0
    %6990 = vmatpush1.xpose.msra.mxu0 0.0
    %6991 = vmatprep.subr.mxu0 0.0
    %6992 = vmatpush1.xpose.msra.mxu0 0.0
    %6993 = vmatprep.subr.mxu0 0.0
    %6994 = vmatpush1.xpose.msra.mxu0 0.0
    %6995 = vmatprep.subr.mxu0 0.0
    %6996 = vmatpush1.xpose.msra.mxu0 0.0
    %6997 = vmatprep.subr.mxu0 0.0
    %6998 = vmatpush1.xpose.msra.mxu0 0.0
    %6999 = vmatprep.subr.mxu0 0.0
    %7000 = vmatpush1.xpose.msra.mxu0 0.0
    %7001 = vmatprep.mubr.f32.mxu0 0.0
    %7002 = vmatmul.mubr.f32.gmra.mrb[0].mxu0 %v6930
    %v7003 = vpop.f32.mrb[0].mxu0
    %v7004 = vadd.f32 0.0, %v7003
    %v7005 = vpop.f32.mrb[0].mxu0
    %7006 = vmatprep.mubr.f32.mxu0 0.0
    %7007 = vmatmul.mubr.f32.gmra.mrb[0].mxu0 %v6933
    %v7008 = vpop.f32.mrb[0].mxu0
    %v7009 = vadd.f32 0.0, %v7008
    %v7010 = vpop.f32.mrb[0].mxu0
    %7011 = vdwg.mxu0
    %v7012 = vsel %vm1700, %v6919, -inf
    %7013 = vmax.xlane.f32.xlu0 %v7012
    %v7014 = vpop.xlane.xlu0 %7013
    %v7015 = vsel %vm1700, %v6924, -inf
    %7016 = vmax.xlane.f32.xlu0 %v7015
    %v7017 = vpop.xlane.xlu0 %7016
    %v7018 = vsel %vm1700, %v7004, -inf
    %7019 = vmax.xlane.f32.xlu0 %v7018
    %v7020 = vpop.xlane.xlu0 %7019
    %v7021 = vsel %vm1700, %v7009, -inf
    %7022 = vmax.xlane.f32.xlu0 %v7021
    %v7023 = vpop.xlane.xlu0 %7022
    %v7024 = vsub.f32 %v6919, %v7014
    %v7025 = vsub.f32 %v6924, %v7017
    %v7026 = vsub.f32 %v7004, %v7020
    %v7027 = vsub.f32 %v7009, %v7023
    %v7028 = vmul.f32 %v7024, 1.442695
    %v7029 = vpow.pop %v7028
    %v7030 = vmul.f32 %v7025, 1.442695
    %v7031 = vpow.pop %v7030
    %v7032 = vmul.f32 %v7026, 1.442695
    %v7033 = vpow.pop %v7032
    %v7034 = vmul.f32 %v7027, 1.442695
    %v7035 = vpow.pop %v7034
    %v7036 = vsel %vm1700, %v7029, 0.0
    %7037 = vadd.xlane.f32.xlu0 %v7036
    %v7038 = vpop.xlane.xlu0 %7037
    %v7039 = vsel %vm1700, %v7031, 0.0
    %7040 = vadd.xlane.f32.xlu0 %v7039
    %v7041 = vpop.xlane.xlu0 %7040
    %v7042 = vsel %vm1700, %v7033, 0.0
    %7043 = vadd.xlane.f32.xlu0 %v7042
    %v7044 = vpop.xlane.xlu0 %7043
    %v7045 = vsel %vm1700, %v7035, 0.0
    %7046 = vadd.xlane.f32.xlu0 %v7045
    %v7047 = vpop.xlane.xlu0 %7046
    %v7048 = vrcp.pop %v7038
    %v7049 = vrcp.pop %v7041
    %v7050 = vrcp.pop %v7044
    %v7051 = vrcp.pop %v7047
    %v7052 = vmul.f32 %v7029, %v7048
    %v7053 = vmul.f32 %v7031, %v7049
    %v7054 = vmul.f32 %v7033, %v7050
    %v7055 = vmul.f32 %v7035, %v7051
    %v7056 = vadd.f32 %v7052, 1e-08
    %v7057 = vadd.f32 %v7053, 1e-08
    %v7058 = vadd.f32 %v7054, 1e-08
    %v7059 = vadd.f32 %v7055, 1e-08
    %v7060 = vsel %vm1700, %v7056, 0.0
    %v7061 = vsel %vm1700, %v7057, 0.0
    %v7062 = vadd.f32 %v7060, %v7061
    %v7063 = vrot.slane %v7062, 4
    %v7064 = vadd.f32 %v7062, %v7063
    %v7065 = vrot.slane %v7064, 2
    %v7066 = vadd.f32 %v7064, %v7065
    %v7067 = vrot.slane %v7066, 1
    %v7068 = vadd.f32 %v7066, %v7067
    %v7069 = vsel %vm1700, %v7058, 0.0
    %v7070 = vsel %vm1700, %v7059, 0.0
    %v7071 = vadd.f32 %v7069, %v7070
    %v7072 = vrot.slane %v7071, 4
    %v7073 = vadd.f32 %v7071, %v7072
    %v7074 = vrot.slane %v7073, 2
    %v7075 = vadd.f32 %v7073, %v7074
    %v7076 = vrot.slane %v7075, 1
    %v7077 = vadd.f32 %v7075, %v7076
    %v7078 = vrcp.pop %v7068
    %v7079 = vmul.f32 %v7056, %v7078
    %v7080 = vmul.f32 %v7057, %v7078
    %v7081 = vrcp.pop %v7077
    %v7082 = vmul.f32 %v7058, %v7081
    %v7083 = vmul.f32 %v7059, %v7081
    %7084 = vrot.lane.b32.xlu0 %v6837, 64
    %v7085 = vpop.permute.xlu0 %7084
    %v7087 = vsel %vm1700, %v7079, 0
    %v7090 = vsel %vm1700, %v7080, 0
    %v7092 = vsel %vm1781, %v7085, 0
    %7094 = vmatprep.subr.mxu0 0.0
    %7095 = vmatpush1.msra.mxu0 %v7092
    %7096 = vmatprep.subr.mxu0 0.0
    %7097 = vmatpush1.msra.mxu0 0.0
    %7098 = vmatprep.subr.mxu0 0.0
    %7099 = vmatpush1.msra.mxu0 0.0
    %7100 = vmatprep.subr.mxu0 0.0
    %7101 = vmatpush1.msra.mxu0 0.0
    %7102 = vmatprep.subr.mxu0 0.0
    %7103 = vmatpush1.msra.mxu0 0.0
    %7104 = vmatprep.subr.mxu0 0.0
    %7105 = vmatpush1.msra.mxu0 0.0
    %7106 = vmatprep.subr.mxu0 0.0
    %7107 = vmatpush1.msra.mxu0 0.0
    %7108 = vmatprep.subr.mxu0 0.0
    %7109 = vmatpush1.msra.mxu0 0.0
    %7110 = vmatprep.subr.mxu0 0.0
    %7111 = vmatpush1.msra.mxu0 0.0
    %7112 = vmatprep.subr.mxu0 0.0
    %7113 = vmatpush1.msra.mxu0 0.0
    %7114 = vmatprep.subr.mxu0 0.0
    %7115 = vmatpush1.msra.mxu0 0.0
    %7116 = vmatprep.subr.mxu0 0.0
    %7117 = vmatpush1.msra.mxu0 0.0
    %7118 = vmatprep.subr.mxu0 0.0
    %7119 = vmatpush1.msra.mxu0 0.0
    %7120 = vmatprep.subr.mxu0 0.0
    %7121 = vmatpush1.msra.mxu0 0.0
    %7122 = vmatprep.subr.mxu0 0.0
    %7123 = vmatpush1.msra.mxu0 0.0
    %7124 = vmatprep.subr.mxu0 0.0
    %7125 = vmatpush1.msra.mxu0 0.0
    %7126 = vmatprep.subr.mxu0 0.0
    %7127 = vmatpush1.msra.mxu0 0.0
    %7128 = vmatprep.subr.mxu0 0.0
    %7129 = vmatpush1.msra.mxu0 0.0
    %7130 = vmatprep.subr.mxu0 0.0
    %7131 = vmatpush1.msra.mxu0 0.0
    %7132 = vmatprep.subr.mxu0 0.0
    %7133 = vmatpush1.msra.mxu0 0.0
    %7134 = vmatprep.subr.mxu0 0.0
    %7135 = vmatpush1.msra.mxu0 0.0
    %7136 = vmatprep.subr.mxu0 0.0
    %7137 = vmatpush1.msra.mxu0 0.0
    %7138 = vmatprep.subr.mxu0 0.0
    %7139 = vmatpush1.msra.mxu0 0.0
    %7140 = vmatprep.subr.mxu0 0.0
    %7141 = vmatpush1.msra.mxu0 0.0
    %7142 = vmatprep.subr.mxu0 0.0
    %7143 = vmatpush1.msra.mxu0 0.0
    %7144 = vmatprep.subr.mxu0 0.0
    %7145 = vmatpush1.msra.mxu0 0.0
    %7146 = vmatprep.subr.mxu0 0.0
    %7147 = vmatpush1.msra.mxu0 0.0
    %7148 = vmatprep.subr.mxu0 0.0
    %7149 = vmatpush1.msra.mxu0 0.0
    %7150 = vmatprep.subr.mxu0 0.0
    %7151 = vmatpush1.msra.mxu0 0.0
    %7152 = vmatprep.subr.mxu0 0.0
    %7153 = vmatpush1.msra.mxu0 0.0
    %7154 = vmatprep.subr.mxu0 0.0
    %7155 = vmatpush1.msra.mxu0 0.0
    %7156 = vmatprep.subr.mxu0 0.0
    %7157 = vmatpush1.msra.mxu0 0.0
    %7158 = vmatprep.mubr.f32.mxu0 0.0
    %7159 = vmatmul.mubr.f32.gmra.mrb[0].mxu0 %v7087
    %v7160 = vpop.f32.mrb[0].mxu0
    %v7161 = vadd.f32 0.0, %v7160
    %v7162 = vpop.f32.mrb[0].mxu0
    %7163 = vmatprep.mubr.f32.mxu0 0.0
    %7164 = vmatmul.mubr.f32.gmra.mrb[0].mxu0 %v7090
    %v7165 = vpop.f32.mrb[0].mxu0
    %v7166 = vadd.f32 0.0, %v7165
    %v7167 = vpop.f32.mrb[0].mxu0
    %7168 = vdwg.mxu0
    %7169 = vrot.lane.b32.xlu0 %v6841, 64
    %v7170 = vpop.permute.xlu0 %7169
    %v7172 = vsel %vm1700, %v7082, 0
    %v7175 = vsel %vm1700, %v7083, 0
    %v7177 = vsel %vm1781, %v7170, 0
    %7179 = vmatprep.subr.mxu0 0.0
    %7180 = vmatpush1.msra.mxu0 %v7177
    %7181 = vmatprep.subr.mxu0 0.0
    %7182 = vmatpush1.msra.mxu0 0.0
    %7183 = vmatprep.subr.mxu0 0.0
    %7184 = vmatpush1.msra.mxu0 0.0
    %7185 = vmatprep.subr.mxu0 0.0
    %7186 = vmatpush1.msra.mxu0 0.0
    %7187 = vmatprep.subr.mxu0 0.0
    %7188 = vmatpush1.msra.mxu0 0.0
    %7189 = vmatprep.subr.mxu0 0.0
    %7190 = vmatpush1.msra.mxu0 0.0
    %7191 = vmatprep.subr.mxu0 0.0
    %7192 = vmatpush1.msra.mxu0 0.0
    %7193 = vmatprep.subr.mxu0 0.0
    %7194 = vmatpush1.msra.mxu0 0.0
    %7195 = vmatprep.subr.mxu0 0.0
    %7196 = vmatpush1.msra.mxu0 0.0
    %7197 = vmatprep.subr.mxu0 0.0
    %7198 = vmatpush1.msra.mxu0 0.0
    %7199 = vmatprep.subr.mxu0 0.0
    %7200 = vmatpush1.msra.mxu0 0.0
    %7201 = vmatprep.subr.mxu0 0.0
    %7202 = vmatpush1.msra.mxu0 0.0
    %7203 = vmatprep.subr.mxu0 0.0
    %7204 = vmatpush1.msra.mxu0 0.0
    %7205 = vmatprep.subr.mxu0 0.0
    %7206 = vmatpush1.msra.mxu0 0.0
    %7207 = vmatprep.subr.mxu0 0.0
    %7208 = vmatpush1.msra.mxu0 0.0
    %7209 = vmatprep.subr.mxu0 0.0
    %7210 = vmatpush1.msra.mxu0 0.0
    %7211 = vmatprep.subr.mxu0 0.0
    %7212 = vmatpush1.msra.mxu0 0.0
    %7213 = vmatprep.subr.mxu0 0.0
    %7214 = vmatpush1.msra.mxu0 0.0
    %7215 = vmatprep.subr.mxu0 0.0
    %7216 = vmatpush1.msra.mxu0 0.0
    %7217 = vmatprep.subr.mxu0 0.0
    %7218 = vmatpush1.msra.mxu0 0.0
    %7219 = vmatprep.subr.mxu0 0.0
    %7220 = vmatpush1.msra.mxu0 0.0
    %7221 = vmatprep.subr.mxu0 0.0
    %7222 = vmatpush1.msra.mxu0 0.0
    %7223 = vmatprep.subr.mxu0 0.0
    %7224 = vmatpush1.msra.mxu0 0.0
    %7225 = vmatprep.subr.mxu0 0.0
    %7226 = vmatpush1.msra.mxu0 0.0
    %7227 = vmatprep.subr.mxu0 0.0
    %7228 = vmatpush1.msra.mxu0 0.0
    %7229 = vmatprep.subr.mxu0 0.0
    %7230 = vmatpush1.msra.mxu0 0.0
    %7231 = vmatprep.subr.mxu0 0.0
    %7232 = vmatpush1.msra.mxu0 0.0
    %7233 = vmatprep.subr.mxu0 0.0
    %7234 = vmatpush1.msra.mxu0 0.0
    %7235 = vmatprep.subr.mxu0 0.0
    %7236 = vmatpush1.msra.mxu0 0.0
    %7237 = vmatprep.subr.mxu0 0.0
    %7238 = vmatpush1.msra.mxu0 0.0
    %7239 = vmatprep.subr.mxu0 0.0
    %7240 = vmatpush1.msra.mxu0 0.0
    %7241 = vmatprep.subr.mxu0 0.0
    %7242 = vmatpush1.msra.mxu0 0.0
    %7243 = vmatprep.mubr.f32.mxu0 0.0
    %7244 = vmatmul.mubr.f32.gmra.mrb[0].mxu0 %v7172
    %v7245 = vpop.f32.mrb[0].mxu0
    %v7246 = vadd.f32 0.0, %v7245
    %v7247 = vpop.f32.mrb[0].mxu0
    %7248 = vmatprep.mubr.f32.mxu0 0.0
    %7249 = vmatmul.mubr.f32.gmra.mrb[0].mxu0 %v7175
    %v7250 = vpop.f32.mrb[0].mxu0
    %v7251 = vadd.f32 0.0, %v7250
    %v7252 = vpop.f32.mrb[0].mxu0
    %7253 = vdwg.mxu0
    %v7254 = vsel %vm115, %v7161, %v5507
    %v7255 = vsel %vm115, %v7166, %v5508
    %v7256 = vsel %vm115, %v7246, %v5509
    %v7257 = vsel %vm115, %v7251, %v5510
    %v7258 = vld [vmem:[#allocation10 + $0x20] sm:$0xff]
    %v7259 = vld [vmem:[#allocation10 + $0x28] sm:$0xff]
    %v7260 = vld [vmem:[#allocation10 + $0x60] sm:$0xff]
    %v7261 = vld [vmem:[#allocation10 + $0x68] sm:$0xff]
    %v7262 = vld [vmem:[#allocation10 + $0xa0] sm:$0xff]
    %v7263 = vld [vmem:[#allocation10 + $0xa8] sm:$0xff]
    %v7264 = vld [vmem:[#allocation10 + $0xe0] sm:$0xff]
    %v7265 = vld [vmem:[#allocation10 + $0xe8] sm:$0xff]
    %v7266 = vld [vmem:[#allocation10 + $0x120] sm:$0xff]
    %v7267 = vld [vmem:[#allocation10 + $0x128] sm:$0xff]
    %v7268 = vld [vmem:[#allocation10 + $0x160] sm:$0xff]
    %v7269 = vld [vmem:[#allocation10 + $0x168] sm:$0xff]
    %v7270 = vld [vmem:[#allocation10 + $0x1a0] sm:$0xff]
    %v7271 = vld [vmem:[#allocation10 + $0x1a8] sm:$0xff]
    %v7272 = vld [vmem:[#allocation10 + $0x1e0] sm:$0xff]
    %v7273 = vld [vmem:[#allocation10 + $0x1e8] sm:$0xff]
    %v7275 = vsel %vm861, %v7254, 0
    %v7278 = vsel %vm861, %v7255, 0
    %v7281 = vsel %vm861, %v7256, 0
    %v7284 = vsel %vm861, %v7257, 0
    %7286 = vmatprep.subr.mxu0 %v7259
    %7287 = vmatpush1.msra.mxu0 %v7258
    %7288 = vmatprep.subr.mxu0 %v7261
    %7289 = vmatpush1.msra.mxu0 %v7260
    %7290 = vmatprep.subr.mxu0 %v7263
    %7291 = vmatpush1.msra.mxu0 %v7262
    %7292 = vmatprep.subr.mxu0 %v7265
    %7293 = vmatpush1.msra.mxu0 %v7264
    %7294 = vmatprep.subr.mxu0 %v7267
    %7295 = vmatpush1.msra.mxu0 %v7266
    %7296 = vmatprep.subr.mxu0 %v7269
    %7297 = vmatpush1.msra.mxu0 %v7268
    %7298 = vmatprep.subr.mxu0 %v7271
    %7299 = vmatpush1.msra.mxu0 %v7270
    %7300 = vmatprep.subr.mxu0 %v7273
    %7301 = vmatpush1.msra.mxu0 %v7272
    %7302 = vmatprep.subr.mxu0 0.0
    %7303 = vmatpush1.msra.mxu0 0.0
    %7304 = vmatprep.subr.mxu0 0.0
    %7305 = vmatpush1.msra.mxu0 0.0
    %7306 = vmatprep.subr.mxu0 0.0
    %7307 = vmatpush1.msra.mxu0 0.0
    %7308 = vmatprep.subr.mxu0 0.0
    %7309 = vmatpush1.msra.mxu0 0.0
    %7310 = vmatprep.subr.mxu0 0.0
    %7311 = vmatpush1.msra.mxu0 0.0
    %7312 = vmatprep.subr.mxu0 0.0
    %7313 = vmatpush1.msra.mxu0 0.0
    %7314 = vmatprep.subr.mxu0 0.0
    %7315 = vmatpush1.msra.mxu0 0.0
    %7316 = vmatprep.subr.mxu0 0.0
    %7317 = vmatpush1.msra.mxu0 0.0
    %7318 = vmatprep.subr.mxu0 0.0
    %7319 = vmatpush1.msra.mxu0 0.0
    %7320 = vmatprep.subr.mxu0 0.0
    %7321 = vmatpush1.msra.mxu0 0.0
    %7322 = vmatprep.subr.mxu0 0.0
    %7323 = vmatpush1.msra.mxu0 0.0
    %7324 = vmatprep.subr.mxu0 0.0
    %7325 = vmatpush1.msra.mxu0 0.0
    %7326 = vmatprep.subr.mxu0 0.0
    %7327 = vmatpush1.msra.mxu0 0.0
    %7328 = vmatprep.subr.mxu0 0.0
    %7329 = vmatpush1.msra.mxu0 0.0
    %7330 = vmatprep.subr.mxu0 0.0
    %7331 = vmatpush1.msra.mxu0 0.0
    %7332 = vmatprep.subr.mxu0 0.0
    %7333 = vmatpush1.msra.mxu0 0.0
    %7334 = vmatprep.subr.mxu0 0.0
    %7335 = vmatpush1.msra.mxu0 0.0
    %7336 = vmatprep.subr.mxu0 0.0
    %7337 = vmatpush1.msra.mxu0 0.0
    %7338 = vmatprep.subr.mxu0 0.0
    %7339 = vmatpush1.msra.mxu0 0.0
    %7340 = vmatprep.subr.mxu0 0.0
    %7341 = vmatpush1.msra.mxu0 0.0
    %7342 = vmatprep.subr.mxu0 0.0
    %7343 = vmatpush1.msra.mxu0 0.0
    %7344 = vmatprep.subr.mxu0 0.0
    %7345 = vmatpush1.msra.mxu0 0.0
    %7346 = vmatprep.subr.mxu0 0.0
    %7347 = vmatpush1.msra.mxu0 0.0
    %7348 = vmatprep.subr.mxu0 0.0
    %7349 = vmatpush1.msra.mxu0 0.0
    %7350 = vmatprep.mubr.f32.mxu0 0.0
    %7351 = vmatmul.mubr.f32.gmra.mrb[0].mxu0 %v7275
    %v7352 = vpop.f32.mrb[0].mxu0
    %v7353 = vadd.f32 0.0, %v7352
    %v7354 = vpop.f32.mrb[0].mxu0
    %v7355 = vadd.f32 0.0, %v7354
    %7356 = vmatprep.mubr.f32.mxu0 0.0
    %7357 = vmatmul.mubr.f32.gmra.mrb[0].mxu0 %v7278
    %v7358 = vpop.f32.mrb[0].mxu0
    %v7359 = vadd.f32 0.0, %v7358
    %v7360 = vpop.f32.mrb[0].mxu0
    %v7361 = vadd.f32 0.0, %v7360
    %7362 = vmatprep.mubr.f32.mxu0 0.0
    %7363 = vmatmul.mubr.f32.gmra.mrb[0].mxu0 %v7281
    %v7364 = vpop.f32.mrb[0].mxu0
    %v7365 = vadd.f32 0.0, %v7364
    %v7366 = vpop.f32.mrb[0].mxu0
    %v7367 = vadd.f32 0.0, %v7366
    %7368 = vmatprep.mubr.f32.mxu0 0.0
    %7369 = vmatmul.mubr.f32.gmra.mrb[0].mxu0 %v7284
    %v7370 = vpop.f32.mrb[0].mxu0
    %v7371 = vadd.f32 0.0, %v7370
    %v7372 = vpop.f32.mrb[0].mxu0
    %v7373 = vadd.f32 0.0, %v7372
    %7374 = vdwg.mxu0
    %v7375 = vld [vmem:[#allocation11 + $0x14] sm:$0x1]
    %v7377 = vlaneseq
    %v7378 = vshrl.u32 %v7377, 7
    %v7379 = vsub.s32 0, %v7378
    %v7380 = vrot.slane %v7375, %v7379
    %v7382 = vadd.f32 %v7353, %v7380
    %v7383 = vadd.f32 %v7359, %v7380
    %v7384 = vadd.f32 %v7365, %v7380
    %v7385 = vadd.f32 %v7371, %v7380
    %v7386 = vld [vmem:[#allocation11 + $0x15] sm:$0x1]
    %v7388 = vlaneseq
    %v7389 = vshrl.u32 %v7388, 7
    %v7390 = vsub.s32 0, %v7389
    %v7391 = vrot.slane %v7386, %v7390
    %7392 = vrot.lane.b32.xlu0 %v7391, 96
    %v7393 = vpop.permute.xlu0 %7392
    %v7395 = vadd.f32 %v7353, %v7393
    %v7396 = vadd.f32 %v7355, %v7393
    %v7397 = vadd.f32 %v7359, %v7393
    %v7398 = vadd.f32 %v7361, %v7393
    %v7399 = vadd.f32 %v7365, %v7393
    %v7400 = vadd.f32 %v7367, %v7393
    %v7401 = vadd.f32 %v7371, %v7393
    %v7402 = vadd.f32 %v7373, %v7393
    %7411 = vrot.lane.b32.xlu0 %v7395, 32
    %v7412 = vpop.permute.xlu0 %7411
    %7413 = vrot.lane.b32.xlu0 %v7396, 32
    %v7414 = vpop.permute.xlu0 %7413
    %7415 = vrot.lane.b32.xlu0 %v7397, 32
    %v7416 = vpop.permute.xlu0 %7415
    %7417 = vrot.lane.b32.xlu0 %v7398, 32
    %v7418 = vpop.permute.xlu0 %7417
    %7419 = vrot.lane.b32.xlu0 %v7399, 32
    %v7420 = vpop.permute.xlu0 %7419
    %7421 = vrot.lane.b32.xlu0 %v7400, 32
    %v7422 = vpop.permute.xlu0 %7421
    %7423 = vrot.lane.b32.xlu0 %v7401, 32
    %v7424 = vpop.permute.xlu0 %7423
    %7425 = vrot.lane.b32.xlu0 %v7402, 32
    %v7426 = vpop.permute.xlu0 %7425
    %v7427 = vsel %vm115, %v7412, %v7414
    %v7428 = vsel %vm115, %v7416, %v7418
    %v7429 = vsel %vm115, %v7420, %v7422
    %v7430 = vsel %vm115, %v7424, %v7426
    %v7435 = vadd.f32 %v7382, %v7427
    %v7436 = vadd.f32 %v7383, %v7428
    %v7437 = vadd.f32 %v7384, %v7429
    %v7438 = vadd.f32 %v7385, %v7430
    %v7439 = vxor.u32 %v7435, 2147483648
    %v7440 = vxor.u32 %v7436, 2147483648
    %v7441 = vxor.u32 %v7437, 2147483648
    %v7442 = vxor.u32 %v7438, 2147483648
    %v7443 = vmul.f32 %v7439, 1.442695
    %v7444 = vpow.pop %v7443
    %v7445 = vmul.f32 %v7440, 1.442695
    %v7446 = vpow.pop %v7445
    %v7447 = vmul.f32 %v7441, 1.442695
    %v7448 = vpow.pop %v7447
    %v7449 = vmul.f32 %v7442, 1.442695
    %v7450 = vpow.pop %v7449
    %v7451 = vadd.f32 %v7444, 1.0
    %v7452 = vadd.f32 %v7446, 1.0
    %v7453 = vadd.f32 %v7448, 1.0
    %v7454 = vadd.f32 %v7450, 1.0
    %v7455 = vrcp.pop %v7451
    %v7456 = vmul.f32 1.0, %v7455
    %v7457 = vrcp.pop %v7452
    %v7458 = vmul.f32 1.0, %v7457
    %v7459 = vrcp.pop %v7453
    %v7460 = vmul.f32 1.0, %v7459
    %v7461 = vrcp.pop %v7454
    %v7462 = vmul.f32 1.0, %v7461
    %7463 = vrot.lane.b32.xlu0 %v7396, 96
    %v7464 = vpop.permute.xlu0 %7463
    %7465 = vrot.lane.b32.xlu0 %v7398, 96
    %v7466 = vpop.permute.xlu0 %7465
    %7467 = vrot.lane.b32.xlu0 %v7400, 96
    %v7468 = vpop.permute.xlu0 %7467
    %7469 = vrot.lane.b32.xlu0 %v7402, 96
    %v7470 = vpop.permute.xlu0 %7469
    %v7475 = vmul.f32 %v7456, %v7464
    %v7476 = vmul.f32 %v7458, %v7466
    %v7477 = vmul.f32 %v7460, %v7468
    %v7478 = vmul.f32 %v7462, %v7470
    %7483 = vrot.lane.b32.xlu0 %v7475, 64
    %v7484 = vpop.permute.xlu0 %7483
    %7485 = vrot.lane.b32.xlu0 %v7476, 64
    %v7486 = vpop.permute.xlu0 %7485
    %7487 = vrot.lane.b32.xlu0 %v7477, 64
    %v7488 = vpop.permute.xlu0 %7487
    %7489 = vrot.lane.b32.xlu0 %v7478, 64
    %v7490 = vpop.permute.xlu0 %7489
    %v7495 = vadd.f32 %v7382, %v7484
    %v7496 = vadd.f32 %v7383, %v7486
    %v7497 = vadd.f32 %v7384, %v7488
    %v7498 = vadd.f32 %v7385, %v7490
    %v7499 = vtanh.pop %v7495
    %v7500 = vtanh.pop %v7496
    %v7501 = vtanh.pop %v7497
    %v7502 = vtanh.pop %v7498
    %v7503 = vsub.f32 1.0, %v7456
    %v7504 = vsub.f32 1.0, %v7458
    %v7505 = vsub.f32 1.0, %v7460
    %v7506 = vsub.f32 1.0, %v7462
    %7511 = vrot.lane.b32.xlu0 %v7499, 96
    %v7512 = vpop.permute.xlu0 %7511
    %7513 = vrot.lane.b32.xlu0 %v7500, 96
    %v7514 = vpop.permute.xlu0 %7513
    %7515 = vrot.lane.b32.xlu0 %v7501, 96
    %v7516 = vpop.permute.xlu0 %7515
    %7517 = vrot.lane.b32.xlu0 %v7502, 96
    %v7518 = vpop.permute.xlu0 %7517
    %v7523 = vmul.f32 %v7503, %v7512
    %v7524 = vmul.f32 %v7504, %v7514
    %v7525 = vmul.f32 %v7505, %v7516
    %v7526 = vmul.f32 %v7506, %v7518
    %v7527 = vmul.f32 %v7456, %v5507
    %v7528 = vmul.f32 %v7458, %v5508
    %v7529 = vmul.f32 %v7460, %v5509
    %v7530 = vmul.f32 %v7462, %v5510
    %v7531 = vadd.f32 %v7523, %v7527
    %v7532 = vadd.f32 %v7524, %v7528
    %v7533 = vadd.f32 %v7525, %v7529
    %v7534 = vadd.f32 %v7526, %v7530
    %v7535 = vld [vmem:[#allocation11 + $0x16] sm:$0x1]
    %v7536 = vld [vmem:[#allocation11 + $0x17] sm:$0x1]
    %7541 = vrot.lane.b32.xlu0 %v7531, 96
    %v7542 = vpop.permute.xlu0 %7541
    %7543 = vrot.lane.b32.xlu0 %v7532, 96
    %v7544 = vpop.permute.xlu0 %7543
    %7545 = vrot.lane.b32.xlu0 %v7533, 96
    %v7546 = vpop.permute.xlu0 %7545
    %7547 = vrot.lane.b32.xlu0 %v7534, 96
    %v7548 = vpop.permute.xlu0 %7547
    %v7553 = vsel %vm115, %v7542, 0.0
    %7554 = vadd.xlane.f32.xlu0 %v7553
    %v7555 = vpop.xlane.xlu0 %7554
    %v7556 = vsel %vm115, %v7544, 0.0
    %7557 = vadd.xlane.f32.xlu0 %v7556
    %v7558 = vpop.xlane.xlu0 %7557
    %v7559 = vsel %vm115, %v7546, 0.0
    %7560 = vadd.xlane.f32.xlu0 %v7559
    %v7561 = vpop.xlane.xlu0 %7560
    %v7562 = vsel %vm115, %v7548, 0.0
    %7563 = vadd.xlane.f32.xlu0 %v7562
    %v7564 = vpop.xlane.xlu0 %7563
    %v7565 = vmul.f32 %v7555, %v128
    %v7566 = vmul.f32 %v7558, %v128
    %v7567 = vmul.f32 %v7561, %v128
    %v7568 = vmul.f32 %v7564, %v128
    %v7569 = vsub.f32 %v7531, %v7565
    %v7570 = vsub.f32 %v7532, %v7566
    %v7571 = vsub.f32 %v7533, %v7567
    %v7572 = vsub.f32 %v7534, %v7568
    %v7573 = vmul.f32 %v7569, %v7569
    %v7574 = vmul.f32 %v7570, %v7570
    %v7575 = vmul.f32 %v7571, %v7571
    %v7576 = vmul.f32 %v7572, %v7572
    %7581 = vrot.lane.b32.xlu0 %v7573, 96
    %v7582 = vpop.permute.xlu0 %7581
    %7583 = vrot.lane.b32.xlu0 %v7574, 96
    %v7584 = vpop.permute.xlu0 %7583
    %7585 = vrot.lane.b32.xlu0 %v7575, 96
    %v7586 = vpop.permute.xlu0 %7585
    %7587 = vrot.lane.b32.xlu0 %v7576, 96
    %v7588 = vpop.permute.xlu0 %7587
    %v7593 = vsel %vm115, %v7582, 0.0
    %7594 = vadd.xlane.f32.xlu0 %v7593
    %v7595 = vpop.xlane.xlu0 %7594
    %v7596 = vsel %vm115, %v7584, 0.0
    %7597 = vadd.xlane.f32.xlu0 %v7596
    %v7598 = vpop.xlane.xlu0 %7597
    %v7599 = vsel %vm115, %v7586, 0.0
    %7600 = vadd.xlane.f32.xlu0 %v7599
    %v7601 = vpop.xlane.xlu0 %7600
    %v7602 = vsel %vm115, %v7588, 0.0
    %7603 = vadd.xlane.f32.xlu0 %v7602
    %v7604 = vpop.xlane.xlu0 %7603
    %v7605 = vmul.f32 %v7595, %v128
    %v7606 = vmul.f32 %v7598, %v128
    %v7607 = vmul.f32 %v7601, %v128
    %v7608 = vmul.f32 %v7604, %v128
    %v7609 = vadd.f32 %v7605, 1e-05
    %v7610 = vadd.f32 %v7606, 1e-05
    %v7611 = vadd.f32 %v7607, 1e-05
    %v7612 = vadd.f32 %v7608, 1e-05
    %v7613 = vrsqrt.pop %v7609
    %v7614 = vrsqrt.pop %v7610
    %v7615 = vrsqrt.pop %v7611
    %v7616 = vrsqrt.pop %v7612
    %v7617 = vmul.f32 %v7569, %v7613
    %v7618 = vmul.f32 %v7570, %v7614
    %v7619 = vmul.f32 %v7571, %v7615
    %v7620 = vmul.f32 %v7572, %v7616
    %v7622 = vlaneseq
    %v7623 = vshrl.u32 %v7622, 7
    %v7624 = vsub.s32 0, %v7623
    %v7625 = vrot.slane %v7535, %v7624
    %7626 = vrot.lane.b32.xlu0 %v7625, 32
    %v7627 = vpop.permute.xlu0 %7626
    %v7629 = vmul.f32 %v7617, %v7627
    %v7630 = vmul.f32 %v7618, %v7627
    %v7631 = vmul.f32 %v7619, %v7627
    %v7632 = vmul.f32 %v7620, %v7627
    %v7634 = vlaneseq
    %v7635 = vshrl.u32 %v7634, 7
    %v7636 = vsub.s32 0, %v7635
    %v7637 = vrot.slane %v7536, %v7636
    %7638 = vrot.lane.b32.xlu0 %v7637, 32
    %v7639 = vpop.permute.xlu0 %7638
    %v7641 = vadd.f32 %v7629, %v7639
    %v7642 = vadd.f32 %v7630, %v7639
    %v7643 = vadd.f32 %v7631, %v7639
    %v7644 = vadd.f32 %v7632, %v7639
    %v7645 = vld [vmem:[#allocation7 + $0x18] sm:$0xff]
    %v7646 = vld [vmem:[#allocation7 + $0x38] sm:$0xff]
    %v7647 = vld [vmem:[#allocation7 + $0x58] sm:$0xff]
    %v7648 = vld [vmem:[#allocation7 + $0x78] sm:$0xff]
    %v7649 = vld [vmem:[#allocation11 + $0x18] sm:$0x1]
    %v7651 = vlaneseq
    %v7652 = vshrl.u32 %v7651, 7
    %v7653 = vsub.s32 0, %v7652
    %v7654 = vrot.slane %v7649, %v7653
    %7660 = vrot.lane.b32.xlu0 %v7641, 96
    %v7661 = vpop.permute.xlu0 %7660
    %7662 = vrot.lane.b32.xlu0 %v7642, 96
    %v7663 = vpop.permute.xlu0 %7662
    %7664 = vrot.lane.b32.xlu0 %v7643, 96
    %v7665 = vpop.permute.xlu0 %7664
    %7666 = vrot.lane.b32.xlu0 %v7644, 96
    %v7667 = vpop.permute.xlu0 %7666
    %v7668 = vsel %vm115, %v7661, 0
    %v7670 = vsel %vm115, %v7663, 0
    %v7672 = vsel %vm115, %v7665, 0
    %v7674 = vsel %vm115, %v7667, 0
    %7676 = vmatprep.subr.mxu0 0.0
    %7677 = vmatpush1.msra.mxu0 %v7645
    %7678 = vmatprep.subr.mxu0 0.0
    %7679 = vmatpush1.msra.mxu0 %v7646
    %7680 = vmatprep.subr.mxu0 0.0
    %7681 = vmatpush1.msra.mxu0 %v7647
    %7682 = vmatprep.subr.mxu0 0.0
    %7683 = vmatpush1.msra.mxu0 %v7648
    %7684 = vmatprep.subr.mxu0 0.0
    %7685 = vmatpush1.msra.mxu0 0.0
    %7686 = vmatprep.subr.mxu0 0.0
    %7687 = vmatpush1.msra.mxu0 0.0
    %7688 = vmatprep.subr.mxu0 0.0
    %7689 = vmatpush1.msra.mxu0 0.0
    %7690 = vmatprep.subr.mxu0 0.0
    %7691 = vmatpush1.msra.mxu0 0.0
    %7692 = vmatprep.subr.mxu0 0.0
    %7693 = vmatpush1.msra.mxu0 0.0
    %7694 = vmatprep.subr.mxu0 0.0
    %7695 = vmatpush1.msra.mxu0 0.0
    %7696 = vmatprep.subr.mxu0 0.0
    %7697 = vmatpush1.msra.mxu0 0.0
    %7698 = vmatprep.subr.mxu0 0.0
    %7699 = vmatpush1.msra.mxu0 0.0
    %7700 = vmatprep.subr.mxu0 0.0
    %7701 = vmatpush1.msra.mxu0 0.0
    %7702 = vmatprep.subr.mxu0 0.0
    %7703 = vmatpush1.msra.mxu0 0.0
    %7704 = vmatprep.subr.mxu0 0.0
    %7705 = vmatpush1.msra.mxu0 0.0
    %7706 = vmatprep.subr.mxu0 0.0
    %7707 = vmatpush1.msra.mxu0 0.0
    %7708 = vmatprep.subr.mxu0 0.0
    %7709 = vmatpush1.msra.mxu0 0.0
    %7710 = vmatprep.subr.mxu0 0.0
    %7711 = vmatpush1.msra.mxu0 0.0
    %7712 = vmatprep.subr.mxu0 0.0
    %7713 = vmatpush1.msra.mxu0 0.0
    %7714 = vmatprep.subr.mxu0 0.0
    %7715 = vmatpush1.msra.mxu0 0.0
    %7716 = vmatprep.subr.mxu0 0.0
    %7717 = vmatpush1.msra.mxu0 0.0
    %7718 = vmatprep.subr.mxu0 0.0
    %7719 = vmatpush1.msra.mxu0 0.0
    %7720 = vmatprep.subr.mxu0 0.0
    %7721 = vmatpush1.msra.mxu0 0.0
    %7722 = vmatprep.subr.mxu0 0.0
    %7723 = vmatpush1.msra.mxu0 0.0
    %7724 = vmatprep.subr.mxu0 0.0
    %7725 = vmatpush1.msra.mxu0 0.0
    %7726 = vmatprep.subr.mxu0 0.0
    %7727 = vmatpush1.msra.mxu0 0.0
    %7728 = vmatprep.subr.mxu0 0.0
    %7729 = vmatpush1.msra.mxu0 0.0
    %7730 = vmatprep.subr.mxu0 0.0
    %7731 = vmatpush1.msra.mxu0 0.0
    %7732 = vmatprep.subr.mxu0 0.0
    %7733 = vmatpush1.msra.mxu0 0.0
    %7734 = vmatprep.subr.mxu0 0.0
    %7735 = vmatpush1.msra.mxu0 0.0
    %7736 = vmatprep.subr.mxu0 0.0
    %7737 = vmatpush1.msra.mxu0 0.0
    %7738 = vmatprep.subr.mxu0 0.0
    %7739 = vmatpush1.msra.mxu0 0.0
    %7740 = vmatprep.mubr.f32.mxu0 0.0
    %7741 = vmatmul.mubr.f32.gmra.mrb[0].mxu0 %v7668
    %v7742 = vpop.f32.mrb[0].mxu0
    %v7743 = vadd.f32 %v7654, %v7742
    %v7744 = vpop.f32.mrb[0].mxu0
    %7745 = vmatprep.mubr.f32.mxu0 0.0
    %7746 = vmatmul.mubr.f32.gmra.mrb[0].mxu0 %v7670
    %v7747 = vpop.f32.mrb[0].mxu0
    %v7748 = vadd.f32 %v7654, %v7747
    %v7749 = vpop.f32.mrb[0].mxu0
    %7750 = vmatprep.mubr.f32.mxu0 0.0
    %7751 = vmatmul.mubr.f32.gmra.mrb[0].mxu0 %v7672
    %v7752 = vpop.f32.mrb[0].mxu0
    %v7753 = vadd.f32 %v7654, %v7752
    %v7754 = vpop.f32.mrb[0].mxu0
    %7755 = vmatprep.mubr.f32.mxu0 0.0
    %7756 = vmatmul.mubr.f32.gmra.mrb[0].mxu0 %v7674
    %v7757 = vpop.f32.mrb[0].mxu0
    %v7758 = vadd.f32 %v7654, %v7757
    %v7759 = vpop.f32.mrb[0].mxu0
    %7760 = vdwg.mxu0
    %v7761 = vmax.f32 %v7743, 0.0
    %v7762 = vmax.f32 %v7748, 0.0
    %v7763 = vmax.f32 %v7753, 0.0
    %v7764 = vmax.f32 %v7758, 0.0
    %v7765 = vld [vmem:[#allocation8 + $0x8] sm:$0xff]
    %v7766 = vld [vmem:[#allocation8 + $0x18] sm:$0xff]
    %v7767 = vld [vmem:[#allocation8 + $0x28] sm:$0xff]
    %v7768 = vld [vmem:[#allocation8 + $0x38] sm:$0xff]
    %v7769 = vld [vmem:[#allocation8 + $0x48] sm:$0xff]
    %v7770 = vld [vmem:[#allocation8 + $0x58] sm:$0xff]
    %v7771 = vld [vmem:[#allocation8 + $0x68] sm:$0xff]
    %v7772 = vld [vmem:[#allocation8 + $0x78] sm:$0xff]
    %v7773 = vld [vmem:[#allocation11 + $0x19] sm:$0x1]
    %v7775 = vlaneseq
    %v7776 = vshrl.u32 %v7775, 7
    %v7777 = vsub.s32 0, %v7776
    %v7778 = vrot.slane %v7773, %v7777
    %v7781 = vsel %vm861, %v7761, 0
    %v7784 = vsel %vm861, %v7762, 0
    %v7787 = vsel %vm861, %v7763, 0
    %v7790 = vsel %vm861, %v7764, 0
    %7792 = vmatprep.subr.mxu0 0.0
    %7793 = vmatpush1.msra.mxu0 %v7765
    %7794 = vmatprep.subr.mxu0 0.0
    %7795 = vmatpush1.msra.mxu0 %v7766
    %7796 = vmatprep.subr.mxu0 0.0
    %7797 = vmatpush1.msra.mxu0 %v7767
    %7798 = vmatprep.subr.mxu0 0.0
    %7799 = vmatpush1.msra.mxu0 %v7768
    %7800 = vmatprep.subr.mxu0 0.0
    %7801 = vmatpush1.msra.mxu0 %v7769
    %7802 = vmatprep.subr.mxu0 0.0
    %7803 = vmatpush1.msra.mxu0 %v7770
    %7804 = vmatprep.subr.mxu0 0.0
    %7805 = vmatpush1.msra.mxu0 %v7771
    %7806 = vmatprep.subr.mxu0 0.0
    %7807 = vmatpush1.msra.mxu0 %v7772
    %7808 = vmatprep.subr.mxu0 0.0
    %7809 = vmatpush1.msra.mxu0 0.0
    %7810 = vmatprep.subr.mxu0 0.0
    %7811 = vmatpush1.msra.mxu0 0.0
    %7812 = vmatprep.subr.mxu0 0.0
    %7813 = vmatpush1.msra.mxu0 0.0
    %7814 = vmatprep.subr.mxu0 0.0
    %7815 = vmatpush1.msra.mxu0 0.0
    %7816 = vmatprep.subr.mxu0 0.0
    %7817 = vmatpush1.msra.mxu0 0.0
    %7818 = vmatprep.subr.mxu0 0.0
    %7819 = vmatpush1.msra.mxu0 0.0
    %7820 = vmatprep.subr.mxu0 0.0
    %7821 = vmatpush1.msra.mxu0 0.0
    %7822 = vmatprep.subr.mxu0 0.0
    %7823 = vmatpush1.msra.mxu0 0.0
    %7824 = vmatprep.subr.mxu0 0.0
    %7825 = vmatpush1.msra.mxu0 0.0
    %7826 = vmatprep.subr.mxu0 0.0
    %7827 = vmatpush1.msra.mxu0 0.0
    %7828 = vmatprep.subr.mxu0 0.0
    %7829 = vmatpush1.msra.mxu0 0.0
    %7830 = vmatprep.subr.mxu0 0.0
    %7831 = vmatpush1.msra.mxu0 0.0
    %7832 = vmatprep.subr.mxu0 0.0
    %7833 = vmatpush1.msra.mxu0 0.0
    %7834 = vmatprep.subr.mxu0 0.0
    %7835 = vmatpush1.msra.mxu0 0.0
    %7836 = vmatprep.subr.mxu0 0.0
    %7837 = vmatpush1.msra.mxu0 0.0
    %7838 = vmatprep.subr.mxu0 0.0
    %7839 = vmatpush1.msra.mxu0 0.0
    %7840 = vmatprep.subr.mxu0 0.0
    %7841 = vmatpush1.msra.mxu0 0.0
    %7842 = vmatprep.subr.mxu0 0.0
    %7843 = vmatpush1.msra.mxu0 0.0
    %7844 = vmatprep.subr.mxu0 0.0
    %7845 = vmatpush1.msra.mxu0 0.0
    %7846 = vmatprep.subr.mxu0 0.0
    %7847 = vmatpush1.msra.mxu0 0.0
    %7848 = vmatprep.subr.mxu0 0.0
    %7849 = vmatpush1.msra.mxu0 0.0
    %7850 = vmatprep.subr.mxu0 0.0
    %7851 = vmatpush1.msra.mxu0 0.0
    %7852 = vmatprep.subr.mxu0 0.0
    %7853 = vmatpush1.msra.mxu0 0.0
    %7854 = vmatprep.subr.mxu0 0.0
    %7855 = vmatpush1.msra.mxu0 0.0
    %7856 = vmatprep.mubr.f32.mxu0 0.0
    %7857 = vmatmul.mubr.f32.gmra.mrb[0].mxu0 %v7781
    %v7858 = vpop.f32.mrb[0].mxu0
    %v7859 = vadd.f32 %v7778, %v7858
    %v7860 = vpop.f32.mrb[0].mxu0
    %7861 = vmatprep.mubr.f32.mxu0 0.0
    %7862 = vmatmul.mubr.f32.gmra.mrb[0].mxu0 %v7784
    %v7863 = vpop.f32.mrb[0].mxu0
    %v7864 = vadd.f32 %v7778, %v7863
    %v7865 = vpop.f32.mrb[0].mxu0
    %7866 = vmatprep.mubr.f32.mxu0 0.0
    %7867 = vmatmul.mubr.f32.gmra.mrb[0].mxu0 %v7787
    %v7868 = vpop.f32.mrb[0].mxu0
    %v7869 = vadd.f32 %v7778, %v7868
    %v7870 = vpop.f32.mrb[0].mxu0
    %7871 = vmatprep.mubr.f32.mxu0 0.0
    %7872 = vmatmul.mubr.f32.gmra.mrb[0].mxu0 %v7790
    %v7873 = vpop.f32.mrb[0].mxu0
    %v7874 = vadd.f32 %v7778, %v7873
    %v7875 = vpop.f32.mrb[0].mxu0
    %7876 = vdwg.mxu0
    %v7877 = vsel %vm115, %v7859, %v7531
    %v7878 = vsel %vm115, %v7864, %v7532
    %v7879 = vsel %vm115, %v7869, %v7533
    %v7880 = vsel %vm115, %v7874, %v7534
    %v7881 = vld [vmem:[#allocation10 + $0x30] sm:$0xff]
    %v7882 = vld [vmem:[#allocation10 + $0x38] sm:$0xff]
    %v7883 = vld [vmem:[#allocation10 + $0x70] sm:$0xff]
    %v7884 = vld [vmem:[#allocation10 + $0x78] sm:$0xff]
    %v7885 = vld [vmem:[#allocation10 + $0xb0] sm:$0xff]
    %v7886 = vld [vmem:[#allocation10 + $0xb8] sm:$0xff]
    %v7887 = vld [vmem:[#allocation10 + $0xf0] sm:$0xff]
    %v7888 = vld [vmem:[#allocation10 + $0xf8] sm:$0xff]
    %v7889 = vld [vmem:[#allocation10 + $0x130] sm:$0xff]
    %v7890 = vld [vmem:[#allocation10 + $0x138] sm:$0xff]
    %v7891 = vld [vmem:[#allocation10 + $0x170] sm:$0xff]
    %v7892 = vld [vmem:[#allocation10 + $0x178] sm:$0xff]
    %v7893 = vld [vmem:[#allocation10 + $0x1b0] sm:$0xff]
    %v7894 = vld [vmem:[#allocation10 + $0x1b8] sm:$0xff]
    %v7895 = vld [vmem:[#allocation10 + $0x1f0] sm:$0xff]
    %v7896 = vld [vmem:[#allocation10 + $0x1f8] sm:$0xff]
    %v7898 = vsel %vm861, %v7877, 0
    %v7901 = vsel %vm861, %v7878, 0
    %v7904 = vsel %vm861, %v7879, 0
    %v7907 = vsel %vm861, %v7880, 0
    %7909 = vmatprep.subr.mxu0 %v7882
    %7910 = vmatpush1.msra.mxu0 %v7881
    %7911 = vmatprep.subr.mxu0 %v7884
    %7912 = vmatpush1.msra.mxu0 %v7883
    %7913 = vmatprep.subr.mxu0 %v7886
    %7914 = vmatpush1.msra.mxu0 %v7885
    %7915 = vmatprep.subr.mxu0 %v7888
    %7916 = vmatpush1.msra.mxu0 %v7887
    %7917 = vmatprep.subr.mxu0 %v7890
    %7918 = vmatpush1.msra.mxu0 %v7889
    %7919 = vmatprep.subr.mxu0 %v7892
    %7920 = vmatpush1.msra.mxu0 %v7891
    %7921 = vmatprep.subr.mxu0 %v7894
    %7922 = vmatpush1.msra.mxu0 %v7893
    %7923 = vmatprep.subr.mxu0 %v7896
    %7924 = vmatpush1.msra.mxu0 %v7895
    %7925 = vmatprep.subr.mxu0 0.0
    %7926 = vmatpush1.msra.mxu0 0.0
    %7927 = vmatprep.subr.mxu0 0.0
    %7928 = vmatpush1.msra.mxu0 0.0
    %7929 = vmatprep.subr.mxu0 0.0
    %7930 = vmatpush1.msra.mxu0 0.0
    %7931 = vmatprep.subr.mxu0 0.0
    %7932 = vmatpush1.msra.mxu0 0.0
    %7933 = vmatprep.subr.mxu0 0.0
    %7934 = vmatpush1.msra.mxu0 0.0
    %7935 = vmatprep.subr.mxu0 0.0
    %7936 = vmatpush1.msra.mxu0 0.0
    %7937 = vmatprep.subr.mxu0 0.0
    %7938 = vmatpush1.msra.mxu0 0.0
    %7939 = vmatprep.subr.mxu0 0.0
    %7940 = vmatpush1.msra.mxu0 0.0
    %7941 = vmatprep.subr.mxu0 0.0
    %7942 = vmatpush1.msra.mxu0 0.0
    %7943 = vmatprep.subr.mxu0 0.0
    %7944 = vmatpush1.msra.mxu0 0.0
    %7945 = vmatprep.subr.mxu0 0.0
    %7946 = vmatpush1.msra.mxu0 0.0
    %7947 = vmatprep.subr.mxu0 0.0
    %7948 = vmatpush1.msra.mxu0 0.0
    %7949 = vmatprep.subr.mxu0 0.0
    %7950 = vmatpush1.msra.mxu0 0.0
    %7951 = vmatprep.subr.mxu0 0.0
    %7952 = vmatpush1.msra.mxu0 0.0
    %7953 = vmatprep.subr.mxu0 0.0
    %7954 = vmatpush1.msra.mxu0 0.0
    %7955 = vmatprep.subr.mxu0 0.0
    %7956 = vmatpush1.msra.mxu0 0.0
    %7957 = vmatprep.subr.mxu0 0.0
    %7958 = vmatpush1.msra.mxu0 0.0
    %7959 = vmatprep.subr.mxu0 0.0
    %7960 = vmatpush1.msra.mxu0 0.0
    %7961 = vmatprep.subr.mxu0 0.0
    %7962 = vmatpush1.msra.mxu0 0.0
    %7963 = vmatprep.subr.mxu0 0.0
    %7964 = vmatpush1.msra.mxu0 0.0
    %7965 = vmatprep.subr.mxu0 0.0
    %7966 = vmatpush1.msra.mxu0 0.0
    %7967 = vmatprep.subr.mxu0 0.0
    %7968 = vmatpush1.msra.mxu0 0.0
    %7969 = vmatprep.subr.mxu0 0.0
    %7970 = vmatpush1.msra.mxu0 0.0
    %7971 = vmatprep.subr.mxu0 0.0
    %7972 = vmatpush1.msra.mxu0 0.0
    %7973 = vmatprep.mubr.f32.mxu0 0.0
    %7974 = vmatmul.mubr.f32.gmra.mrb[0].mxu0 %v7898
    %v7975 = vpop.f32.mrb[0].mxu0
    %v7976 = vadd.f32 0.0, %v7975
    %v7977 = vpop.f32.mrb[0].mxu0
    %v7978 = vadd.f32 0.0, %v7977
    %7979 = vmatprep.mubr.f32.mxu0 0.0
    %7980 = vmatmul.mubr.f32.gmra.mrb[0].mxu0 %v7901
    %v7981 = vpop.f32.mrb[0].mxu0
    %v7982 = vadd.f32 0.0, %v7981
    %v7983 = vpop.f32.mrb[0].mxu0
    %v7984 = vadd.f32 0.0, %v7983
    %7985 = vmatprep.mubr.f32.mxu0 0.0
    %7986 = vmatmul.mubr.f32.gmra.mrb[0].mxu0 %v7904
    %v7987 = vpop.f32.mrb[0].mxu0
    %v7988 = vadd.f32 0.0, %v7987
    %v7989 = vpop.f32.mrb[0].mxu0
    %v7990 = vadd.f32 0.0, %v7989
    %7991 = vmatprep.mubr.f32.mxu0 0.0
    %7992 = vmatmul.mubr.f32.gmra.mrb[0].mxu0 %v7907
    %v7993 = vpop.f32.mrb[0].mxu0
    %v7994 = vadd.f32 0.0, %v7993
    %v7995 = vpop.f32.mrb[0].mxu0
    %v7996 = vadd.f32 0.0, %v7995
    %7997 = vdwg.mxu0
    %v7998 = vld [vmem:[#allocation11 + $0x1a] sm:$0x1]
    %v8000 = vlaneseq
    %v8001 = vshrl.u32 %v8000, 7
    %v8002 = vsub.s32 0, %v8001
    %v8003 = vrot.slane %v7998, %v8002
    %v8005 = vadd.f32 %v7976, %v8003
    %v8006 = vadd.f32 %v7982, %v8003
    %v8007 = vadd.f32 %v7988, %v8003
    %v8008 = vadd.f32 %v7994, %v8003
    %v8009 = vld [vmem:[#allocation11 + $0x1b] sm:$0x1]
    %v8011 = vlaneseq
    %v8012 = vshrl.u32 %v8011, 7
    %v8013 = vsub.s32 0, %v8012
    %v8014 = vrot.slane %v8009, %v8013
    %8015 = vrot.lane.b32.xlu0 %v8014, 96
    %v8016 = vpop.permute.xlu0 %8015
    %v8018 = vadd.f32 %v7976, %v8016
    %v8019 = vadd.f32 %v7978, %v8016
    %v8020 = vadd.f32 %v7982, %v8016
    %v8021 = vadd.f32 %v7984, %v8016
    %v8022 = vadd.f32 %v7988, %v8016
    %v8023 = vadd.f32 %v7990, %v8016
    %v8024 = vadd.f32 %v7994, %v8016
    %v8025 = vadd.f32 %v7996, %v8016
    %8034 = vrot.lane.b32.xlu0 %v8018, 32
    %v8035 = vpop.permute.xlu0 %8034
    %8036 = vrot.lane.b32.xlu0 %v8019, 32
    %v8037 = vpop.permute.xlu0 %8036
    %8038 = vrot.lane.b32.xlu0 %v8020, 32
    %v8039 = vpop.permute.xlu0 %8038
    %8040 = vrot.lane.b32.xlu0 %v8021, 32
    %v8041 = vpop.permute.xlu0 %8040
    %8042 = vrot.lane.b32.xlu0 %v8022, 32
    %v8043 = vpop.permute.xlu0 %8042
    %8044 = vrot.lane.b32.xlu0 %v8023, 32
    %v8045 = vpop.permute.xlu0 %8044
    %8046 = vrot.lane.b32.xlu0 %v8024, 32
    %v8047 = vpop.permute.xlu0 %8046
    %8048 = vrot.lane.b32.xlu0 %v8025, 32
    %v8049 = vpop.permute.xlu0 %8048
    %v8050 = vsel %vm115, %v8035, %v8037
    %v8051 = vsel %vm115, %v8039, %v8041
    %v8052 = vsel %vm115, %v8043, %v8045
    %v8053 = vsel %vm115, %v8047, %v8049
    %v8058 = vadd.f32 %v8005, %v8050
    %v8059 = vadd.f32 %v8006, %v8051
    %v8060 = vadd.f32 %v8007, %v8052
    %v8061 = vadd.f32 %v8008, %v8053
    %v8062 = vxor.u32 %v8058, 2147483648
    %v8063 = vxor.u32 %v8059, 2147483648
    %v8064 = vxor.u32 %v8060, 2147483648
    %v8065 = vxor.u32 %v8061, 2147483648
    %v8066 = vmul.f32 %v8062, 1.442695
    %v8067 = vpow.pop %v8066
    %v8068 = vmul.f32 %v8063, 1.442695
    %v8069 = vpow.pop %v8068
    %v8070 = vmul.f32 %v8064, 1.442695
    %v8071 = vpow.pop %v8070
    %v8072 = vmul.f32 %v8065, 1.442695
    %v8073 = vpow.pop %v8072
    %v8074 = vadd.f32 %v8067, 1.0
    %v8075 = vadd.f32 %v8069, 1.0
    %v8076 = vadd.f32 %v8071, 1.0
    %v8077 = vadd.f32 %v8073, 1.0
    %v8078 = vrcp.pop %v8074
    %v8079 = vmul.f32 1.0, %v8078
    %v8080 = vrcp.pop %v8075
    %v8081 = vmul.f32 1.0, %v8080
    %v8082 = vrcp.pop %v8076
    %v8083 = vmul.f32 1.0, %v8082
    %v8084 = vrcp.pop %v8077
    %v8085 = vmul.f32 1.0, %v8084
    %8086 = vrot.lane.b32.xlu0 %v8019, 96
    %v8087 = vpop.permute.xlu0 %8086
    %8088 = vrot.lane.b32.xlu0 %v8021, 96
    %v8089 = vpop.permute.xlu0 %8088
    %8090 = vrot.lane.b32.xlu0 %v8023, 96
    %v8091 = vpop.permute.xlu0 %8090
    %8092 = vrot.lane.b32.xlu0 %v8025, 96
    %v8093 = vpop.permute.xlu0 %8092
    %v8098 = vmul.f32 %v8079, %v8087
    %v8099 = vmul.f32 %v8081, %v8089
    %v8100 = vmul.f32 %v8083, %v8091
    %v8101 = vmul.f32 %v8085, %v8093
    %8106 = vrot.lane.b32.xlu0 %v8098, 64
    %v8107 = vpop.permute.xlu0 %8106
    %8108 = vrot.lane.b32.xlu0 %v8099, 64
    %v8109 = vpop.permute.xlu0 %8108
    %8110 = vrot.lane.b32.xlu0 %v8100, 64
    %v8111 = vpop.permute.xlu0 %8110
    %8112 = vrot.lane.b32.xlu0 %v8101, 64
    %v8113 = vpop.permute.xlu0 %8112
    %v8118 = vadd.f32 %v8005, %v8107
    %v8119 = vadd.f32 %v8006, %v8109
    %v8120 = vadd.f32 %v8007, %v8111
    %v8121 = vadd.f32 %v8008, %v8113
    %v8122 = vtanh.pop %v8118
    %v8123 = vtanh.pop %v8119
    %v8124 = vtanh.pop %v8120
    %v8125 = vtanh.pop %v8121
    %v8126 = vsub.f32 1.0, %v8079
    %v8127 = vsub.f32 1.0, %v8081
    %v8128 = vsub.f32 1.0, %v8083
    %v8129 = vsub.f32 1.0, %v8085
    %8134 = vrot.lane.b32.xlu0 %v8122, 96
    %v8135 = vpop.permute.xlu0 %8134
    %8136 = vrot.lane.b32.xlu0 %v8123, 96
    %v8137 = vpop.permute.xlu0 %8136
    %8138 = vrot.lane.b32.xlu0 %v8124, 96
    %v8139 = vpop.permute.xlu0 %8138
    %8140 = vrot.lane.b32.xlu0 %v8125, 96
    %v8141 = vpop.permute.xlu0 %8140
    %v8146 = vmul.f32 %v8126, %v8135
    %v8147 = vmul.f32 %v8127, %v8137
    %v8148 = vmul.f32 %v8128, %v8139
    %v8149 = vmul.f32 %v8129, %v8141
    %v8150 = vmul.f32 %v8079, %v7531
    %v8151 = vmul.f32 %v8081, %v7532
    %v8152 = vmul.f32 %v8083, %v7533
    %v8153 = vmul.f32 %v8085, %v7534
    %v8154 = vadd.f32 %v8146, %v8150
    %v8155 = vadd.f32 %v8147, %v8151
    %v8156 = vadd.f32 %v8148, %v8152
    %v8157 = vadd.f32 %v8149, %v8153
    %v8158 = vcombine.high %v6646, %v6646
    %8159 = vrot.lane.b32.xlu0 %v8158, 96
    %v8160 = vpop.permute.xlu0 %8159
    %vm8162 = vcmask 257024
    %8163 = vst.msk [vmem:[#allocation13] sm:$0xf] %vm8162, %v6677
    %8164 = vst.msk [vmem:[#allocation13 + $0x4] sm:$0xf] %vm8162, %v8160
    %8169 = vrot.lane.b32.xlu0 %v8154, 96
    %v8170 = vpop.permute.xlu0 %8169
    %8171 = vrot.lane.b32.xlu0 %v8155, 96
    %v8172 = vpop.permute.xlu0 %8171
    %8173 = vrot.lane.b32.xlu0 %v8156, 96
    %v8174 = vpop.permute.xlu0 %8173
    %8175 = vrot.lane.b32.xlu0 %v8157, 96
    %v8176 = vpop.permute.xlu0 %8175
    %8181 = vst.msk [vmem:[#allocation14] sm:$0xff] %vm115, %v8170
    %8182 = vst.msk [vmem:[#allocation14 + $0x8] sm:$0xff] %vm115, %v8172
    %8183 = vst.msk [vmem:[#allocation14 + $0x10] sm:$0xff] %vm115, %v8174
    %8184 = vst.msk [vmem:[#allocation14 + $0x18] sm:$0xff] %vm115, %v8176
    // Predicated region
    $region50: #{tpu_custom_call.1} parent=1 // pred_check
      _
    $region51: #{tpu_custom_call.1} parent=1 // pred_check_branch
      %8186 = sbr.rel (0) target = $region53
    $region52: #{tpu_custom_call.1} parent=1 // pred_region
      %s8188 = ssub.s32 128, 128
      %8189 = vsyncadd [#allocation4], %s8188
      %s8190 = sshll.u32 [#allocation13], 4
      %s8191 = int_to_ptr.vmem [resolvable:$true] %s8190
      %8196 = dma.vmem_to_hbm [thread:$0]  %s8191, 128, %s6, [#allocation4], 64, 64, 4
    $region53: #{tpu_custom_call.1} parent=1 // pred_fallthru
      _
    // Predicated region
    $region54: #{tpu_custom_call.1} parent=1 // pred_check
      _
    $region55: #{tpu_custom_call.1} parent=1 // pred_check_branch
      %8198 = sbr.rel (0) target = $region57
    $region56: #{tpu_custom_call.1} parent=1 // pred_region
      %s8200 = ssub.s32 512, 512
      %8201 = vsyncadd [#allocation15], %s8200
      %s8202 = sshll.u32 [#allocation14], 4
      %s8203 = int_to_ptr.vmem [resolvable:$true] %s8202
      %8208 = dma.vmem_to_hbm [thread:$0]  %s8203, 512, %s7, [#allocation15], 128, 128, 8
    $region57: #{tpu_custom_call.1} parent=1 // pred_fallthru
      _
    // Predicated region
    $region58: #{tpu_custom_call.1} parent=1 // pred_check
      _
    $region59: #{tpu_custom_call.1} parent=1 // pred_check_branch
      %8210 = sbr.rel (0) target = $region61
    $region60: #{tpu_custom_call.1} parent=1 // pred_region
      %8211 = dma.done [#allocation4], 128
    $region61: #{tpu_custom_call.1} parent=1 // pred_fallthru
      _
    // Predicated region
    $region62: #{tpu_custom_call.1} parent=1 // pred_check
      _
    $region63: #{tpu_custom_call.1} parent=1 // pred_check_branch
      %8213 = sbr.rel (0) target = $region65
    $region64: #{tpu_custom_call.1} parent=1 // pred_region
      %8214 = dma.done [#allocation15], 512
    $region65: #{tpu_custom_call.1} parent=1 // pred_fallthru
      _
    %8215 = vsyncpa [#allocation3], 1
    %8216 = vsyncpa [#allocation6], 1
    %8217 = vsyncpa [#allocation9], 1
    %8218 = vsyncpa [#allocation12], 1
    %8219 = vsyncpa [#allocation4], 1
    %8220 = vsyncpa [#allocation15], 1

</llo_original>
